<compile_context>
chip_gen: v7x
topology: tpu7x:2x2x1
jax: 0.10.0
libtpu: 0.0.40
codegen_flags: <defaults>
</compile_context>

<pallas_src>
import functools
import math

import jax
import jax.numpy as jnp
from jax.experimental import pallas as pl
from jax.experimental.pallas import tpu as pltpu

N_ACTIONS = 9
N_STATE = 4
N_TILE = 20
STATE_LEN = 4
input_actions = 1
input_states = 0          # state branch disabled (matches the PyTorch module)

FC_FEAT = 8 * 8 * 8 + N_TILE * N_STATE                      # 592
FC0_IN = 512 + N_TILE * N_STATE * input_states + N_TILE * input_actions  # 532

# Static conv config: (Cin, Cout, kernel, stride).
CONV_CFG = (
    (STATE_LEN, 8, 8, 2),
    (8, 32, 4, 2),
    (32, 64, 4, 1),
    (64, 128, 3, 1),
    (128, 512, 3, 1),
)
CONV5_CIN, CONV5_COUT, CONV5_KS, _ = CONV_CFG[-1]
CONV5_KDIM = CONV5_KS * CONV5_KS * CONV5_CIN                 # 1152


# --------------------------- Pallas: conv matmul ----------------------------
def _matmul_bias_act_kernel(x_ref, w_ref, b_ref, o_ref, *, apply_relu):
    # bf16 x bf16 -> f32 accumulate on the MXU; bias + ReLU epilogue in f32.
    acc = jnp.dot(x_ref[...], w_ref[...], preferred_element_type=jnp.float32)
    acc = acc + b_ref[...]
    if apply_relu:
        acc = jnp.maximum(acc, 0.0)
    o_ref[...] = acc.astype(o_ref.dtype)


def _pick_tile_m(m, dtype, max_tile=512):
    """Largest sublane-pack-aligned divisor of m (<= max_tile); falls back to a
    single full-M block (always legal) if none exists or m is small."""
    if m <= max_tile:
        return m
    pack = 16 if dtype == jnp.bfloat16 else 8
    for t in range(max_tile, pack - 1, -1):
        if t % pack == 0 and m % t == 0:
            return t
    return m


def pallas_matmul_bias(x, w, b, *, apply_relu, out_dtype, max_tile_m=512):
    """y = relu?(x @ w + b); x:(M,K), w:(K,N) resident, b:(1,N) resident.
    Activations streamed over an M grid (parallel, double-buffered)."""
    M, K = x.shape
    Kw, N = w.shape
    assert K == Kw and b.shape == (1, N)
    tile_m = _pick_tile_m(M, x.dtype, max_tile_m)
    grid = (M // tile_m,)
    return pl.pallas_call(
        functools.partial(_matmul_bias_act_kernel, apply_relu=apply_relu),
        out_shape=jax.ShapeDtypeStruct((M, N), out_dtype),
        grid=grid,
        in_specs=[
            pl.BlockSpec((tile_m, K), lambda i: (i, 0)),   # streamed patches
            pl.BlockSpec((K, N), lambda i: (0, 0)),        # resident weight
            pl.BlockSpec((1, N), lambda i: (0, 0)),        # resident bias
        ],
        out_specs=pl.BlockSpec((tile_m, N), lambda i: (i, 0)),
        compiler_params=pltpu.CompilerParams(
            dimension_semantics=("parallel",)),
    )(x, w, b)


# ----------------- Pallas: fused conv5 + FC tail (one launch) ---------------
def _conv5_fc_tail_kernel(x5_ref, a_ref, w5_ref, b5_ref,
                          w0h_ref, w0a_ref, b0_ref,
                          w1_ref, b1_ref, wq_ref, bq_ref, o_ref):
    f32 = jnp.float32
    # conv5: its 3x3 kernel == the full 3x3 spatial extent, so it's a plain
    # (B, 1152) @ (1152, 512) matmul + bias + ReLU.
    h = jnp.dot(x5_ref[...], w5_ref[...], preferred_element_type=f32)
    h = jnp.maximum(h + b5_ref[...], 0.0)                     # (B, 512)
    # fc_0 on [conv_feat | tile(action, N_TILE)]; the tiled-action contribution
    # is folded into w0a (valid for input_actions == 1 -> broadcast multiply).
    h0 = jnp.dot(h.astype(w0h_ref.dtype), w0h_ref[...],
                 preferred_element_type=f32)
    h0 = h0 + a_ref[...].astype(f32) * w0a_ref[...]           # (B,1)*(1,512)
    h0 = jnp.maximum(h0 + b0_ref[...], 0.0)
    # fc_1
    h1 = jnp.dot(h0.astype(w1_ref.dtype), w1_ref[...],
                 preferred_element_type=f32)
    h1 = jnp.maximum(h1 + b1_ref[...], 0.0)
    # fc_q folded with fc_q1 -> single 592 -> 1 projection (mul + lane reduce).
    q = jnp.sum(h1 * wq_ref[...], axis=1, keepdims=True) + bq_ref[...]
    o_ref[...] = q.astype(o_ref.dtype)


def pallas_conv5_fc_tail(x5, a, p):
    B = x5.shape[0]
    operands = (x5, a, p["conv5_w"], p["conv5_b"],
                p["fc0_wh"], p["fc0_wa"], p["fc0_b"],
                p["fc1_w"], p["fc1_b"], p["fcq_w"], p["fcq_b"])

    def full_spec(arr):
        nd = arr.ndim
        return pl.BlockSpec(arr.shape, lambda i, _nd=nd: (0,) * _nd)

    return pl.pallas_call(
        _conv5_fc_tail_kernel,
        out_shape=jax.ShapeDtypeStruct((B, 1), jnp.float32),
        grid=(1,),
        in_specs=[full_spec(t) for t in operands],
        out_specs=pl.BlockSpec((B, 1), lambda i: (0, 0)),
        compiler_params=pltpu.CompilerParams(
            dimension_semantics=("arbitrary",)),
    )(*operands)


# ------------------------------ conv via im2col -----------------------------
def _im2col_nhwc(x, kh, kw, stride):
    # x: (B, H, W, C) -> patches: (B*OH*OW, kh*kw*C), K order = (kh, kw, C)
    B, H, W, C = x.shape
    OH = (H - kh) // stride + 1
    OW = (W - kw) // stride + 1
    cols = []
    for i in range(kh):
        for j in range(kw):
            cols.append(x[:, i:i + stride * OH:stride,
                          j:j + stride * OW:stride, :])
    patches = jnp.concatenate(cols, axis=-1)          # (B, OH, OW, kh*kw*C)
    return patches.reshape(B * OH * OW, kh * kw * C), OH, OW
    # TODO(synk): fuse patch extraction into the Pallas kernel itself to avoid
    # materializing the im2col slab in HBM for large batches.


def conv2d_relu_nhwc(x, w_packed, b, k, stride):
    # w_packed: (k*k*Cin, Cout) bf16, VALID padding; x NHWC bf16 -> NHWC bf16.
    B = x.shape[0]
    Cout = w_packed.shape[1]
    patches, OH, OW = _im2col_nhwc(x, k, k, stride)
    y = pallas_matmul_bias(patches, w_packed, b,
                           apply_relu=True, out_dtype=jnp.bfloat16)
    return y.reshape(B, OH, OW, Cout)


# ------------------------------ parameter init ------------------------------
def _xavier_normal(key, shape):
    fan_in = shape[1] * shape[2] * shape[3]
    fan_out = shape[0] * shape[2] * shape[3]
    std = math.sqrt(2.0 / (fan_in + fan_out))
    return std * jax.random.normal(key, shape, jnp.float32)


def _kaiming_normal(key, shape):
    std = math.sqrt(2.0 / shape[1])   # torch default: fan_in, gain sqrt(2)
    return std * jax.random.normal(key, shape, jnp.float32)


def init_params(key):
    assert input_states == 0 and input_actions == 1
    keys = jax.random.split(key, len(CONV_CFG) + 4)

    convs = []
    conv5 = None
    for i, (cin, cout, k, _s) in enumerate(CONV_CFG):
        w = _xavier_normal(keys[i], (cout, cin, k, k))      # torch (O, I, kh, kw)
        if i == 0:
            w = w / 255.0                                   # fold input scaling
        w_packed = w.transpose(2, 3, 1, 0).reshape(k * k * cin, cout)
        pair = (w_packed.astype(jnp.bfloat16), jnp.zeros((1, cout), jnp.float32))
        if i == len(CONV_CFG) - 1:
            conv5 = pair                                    # fused into FC tail
        else:
            convs.append(pair)

    fc0_w = _kaiming_normal(keys[-4], (512, FC0_IN))        # (out, in)
    fc1_w = _kaiming_normal(keys[-3], (FC_FEAT, 512))
    fcq_w = _kaiming_normal(keys[-2], (N_ACTIONS, FC_FEAT))
    fcq1_w = _kaiming_normal(keys[-1], (1, N_ACTIONS))
    fcq_b = jnp.zeros((N_ACTIONS,), jnp.float32)
    fcq1_b = jnp.zeros((1,), jnp.float32)

    w0 = fc0_w.T                                            # (532, 512)
    w0h = w0[:512]                                          # conv-feature part
    # Fold tile(action, N_TILE): tiled(a) @ w0[512:] == a @ sum_over_tiles(...)
    w0a = w0[512:].reshape(N_TILE, input_actions, 512).sum(axis=0)   # (1, 512)
    # Fold fc_q1 into fc_q: q = (x @ Wq^T + bq) @ Wq1^T + bq1
    wq_fold = fcq_w.T @ fcq1_w.T                            # (592, 1)
    bq_fold = fcq_b @ fcq1_w.T + fcq1_b                     # (1,)

    return {
        "convs": convs,                                     # conv1..conv4
        "conv5_w": conv5[0],                                # (1152, 512) bf16
        "conv5_b": conv5[1],                                # (1, 512) f32
        "fc0_wh": w0h.astype(jnp.bfloat16),                 # (512, 512)
        "fc0_wa": w0a.astype(jnp.float32),                  # (1, 512)
        "fc0_b": jnp.zeros((1, 512), jnp.float32),
        "fc1_w": fc1_w.T.astype(jnp.bfloat16),              # (512, 592)
        "fc1_b": jnp.zeros((1, FC_FEAT), jnp.float32),
        "fcq_w": wq_fold.T.astype(jnp.float32),             # (1, 592)
        "fcq_b": bq_fold.reshape(1, 1).astype(jnp.float32),
    }


# --------------------------------- forward ----------------------------------
def convnet_forward(params, x, action):
    mb = x.shape[0]
    # NCHW (PyTorch) -> NHWC once; /255.0 is folded into conv1's weights.
    h = jnp.transpose(x, (0, 2, 3, 1)).astype(jnp.bfloat16)
    for (w, b), (_cin, _cout, k, s) in zip(params["convs"], CONV_CFG[:-1]):
        h = conv2d_relu_nhwc(h, w, b, k, s)
    # conv5's kernel covers its entire 3x3 input -> its im2col is a free
    # row-major flatten; conv5 itself runs inside the fused FC-tail kernel.
    x5 = h.reshape(mb, -1)
    assert x5.shape[1] == CONV5_KDIM, x5.shape
    a = action.reshape(mb, -1).astype(jnp.float32)
    return pallas_conv5_fc_tail(x5, a, params)               # (B, 1)


if __name__ == "__main__":
    key = jax.random.PRNGKey(0)
    k_param, k_x, k_a = jax.random.split(key, 3)
    params = init_params(k_param)

    # 42x42 is the smallest spatial size consistent with fc_0 (the conv stack
    # must flatten to exactly 512 features -> final conv output is 512 x 1 x 1).
    B = 2
    x = jax.random.uniform(k_x, (B, STATE_LEN, 42, 42), jnp.float32,
                           minval=0.0, maxval=255.0)
    action = jax.random.normal(k_a, (B, input_actions), jnp.float32)

    out = jax.jit(convnet_forward)(params, x, action)
    jax.block_until_ready(out)
    assert out.shape == (B, 1)
    print("KERNEL_OK")
</pallas_src>

<mosaic_0001>
module attributes {stable_mosaic.version = 11 : i64} {
  func.func @_matmul_bias_act_kernel(%arg0: i32, %arg1: memref<648x256xbf16, #tpu.memory_space<vmem>>, %arg2: memref<256x8xbf16, #tpu.memory_space<vmem>>, %arg3: memref<1x8xf32, #tpu.memory_space<vmem>>, %arg4: memref<648x8xbf16, #tpu.memory_space<vmem>>) attributes {dimension_semantics = [#tpu.dimension_semantics<parallel>], iteration_bounds = array<i64: 1>, scalar_prefetch = 0 : i64, scratch_operands = 0 : i64, tpu.core_type = #tpu.core_type<tc>, window_params = [{transform_indices = @transform_0, window_bounds = array<i64: 648, 256>}, {pipeline_mode = #tpu.pipeline_mode<synchronous>, transform_indices = @transform_1, window_bounds = array<i64: 256, 8>}, {pipeline_mode = #tpu.pipeline_mode<synchronous>, transform_indices = @transform_2, window_bounds = array<i64: 1, 8>}, {transform_indices = @transform_3, window_bounds = array<i64: 648, 8>}]} {
    %c0 = arith.constant 0 : index
    %c0_0 = arith.constant 0 : index
    %0 = vector.load %arg1[%c0, %c0_0] : memref<648x256xbf16, #tpu.memory_space<vmem>>, vector<648x256xbf16>
    %c0_1 = arith.constant 0 : index
    %c0_2 = arith.constant 0 : index
    %1 = vector.load %arg2[%c0_1, %c0_2] : memref<256x8xbf16, #tpu.memory_space<vmem>>, vector<256x8xbf16>
    %cst = arith.constant dense<0.000000e+00> : vector<648x8xf32>
    %2 = tpu.matmul %0, %1, %cst {dimension_numbers = #tpu.dot_dimension_numbers<[1], [0], [0], [1], [0, 0, 1, 1], [], []>} : vector<648x256xbf16>, vector<256x8xbf16>, vector<648x8xf32> -> vector<648x8xf32>
    %c0_3 = arith.constant 0 : index
    %c0_4 = arith.constant 0 : index
    %3 = vector.load %arg3[%c0_3, %c0_4] : memref<1x8xf32, #tpu.memory_space<vmem>>, vector<1x8xf32>
    %4 = vector.broadcast %3 : vector<1x8xf32> to vector<648x8xf32>
    %5 = arith.addf %2, %4 : vector<648x8xf32>
    %cst_5 = arith.constant 0.000000e+00 : f32
    %6 = vector.broadcast %cst_5 : f32 to vector<648x8xf32>
    %7 = arith.maximumf %5, %6 : vector<648x8xf32>
    %8 = arith.truncf %7 : vector<648x8xf32> to vector<648x8xbf16>
    %c0_6 = arith.constant 0 : index
    %c0_7 = arith.constant 0 : index
    %9 = vector.load %arg4[%c0_6, %c0_7] : memref<648x8xbf16, #tpu.memory_space<vmem>>, vector<648x8xbf16>
    tpu.vector_store %arg4[%c0_6, %c0_7], %8 {strides = array<i32>} : memref<648x8xbf16, #tpu.memory_space<vmem>>, vector<648x8xbf16>,
    return
  }
  func.func @transform_0(%arg0: i32) -> (i32, i32) {
    %c0_i32 = arith.constant 0 : i32
    %c0_i32_0 = arith.constant 0 : i32
    return %arg0, %c0_i32 : i32, i32
  }
  func.func @transform_1(%arg0: i32) -> (i32, i32) {
    %c0_i32 = arith.constant 0 : i32
    %c0_i32_0 = arith.constant 0 : i32
    %c0_i32_1 = arith.constant 0 : i32
    return %c0_i32, %c0_i32_0 : i32, i32
  }
  func.func @transform_2(%arg0: i32) -> (i32, i32) {
    %c0_i32 = arith.constant 0 : i32
    %c0_i32_0 = arith.constant 0 : i32
    %c0_i32_1 = arith.constant 0 : i32
    return %c0_i32, %c0_i32_0 : i32, i32
  }
  func.func @transform_3(%arg0: i32) -> (i32, i32) {
    %c0_i32 = arith.constant 0 : i32
    %c0_i32_0 = arith.constant 0 : i32
    return %arg0, %c0_i32 : i32, i32
  }
}

module attributes {stable_mosaic.version = 11 : i64} {
  func.func @_matmul_bias_act_kernel(%arg0: i32, %arg1: memref<128x128xbf16, #tpu.memory_space<vmem>>, %arg2: memref<128x32xbf16, #tpu.memory_space<vmem>>, %arg3: memref<1x32xf32, #tpu.memory_space<vmem>>, %arg4: memref<128x32xbf16, #tpu.memory_space<vmem>>) attributes {dimension_semantics = [#tpu.dimension_semantics<parallel>], iteration_bounds = array<i64: 1>, scalar_prefetch = 0 : i64, scratch_operands = 0 : i64, tpu.core_type = #tpu.core_type<tc>, window_params = [{transform_indices = @transform_0, window_bounds = array<i64: 128, 128>}, {pipeline_mode = #tpu.pipeline_mode<synchronous>, transform_indices = @transform_1, window_bounds = array<i64: 128, 32>}, {pipeline_mode = #tpu.pipeline_mode<synchronous>, transform_indices = @transform_2, window_bounds = array<i64: 1, 32>}, {transform_indices = @transform_3, window_bounds = array<i64: 128, 32>}]} {
    %c0 = arith.constant 0 : index
    %c0_0 = arith.constant 0 : index
    %0 = vector.load %arg1[%c0, %c0_0] : memref<128x128xbf16, #tpu.memory_space<vmem>>, vector<128x128xbf16>
    %c0_1 = arith.constant 0 : index
    %c0_2 = arith.constant 0 : index
    %1 = vector.load %arg2[%c0_1, %c0_2] : memref<128x32xbf16, #tpu.memory_space<vmem>>, vector<128x32xbf16>
    %cst = arith.constant dense<0.000000e+00> : vector<128x32xf32>
    %2 = tpu.matmul %0, %1, %cst {dimension_numbers = #tpu.dot_dimension_numbers<[1], [0], [0], [1], [0, 0, 1, 1], [], []>} : vector<128x128xbf16>, vector<128x32xbf16>, vector<128x32xf32> -> vector<128x32xf32>
    %c0_3 = arith.constant 0 : index
    %c0_4 = arith.constant 0 : index
    %3 = vector.load %arg3[%c0_3, %c0_4] : memref<1x32xf32, #tpu.memory_space<vmem>>, vector<1x32xf32>
    %4 = vector.broadcast %3 : vector<1x32xf32> to vector<128x32xf32>
    %5 = arith.addf %2, %4 : vector<128x32xf32>
    %cst_5 = arith.constant 0.000000e+00 : f32
    %6 = vector.broadcast %cst_5 : f32 to vector<128x32xf32>
    %7 = arith.maximumf %5, %6 : vector<128x32xf32>
    %8 = arith.truncf %7 : vector<128x32xf32> to vector<128x32xbf16>
    %c0_6 = arith.constant 0 : index
    %c0_7 = arith.constant 0 : index
    %9 = vector.load %arg4[%c0_6, %c0_7] : memref<128x32xbf16, #tpu.memory_space<vmem>>, vector<128x32xbf16>
    tpu.vector_store %arg4[%c0_6, %c0_7], %8 {strides = array<i32>} : memref<128x32xbf16, #tpu.memory_space<vmem>>, vector<128x32xbf16>,
    return
  }
  func.func @transform_0(%arg0: i32) -> (i32, i32) {
    %c0_i32 = arith.constant 0 : i32
    %c0_i32_0 = arith.constant 0 : i32
    return %arg0, %c0_i32 : i32, i32
  }
  func.func @transform_1(%arg0: i32) -> (i32, i32) {
    %c0_i32 = arith.constant 0 : i32
    %c0_i32_0 = arith.constant 0 : i32
    %c0_i32_1 = arith.constant 0 : i32
    return %c0_i32, %c0_i32_0 : i32, i32
  }
  func.func @transform_2(%arg0: i32) -> (i32, i32) {
    %c0_i32 = arith.constant 0 : i32
    %c0_i32_0 = arith.constant 0 : i32
    %c0_i32_1 = arith.constant 0 : i32
    return %c0_i32, %c0_i32_0 : i32, i32
  }
  func.func @transform_3(%arg0: i32) -> (i32, i32) {
    %c0_i32 = arith.constant 0 : i32
    %c0_i32_0 = arith.constant 0 : i32
    return %arg0, %c0_i32 : i32, i32
  }
}

module attributes {stable_mosaic.version = 11 : i64} {
  func.func @_matmul_bias_act_kernel(%arg0: i32, %arg1: memref<50x512xbf16, #tpu.memory_space<vmem>>, %arg2: memref<512x64xbf16, #tpu.memory_space<vmem>>, %arg3: memref<1x64xf32, #tpu.memory_space<vmem>>, %arg4: memref<50x64xbf16, #tpu.memory_space<vmem>>) attributes {dimension_semantics = [#tpu.dimension_semantics<parallel>], iteration_bounds = array<i64: 1>, scalar_prefetch = 0 : i64, scratch_operands = 0 : i64, tpu.core_type = #tpu.core_type<tc>, window_params = [{transform_indices = @transform_0, window_bounds = array<i64: 50, 512>}, {pipeline_mode = #tpu.pipeline_mode<synchronous>, transform_indices = @transform_1, window_bounds = array<i64: 512, 64>}, {pipeline_mode = #tpu.pipeline_mode<synchronous>, transform_indices = @transform_2, window_bounds = array<i64: 1, 64>}, {transform_indices = @transform_3, window_bounds = array<i64: 50, 64>}]} {
    %c0 = arith.constant 0 : index
    %c0_0 = arith.constant 0 : index
    %0 = vector.load %arg1[%c0, %c0_0] : memref<50x512xbf16, #tpu.memory_space<vmem>>, vector<50x512xbf16>
    %c0_1 = arith.constant 0 : index
    %c0_2 = arith.constant 0 : index
    %1 = vector.load %arg2[%c0_1, %c0_2] : memref<512x64xbf16, #tpu.memory_space<vmem>>, vector<512x64xbf16>
    %cst = arith.constant dense<0.000000e+00> : vector<50x64xf32>
    %2 = tpu.matmul %0, %1, %cst {dimension_numbers = #tpu.dot_dimension_numbers<[1], [0], [0], [1], [0, 0, 1, 1], [], []>} : vector<50x512xbf16>, vector<512x64xbf16>, vector<50x64xf32> -> vector<50x64xf32>
    %c0_3 = arith.constant 0 : index
    %c0_4 = arith.constant 0 : index
    %3 = vector.load %arg3[%c0_3, %c0_4] : memref<1x64xf32, #tpu.memory_space<vmem>>, vector<1x64xf32>
    %4 = vector.broadcast %3 : vector<1x64xf32> to vector<50x64xf32>
    %5 = arith.addf %2, %4 : vector<50x64xf32>
    %cst_5 = arith.constant 0.000000e+00 : f32
    %6 = vector.broadcast %cst_5 : f32 to vector<50x64xf32>
    %7 = arith.maximumf %5, %6 : vector<50x64xf32>
    %8 = arith.truncf %7 : vector<50x64xf32> to vector<50x64xbf16>
    %c0_6 = arith.constant 0 : index
    %c0_7 = arith.constant 0 : index
    %9 = vector.load %arg4[%c0_6, %c0_7] : memref<50x64xbf16, #tpu.memory_space<vmem>>, vector<50x64xbf16>
    tpu.vector_store %arg4[%c0_6, %c0_7], %8 {strides = array<i32>} : memref<50x64xbf16, #tpu.memory_space<vmem>>, vector<50x64xbf16>,
    return
  }
  func.func @transform_0(%arg0: i32) -> (i32, i32) {
    %c0_i32 = arith.constant 0 : i32
    %c0_i32_0 = arith.constant 0 : i32
    return %arg0, %c0_i32 : i32, i32
  }
  func.func @transform_1(%arg0: i32) -> (i32, i32) {
    %c0_i32 = arith.constant 0 : i32
    %c0_i32_0 = arith.constant 0 : i32
    %c0_i32_1 = arith.constant 0 : i32
    return %c0_i32, %c0_i32_0 : i32, i32
  }
  func.func @transform_2(%arg0: i32) -> (i32, i32) {
    %c0_i32 = arith.constant 0 : i32
    %c0_i32_0 = arith.constant 0 : i32
    %c0_i32_1 = arith.constant 0 : i32
    return %c0_i32, %c0_i32_0 : i32, i32
  }
  func.func @transform_3(%arg0: i32) -> (i32, i32) {
    %c0_i32 = arith.constant 0 : i32
    %c0_i32_0 = arith.constant 0 : i32
    return %arg0, %c0_i32 : i32, i32
  }
}

module attributes {stable_mosaic.version = 11 : i64} {
  func.func @_matmul_bias_act_kernel(%arg0: i32, %arg1: memref<18x576xbf16, #tpu.memory_space<vmem>>, %arg2: memref<576x128xbf16, #tpu.memory_space<vmem>>, %arg3: memref<1x128xf32, #tpu.memory_space<vmem>>, %arg4: memref<18x128xbf16, #tpu.memory_space<vmem>>) attributes {dimension_semantics = [#tpu.dimension_semantics<parallel>], iteration_bounds = array<i64: 1>, scalar_prefetch = 0 : i64, scratch_operands = 0 : i64, tpu.core_type = #tpu.core_type<tc>, window_params = [{transform_indices = @transform_0, window_bounds = array<i64: 18, 576>}, {pipeline_mode = #tpu.pipeline_mode<synchronous>, transform_indices = @transform_1, window_bounds = array<i64: 576, 128>}, {pipeline_mode = #tpu.pipeline_mode<synchronous>, transform_indices = @transform_2, window_bounds = array<i64: 1, 128>}, {transform_indices = @transform_3, window_bounds = array<i64: 18, 128>}]} {
    %c0 = arith.constant 0 : index
    %c0_0 = arith.constant 0 : index
    %0 = vector.load %arg1[%c0, %c0_0] : memref<18x576xbf16, #tpu.memory_space<vmem>>, vector<18x576xbf16>
    %c0_1 = arith.constant 0 : index
    %c0_2 = arith.constant 0 : index
    %1 = vector.load %arg2[%c0_1, %c0_2] : memref<576x128xbf16, #tpu.memory_space<vmem>>, vector<576x128xbf16>
    %cst = arith.constant dense<0.000000e+00> : vector<18x128xf32>
    %2 = tpu.matmul %0, %1, %cst {dimension_numbers = #tpu.dot_dimension_numbers<[1], [0], [0], [1], [0, 0, 1, 1], [], []>} : vector<18x576xbf16>, vector<576x128xbf16>, vector<18x128xf32> -> vector<18x128xf32>
    %c0_3 = arith.constant 0 : index
    %c0_4 = arith.constant 0 : index
    %3 = vector.load %arg3[%c0_3, %c0_4] : memref<1x128xf32, #tpu.memory_space<vmem>>, vector<1x128xf32>
    %4 = vector.broadcast %3 : vector<1x128xf32> to vector<18x128xf32>
    %5 = arith.addf %2, %4 : vector<18x128xf32>
    %cst_5 = arith.constant 0.000000e+00 : f32
    %6 = vector.broadcast %cst_5 : f32 to vector<18x128xf32>
    %7 = arith.maximumf %5, %6 : vector<18x128xf32>
    %8 = arith.truncf %7 : vector<18x128xf32> to vector<18x128xbf16>
    %c0_6 = arith.constant 0 : index
    %c0_7 = arith.constant 0 : index
    %9 = vector.load %arg4[%c0_6, %c0_7] : memref<18x128xbf16, #tpu.memory_space<vmem>>, vector<18x128xbf16>
    tpu.vector_store %arg4[%c0_6, %c0_7], %8 {strides = array<i32>} : memref<18x128xbf16, #tpu.memory_space<vmem>>, vector<18x128xbf16>,
    return
  }
  func.func @transform_0(%arg0: i32) -> (i32, i32) {
    %c0_i32 = arith.constant 0 : i32
    %c0_i32_0 = arith.constant 0 : i32
    return %arg0, %c0_i32 : i32, i32
  }
  func.func @transform_1(%arg0: i32) -> (i32, i32) {
    %c0_i32 = arith.constant 0 : i32
    %c0_i32_0 = arith.constant 0 : i32
    %c0_i32_1 = arith.constant 0 : i32
    return %c0_i32, %c0_i32_0 : i32, i32
  }
  func.func @transform_2(%arg0: i32) -> (i32, i32) {
    %c0_i32 = arith.constant 0 : i32
    %c0_i32_0 = arith.constant 0 : i32
    %c0_i32_1 = arith.constant 0 : i32
    return %c0_i32, %c0_i32_0 : i32, i32
  }
  func.func @transform_3(%arg0: i32) -> (i32, i32) {
    %c0_i32 = arith.constant 0 : i32
    %c0_i32_0 = arith.constant 0 : i32
    return %arg0, %c0_i32 : i32, i32
  }
}

module attributes {stable_mosaic.version = 11 : i64} {
  func.func @_conv5_fc_tail_kernel(%arg0: i32, %arg1: memref<2x1152xbf16, #tpu.memory_space<vmem>>, %arg2: memref<2x1xf32, #tpu.memory_space<vmem>>, %arg3: memref<1152x512xbf16, #tpu.memory_space<vmem>>, %arg4: memref<1x512xf32, #tpu.memory_space<vmem>>, %arg5: memref<512x512xbf16, #tpu.memory_space<vmem>>, %arg6: memref<1x512xf32, #tpu.memory_space<vmem>>, %arg7: memref<1x512xf32, #tpu.memory_space<vmem>>, %arg8: memref<512x592xbf16, #tpu.memory_space<vmem>>, %arg9: memref<1x592xf32, #tpu.memory_space<vmem>>, %arg10: memref<1x592xf32, #tpu.memory_space<vmem>>, %arg11: memref<1x1xf32, #tpu.memory_space<vmem>>, %arg12: memref<2x1xf32, #tpu.memory_space<vmem>>) attributes {dimension_semantics = [#tpu.dimension_semantics<arbitrary>], iteration_bounds = array<i64: 1>, scalar_prefetch = 0 : i64, scratch_operands = 0 : i64, tpu.core_type = #tpu.core_type<tc>, window_params = [{pipeline_mode = #tpu.pipeline_mode<synchronous>, transform_indices = @transform_0, window_bounds = array<i64: 2, 1152>}, {pipeline_mode = #tpu.pipeline_mode<synchronous>, transform_indices = @transform_1, window_bounds = array<i64: 2, 1>}, {pipeline_mode = #tpu.pipeline_mode<synchronous>, transform_indices = @transform_2, window_bounds = array<i64: 1152, 512>}, {pipeline_mode = #tpu.pipeline_mode<synchronous>, transform_indices = @transform_3, window_bounds = array<i64: 1, 512>}, {pipeline_mode = #tpu.pipeline_mode<synchronous>, transform_indices = @transform_4, window_bounds = array<i64: 512, 512>}, {pipeline_mode = #tpu.pipeline_mode<synchronous>, transform_indices = @transform_5, window_bounds = array<i64: 1, 512>}, {pipeline_mode = #tpu.pipeline_mode<synchronous>, transform_indices = @transform_6, window_bounds = array<i64: 1, 512>}, {pipeline_mode = #tpu.pipeline_mode<synchronous>, transform_indices = @transform_7, window_bounds = array<i64: 512, 592>}, {pipeline_mode = #tpu.pipeline_mode<synchronous>, transform_indices = @transform_8, window_bounds = array<i64: 1, 592>}, {pipeline_mode = #tpu.pipeline_mode<synchronous>, transform_indices = @transform_9, window_bounds = array<i64: 1, 592>}, {pipeline_mode = #tpu.pipeline_mode<synchronous>, transform_indices = @transform_10, window_bounds = array<i64: 1, 1>}, {pipeline_mode = #tpu.pipeline_mode<synchronous>, transform_indices = @transform_11, window_bounds = array<i64: 2, 1>}]} {
    %c0 = arith.constant 0 : index
    %c0_0 = arith.constant 0 : index
    %0 = vector.load %arg1[%c0, %c0_0] : memref<2x1152xbf16, #tpu.memory_space<vmem>>, vector<2x1152xbf16>
    %c0_1 = arith.constant 0 : index
    %c0_2 = arith.constant 0 : index
    %1 = vector.load %arg3[%c0_1, %c0_2] : memref<1152x512xbf16, #tpu.memory_space<vmem>>, vector<1152x512xbf16>
    %cst = arith.constant dense<0.000000e+00> : vector<2x512xf32>
    %2 = tpu.matmul %0, %1, %cst {dimension_numbers = #tpu.dot_dimension_numbers<[1], [0], [0], [1], [0, 0, 1, 1], [], []>} : vector<2x1152xbf16>, vector<1152x512xbf16>, vector<2x512xf32> -> vector<2x512xf32>
    %c0_3 = arith.constant 0 : index
    %c0_4 = arith.constant 0 : index
    %3 = vector.load %arg4[%c0_3, %c0_4] : memref<1x512xf32, #tpu.memory_space<vmem>>, vector<1x512xf32>
    %4 = vector.broadcast %3 : vector<1x512xf32> to vector<2x512xf32>
    %5 = arith.addf %2, %4 : vector<2x512xf32>
    %cst_5 = arith.constant 0.000000e+00 : f32
    %6 = vector.broadcast %cst_5 : f32 to vector<2x512xf32>
    %7 = arith.maximumf %5, %6 : vector<2x512xf32>
    %8 = arith.truncf %7 : vector<2x512xf32> to vector<2x512xbf16>
    %c0_6 = arith.constant 0 : index
    %c0_7 = arith.constant 0 : index
    %9 = vector.load %arg5[%c0_6, %c0_7] : memref<512x512xbf16, #tpu.memory_space<vmem>>, vector<512x512xbf16>
    %cst_8 = arith.constant dense<0.000000e+00> : vector<2x512xf32>
    %10 = tpu.matmul %8, %9, %cst_8 {dimension_numbers = #tpu.dot_dimension_numbers<[1], [0], [0], [1], [0, 0, 1, 1], [], []>} : vector<2x512xbf16>, vector<512x512xbf16>, vector<2x512xf32> -> vector<2x512xf32>
    %c0_9 = arith.constant 0 : index
    %c0_10 = arith.constant 0 : index
    %11 = vector.load %arg2[%c0_9, %c0_10] : memref<2x1xf32, #tpu.memory_space<vmem>>, vector<2x1xf32>
    %c0_11 = arith.constant 0 : index
    %c0_12 = arith.constant 0 : index
    %12 = vector.load %arg6[%c0_11, %c0_12] : memref<1x512xf32, #tpu.memory_space<vmem>>, vector<1x512xf32>
    %13 = vector.broadcast %11 : vector<2x1xf32> to vector<2x512xf32>
    %14 = vector.broadcast %12 : vector<1x512xf32> to vector<2x512xf32>
    %15 = arith.mulf %13, %14 : vector<2x512xf32>
    %16 = arith.addf %10, %15 : vector<2x512xf32>
    %c0_13 = arith.constant 0 : index
    %c0_14 = arith.constant 0 : index
    %17 = vector.load %arg7[%c0_13, %c0_14] : memref<1x512xf32, #tpu.memory_space<vmem>>, vector<1x512xf32>
    %18 = vector.broadcast %17 : vector<1x512xf32> to vector<2x512xf32>
    %19 = arith.addf %16, %18 : vector<2x512xf32>
    %cst_15 = arith.constant 0.000000e+00 : f32
    %20 = vector.broadcast %cst_15 : f32 to vector<2x512xf32>
    %21 = arith.maximumf %19, %20 : vector<2x512xf32>
    %22 = arith.truncf %21 : vector<2x512xf32> to vector<2x512xbf16>
    %c0_16 = arith.constant 0 : index
    %c0_17 = arith.constant 0 : index
    %23 = vector.load %arg8[%c0_16, %c0_17] : memref<512x592xbf16, #tpu.memory_space<vmem>>, vector<512x592xbf16>
    %cst_18 = arith.constant dense<0.000000e+00> : vector<2x592xf32>
    %24 = tpu.matmul %22, %23, %cst_18 {dimension_numbers = #tpu.dot_dimension_numbers<[1], [0], [0], [1], [0, 0, 1, 1], [], []>} : vector<2x512xbf16>, vector<512x592xbf16>, vector<2x592xf32> -> vector<2x592xf32>
    %c0_19 = arith.constant 0 : index
    %c0_20 = arith.constant 0 : index
    %25 = vector.load %arg9[%c0_19, %c0_20] : memref<1x592xf32, #tpu.memory_space<vmem>>, vector<1x592xf32>
    %26 = vector.broadcast %25 : vector<1x592xf32> to vector<2x592xf32>
    %27 = arith.addf %24, %26 : vector<2x592xf32>
    %cst_21 = arith.constant 0.000000e+00 : f32
    %28 = vector.broadcast %cst_21 : f32 to vector<2x592xf32>
    %29 = arith.maximumf %27, %28 : vector<2x592xf32>
    %c0_22 = arith.constant 0 : index
    %c0_23 = arith.constant 0 : index
    %30 = vector.load %arg10[%c0_22, %c0_23] : memref<1x592xf32, #tpu.memory_space<vmem>>, vector<1x592xf32>
    %31 = vector.broadcast %30 : vector<1x592xf32> to vector<2x592xf32>
    %32 = arith.mulf %29, %31 : vector<2x592xf32>
    %cst_24 = arith.constant dense<0.000000e+00> : vector<2xf32>
    %33 = vector.multi_reduction <add>, %32, %cst_24 [1] : vector<2x592xf32> to vector<2xf32>
    %34 = vector.shape_cast %33 : vector<2xf32> to vector<2x1xf32>
    %c0_25 = arith.constant 0 : index
    %c0_26 = arith.constant 0 : index
    %35 = vector.load %arg11[%c0_25, %c0_26] : memref<1x1xf32, #tpu.memory_space<vmem>>, vector<1x1xf32>
    %36 = vector.broadcast %35 : vector<1x1xf32> to vector<2x1xf32>
    %37 = arith.addf %34, %36 : vector<2x1xf32>
    %c0_27 = arith.constant 0 : index
    %c0_28 = arith.constant 0 : index
    %38 = vector.load %arg12[%c0_27, %c0_28] : memref<2x1xf32, #tpu.memory_space<vmem>>, vector<2x1xf32>
    tpu.vector_store %arg12[%c0_27, %c0_28], %37 {strides = array<i32>} : memref<2x1xf32, #tpu.memory_space<vmem>>, vector<2x1xf32>,
    return
  }
  func.func @transform_0(%arg0: i32) -> (i32, i32) {
    %c0_i32 = arith.constant 0 : i32
    %c0_i32_0 = arith.constant 0 : i32
    %c0_i32_1 = arith.constant 0 : i32
    return %c0_i32, %c0_i32_0 : i32, i32
  }
  func.func @transform_1(%arg0: i32) -> (i32, i32) {
    %c0_i32 = arith.constant 0 : i32
    %c0_i32_0 = arith.constant 0 : i32
    %c0_i32_1 = arith.constant 0 : i32
    return %c0_i32, %c0_i32_0 : i32, i32
  }
  func.func @transform_2(%arg0: i32) -> (i32, i32) {
    %c0_i32 = arith.constant 0 : i32
    %c0_i32_0 = arith.constant 0 : i32
    %c0_i32_1 = arith.constant 0 : i32
    return %c0_i32, %c0_i32_0 : i32, i32
  }
  func.func @transform_3(%arg0: i32) -> (i32, i32) {
    %c0_i32 = arith.constant 0 : i32
    %c0_i32_0 = arith.constant 0 : i32
    %c0_i32_1 = arith.constant 0 : i32
    return %c0_i32, %c0_i32_0 : i32, i32
  }
  func.func @transform_4(%arg0: i32) -> (i32, i32) {
    %c0_i32 = arith.constant 0 : i32
    %c0_i32_0 = arith.constant 0 : i32
    %c0_i32_1 = arith.constant 0 : i32
    return %c0_i32, %c0_i32_0 : i32, i32
  }
  func.func @transform_5(%arg0: i32) -> (i32, i32) {
    %c0_i32 = arith.constant 0 : i32
    %c0_i32_0 = arith.constant 0 : i32
    %c0_i32_1 = arith.constant 0 : i32
    return %c0_i32, %c0_i32_0 : i32, i32
  }
  func.func @transform_6(%arg0: i32) -> (i32, i32) {
    %c0_i32 = arith.constant 0 : i32
    %c0_i32_0 = arith.constant 0 : i32
    %c0_i32_1 = arith.constant 0 : i32
    return %c0_i32, %c0_i32_0 : i32, i32
  }
  func.func @transform_7(%arg0: i32) -> (i32, i32) {
    %c0_i32 = arith.constant 0 : i32
    %c0_i32_0 = arith.constant 0 : i32
    %c0_i32_1 = arith.constant 0 : i32
    return %c0_i32, %c0_i32_0 : i32, i32
  }
  func.func @transform_8(%arg0: i32) -> (i32, i32) {
    %c0_i32 = arith.constant 0 : i32
    %c0_i32_0 = arith.constant 0 : i32
    %c0_i32_1 = arith.constant 0 : i32
    return %c0_i32, %c0_i32_0 : i32, i32
  }
  func.func @transform_9(%arg0: i32) -> (i32, i32) {
    %c0_i32 = arith.constant 0 : i32
    %c0_i32_0 = arith.constant 0 : i32
    %c0_i32_1 = arith.constant 0 : i32
    return %c0_i32, %c0_i32_0 : i32, i32
  }
  func.func @transform_10(%arg0: i32) -> (i32, i32) {
    %c0_i32 = arith.constant 0 : i32
    %c0_i32_0 = arith.constant 0 : i32
    %c0_i32_1 = arith.constant 0 : i32
    return %c0_i32, %c0_i32_0 : i32, i32
  }
  func.func @transform_11(%arg0: i32) -> (i32, i32) {
    %c0_i32 = arith.constant 0 : i32
    %c0_i32_0 = arith.constant 0 : i32
    %c0_i32_1 = arith.constant 0 : i32
    return %c0_i32, %c0_i32_0 : i32, i32
  }
}

</mosaic_0001>

<llo_original>
// kernel: convnet_forward.5
$region0: #{convnet_forward.5}
  #allocation0 [shape = 'u32[]', space=smem, size = 0x4, offset = 0x4, fixed_abs, tag = 'smem constant byte address 0x4 - core index']
  #allocation1 [shape = 'u32[144,128]{1,0:T(1,128)}', space=vmem, size = 0x12000, scoped, tag = 'internal scratch']
  %s0 = inlined_call_operand.vmem [shape: bf16[648,256], index: 0, kind: input, shape index: {}]
  %s1 = inlined_call_operand.vmem [shape: bf16[256,8], index: 1, kind: input, shape index: {}]
  %s2 = inlined_call_operand.vmem [shape: f32[1,8], index: 2, kind: input, shape index: {}]
  %s3 = inlined_call_operand.vmem [shape: bf16[648,8], index: 3, kind: output, shape index: {}]
  %s4 = sld [smem:[#allocation0]]
  $region22: #{convnet_forward.5} parent=0
    _
  %s6 = ssub.s32 1, %s4
  %s7 = scalar_select 0, %s6, %s4
  // Predicated region
  $region2: #{convnet_forward.5} parent=0 // pred_check
    _
  $region3: #{convnet_forward.5} parent=0 // pred_check_branch
    %9 = sbr.rel (0) target = $region5
  $region4: #{convnet_forward.5} parent=0 // pred_region
    _
  $region5: #{convnet_forward.5} parent=0 // pred_fallthru
    _
  // Predicated region
  $region6: #{convnet_forward.5} parent=0 // pred_check
    _
  $region7: #{convnet_forward.5} parent=0 // pred_check_branch
    %11 = sbr.rel (0) target = $region9
  $region8: #{convnet_forward.5} parent=0 // pred_region
    _
  $region9: #{convnet_forward.5} parent=0 // pred_fallthru
    _
  // Predicated region
  $region10: #{convnet_forward.5} parent=0 // pred_check
    _
  $region11: #{convnet_forward.5} parent=0 // pred_check_branch
    %13 = sbr.rel (0) target = $region13
  $region12: #{convnet_forward.5} parent=0 // pred_region
    _
  $region13: #{convnet_forward.5} parent=0 // pred_fallthru
    _
  %v15 = vld [vmem:[%s0] sm:$0xff]
  %v16 = vld [vmem:[%s0 + $0x8] sm:$0xff]
  %v17 = vld [vmem:[%s0 + $0x10] sm:$0xff]
  %v18 = vld [vmem:[%s0 + $0x18] sm:$0xff]
  %v19 = vld [vmem:[%s0 + $0x20] sm:$0xff]
  %v20 = vld [vmem:[%s0 + $0x28] sm:$0xff]
  %v21 = vld [vmem:[%s0 + $0x30] sm:$0xff]
  %v22 = vld [vmem:[%s0 + $0x38] sm:$0xff]
  %v23 = vld [vmem:[%s0 + $0x40] sm:$0xff]
  %v24 = vld [vmem:[%s0 + $0x48] sm:$0xff]
  %v25 = vld [vmem:[%s0 + $0x50] sm:$0xff]
  %v26 = vld [vmem:[%s0 + $0x58] sm:$0xff]
  %v27 = vld [vmem:[%s0 + $0x60] sm:$0xff]
  %v28 = vld [vmem:[%s0 + $0x68] sm:$0xff]
  %v29 = vld [vmem:[%s0 + $0x70] sm:$0xff]
  %v30 = vld [vmem:[%s0 + $0x78] sm:$0xff]
  %v31 = vld [vmem:[%s0 + $0x80] sm:$0xff]
  %v32 = vld [vmem:[%s0 + $0x88] sm:$0xff]
  %v33 = vld [vmem:[%s0 + $0x90] sm:$0xff]
  %v34 = vld [vmem:[%s0 + $0x98] sm:$0xff]
  %v35 = vld [vmem:[%s0 + $0xa0] sm:$0xff]
  %v36 = vld [vmem:[%s0 + $0xa8] sm:$0xff]
  %v37 = vld [vmem:[%s0 + $0xb0] sm:$0xff]
  %v38 = vld [vmem:[%s0 + $0xb8] sm:$0xff]
  %v39 = vld [vmem:[%s0 + $0xc0] sm:$0xff]
  %v40 = vld [vmem:[%s0 + $0xc8] sm:$0xff]
  %v41 = vld [vmem:[%s0 + $0xd0] sm:$0xff]
  %v42 = vld [vmem:[%s0 + $0xd8] sm:$0xff]
  %v43 = vld [vmem:[%s0 + $0xe0] sm:$0xff]
  %v44 = vld [vmem:[%s0 + $0xe8] sm:$0xff]
  %v45 = vld [vmem:[%s0 + $0xf0] sm:$0xff]
  %v46 = vld [vmem:[%s0 + $0xf8] sm:$0xff]
  %v47 = vld [vmem:[%s0 + $0x100] sm:$0xff]
  %v48 = vld [vmem:[%s0 + $0x108] sm:$0xff]
  %v49 = vld [vmem:[%s0 + $0x110] sm:$0xff]
  %v50 = vld [vmem:[%s0 + $0x118] sm:$0xff]
  %v51 = vld [vmem:[%s0 + $0x120] sm:$0xff]
  %v52 = vld [vmem:[%s0 + $0x128] sm:$0xff]
  %v53 = vld [vmem:[%s0 + $0x130] sm:$0xff]
  %v54 = vld [vmem:[%s0 + $0x138] sm:$0xff]
  %v55 = vld [vmem:[%s0 + $0x140] sm:$0xff]
  %v56 = vld [vmem:[%s0 + $0x148] sm:$0xff]
  %v57 = vld [vmem:[%s0 + $0x150] sm:$0xff]
  %v58 = vld [vmem:[%s0 + $0x158] sm:$0xff]
  %v59 = vld [vmem:[%s0 + $0x160] sm:$0xff]
  %v60 = vld [vmem:[%s0 + $0x168] sm:$0xff]
  %v61 = vld [vmem:[%s0 + $0x170] sm:$0xff]
  %v62 = vld [vmem:[%s0 + $0x178] sm:$0xff]
  %v63 = vld [vmem:[%s0 + $0x180] sm:$0xff]
  %v64 = vld [vmem:[%s0 + $0x188] sm:$0xff]
  %v65 = vld [vmem:[%s0 + $0x190] sm:$0xff]
  %v66 = vld [vmem:[%s0 + $0x198] sm:$0xff]
  %v67 = vld [vmem:[%s0 + $0x1a0] sm:$0xff]
  %v68 = vld [vmem:[%s0 + $0x1a8] sm:$0xff]
  %v69 = vld [vmem:[%s0 + $0x1b0] sm:$0xff]
  %v70 = vld [vmem:[%s0 + $0x1b8] sm:$0xff]
  %v71 = vld [vmem:[%s0 + $0x1c0] sm:$0xff]
  %v72 = vld [vmem:[%s0 + $0x1c8] sm:$0xff]
  %v73 = vld [vmem:[%s0 + $0x1d0] sm:$0xff]
  %v74 = vld [vmem:[%s0 + $0x1d8] sm:$0xff]
  %v75 = vld [vmem:[%s0 + $0x1e0] sm:$0xff]
  %v76 = vld [vmem:[%s0 + $0x1e8] sm:$0xff]
  %v77 = vld [vmem:[%s0 + $0x1f0] sm:$0xff]
  %v78 = vld [vmem:[%s0 + $0x1f8] sm:$0xff]
  %v79 = vld [vmem:[%s0 + $0x200] sm:$0xff]
  %v80 = vld [vmem:[%s0 + $0x208] sm:$0xff]
  %v81 = vld [vmem:[%s0 + $0x210] sm:$0xff]
  %v82 = vld [vmem:[%s0 + $0x218] sm:$0xff]
  %v83 = vld [vmem:[%s0 + $0x220] sm:$0xff]
  %v84 = vld [vmem:[%s0 + $0x228] sm:$0xff]
  %v85 = vld [vmem:[%s0 + $0x230] sm:$0xff]
  %v86 = vld [vmem:[%s0 + $0x238] sm:$0xff]
  %v87 = vld [vmem:[%s0 + $0x240] sm:$0xff]
  %v88 = vld [vmem:[%s0 + $0x248] sm:$0xff]
  %v89 = vld [vmem:[%s0 + $0x250] sm:$0xff]
  %v90 = vld [vmem:[%s0 + $0x258] sm:$0xff]
  %v91 = vld [vmem:[%s0 + $0x260] sm:$0xff]
  %v92 = vld [vmem:[%s0 + $0x268] sm:$0xff]
  %v93 = vld [vmem:[%s0 + $0x270] sm:$0xff]
  %v94 = vld [vmem:[%s0 + $0x278] sm:$0xff]
  %v95 = vld [vmem:[%s0 + $0x280] sm:$0xff]
  %v96 = vld [vmem:[%s1] sm:$0xf]
  %v97 = vld [vmem:[%s1 + $0x4] sm:$0xf]
  %v98 = vld [vmem:[%s1 + $0x8] sm:$0xf]
  %v99 = vld [vmem:[%s1 + $0xc] sm:$0xf]
  %v100 = vld [vmem:[%s1 + $0x10] sm:$0xf]
  %v101 = vld [vmem:[%s1 + $0x14] sm:$0xf]
  %v102 = vld [vmem:[%s1 + $0x18] sm:$0xf]
  %v103 = vld [vmem:[%s1 + $0x1c] sm:$0xf]
  %v104 = vld [vmem:[%s1 + $0x20] sm:$0xf]
  %v105 = vld [vmem:[%s1 + $0x24] sm:$0xf]
  %v106 = vld [vmem:[%s1 + $0x28] sm:$0xf]
  %v107 = vld [vmem:[%s1 + $0x2c] sm:$0xf]
  %v108 = vld [vmem:[%s1 + $0x30] sm:$0xf]
  %v109 = vld [vmem:[%s1 + $0x34] sm:$0xf]
  %v110 = vld [vmem:[%s1 + $0x38] sm:$0xf]
  %v111 = vld [vmem:[%s1 + $0x3c] sm:$0xf]
  %v112 = vld [vmem:[%s1 + $0x40] sm:$0xf]
  %v113 = vld [vmem:[%s1 + $0x44] sm:$0xf]
  %v114 = vld [vmem:[%s1 + $0x48] sm:$0xf]
  %v115 = vld [vmem:[%s1 + $0x4c] sm:$0xf]
  %v116 = vld [vmem:[%s1 + $0x50] sm:$0xf]
  %v117 = vld [vmem:[%s1 + $0x54] sm:$0xf]
  %v118 = vld [vmem:[%s1 + $0x58] sm:$0xf]
  %v119 = vld [vmem:[%s1 + $0x5c] sm:$0xf]
  %v120 = vld [vmem:[%s1 + $0x60] sm:$0xf]
  %v121 = vld [vmem:[%s1 + $0x64] sm:$0xf]
  %v122 = vld [vmem:[%s1 + $0x68] sm:$0xf]
  %v123 = vld [vmem:[%s1 + $0x6c] sm:$0xf]
  %v124 = vld [vmem:[%s1 + $0x70] sm:$0xf]
  %v125 = vld [vmem:[%s1 + $0x74] sm:$0xf]
  %v126 = vld [vmem:[%s1 + $0x78] sm:$0xf]
  %v127 = vld [vmem:[%s1 + $0x7c] sm:$0xf]
  %v128 = vld [vmem:[%s2] sm:$0x1]
  %v130 = vlaneseq
  %v131 = vshrl.u32 %v130, 7
  %v132 = vsub.s32 0, %v131
  %v133 = vrot.slane %v128, %v132
  %v216 = vunpack.c.l.b16 %v15
  %v217 = vunpack.c.h.b16 %v15
  %v218 = vunpack.c.l.b16 %v16
  %v219 = vunpack.c.h.b16 %v16
  %v220 = vunpack.c.l.b16 %v17
  %v221 = vunpack.c.h.b16 %v17
  %v222 = vunpack.c.l.b16 %v18
  %v223 = vunpack.c.h.b16 %v18
  %v224 = vunpack.c.l.b16 %v19
  %v225 = vunpack.c.h.b16 %v19
  %v226 = vunpack.c.l.b16 %v20
  %v227 = vunpack.c.h.b16 %v20
  %v228 = vunpack.c.l.b16 %v21
  %v229 = vunpack.c.h.b16 %v21
  %v230 = vunpack.c.l.b16 %v22
  %v231 = vunpack.c.h.b16 %v22
  %v232 = vunpack.c.l.b16 %v23
  %v233 = vunpack.c.h.b16 %v23
  %v234 = vunpack.c.l.b16 %v24
  %v235 = vunpack.c.h.b16 %v24
  %v236 = vunpack.c.l.b16 %v25
  %v237 = vunpack.c.h.b16 %v25
  %v238 = vunpack.c.l.b16 %v26
  %v239 = vunpack.c.h.b16 %v26
  %v240 = vunpack.c.l.b16 %v27
  %v241 = vunpack.c.h.b16 %v27
  %v242 = vunpack.c.l.b16 %v28
  %v243 = vunpack.c.h.b16 %v28
  %v244 = vunpack.c.l.b16 %v29
  %v245 = vunpack.c.h.b16 %v29
  %v246 = vunpack.c.l.b16 %v30
  %v247 = vunpack.c.h.b16 %v30
  %v248 = vunpack.c.l.b16 %v31
  %v249 = vunpack.c.h.b16 %v31
  %v250 = vunpack.c.l.b16 %v32
  %v251 = vunpack.c.h.b16 %v32
  %v252 = vunpack.c.l.b16 %v33
  %v253 = vunpack.c.h.b16 %v33
  %v254 = vunpack.c.l.b16 %v34
  %v255 = vunpack.c.h.b16 %v34
  %v256 = vunpack.c.l.b16 %v35
  %v257 = vunpack.c.h.b16 %v35
  %v258 = vunpack.c.l.b16 %v36
  %v259 = vunpack.c.h.b16 %v36
  %v260 = vunpack.c.l.b16 %v37
  %v261 = vunpack.c.h.b16 %v37
  %v262 = vunpack.c.l.b16 %v38
  %v263 = vunpack.c.h.b16 %v38
  %v264 = vunpack.c.l.b16 %v39
  %v265 = vunpack.c.h.b16 %v39
  %v266 = vunpack.c.l.b16 %v40
  %v267 = vunpack.c.h.b16 %v40
  %v268 = vunpack.c.l.b16 %v41
  %v269 = vunpack.c.h.b16 %v41
  %v270 = vunpack.c.l.b16 %v42
  %v271 = vunpack.c.h.b16 %v42
  %v272 = vunpack.c.l.b16 %v43
  %v273 = vunpack.c.h.b16 %v43
  %v274 = vunpack.c.l.b16 %v44
  %v275 = vunpack.c.h.b16 %v44
  %v276 = vunpack.c.l.b16 %v45
  %v277 = vunpack.c.h.b16 %v45
  %v278 = vunpack.c.l.b16 %v46
  %v279 = vunpack.c.h.b16 %v46
  %v280 = vunpack.c.l.b16 %v47
  %v281 = vunpack.c.h.b16 %v47
  %v282 = vunpack.c.l.b16 %v48
  %v283 = vunpack.c.h.b16 %v48
  %v284 = vunpack.c.l.b16 %v49
  %v285 = vunpack.c.h.b16 %v49
  %v286 = vunpack.c.l.b16 %v50
  %v287 = vunpack.c.h.b16 %v50
  %v288 = vunpack.c.l.b16 %v51
  %v289 = vunpack.c.h.b16 %v51
  %v290 = vunpack.c.l.b16 %v52
  %v291 = vunpack.c.h.b16 %v52
  %v292 = vunpack.c.l.b16 %v53
  %v293 = vunpack.c.h.b16 %v53
  %v294 = vunpack.c.l.b16 %v54
  %v295 = vunpack.c.h.b16 %v54
  %v296 = vunpack.c.l.b16 %v55
  %v297 = vunpack.c.h.b16 %v55
  %v298 = vunpack.c.l.b16 %v56
  %v299 = vunpack.c.h.b16 %v56
  %v300 = vunpack.c.l.b16 %v57
  %v301 = vunpack.c.h.b16 %v57
  %v302 = vunpack.c.l.b16 %v58
  %v303 = vunpack.c.h.b16 %v58
  %v304 = vunpack.c.l.b16 %v59
  %v305 = vunpack.c.h.b16 %v59
  %v306 = vunpack.c.l.b16 %v60
  %v307 = vunpack.c.h.b16 %v60
  %v308 = vunpack.c.l.b16 %v61
  %v309 = vunpack.c.h.b16 %v61
  %v310 = vunpack.c.l.b16 %v62
  %v311 = vunpack.c.h.b16 %v62
  %v312 = vunpack.c.l.b16 %v63
  %v313 = vunpack.c.h.b16 %v63
  %v314 = vunpack.c.l.b16 %v64
  %v315 = vunpack.c.h.b16 %v64
  %v316 = vunpack.c.l.b16 %v65
  %v317 = vunpack.c.h.b16 %v65
  %v318 = vunpack.c.l.b16 %v66
  %v319 = vunpack.c.h.b16 %v66
  %v320 = vunpack.c.l.b16 %v67
  %v321 = vunpack.c.h.b16 %v67
  %v322 = vunpack.c.l.b16 %v68
  %v323 = vunpack.c.h.b16 %v68
  %v324 = vunpack.c.l.b16 %v69
  %v325 = vunpack.c.h.b16 %v69
  %v326 = vunpack.c.l.b16 %v70
  %v327 = vunpack.c.h.b16 %v70
  %v328 = vunpack.c.l.b16 %v71
  %v329 = vunpack.c.h.b16 %v71
  %v330 = vunpack.c.l.b16 %v72
  %v331 = vunpack.c.h.b16 %v72
  %v332 = vunpack.c.l.b16 %v73
  %v333 = vunpack.c.h.b16 %v73
  %v334 = vunpack.c.l.b16 %v74
  %v335 = vunpack.c.h.b16 %v74
  %v336 = vunpack.c.l.b16 %v75
  %v337 = vunpack.c.h.b16 %v75
  %v338 = vunpack.c.l.b16 %v76
  %v339 = vunpack.c.h.b16 %v76
  %v340 = vunpack.c.l.b16 %v77
  %v341 = vunpack.c.h.b16 %v77
  %v342 = vunpack.c.l.b16 %v78
  %v343 = vunpack.c.h.b16 %v78
  %v344 = vunpack.c.l.b16 %v79
  %v345 = vunpack.c.h.b16 %v79
  %v346 = vunpack.c.l.b16 %v80
  %v347 = vunpack.c.h.b16 %v80
  %v348 = vunpack.c.l.b16 %v81
  %v349 = vunpack.c.h.b16 %v81
  %v350 = vunpack.c.l.b16 %v82
  %v351 = vunpack.c.h.b16 %v82
  %v352 = vunpack.c.l.b16 %v83
  %v353 = vunpack.c.h.b16 %v83
  %v354 = vunpack.c.l.b16 %v84
  %v355 = vunpack.c.h.b16 %v84
  %v356 = vunpack.c.l.b16 %v85
  %v357 = vunpack.c.h.b16 %v85
  %v358 = vunpack.c.l.b16 %v86
  %v359 = vunpack.c.h.b16 %v86
  %v360 = vunpack.c.l.b16 %v87
  %v361 = vunpack.c.h.b16 %v87
  %v362 = vunpack.c.l.b16 %v88
  %v363 = vunpack.c.h.b16 %v88
  %v364 = vunpack.c.l.b16 %v89
  %v365 = vunpack.c.h.b16 %v89
  %v366 = vunpack.c.l.b16 %v90
  %v367 = vunpack.c.h.b16 %v90
  %v368 = vunpack.c.l.b16 %v91
  %v369 = vunpack.c.h.b16 %v91
  %v370 = vunpack.c.l.b16 %v92
  %v371 = vunpack.c.h.b16 %v92
  %v372 = vunpack.c.l.b16 %v93
  %v373 = vunpack.c.h.b16 %v93
  %v374 = vunpack.c.l.b16 %v94
  %v375 = vunpack.c.h.b16 %v94
  %v376 = vunpack.c.l.b16 %v95
  %v377 = vunpack.c.h.b16 %v95
  %v378 = vpack.c.b16 %v218, %v216
  %v379 = vpack.c.b16 %v219, %v217
  %v380 = vpack.c.b16 %v222, %v220
  %v381 = vpack.c.b16 %v223, %v221
  %v382 = vpack.c.b16 %v226, %v224
  %v383 = vpack.c.b16 %v227, %v225
  %v384 = vpack.c.b16 %v230, %v228
  %v385 = vpack.c.b16 %v231, %v229
  %v386 = vpack.c.b16 %v234, %v232
  %v387 = vpack.c.b16 %v235, %v233
  %v388 = vpack.c.b16 %v238, %v236
  %v389 = vpack.c.b16 %v239, %v237
  %v390 = vpack.c.b16 %v242, %v240
  %v391 = vpack.c.b16 %v243, %v241
  %v392 = vpack.c.b16 %v246, %v244
  %v393 = vpack.c.b16 %v247, %v245
  %v394 = vpack.c.b16 %v250, %v248
  %v395 = vpack.c.b16 %v251, %v249
  %v396 = vpack.c.b16 %v254, %v252
  %v397 = vpack.c.b16 %v255, %v253
  %v398 = vpack.c.b16 %v258, %v256
  %v399 = vpack.c.b16 %v259, %v257
  %v400 = vpack.c.b16 %v262, %v260
  %v401 = vpack.c.b16 %v263, %v261
  %v402 = vpack.c.b16 %v266, %v264
  %v403 = vpack.c.b16 %v267, %v265
  %v404 = vpack.c.b16 %v270, %v268
  %v405 = vpack.c.b16 %v271, %v269
  %v406 = vpack.c.b16 %v274, %v272
  %v407 = vpack.c.b16 %v275, %v273
  %v408 = vpack.c.b16 %v278, %v276
  %v409 = vpack.c.b16 %v279, %v277
  %v410 = vpack.c.b16 %v282, %v280
  %v411 = vpack.c.b16 %v283, %v281
  %v412 = vpack.c.b16 %v286, %v284
  %v413 = vpack.c.b16 %v287, %v285
  %v414 = vpack.c.b16 %v290, %v288
  %v415 = vpack.c.b16 %v291, %v289
  %v416 = vpack.c.b16 %v294, %v292
  %v417 = vpack.c.b16 %v295, %v293
  %v418 = vpack.c.b16 %v298, %v296
  %v419 = vpack.c.b16 %v299, %v297
  %v420 = vpack.c.b16 %v302, %v300
  %v421 = vpack.c.b16 %v303, %v301
  %v422 = vpack.c.b16 %v306, %v304
  %v423 = vpack.c.b16 %v307, %v305
  %v424 = vpack.c.b16 %v310, %v308
  %v425 = vpack.c.b16 %v311, %v309
  %v426 = vpack.c.b16 %v314, %v312
  %v427 = vpack.c.b16 %v315, %v313
  %v428 = vpack.c.b16 %v318, %v316
  %v429 = vpack.c.b16 %v319, %v317
  %v430 = vpack.c.b16 %v322, %v320
  %v431 = vpack.c.b16 %v323, %v321
  %v432 = vpack.c.b16 %v326, %v324
  %v433 = vpack.c.b16 %v327, %v325
  %v434 = vpack.c.b16 %v330, %v328
  %v435 = vpack.c.b16 %v331, %v329
  %v436 = vpack.c.b16 %v334, %v332
  %v437 = vpack.c.b16 %v335, %v333
  %v438 = vpack.c.b16 %v338, %v336
  %v439 = vpack.c.b16 %v339, %v337
  %v440 = vpack.c.b16 %v342, %v340
  %v441 = vpack.c.b16 %v343, %v341
  %v442 = vpack.c.b16 %v346, %v344
  %v443 = vpack.c.b16 %v347, %v345
  %v444 = vpack.c.b16 %v350, %v348
  %v445 = vpack.c.b16 %v351, %v349
  %v446 = vpack.c.b16 %v354, %v352
  %v447 = vpack.c.b16 %v355, %v353
  %v448 = vpack.c.b16 %v358, %v356
  %v449 = vpack.c.b16 %v359, %v357
  %v450 = vpack.c.b16 %v362, %v360
  %v451 = vpack.c.b16 %v363, %v361
  %v452 = vpack.c.b16 %v366, %v364
  %v453 = vpack.c.b16 %v367, %v365
  %v454 = vpack.c.b16 %v370, %v368
  %v455 = vpack.c.b16 %v371, %v369
  %v456 = vpack.c.b16 %v374, %v372
  %v457 = vpack.c.b16 %v375, %v373
  %v458 = vpack.c.b16 %v376, %v376
  %v459 = vpack.c.b16 %v377, %v377
  %v574 = vunpack.c.l.b16 %v96
  %v575 = vunpack.c.l.b16 %v97
  %v576 = vunpack.c.l.b16 %v98
  %v577 = vunpack.c.l.b16 %v99
  %v578 = vunpack.c.l.b16 %v100
  %v579 = vunpack.c.l.b16 %v101
  %v580 = vunpack.c.l.b16 %v102
  %v581 = vunpack.c.l.b16 %v103
  %v582 = vunpack.c.l.b16 %v104
  %v583 = vunpack.c.l.b16 %v105
  %v584 = vunpack.c.l.b16 %v106
  %v585 = vunpack.c.l.b16 %v107
  %v586 = vunpack.c.l.b16 %v108
  %v587 = vunpack.c.l.b16 %v109
  %v588 = vunpack.c.l.b16 %v110
  %v589 = vunpack.c.l.b16 %v111
  %v590 = vunpack.c.l.b16 %v112
  %v591 = vunpack.c.l.b16 %v113
  %v592 = vunpack.c.l.b16 %v114
  %v593 = vunpack.c.l.b16 %v115
  %v594 = vunpack.c.l.b16 %v116
  %v595 = vunpack.c.l.b16 %v117
  %v596 = vunpack.c.l.b16 %v118
  %v597 = vunpack.c.l.b16 %v119
  %v598 = vunpack.c.l.b16 %v120
  %v599 = vunpack.c.l.b16 %v121
  %v600 = vunpack.c.l.b16 %v122
  %v601 = vunpack.c.l.b16 %v123
  %v602 = vunpack.c.l.b16 %v124
  %v603 = vunpack.c.l.b16 %v125
  %v604 = vunpack.c.l.b16 %v126
  %v605 = vunpack.c.l.b16 %v127
  %v606 = vpack.c.b16 %v575, %v574
  %v607 = vpack.c.b16 %v577, %v576
  %v608 = vpack.c.b16 %v579, %v578
  %v609 = vpack.c.b16 %v581, %v580
  %v610 = vpack.c.b16 %v583, %v582
  %v611 = vpack.c.b16 %v585, %v584
  %v612 = vpack.c.b16 %v587, %v586
  %v613 = vpack.c.b16 %v589, %v588
  %v614 = vpack.c.b16 %v591, %v590
  %v615 = vpack.c.b16 %v593, %v592
  %v616 = vpack.c.b16 %v595, %v594
  %v617 = vpack.c.b16 %v597, %v596
  %v618 = vpack.c.b16 %v599, %v598
  %v619 = vpack.c.b16 %v601, %v600
  %v620 = vpack.c.b16 %v603, %v602
  %v621 = vpack.c.b16 %v605, %v604
  %638 = vmatprep.subr.bf16.mxu0 0
  %639 = vmatpush1.bf16.msra.mxu0 %v606
  %640 = vmatprep.subr.bf16.mxu0 0
  %641 = vmatpush1.bf16.msra.mxu0 %v607
  %642 = vmatprep.subr.bf16.mxu0 0
  %643 = vmatpush1.bf16.msra.mxu0 %v608
  %644 = vmatprep.subr.bf16.mxu0 0
  %645 = vmatpush1.bf16.msra.mxu0 %v609
  %646 = vmatprep.subr.bf16.mxu0 0
  %647 = vmatpush1.bf16.msra.mxu0 %v610
  %648 = vmatprep.subr.bf16.mxu0 0
  %649 = vmatpush1.bf16.msra.mxu0 %v611
  %650 = vmatprep.subr.bf16.mxu0 0
  %651 = vmatpush1.bf16.msra.mxu0 %v612
  %652 = vmatprep.subr.bf16.mxu0 0
  %653 = vmatpush1.bf16.msra.mxu0 %v613
  %654 = vmatprep.subr.bf16.mxu0 0
  %655 = vmatpush1.bf16.msra.mxu0 %v614
  %656 = vmatprep.subr.bf16.mxu0 0
  %657 = vmatpush1.bf16.msra.mxu0 %v615
  %658 = vmatprep.subr.bf16.mxu0 0
  %659 = vmatpush1.bf16.msra.mxu0 %v616
  %660 = vmatprep.subr.bf16.mxu0 0
  %661 = vmatpush1.bf16.msra.mxu0 %v617
  %662 = vmatprep.subr.bf16.mxu0 0
  %663 = vmatpush1.bf16.msra.mxu0 %v618
  %664 = vmatprep.subr.bf16.mxu0 0
  %665 = vmatpush1.bf16.msra.mxu0 %v619
  %666 = vmatprep.subr.bf16.mxu0 0
  %667 = vmatpush1.bf16.msra.mxu0 %v620
  %668 = vmatprep.subr.bf16.mxu0 0
  %669 = vmatpush1.bf16.msra.mxu0 %v621
  %670 = vmatprep.mubr.bf16.mxu0 %v379
  %671 = vmatmul.mubr.bf16.gmra.mrb[0].mxu0 %v378
  %v672 = vpop.f32.mrb[0].mxu0
  %v673 = vadd.f32 %v133, %v672
  %v674 = vpop.f32.mrb[0].mxu0
  %v675 = vpop.f32.mrb[0].mxu0
  %v676 = vadd.f32 %v133, %v675
  %v677 = vpop.f32.mrb[0].mxu0
  %678 = vmatprep.mubr.bf16.mxu0 %v381
  %679 = vmatmul.mubr.bf16.gmra.mrb[0].mxu0 %v380
  %v680 = vpop.f32.mrb[0].mxu0
  %v681 = vadd.f32 %v133, %v680
  %v682 = vpop.f32.mrb[0].mxu0
  %v683 = vpop.f32.mrb[0].mxu0
  %v684 = vadd.f32 %v133, %v683
  %v685 = vpop.f32.mrb[0].mxu0
  %686 = vmatprep.mubr.bf16.mxu0 %v383
  %687 = vmatmul.mubr.bf16.gmra.mrb[0].mxu0 %v382
  %v688 = vpop.f32.mrb[0].mxu0
  %v689 = vadd.f32 %v133, %v688
  %v690 = vpop.f32.mrb[0].mxu0
  %v691 = vpop.f32.mrb[0].mxu0
  %v692 = vadd.f32 %v133, %v691
  %v693 = vpop.f32.mrb[0].mxu0
  %694 = vmatprep.mubr.bf16.mxu0 %v385
  %695 = vmatmul.mubr.bf16.gmra.mrb[0].mxu0 %v384
  %v696 = vpop.f32.mrb[0].mxu0
  %v697 = vadd.f32 %v133, %v696
  %v698 = vpop.f32.mrb[0].mxu0
  %v699 = vpop.f32.mrb[0].mxu0
  %v700 = vadd.f32 %v133, %v699
  %v701 = vpop.f32.mrb[0].mxu0
  %702 = vmatprep.mubr.bf16.mxu0 %v387
  %703 = vmatmul.mubr.bf16.gmra.mrb[0].mxu0 %v386
  %v704 = vpop.f32.mrb[0].mxu0
  %v705 = vadd.f32 %v133, %v704
  %v706 = vpop.f32.mrb[0].mxu0
  %v707 = vpop.f32.mrb[0].mxu0
  %v708 = vadd.f32 %v133, %v707
  %v709 = vpop.f32.mrb[0].mxu0
  %710 = vmatprep.mubr.bf16.mxu0 %v389
  %711 = vmatmul.mubr.bf16.gmra.mrb[0].mxu0 %v388
  %v712 = vpop.f32.mrb[0].mxu0
  %v713 = vadd.f32 %v133, %v712
  %v714 = vpop.f32.mrb[0].mxu0
  %v715 = vpop.f32.mrb[0].mxu0
  %v716 = vadd.f32 %v133, %v715
  %v717 = vpop.f32.mrb[0].mxu0
  %718 = vmatprep.mubr.bf16.mxu0 %v391
  %719 = vmatmul.mubr.bf16.gmra.mrb[0].mxu0 %v390
  %v720 = vpop.f32.mrb[0].mxu0
  %v721 = vadd.f32 %v133, %v720
  %v722 = vpop.f32.mrb[0].mxu0
  %v723 = vpop.f32.mrb[0].mxu0
  %v724 = vadd.f32 %v133, %v723
  %v725 = vpop.f32.mrb[0].mxu0
  %726 = vmatprep.mubr.bf16.mxu0 %v393
  %727 = vmatmul.mubr.bf16.gmra.mrb[0].mxu0 %v392
  %v728 = vpop.f32.mrb[0].mxu0
  %v729 = vadd.f32 %v133, %v728
  %v730 = vpop.f32.mrb[0].mxu0
  %v731 = vpop.f32.mrb[0].mxu0
  %v732 = vadd.f32 %v133, %v731
  %v733 = vpop.f32.mrb[0].mxu0
  %734 = vmatprep.mubr.bf16.mxu0 %v395
  %735 = vmatmul.mubr.bf16.gmra.mrb[0].mxu0 %v394
  %v736 = vpop.f32.mrb[0].mxu0
  %v737 = vadd.f32 %v133, %v736
  %v738 = vpop.f32.mrb[0].mxu0
  %v739 = vpop.f32.mrb[0].mxu0
  %v740 = vadd.f32 %v133, %v739
  %v741 = vpop.f32.mrb[0].mxu0
  %742 = vmatprep.mubr.bf16.mxu0 %v397
  %743 = vmatmul.mubr.bf16.gmra.mrb[0].mxu0 %v396
  %v744 = vpop.f32.mrb[0].mxu0
  %v745 = vadd.f32 %v133, %v744
  %v746 = vpop.f32.mrb[0].mxu0
  %v747 = vpop.f32.mrb[0].mxu0
  %v748 = vadd.f32 %v133, %v747
  %v749 = vpop.f32.mrb[0].mxu0
  %750 = vmatprep.mubr.bf16.mxu0 %v399
  %751 = vmatmul.mubr.bf16.gmra.mrb[0].mxu0 %v398
  %v752 = vpop.f32.mrb[0].mxu0
  %v753 = vadd.f32 %v133, %v752
  %v754 = vpop.f32.mrb[0].mxu0
  %v755 = vpop.f32.mrb[0].mxu0
  %v756 = vadd.f32 %v133, %v755
  %v757 = vpop.f32.mrb[0].mxu0
  %758 = vmatprep.mubr.bf16.mxu0 %v401
  %759 = vmatmul.mubr.bf16.gmra.mrb[0].mxu0 %v400
  %v760 = vpop.f32.mrb[0].mxu0
  %v761 = vadd.f32 %v133, %v760
  %v762 = vpop.f32.mrb[0].mxu0
  %v763 = vpop.f32.mrb[0].mxu0
  %v764 = vadd.f32 %v133, %v763
  %v765 = vpop.f32.mrb[0].mxu0
  %766 = vmatprep.mubr.bf16.mxu0 %v403
  %767 = vmatmul.mubr.bf16.gmra.mrb[0].mxu0 %v402
  %v768 = vpop.f32.mrb[0].mxu0
  %v769 = vadd.f32 %v133, %v768
  %v770 = vpop.f32.mrb[0].mxu0
  %v771 = vpop.f32.mrb[0].mxu0
  %v772 = vadd.f32 %v133, %v771
  %v773 = vpop.f32.mrb[0].mxu0
  %774 = vmatprep.mubr.bf16.mxu0 %v405
  %775 = vmatmul.mubr.bf16.gmra.mrb[0].mxu0 %v404
  %v776 = vpop.f32.mrb[0].mxu0
  %v777 = vadd.f32 %v133, %v776
  %v778 = vpop.f32.mrb[0].mxu0
  %v779 = vpop.f32.mrb[0].mxu0
  %v780 = vadd.f32 %v133, %v779
  %v781 = vpop.f32.mrb[0].mxu0
  %782 = vmatprep.mubr.bf16.mxu0 %v407
  %783 = vmatmul.mubr.bf16.gmra.mrb[0].mxu0 %v406
  %v784 = vpop.f32.mrb[0].mxu0
  %v785 = vadd.f32 %v133, %v784
  %v786 = vpop.f32.mrb[0].mxu0
  %v787 = vpop.f32.mrb[0].mxu0
  %v788 = vadd.f32 %v133, %v787
  %v789 = vpop.f32.mrb[0].mxu0
  %790 = vmatprep.mubr.bf16.mxu0 %v409
  %791 = vmatmul.mubr.bf16.gmra.mrb[0].mxu0 %v408
  %v792 = vpop.f32.mrb[0].mxu0
  %v793 = vadd.f32 %v133, %v792
  %v794 = vpop.f32.mrb[0].mxu0
  %v795 = vpop.f32.mrb[0].mxu0
  %v796 = vadd.f32 %v133, %v795
  %v797 = vpop.f32.mrb[0].mxu0
  %798 = vmatprep.mubr.bf16.mxu0 %v411
  %799 = vmatmul.mubr.bf16.gmra.mrb[0].mxu0 %v410
  %v800 = vpop.f32.mrb[0].mxu0
  %v801 = vadd.f32 %v133, %v800
  %v802 = vpop.f32.mrb[0].mxu0
  %v803 = vpop.f32.mrb[0].mxu0
  %v804 = vadd.f32 %v133, %v803
  %v805 = vpop.f32.mrb[0].mxu0
  %806 = vmatprep.mubr.bf16.mxu0 %v413
  %807 = vmatmul.mubr.bf16.gmra.mrb[0].mxu0 %v412
  %v808 = vpop.f32.mrb[0].mxu0
  %v809 = vadd.f32 %v133, %v808
  %v810 = vpop.f32.mrb[0].mxu0
  %v811 = vpop.f32.mrb[0].mxu0
  %v812 = vadd.f32 %v133, %v811
  %v813 = vpop.f32.mrb[0].mxu0
  %814 = vmatprep.mubr.bf16.mxu0 %v415
  %815 = vmatmul.mubr.bf16.gmra.mrb[0].mxu0 %v414
  %v816 = vpop.f32.mrb[0].mxu0
  %v817 = vadd.f32 %v133, %v816
  %v818 = vpop.f32.mrb[0].mxu0
  %v819 = vpop.f32.mrb[0].mxu0
  %v820 = vadd.f32 %v133, %v819
  %v821 = vpop.f32.mrb[0].mxu0
  %822 = vmatprep.mubr.bf16.mxu0 %v417
  %823 = vmatmul.mubr.bf16.gmra.mrb[0].mxu0 %v416
  %v824 = vpop.f32.mrb[0].mxu0
  %v825 = vadd.f32 %v133, %v824
  %v826 = vpop.f32.mrb[0].mxu0
  %v827 = vpop.f32.mrb[0].mxu0
  %v828 = vadd.f32 %v133, %v827
  %v829 = vpop.f32.mrb[0].mxu0
  %830 = vmatprep.mubr.bf16.mxu0 %v419
  %831 = vmatmul.mubr.bf16.gmra.mrb[0].mxu0 %v418
  %v832 = vpop.f32.mrb[0].mxu0
  %v833 = vadd.f32 %v133, %v832
  %v834 = vpop.f32.mrb[0].mxu0
  %v835 = vpop.f32.mrb[0].mxu0
  %v836 = vadd.f32 %v133, %v835
  %v837 = vpop.f32.mrb[0].mxu0
  %838 = vmatprep.mubr.bf16.mxu0 %v421
  %839 = vmatmul.mubr.bf16.gmra.mrb[0].mxu0 %v420
  %v840 = vpop.f32.mrb[0].mxu0
  %v841 = vadd.f32 %v133, %v840
  %v842 = vpop.f32.mrb[0].mxu0
  %v843 = vpop.f32.mrb[0].mxu0
  %v844 = vadd.f32 %v133, %v843
  %v845 = vpop.f32.mrb[0].mxu0
  %846 = vmatprep.mubr.bf16.mxu0 %v423
  %847 = vmatmul.mubr.bf16.gmra.mrb[0].mxu0 %v422
  %v848 = vpop.f32.mrb[0].mxu0
  %v849 = vadd.f32 %v133, %v848
  %v850 = vpop.f32.mrb[0].mxu0
  %v851 = vpop.f32.mrb[0].mxu0
  %v852 = vadd.f32 %v133, %v851
  %v853 = vpop.f32.mrb[0].mxu0
  %854 = vmatprep.mubr.bf16.mxu0 %v425
  %855 = vmatmul.mubr.bf16.gmra.mrb[0].mxu0 %v424
  %v856 = vpop.f32.mrb[0].mxu0
  %v857 = vadd.f32 %v133, %v856
  %v858 = vpop.f32.mrb[0].mxu0
  %v859 = vpop.f32.mrb[0].mxu0
  %v860 = vadd.f32 %v133, %v859
  %v861 = vpop.f32.mrb[0].mxu0
  %862 = vmatprep.mubr.bf16.mxu0 %v427
  %863 = vmatmul.mubr.bf16.gmra.mrb[0].mxu0 %v426
  %v864 = vpop.f32.mrb[0].mxu0
  %v865 = vadd.f32 %v133, %v864
  %v866 = vpop.f32.mrb[0].mxu0
  %v867 = vpop.f32.mrb[0].mxu0
  %v868 = vadd.f32 %v133, %v867
  %v869 = vpop.f32.mrb[0].mxu0
  %870 = vmatprep.mubr.bf16.mxu0 %v429
  %871 = vmatmul.mubr.bf16.gmra.mrb[0].mxu0 %v428
  %v872 = vpop.f32.mrb[0].mxu0
  %v873 = vadd.f32 %v133, %v872
  %v874 = vpop.f32.mrb[0].mxu0
  %v875 = vpop.f32.mrb[0].mxu0
  %v876 = vadd.f32 %v133, %v875
  %v877 = vpop.f32.mrb[0].mxu0
  %878 = vmatprep.mubr.bf16.mxu0 %v431
  %879 = vmatmul.mubr.bf16.gmra.mrb[0].mxu0 %v430
  %v880 = vpop.f32.mrb[0].mxu0
  %v881 = vadd.f32 %v133, %v880
  %v882 = vpop.f32.mrb[0].mxu0
  %v883 = vpop.f32.mrb[0].mxu0
  %v884 = vadd.f32 %v133, %v883
  %v885 = vpop.f32.mrb[0].mxu0
  %886 = vmatprep.mubr.bf16.mxu0 %v433
  %887 = vmatmul.mubr.bf16.gmra.mrb[0].mxu0 %v432
  %v888 = vpop.f32.mrb[0].mxu0
  %v889 = vadd.f32 %v133, %v888
  %v890 = vpop.f32.mrb[0].mxu0
  %v891 = vpop.f32.mrb[0].mxu0
  %v892 = vadd.f32 %v133, %v891
  %v893 = vpop.f32.mrb[0].mxu0
  %894 = vmatprep.mubr.bf16.mxu0 %v435
  %895 = vmatmul.mubr.bf16.gmra.mrb[0].mxu0 %v434
  %v896 = vpop.f32.mrb[0].mxu0
  %v897 = vadd.f32 %v133, %v896
  %v898 = vpop.f32.mrb[0].mxu0
  %v899 = vpop.f32.mrb[0].mxu0
  %v900 = vadd.f32 %v133, %v899
  %v901 = vpop.f32.mrb[0].mxu0
  %902 = vmatprep.mubr.bf16.mxu0 %v437
  %903 = vmatmul.mubr.bf16.gmra.mrb[0].mxu0 %v436
  %v904 = vpop.f32.mrb[0].mxu0
  %v905 = vadd.f32 %v133, %v904
  %v906 = vpop.f32.mrb[0].mxu0
  %v907 = vpop.f32.mrb[0].mxu0
  %v908 = vadd.f32 %v133, %v907
  %v909 = vpop.f32.mrb[0].mxu0
  %910 = vmatprep.mubr.bf16.mxu0 %v439
  %911 = vmatmul.mubr.bf16.gmra.mrb[0].mxu0 %v438
  %v912 = vpop.f32.mrb[0].mxu0
  %v913 = vadd.f32 %v133, %v912
  %v914 = vpop.f32.mrb[0].mxu0
  %v915 = vpop.f32.mrb[0].mxu0
  %v916 = vadd.f32 %v133, %v915
  %v917 = vpop.f32.mrb[0].mxu0
  %918 = vmatprep.mubr.bf16.mxu0 %v441
  %919 = vmatmul.mubr.bf16.gmra.mrb[0].mxu0 %v440
  %v920 = vpop.f32.mrb[0].mxu0
  %v921 = vadd.f32 %v133, %v920
  %v922 = vpop.f32.mrb[0].mxu0
  %v923 = vpop.f32.mrb[0].mxu0
  %v924 = vadd.f32 %v133, %v923
  %v925 = vpop.f32.mrb[0].mxu0
  %926 = vmatprep.mubr.bf16.mxu0 %v443
  %927 = vmatmul.mubr.bf16.gmra.mrb[0].mxu0 %v442
  %v928 = vpop.f32.mrb[0].mxu0
  %v929 = vadd.f32 %v133, %v928
  %v930 = vpop.f32.mrb[0].mxu0
  %v931 = vpop.f32.mrb[0].mxu0
  %v932 = vadd.f32 %v133, %v931
  %v933 = vpop.f32.mrb[0].mxu0
  %934 = vmatprep.mubr.bf16.mxu0 %v445
  %935 = vmatmul.mubr.bf16.gmra.mrb[0].mxu0 %v444
  %v936 = vpop.f32.mrb[0].mxu0
  %v937 = vadd.f32 %v133, %v936
  %v938 = vpop.f32.mrb[0].mxu0
  %v939 = vpop.f32.mrb[0].mxu0
  %v940 = vadd.f32 %v133, %v939
  %v941 = vpop.f32.mrb[0].mxu0
  %942 = vmatprep.mubr.bf16.mxu0 %v447
  %943 = vmatmul.mubr.bf16.gmra.mrb[0].mxu0 %v446
  %v944 = vpop.f32.mrb[0].mxu0
  %v945 = vadd.f32 %v133, %v944
  %v946 = vpop.f32.mrb[0].mxu0
  %v947 = vpop.f32.mrb[0].mxu0
  %v948 = vadd.f32 %v133, %v947
  %v949 = vpop.f32.mrb[0].mxu0
  %950 = vmatprep.mubr.bf16.mxu0 %v449
  %951 = vmatmul.mubr.bf16.gmra.mrb[0].mxu0 %v448
  %v952 = vpop.f32.mrb[0].mxu0
  %v953 = vadd.f32 %v133, %v952
  %v954 = vpop.f32.mrb[0].mxu0
  %v955 = vpop.f32.mrb[0].mxu0
  %v956 = vadd.f32 %v133, %v955
  %v957 = vpop.f32.mrb[0].mxu0
  %958 = vmatprep.mubr.bf16.mxu0 %v451
  %959 = vmatmul.mubr.bf16.gmra.mrb[0].mxu0 %v450
  %v960 = vpop.f32.mrb[0].mxu0
  %v961 = vadd.f32 %v133, %v960
  %v962 = vpop.f32.mrb[0].mxu0
  %v963 = vpop.f32.mrb[0].mxu0
  %v964 = vadd.f32 %v133, %v963
  %v965 = vpop.f32.mrb[0].mxu0
  %966 = vmatprep.mubr.bf16.mxu0 %v453
  %967 = vmatmul.mubr.bf16.gmra.mrb[0].mxu0 %v452
  %v968 = vpop.f32.mrb[0].mxu0
  %v969 = vadd.f32 %v133, %v968
  %v970 = vpop.f32.mrb[0].mxu0
  %v971 = vpop.f32.mrb[0].mxu0
  %v972 = vadd.f32 %v133, %v971
  %v973 = vpop.f32.mrb[0].mxu0
  %974 = vmatprep.mubr.bf16.mxu0 %v455
  %975 = vmatmul.mubr.bf16.gmra.mrb[0].mxu0 %v454
  %v976 = vpop.f32.mrb[0].mxu0
  %v977 = vadd.f32 %v133, %v976
  %v978 = vpop.f32.mrb[0].mxu0
  %v979 = vpop.f32.mrb[0].mxu0
  %v980 = vadd.f32 %v133, %v979
  %v981 = vpop.f32.mrb[0].mxu0
  %982 = vmatprep.mubr.bf16.mxu0 %v457
  %983 = vmatmul.mubr.bf16.gmra.mrb[0].mxu0 %v456
  %v984 = vpop.f32.mrb[0].mxu0
  %v985 = vadd.f32 %v133, %v984
  %v986 = vpop.f32.mrb[0].mxu0
  %v987 = vpop.f32.mrb[0].mxu0
  %v988 = vadd.f32 %v133, %v987
  %v989 = vpop.f32.mrb[0].mxu0
  %990 = vmatprep.mubr.bf16.mxu0 %v459
  %991 = vmatmul.mubr.bf16.gmra.mrb[0].mxu0 %v458
  %v992 = vpop.f32.mrb[0].mxu0
  %v993 = vadd.f32 %v133, %v992
  %v994 = vpop.f32.mrb[0].mxu0
  %v995 = vpop.f32.mrb[0].mxu0
  %v996 = vpop.f32.mrb[0].mxu0
  %997 = vdwg.mxu0
  %v998 = vmax.f32 %v673, 0.0
  %v999 = vmax.f32 %v676, 0.0
  %v1000 = vmax.f32 %v681, 0.0
  %v1001 = vmax.f32 %v684, 0.0
  %v1002 = vmax.f32 %v689, 0.0
  %v1003 = vmax.f32 %v692, 0.0
  %v1004 = vmax.f32 %v697, 0.0
  %v1005 = vmax.f32 %v700, 0.0
  %v1006 = vmax.f32 %v705, 0.0
  %v1007 = vmax.f32 %v708, 0.0
  %v1008 = vmax.f32 %v713, 0.0
  %v1009 = vmax.f32 %v716, 0.0
  %v1010 = vmax.f32 %v721, 0.0
  %v1011 = vmax.f32 %v724, 0.0
  %v1012 = vmax.f32 %v729, 0.0
  %v1013 = vmax.f32 %v732, 0.0
  %v1014 = vmax.f32 %v737, 0.0
  %v1015 = vmax.f32 %v740, 0.0
  %v1016 = vmax.f32 %v745, 0.0
  %v1017 = vmax.f32 %v748, 0.0
  %v1018 = vmax.f32 %v753, 0.0
  %v1019 = vmax.f32 %v756, 0.0
  %v1020 = vmax.f32 %v761, 0.0
  %v1021 = vmax.f32 %v764, 0.0
  %v1022 = vmax.f32 %v769, 0.0
  %v1023 = vmax.f32 %v772, 0.0
  %v1024 = vmax.f32 %v777, 0.0
  %v1025 = vmax.f32 %v780, 0.0
  %v1026 = vmax.f32 %v785, 0.0
  %v1027 = vmax.f32 %v788, 0.0
  %v1028 = vmax.f32 %v793, 0.0
  %v1029 = vmax.f32 %v796, 0.0
  %v1030 = vmax.f32 %v801, 0.0
  %v1031 = vmax.f32 %v804, 0.0
  %v1032 = vmax.f32 %v809, 0.0
  %v1033 = vmax.f32 %v812, 0.0
  %v1034 = vmax.f32 %v817, 0.0
  %v1035 = vmax.f32 %v820, 0.0
  %v1036 = vmax.f32 %v825, 0.0
  %v1037 = vmax.f32 %v828, 0.0
  %v1038 = vmax.f32 %v833, 0.0
  %v1039 = vmax.f32 %v836, 0.0
  %v1040 = vmax.f32 %v841, 0.0
  %v1041 = vmax.f32 %v844, 0.0
  %v1042 = vmax.f32 %v849, 0.0
  %v1043 = vmax.f32 %v852, 0.0
  %v1044 = vmax.f32 %v857, 0.0
  %v1045 = vmax.f32 %v860, 0.0
  %v1046 = vmax.f32 %v865, 0.0
  %v1047 = vmax.f32 %v868, 0.0
  %v1048 = vmax.f32 %v873, 0.0
  %v1049 = vmax.f32 %v876, 0.0
  %v1050 = vmax.f32 %v881, 0.0
  %v1051 = vmax.f32 %v884, 0.0
  %v1052 = vmax.f32 %v889, 0.0
  %v1053 = vmax.f32 %v892, 0.0
  %v1054 = vmax.f32 %v897, 0.0
  %v1055 = vmax.f32 %v900, 0.0
  %v1056 = vmax.f32 %v905, 0.0
  %v1057 = vmax.f32 %v908, 0.0
  %v1058 = vmax.f32 %v913, 0.0
  %v1059 = vmax.f32 %v916, 0.0
  %v1060 = vmax.f32 %v921, 0.0
  %v1061 = vmax.f32 %v924, 0.0
  %v1062 = vmax.f32 %v929, 0.0
  %v1063 = vmax.f32 %v932, 0.0
  %v1064 = vmax.f32 %v937, 0.0
  %v1065 = vmax.f32 %v940, 0.0
  %v1066 = vmax.f32 %v945, 0.0
  %v1067 = vmax.f32 %v948, 0.0
  %v1068 = vmax.f32 %v953, 0.0
  %v1069 = vmax.f32 %v956, 0.0
  %v1070 = vmax.f32 %v961, 0.0
  %v1071 = vmax.f32 %v964, 0.0
  %v1072 = vmax.f32 %v969, 0.0
  %v1073 = vmax.f32 %v972, 0.0
  %v1074 = vmax.f32 %v977, 0.0
  %v1075 = vmax.f32 %v980, 0.0
  %v1076 = vmax.f32 %v985, 0.0
  %v1077 = vmax.f32 %v988, 0.0
  %v1078 = vmax.f32 %v993, 0.0
  %v1079 = vpack.c.bf16 %v999, %v998
  %v1080 = vpack.c.bf16 %v1001, %v1000
  %v1081 = vpack.c.bf16 %v1003, %v1002
  %v1082 = vpack.c.bf16 %v1005, %v1004
  %v1083 = vpack.c.bf16 %v1007, %v1006
  %v1084 = vpack.c.bf16 %v1009, %v1008
  %v1085 = vpack.c.bf16 %v1011, %v1010
  %v1086 = vpack.c.bf16 %v1013, %v1012
  %v1087 = vpack.c.bf16 %v1015, %v1014
  %v1088 = vpack.c.bf16 %v1017, %v1016
  %v1089 = vpack.c.bf16 %v1019, %v1018
  %v1090 = vpack.c.bf16 %v1021, %v1020
  %v1091 = vpack.c.bf16 %v1023, %v1022
  %v1092 = vpack.c.bf16 %v1025, %v1024
  %v1093 = vpack.c.bf16 %v1027, %v1026
  %v1094 = vpack.c.bf16 %v1029, %v1028
  %v1095 = vpack.c.bf16 %v1031, %v1030
  %v1096 = vpack.c.bf16 %v1033, %v1032
  %v1097 = vpack.c.bf16 %v1035, %v1034
  %v1098 = vpack.c.bf16 %v1037, %v1036
  %v1099 = vpack.c.bf16 %v1039, %v1038
  %v1100 = vpack.c.bf16 %v1041, %v1040
  %v1101 = vpack.c.bf16 %v1043, %v1042
  %v1102 = vpack.c.bf16 %v1045, %v1044
  %v1103 = vpack.c.bf16 %v1047, %v1046
  %v1104 = vpack.c.bf16 %v1049, %v1048
  %v1105 = vpack.c.bf16 %v1051, %v1050
  %v1106 = vpack.c.bf16 %v1053, %v1052
  %v1107 = vpack.c.bf16 %v1055, %v1054
  %v1108 = vpack.c.bf16 %v1057, %v1056
  %v1109 = vpack.c.bf16 %v1059, %v1058
  %v1110 = vpack.c.bf16 %v1061, %v1060
  %v1111 = vpack.c.bf16 %v1063, %v1062
  %v1112 = vpack.c.bf16 %v1065, %v1064
  %v1113 = vpack.c.bf16 %v1067, %v1066
  %v1114 = vpack.c.bf16 %v1069, %v1068
  %v1115 = vpack.c.bf16 %v1071, %v1070
  %v1116 = vpack.c.bf16 %v1073, %v1072
  %v1117 = vpack.c.bf16 %v1075, %v1074
  %v1118 = vpack.c.bf16 %v1077, %v1076
  %v1119 = vpack.c.bf16 %v1078, %v1078
  %v1161 = vunpack.c.l.b16 %v1079
  %v1162 = vunpack.c.h.b16 %v1079
  %v1163 = vunpack.c.l.b16 %v1080
  %v1164 = vunpack.c.h.b16 %v1080
  %v1165 = vunpack.c.l.b16 %v1081
  %v1166 = vunpack.c.h.b16 %v1081
  %v1167 = vunpack.c.l.b16 %v1082
  %v1168 = vunpack.c.h.b16 %v1082
  %v1169 = vunpack.c.l.b16 %v1083
  %v1170 = vunpack.c.h.b16 %v1083
  %v1171 = vunpack.c.l.b16 %v1084
  %v1172 = vunpack.c.h.b16 %v1084
  %v1173 = vunpack.c.l.b16 %v1085
  %v1174 = vunpack.c.h.b16 %v1085
  %v1175 = vunpack.c.l.b16 %v1086
  %v1176 = vunpack.c.h.b16 %v1086
  %v1177 = vunpack.c.l.b16 %v1087
  %v1178 = vunpack.c.h.b16 %v1087
  %v1179 = vunpack.c.l.b16 %v1088
  %v1180 = vunpack.c.h.b16 %v1088
  %v1181 = vunpack.c.l.b16 %v1089
  %v1182 = vunpack.c.h.b16 %v1089
  %v1183 = vunpack.c.l.b16 %v1090
  %v1184 = vunpack.c.h.b16 %v1090
  %v1185 = vunpack.c.l.b16 %v1091
  %v1186 = vunpack.c.h.b16 %v1091
  %v1187 = vunpack.c.l.b16 %v1092
  %v1188 = vunpack.c.h.b16 %v1092
  %v1189 = vunpack.c.l.b16 %v1093
  %v1190 = vunpack.c.h.b16 %v1093
  %v1191 = vunpack.c.l.b16 %v1094
  %v1192 = vunpack.c.h.b16 %v1094
  %v1193 = vunpack.c.l.b16 %v1095
  %v1194 = vunpack.c.h.b16 %v1095
  %v1195 = vunpack.c.l.b16 %v1096
  %v1196 = vunpack.c.h.b16 %v1096
  %v1197 = vunpack.c.l.b16 %v1097
  %v1198 = vunpack.c.h.b16 %v1097
  %v1199 = vunpack.c.l.b16 %v1098
  %v1200 = vunpack.c.h.b16 %v1098
  %v1201 = vunpack.c.l.b16 %v1099
  %v1202 = vunpack.c.h.b16 %v1099
  %v1203 = vunpack.c.l.b16 %v1100
  %v1204 = vunpack.c.h.b16 %v1100
  %v1205 = vunpack.c.l.b16 %v1101
  %v1206 = vunpack.c.h.b16 %v1101
  %v1207 = vunpack.c.l.b16 %v1102
  %v1208 = vunpack.c.h.b16 %v1102
  %v1209 = vunpack.c.l.b16 %v1103
  %v1210 = vunpack.c.h.b16 %v1103
  %v1211 = vunpack.c.l.b16 %v1104
  %v1212 = vunpack.c.h.b16 %v1104
  %v1213 = vunpack.c.l.b16 %v1105
  %v1214 = vunpack.c.h.b16 %v1105
  %v1215 = vunpack.c.l.b16 %v1106
  %v1216 = vunpack.c.h.b16 %v1106
  %v1217 = vunpack.c.l.b16 %v1107
  %v1218 = vunpack.c.h.b16 %v1107
  %v1219 = vunpack.c.l.b16 %v1108
  %v1220 = vunpack.c.h.b16 %v1108
  %v1221 = vunpack.c.l.b16 %v1109
  %v1222 = vunpack.c.h.b16 %v1109
  %v1223 = vunpack.c.l.b16 %v1110
  %v1224 = vunpack.c.h.b16 %v1110
  %v1225 = vunpack.c.l.b16 %v1111
  %v1226 = vunpack.c.h.b16 %v1111
  %v1227 = vunpack.c.l.b16 %v1112
  %v1228 = vunpack.c.h.b16 %v1112
  %v1229 = vunpack.c.l.b16 %v1113
  %v1230 = vunpack.c.h.b16 %v1113
  %v1231 = vunpack.c.l.b16 %v1114
  %v1232 = vunpack.c.h.b16 %v1114
  %v1233 = vunpack.c.l.b16 %v1115
  %v1234 = vunpack.c.h.b16 %v1115
  %v1235 = vunpack.c.l.b16 %v1116
  %v1236 = vunpack.c.h.b16 %v1116
  %v1237 = vunpack.c.l.b16 %v1117
  %v1238 = vunpack.c.h.b16 %v1117
  %v1239 = vunpack.c.l.b16 %v1118
  %v1240 = vunpack.c.h.b16 %v1118
  %v1241 = vunpack.c.l.b16 %v1119
  %v1242 = vpack.c.b16 %v1161, %v1161
  %v1243 = vpack.c.b16 %v1162, %v1162
  %v1244 = vpack.c.b16 %v1163, %v1163
  %v1245 = vpack.c.b16 %v1164, %v1164
  %v1246 = vpack.c.b16 %v1165, %v1165
  %v1247 = vpack.c.b16 %v1166, %v1166
  %v1248 = vpack.c.b16 %v1167, %v1167
  %v1249 = vpack.c.b16 %v1168, %v1168
  %v1250 = vpack.c.b16 %v1169, %v1169
  %v1251 = vpack.c.b16 %v1170, %v1170
  %v1252 = vpack.c.b16 %v1171, %v1171
  %v1253 = vpack.c.b16 %v1172, %v1172
  %v1254 = vpack.c.b16 %v1173, %v1173
  %v1255 = vpack.c.b16 %v1174, %v1174
  %v1256 = vpack.c.b16 %v1175, %v1175
  %v1257 = vpack.c.b16 %v1176, %v1176
  %v1258 = vpack.c.b16 %v1177, %v1177
  %v1259 = vpack.c.b16 %v1178, %v1178
  %v1260 = vpack.c.b16 %v1179, %v1179
  %v1261 = vpack.c.b16 %v1180, %v1180
  %v1262 = vpack.c.b16 %v1181, %v1181
  %v1263 = vpack.c.b16 %v1182, %v1182
  %v1264 = vpack.c.b16 %v1183, %v1183
  %v1265 = vpack.c.b16 %v1184, %v1184
  %v1266 = vpack.c.b16 %v1185, %v1185
  %v1267 = vpack.c.b16 %v1186, %v1186
  %v1268 = vpack.c.b16 %v1187, %v1187
  %v1269 = vpack.c.b16 %v1188, %v1188
  %v1270 = vpack.c.b16 %v1189, %v1189
  %v1271 = vpack.c.b16 %v1190, %v1190
  %v1272 = vpack.c.b16 %v1191, %v1191
  %v1273 = vpack.c.b16 %v1192, %v1192
  %v1274 = vpack.c.b16 %v1193, %v1193
  %v1275 = vpack.c.b16 %v1194, %v1194
  %v1276 = vpack.c.b16 %v1195, %v1195
  %v1277 = vpack.c.b16 %v1196, %v1196
  %v1278 = vpack.c.b16 %v1197, %v1197
  %v1279 = vpack.c.b16 %v1198, %v1198
  %v1280 = vpack.c.b16 %v1199, %v1199
  %v1281 = vpack.c.b16 %v1200, %v1200
  %v1282 = vpack.c.b16 %v1201, %v1201
  %v1283 = vpack.c.b16 %v1202, %v1202
  %v1284 = vpack.c.b16 %v1203, %v1203
  %v1285 = vpack.c.b16 %v1204, %v1204
  %v1286 = vpack.c.b16 %v1205, %v1205
  %v1287 = vpack.c.b16 %v1206, %v1206
  %v1288 = vpack.c.b16 %v1207, %v1207
  %v1289 = vpack.c.b16 %v1208, %v1208
  %v1290 = vpack.c.b16 %v1209, %v1209
  %v1291 = vpack.c.b16 %v1210, %v1210
  %v1292 = vpack.c.b16 %v1211, %v1211
  %v1293 = vpack.c.b16 %v1212, %v1212
  %v1294 = vpack.c.b16 %v1213, %v1213
  %v1295 = vpack.c.b16 %v1214, %v1214
  %v1296 = vpack.c.b16 %v1215, %v1215
  %v1297 = vpack.c.b16 %v1216, %v1216
  %v1298 = vpack.c.b16 %v1217, %v1217
  %v1299 = vpack.c.b16 %v1218, %v1218
  %v1300 = vpack.c.b16 %v1219, %v1219
  %v1301 = vpack.c.b16 %v1220, %v1220
  %v1302 = vpack.c.b16 %v1221, %v1221
  %v1303 = vpack.c.b16 %v1222, %v1222
  %v1304 = vpack.c.b16 %v1223, %v1223
  %v1305 = vpack.c.b16 %v1224, %v1224
  %v1306 = vpack.c.b16 %v1225, %v1225
  %v1307 = vpack.c.b16 %v1226, %v1226
  %v1308 = vpack.c.b16 %v1227, %v1227
  %v1309 = vpack.c.b16 %v1228, %v1228
  %v1310 = vpack.c.b16 %v1229, %v1229
  %v1311 = vpack.c.b16 %v1230, %v1230
  %v1312 = vpack.c.b16 %v1231, %v1231
  %v1313 = vpack.c.b16 %v1232, %v1232
  %v1314 = vpack.c.b16 %v1233, %v1233
  %v1315 = vpack.c.b16 %v1234, %v1234
  %v1316 = vpack.c.b16 %v1235, %v1235
  %v1317 = vpack.c.b16 %v1236, %v1236
  %v1318 = vpack.c.b16 %v1237, %v1237
  %v1319 = vpack.c.b16 %v1238, %v1238
  %v1320 = vpack.c.b16 %v1239, %v1239
  %v1321 = vpack.c.b16 %v1240, %v1240
  %v1322 = vpack.c.b16 %v1241, %v1241
  %vm1404 = vcmask 60416
  %1405 = vst.msk [vmem:[%s3] sm:$0xf] %vm1404, %v1242
  %1406 = vst.msk [vmem:[%s3 + $0x4] sm:$0xf] %vm1404, %v1243
  %1407 = vst.msk [vmem:[%s3 + $0x8] sm:$0xf] %vm1404, %v1244
  %1408 = vst.msk [vmem:[%s3 + $0xc] sm:$0xf] %vm1404, %v1245
  %1409 = vst.msk [vmem:[%s3 + $0x10] sm:$0xf] %vm1404, %v1246
  %1410 = vst.msk [vmem:[%s3 + $0x14] sm:$0xf] %vm1404, %v1247
  %1411 = vst.msk [vmem:[%s3 + $0x18] sm:$0xf] %vm1404, %v1248
  %1412 = vst.msk [vmem:[%s3 + $0x1c] sm:$0xf] %vm1404, %v1249
  %1413 = vst.msk [vmem:[%s3 + $0x20] sm:$0xf] %vm1404, %v1250
  %1414 = vst.msk [vmem:[%s3 + $0x24] sm:$0xf] %vm1404, %v1251
  %1415 = vst.msk [vmem:[%s3 + $0x28] sm:$0xf] %vm1404, %v1252
  %1416 = vst.msk [vmem:[%s3 + $0x2c] sm:$0xf] %vm1404, %v1253
  %1417 = vst.msk [vmem:[%s3 + $0x30] sm:$0xf] %vm1404, %v1254
  %1418 = vst.msk [vmem:[%s3 + $0x34] sm:$0xf] %vm1404, %v1255
  %1419 = vst.msk [vmem:[%s3 + $0x38] sm:$0xf] %vm1404, %v1256
  %1420 = vst.msk [vmem:[%s3 + $0x3c] sm:$0xf] %vm1404, %v1257
  %1421 = vst.msk [vmem:[%s3 + $0x40] sm:$0xf] %vm1404, %v1258
  %1422 = vst.msk [vmem:[%s3 + $0x44] sm:$0xf] %vm1404, %v1259
  %1423 = vst.msk [vmem:[%s3 + $0x48] sm:$0xf] %vm1404, %v1260
  %1424 = vst.msk [vmem:[%s3 + $0x4c] sm:$0xf] %vm1404, %v1261
  %1425 = vst.msk [vmem:[%s3 + $0x50] sm:$0xf] %vm1404, %v1262
  %1426 = vst.msk [vmem:[%s3 + $0x54] sm:$0xf] %vm1404, %v1263
  %1427 = vst.msk [vmem:[%s3 + $0x58] sm:$0xf] %vm1404, %v1264
  %1428 = vst.msk [vmem:[%s3 + $0x5c] sm:$0xf] %vm1404, %v1265
  %1429 = vst.msk [vmem:[%s3 + $0x60] sm:$0xf] %vm1404, %v1266
  %1430 = vst.msk [vmem:[%s3 + $0x64] sm:$0xf] %vm1404, %v1267
  %1431 = vst.msk [vmem:[%s3 + $0x68] sm:$0xf] %vm1404, %v1268
  %1432 = vst.msk [vmem:[%s3 + $0x6c] sm:$0xf] %vm1404, %v1269
  %1433 = vst.msk [vmem:[%s3 + $0x70] sm:$0xf] %vm1404, %v1270
  %1434 = vst.msk [vmem:[%s3 + $0x74] sm:$0xf] %vm1404, %v1271
  %1435 = vst.msk [vmem:[%s3 + $0x78] sm:$0xf] %vm1404, %v1272
  %1436 = vst.msk [vmem:[%s3 + $0x7c] sm:$0xf] %vm1404, %v1273
  %1437 = vst.msk [vmem:[%s3 + $0x80] sm:$0xf] %vm1404, %v1274
  %1438 = vst.msk [vmem:[%s3 + $0x84] sm:$0xf] %vm1404, %v1275
  %1439 = vst.msk [vmem:[%s3 + $0x88] sm:$0xf] %vm1404, %v1276
  %1440 = vst.msk [vmem:[%s3 + $0x8c] sm:$0xf] %vm1404, %v1277
  %1441 = vst.msk [vmem:[%s3 + $0x90] sm:$0xf] %vm1404, %v1278
  %1442 = vst.msk [vmem:[%s3 + $0x94] sm:$0xf] %vm1404, %v1279
  %1443 = vst.msk [vmem:[%s3 + $0x98] sm:$0xf] %vm1404, %v1280
  %1444 = vst.msk [vmem:[%s3 + $0x9c] sm:$0xf] %vm1404, %v1281
  %1445 = vst.msk [vmem:[%s3 + $0xa0] sm:$0xf] %vm1404, %v1282
  %1446 = vst.msk [vmem:[%s3 + $0xa4] sm:$0xf] %vm1404, %v1283
  %1447 = vst.msk [vmem:[%s3 + $0xa8] sm:$0xf] %vm1404, %v1284
  %1448 = vst.msk [vmem:[%s3 + $0xac] sm:$0xf] %vm1404, %v1285
  %1449 = vst.msk [vmem:[%s3 + $0xb0] sm:$0xf] %vm1404, %v1286
  %1450 = vst.msk [vmem:[%s3 + $0xb4] sm:$0xf] %vm1404, %v1287
  %1451 = vst.msk [vmem:[%s3 + $0xb8] sm:$0xf] %vm1404, %v1288
  %1452 = vst.msk [vmem:[%s3 + $0xbc] sm:$0xf] %vm1404, %v1289
  %1453 = vst.msk [vmem:[%s3 + $0xc0] sm:$0xf] %vm1404, %v1290
  %1454 = vst.msk [vmem:[%s3 + $0xc4] sm:$0xf] %vm1404, %v1291
  %1455 = vst.msk [vmem:[%s3 + $0xc8] sm:$0xf] %vm1404, %v1292
  %1456 = vst.msk [vmem:[%s3 + $0xcc] sm:$0xf] %vm1404, %v1293
  %1457 = vst.msk [vmem:[%s3 + $0xd0] sm:$0xf] %vm1404, %v1294
  %1458 = vst.msk [vmem:[%s3 + $0xd4] sm:$0xf] %vm1404, %v1295
  %1459 = vst.msk [vmem:[%s3 + $0xd8] sm:$0xf] %vm1404, %v1296
  %1460 = vst.msk [vmem:[%s3 + $0xdc] sm:$0xf] %vm1404, %v1297
  %1461 = vst.msk [vmem:[%s3 + $0xe0] sm:$0xf] %vm1404, %v1298
  %1462 = vst.msk [vmem:[%s3 + $0xe4] sm:$0xf] %vm1404, %v1299
  %1463 = vst.msk [vmem:[%s3 + $0xe8] sm:$0xf] %vm1404, %v1300
  %1464 = vst.msk [vmem:[%s3 + $0xec] sm:$0xf] %vm1404, %v1301
  %1465 = vst.msk [vmem:[%s3 + $0xf0] sm:$0xf] %vm1404, %v1302
  %1466 = vst.msk [vmem:[%s3 + $0xf4] sm:$0xf] %vm1404, %v1303
  %1467 = vst.msk [vmem:[%s3 + $0xf8] sm:$0xf] %vm1404, %v1304
  %1468 = vst.msk [vmem:[%s3 + $0xfc] sm:$0xf] %vm1404, %v1305
  %1469 = vst.msk [vmem:[%s3 + $0x100] sm:$0xf] %vm1404, %v1306
  %1470 = vst.msk [vmem:[%s3 + $0x104] sm:$0xf] %vm1404, %v1307
  %1471 = vst.msk [vmem:[%s3 + $0x108] sm:$0xf] %vm1404, %v1308
  %1472 = vst.msk [vmem:[%s3 + $0x10c] sm:$0xf] %vm1404, %v1309
  %1473 = vst.msk [vmem:[%s3 + $0x110] sm:$0xf] %vm1404, %v1310
  %1474 = vst.msk [vmem:[%s3 + $0x114] sm:$0xf] %vm1404, %v1311
  %1475 = vst.msk [vmem:[%s3 + $0x118] sm:$0xf] %vm1404, %v1312
  %1476 = vst.msk [vmem:[%s3 + $0x11c] sm:$0xf] %vm1404, %v1313
  %1477 = vst.msk [vmem:[%s3 + $0x120] sm:$0xf] %vm1404, %v1314
  %1478 = vst.msk [vmem:[%s3 + $0x124] sm:$0xf] %vm1404, %v1315
  %1479 = vst.msk [vmem:[%s3 + $0x128] sm:$0xf] %vm1404, %v1316
  %1480 = vst.msk [vmem:[%s3 + $0x12c] sm:$0xf] %vm1404, %v1317
  %1481 = vst.msk [vmem:[%s3 + $0x130] sm:$0xf] %vm1404, %v1318
  %1482 = vst.msk [vmem:[%s3 + $0x134] sm:$0xf] %vm1404, %v1319
  %1483 = vst.msk [vmem:[%s3 + $0x138] sm:$0xf] %vm1404, %v1320
  %1484 = vst.msk [vmem:[%s3 + $0x13c] sm:$0xf] %vm1404, %v1321
  %1485 = vst.msk [vmem:[%s3 + $0x140] sm:$0xf] %vm1404, %v1322
  // Predicated region
  $region14: #{convnet_forward.5} parent=0 // pred_check
    _
  $region15: #{convnet_forward.5} parent=0 // pred_check_branch
    %1487 = sbr.rel (0) target = $region17
  $region16: #{convnet_forward.5} parent=0 // pred_region
    _
  $region17: #{convnet_forward.5} parent=0 // pred_fallthru
    _
  // Predicated region
  $region18: #{convnet_forward.5} parent=0 // pred_check
    _
  $region19: #{convnet_forward.5} parent=0 // pred_check_branch
    %1489 = sbr.rel (0) target = $region21
  $region20: #{convnet_forward.5} parent=0 // pred_region
    _
  $region21: #{convnet_forward.5} parent=0 // pred_fallthru
    _

// kernel: convnet_forward.6
$region0: #{convnet_forward.6}
  #allocation0 [shape = 'u32[]', space=smem, size = 0x4, offset = 0x4, fixed_abs, tag = 'smem constant byte address 0x4 - core index']
  #allocation1 [shape = 'u32[144,128]{1,0:T(1,128)}', space=vmem, size = 0x12000, scoped, tag = 'internal scratch']
  %s0 = inlined_call_operand.vmem [shape: bf16[128,128], index: 0, kind: input, shape index: {}]
  %s1 = inlined_call_operand.vmem [shape: bf16[128,32], index: 1, kind: input, shape index: {}]
  %s2 = inlined_call_operand.vmem [shape: f32[1,32], index: 2, kind: input, shape index: {}]
  %s3 = inlined_call_operand.vmem [shape: bf16[128,32], index: 3, kind: output, shape index: {}]
  %s4 = sld [smem:[#allocation0]]
  $region22: #{convnet_forward.6} parent=0
    _
  %s6 = ssub.s32 1, %s4
  %s7 = scalar_select 0, %s6, %s4
  // Predicated region
  $region2: #{convnet_forward.6} parent=0 // pred_check
    _
  $region3: #{convnet_forward.6} parent=0 // pred_check_branch
    %9 = sbr.rel (0) target = $region5
  $region4: #{convnet_forward.6} parent=0 // pred_region
    _
  $region5: #{convnet_forward.6} parent=0 // pred_fallthru
    _
  // Predicated region
  $region6: #{convnet_forward.6} parent=0 // pred_check
    _
  $region7: #{convnet_forward.6} parent=0 // pred_check_branch
    %11 = sbr.rel (0) target = $region9
  $region8: #{convnet_forward.6} parent=0 // pred_region
    _
  $region9: #{convnet_forward.6} parent=0 // pred_fallthru
    _
  // Predicated region
  $region10: #{convnet_forward.6} parent=0 // pred_check
    _
  $region11: #{convnet_forward.6} parent=0 // pred_check_branch
    %13 = sbr.rel (0) target = $region13
  $region12: #{convnet_forward.6} parent=0 // pred_region
    _
  $region13: #{convnet_forward.6} parent=0 // pred_fallthru
    _
  %v15 = vld [vmem:[%s0] sm:$0xf]
  %v16 = vld [vmem:[%s0 + $0x4] sm:$0xf]
  %v17 = vld [vmem:[%s0 + $0x8] sm:$0xf]
  %v18 = vld [vmem:[%s0 + $0xc] sm:$0xf]
  %v19 = vld [vmem:[%s0 + $0x10] sm:$0xf]
  %v20 = vld [vmem:[%s0 + $0x14] sm:$0xf]
  %v21 = vld [vmem:[%s0 + $0x18] sm:$0xf]
  %v22 = vld [vmem:[%s0 + $0x1c] sm:$0xf]
  %v23 = vld [vmem:[%s0 + $0x20] sm:$0xf]
  %v24 = vld [vmem:[%s0 + $0x24] sm:$0xf]
  %v25 = vld [vmem:[%s0 + $0x28] sm:$0xf]
  %v26 = vld [vmem:[%s0 + $0x2c] sm:$0xf]
  %v27 = vld [vmem:[%s0 + $0x30] sm:$0xf]
  %v28 = vld [vmem:[%s0 + $0x34] sm:$0xf]
  %v29 = vld [vmem:[%s0 + $0x38] sm:$0xf]
  %v30 = vld [vmem:[%s0 + $0x3c] sm:$0xf]
  %v31 = vld [vmem:[%s1] sm:$0xf]
  %v32 = vld [vmem:[%s1 + $0x4] sm:$0xf]
  %v33 = vld [vmem:[%s1 + $0x8] sm:$0xf]
  %v34 = vld [vmem:[%s1 + $0xc] sm:$0xf]
  %v35 = vld [vmem:[%s1 + $0x10] sm:$0xf]
  %v36 = vld [vmem:[%s1 + $0x14] sm:$0xf]
  %v37 = vld [vmem:[%s1 + $0x18] sm:$0xf]
  %v38 = vld [vmem:[%s1 + $0x1c] sm:$0xf]
  %v39 = vld [vmem:[%s1 + $0x20] sm:$0xf]
  %v40 = vld [vmem:[%s1 + $0x24] sm:$0xf]
  %v41 = vld [vmem:[%s1 + $0x28] sm:$0xf]
  %v42 = vld [vmem:[%s1 + $0x2c] sm:$0xf]
  %v43 = vld [vmem:[%s1 + $0x30] sm:$0xf]
  %v44 = vld [vmem:[%s1 + $0x34] sm:$0xf]
  %v45 = vld [vmem:[%s1 + $0x38] sm:$0xf]
  %v46 = vld [vmem:[%s1 + $0x3c] sm:$0xf]
  %v47 = vld [vmem:[%s2] sm:$0x1]
  %v49 = vlaneseq
  %v50 = vshrl.u32 %v49, 7
  %v51 = vsub.s32 0, %v50
  %v52 = vrot.slane %v47, %v51
  %v70 = vunpack.c.l.b16 %v15
  %v71 = vunpack.c.l.b16 %v16
  %v72 = vunpack.c.l.b16 %v17
  %v73 = vunpack.c.l.b16 %v18
  %v74 = vunpack.c.l.b16 %v19
  %v75 = vunpack.c.l.b16 %v20
  %v76 = vunpack.c.l.b16 %v21
  %v77 = vunpack.c.l.b16 %v22
  %v78 = vunpack.c.l.b16 %v23
  %v79 = vunpack.c.l.b16 %v24
  %v80 = vunpack.c.l.b16 %v25
  %v81 = vunpack.c.l.b16 %v26
  %v82 = vunpack.c.l.b16 %v27
  %v83 = vunpack.c.l.b16 %v28
  %v84 = vunpack.c.l.b16 %v29
  %v85 = vunpack.c.l.b16 %v30
  %v86 = vpack.c.b16 %v71, %v70
  %v87 = vpack.c.b16 %v73, %v72
  %v88 = vpack.c.b16 %v75, %v74
  %v89 = vpack.c.b16 %v77, %v76
  %v90 = vpack.c.b16 %v79, %v78
  %v91 = vpack.c.b16 %v81, %v80
  %v92 = vpack.c.b16 %v83, %v82
  %v93 = vpack.c.b16 %v85, %v84
  %v118 = vunpack.c.l.b16 %v31
  %v119 = vunpack.c.l.b16 %v32
  %v120 = vunpack.c.l.b16 %v33
  %v121 = vunpack.c.l.b16 %v34
  %v122 = vunpack.c.l.b16 %v35
  %v123 = vunpack.c.l.b16 %v36
  %v124 = vunpack.c.l.b16 %v37
  %v125 = vunpack.c.l.b16 %v38
  %v126 = vunpack.c.l.b16 %v39
  %v127 = vunpack.c.l.b16 %v40
  %v128 = vunpack.c.l.b16 %v41
  %v129 = vunpack.c.l.b16 %v42
  %v130 = vunpack.c.l.b16 %v43
  %v131 = vunpack.c.l.b16 %v44
  %v132 = vunpack.c.l.b16 %v45
  %v133 = vunpack.c.l.b16 %v46
  %v134 = vpack.c.b16 %v119, %v118
  %v135 = vpack.c.b16 %v121, %v120
  %v136 = vpack.c.b16 %v123, %v122
  %v137 = vpack.c.b16 %v125, %v124
  %v138 = vpack.c.b16 %v127, %v126
  %v139 = vpack.c.b16 %v129, %v128
  %v140 = vpack.c.b16 %v131, %v130
  %v141 = vpack.c.b16 %v133, %v132
  %150 = vmatprep.subr.bf16.mxu0 0
  %151 = vmatpush1.bf16.msra.mxu0 %v134
  %152 = vmatprep.subr.bf16.mxu0 0
  %153 = vmatpush1.bf16.msra.mxu0 %v135
  %154 = vmatprep.subr.bf16.mxu0 0
  %155 = vmatpush1.bf16.msra.mxu0 %v136
  %156 = vmatprep.subr.bf16.mxu0 0
  %157 = vmatpush1.bf16.msra.mxu0 %v137
  %158 = vmatprep.subr.bf16.mxu0 0
  %159 = vmatpush1.bf16.msra.mxu0 %v138
  %160 = vmatprep.subr.bf16.mxu0 0
  %161 = vmatpush1.bf16.msra.mxu0 %v139
  %162 = vmatprep.subr.bf16.mxu0 0
  %163 = vmatpush1.bf16.msra.mxu0 %v140
  %164 = vmatprep.subr.bf16.mxu0 0
  %165 = vmatpush1.bf16.msra.mxu0 %v141
  %166 = vmatprep.subr.bf16.mxu0 0
  %167 = vmatpush1.bf16.msra.mxu0 0
  %168 = vmatprep.subr.bf16.mxu0 0
  %169 = vmatpush1.bf16.msra.mxu0 0
  %170 = vmatprep.subr.bf16.mxu0 0
  %171 = vmatpush1.bf16.msra.mxu0 0
  %172 = vmatprep.subr.bf16.mxu0 0
  %173 = vmatpush1.bf16.msra.mxu0 0
  %174 = vmatprep.subr.bf16.mxu0 0
  %175 = vmatpush1.bf16.msra.mxu0 0
  %176 = vmatprep.subr.bf16.mxu0 0
  %177 = vmatpush1.bf16.msra.mxu0 0
  %178 = vmatprep.subr.bf16.mxu0 0
  %179 = vmatpush1.bf16.msra.mxu0 0
  %180 = vmatprep.subr.bf16.mxu0 0
  %181 = vmatpush1.bf16.msra.mxu0 0
  %182 = vmatprep.mubr.bf16.mxu0 0
  %183 = vmatmul.mubr.bf16.gmra.mrb[0].mxu0 %v86
  %v184 = vpop.f32.mrb[0].mxu0
  %v185 = vadd.f32 %v52, %v184
  %v186 = vpop.f32.mrb[0].mxu0
  %v187 = vpop.f32.mrb[0].mxu0
  %v188 = vadd.f32 %v52, %v187
  %v189 = vpop.f32.mrb[0].mxu0
  %190 = vmatprep.mubr.bf16.mxu0 0
  %191 = vmatmul.mubr.bf16.gmra.mrb[0].mxu0 %v87
  %v192 = vpop.f32.mrb[0].mxu0
  %v193 = vadd.f32 %v52, %v192
  %v194 = vpop.f32.mrb[0].mxu0
  %v195 = vpop.f32.mrb[0].mxu0
  %v196 = vadd.f32 %v52, %v195
  %v197 = vpop.f32.mrb[0].mxu0
  %198 = vmatprep.mubr.bf16.mxu0 0
  %199 = vmatmul.mubr.bf16.gmra.mrb[0].mxu0 %v88
  %v200 = vpop.f32.mrb[0].mxu0
  %v201 = vadd.f32 %v52, %v200
  %v202 = vpop.f32.mrb[0].mxu0
  %v203 = vpop.f32.mrb[0].mxu0
  %v204 = vadd.f32 %v52, %v203
  %v205 = vpop.f32.mrb[0].mxu0
  %206 = vmatprep.mubr.bf16.mxu0 0
  %207 = vmatmul.mubr.bf16.gmra.mrb[0].mxu0 %v89
  %v208 = vpop.f32.mrb[0].mxu0
  %v209 = vadd.f32 %v52, %v208
  %v210 = vpop.f32.mrb[0].mxu0
  %v211 = vpop.f32.mrb[0].mxu0
  %v212 = vadd.f32 %v52, %v211
  %v213 = vpop.f32.mrb[0].mxu0
  %214 = vmatprep.mubr.bf16.mxu0 0
  %215 = vmatmul.mubr.bf16.gmra.mrb[0].mxu0 %v90
  %v216 = vpop.f32.mrb[0].mxu0
  %v217 = vadd.f32 %v52, %v216
  %v218 = vpop.f32.mrb[0].mxu0
  %v219 = vpop.f32.mrb[0].mxu0
  %v220 = vadd.f32 %v52, %v219
  %v221 = vpop.f32.mrb[0].mxu0
  %222 = vmatprep.mubr.bf16.mxu0 0
  %223 = vmatmul.mubr.bf16.gmra.mrb[0].mxu0 %v91
  %v224 = vpop.f32.mrb[0].mxu0
  %v225 = vadd.f32 %v52, %v224
  %v226 = vpop.f32.mrb[0].mxu0
  %v227 = vpop.f32.mrb[0].mxu0
  %v228 = vadd.f32 %v52, %v227
  %v229 = vpop.f32.mrb[0].mxu0
  %230 = vmatprep.mubr.bf16.mxu0 0
  %231 = vmatmul.mubr.bf16.gmra.mrb[0].mxu0 %v92
  %v232 = vpop.f32.mrb[0].mxu0
  %v233 = vadd.f32 %v52, %v232
  %v234 = vpop.f32.mrb[0].mxu0
  %v235 = vpop.f32.mrb[0].mxu0
  %v236 = vadd.f32 %v52, %v235
  %v237 = vpop.f32.mrb[0].mxu0
  %238 = vmatprep.mubr.bf16.mxu0 0
  %239 = vmatmul.mubr.bf16.gmra.mrb[0].mxu0 %v93
  %v240 = vpop.f32.mrb[0].mxu0
  %v241 = vadd.f32 %v52, %v240
  %v242 = vpop.f32.mrb[0].mxu0
  %v243 = vpop.f32.mrb[0].mxu0
  %v244 = vadd.f32 %v52, %v243
  %v245 = vpop.f32.mrb[0].mxu0
  %246 = vdwg.mxu0
  %v247 = vmax.f32 %v185, 0.0
  %v248 = vmax.f32 %v188, 0.0
  %v249 = vmax.f32 %v193, 0.0
  %v250 = vmax.f32 %v196, 0.0
  %v251 = vmax.f32 %v201, 0.0
  %v252 = vmax.f32 %v204, 0.0
  %v253 = vmax.f32 %v209, 0.0
  %v254 = vmax.f32 %v212, 0.0
  %v255 = vmax.f32 %v217, 0.0
  %v256 = vmax.f32 %v220, 0.0
  %v257 = vmax.f32 %v225, 0.0
  %v258 = vmax.f32 %v228, 0.0
  %v259 = vmax.f32 %v233, 0.0
  %v260 = vmax.f32 %v236, 0.0
  %v261 = vmax.f32 %v241, 0.0
  %v262 = vmax.f32 %v244, 0.0
  %v263 = vpack.c.bf16 %v248, %v247
  %v264 = vpack.c.bf16 %v250, %v249
  %v265 = vpack.c.bf16 %v252, %v251
  %v266 = vpack.c.bf16 %v254, %v253
  %v267 = vpack.c.bf16 %v256, %v255
  %v268 = vpack.c.bf16 %v258, %v257
  %v269 = vpack.c.bf16 %v260, %v259
  %v270 = vpack.c.bf16 %v262, %v261
  %v279 = vunpack.c.l.b16 %v263
  %v280 = vunpack.c.h.b16 %v263
  %v281 = vunpack.c.l.b16 %v264
  %v282 = vunpack.c.h.b16 %v264
  %v283 = vunpack.c.l.b16 %v265
  %v284 = vunpack.c.h.b16 %v265
  %v285 = vunpack.c.l.b16 %v266
  %v286 = vunpack.c.h.b16 %v266
  %v287 = vunpack.c.l.b16 %v267
  %v288 = vunpack.c.h.b16 %v267
  %v289 = vunpack.c.l.b16 %v268
  %v290 = vunpack.c.h.b16 %v268
  %v291 = vunpack.c.l.b16 %v269
  %v292 = vunpack.c.h.b16 %v269
  %v293 = vunpack.c.l.b16 %v270
  %v294 = vunpack.c.h.b16 %v270
  %v295 = vpack.c.b16 %v279, %v279
  %v296 = vpack.c.b16 %v280, %v280
  %v297 = vpack.c.b16 %v281, %v281
  %v298 = vpack.c.b16 %v282, %v282
  %v299 = vpack.c.b16 %v283, %v283
  %v300 = vpack.c.b16 %v284, %v284
  %v301 = vpack.c.b16 %v285, %v285
  %v302 = vpack.c.b16 %v286, %v286
  %v303 = vpack.c.b16 %v287, %v287
  %v304 = vpack.c.b16 %v288, %v288
  %v305 = vpack.c.b16 %v289, %v289
  %v306 = vpack.c.b16 %v290, %v290
  %v307 = vpack.c.b16 %v291, %v291
  %v308 = vpack.c.b16 %v292, %v292
  %v309 = vpack.c.b16 %v293, %v293
  %v310 = vpack.c.b16 %v294, %v294
  %vm327 = vcmask 257024
  %328 = vst.msk [vmem:[%s3] sm:$0xf] %vm327, %v295
  %329 = vst.msk [vmem:[%s3 + $0x4] sm:$0xf] %vm327, %v296
  %330 = vst.msk [vmem:[%s3 + $0x8] sm:$0xf] %vm327, %v297
  %331 = vst.msk [vmem:[%s3 + $0xc] sm:$0xf] %vm327, %v298
  %332 = vst.msk [vmem:[%s3 + $0x10] sm:$0xf] %vm327, %v299
  %333 = vst.msk [vmem:[%s3 + $0x14] sm:$0xf] %vm327, %v300
  %334 = vst.msk [vmem:[%s3 + $0x18] sm:$0xf] %vm327, %v301
  %335 = vst.msk [vmem:[%s3 + $0x1c] sm:$0xf] %vm327, %v302
  %336 = vst.msk [vmem:[%s3 + $0x20] sm:$0xf] %vm327, %v303
  %337 = vst.msk [vmem:[%s3 + $0x24] sm:$0xf] %vm327, %v304
  %338 = vst.msk [vmem:[%s3 + $0x28] sm:$0xf] %vm327, %v305
  %339 = vst.msk [vmem:[%s3 + $0x2c] sm:$0xf] %vm327, %v306
  %340 = vst.msk [vmem:[%s3 + $0x30] sm:$0xf] %vm327, %v307
  %341 = vst.msk [vmem:[%s3 + $0x34] sm:$0xf] %vm327, %v308
  %342 = vst.msk [vmem:[%s3 + $0x38] sm:$0xf] %vm327, %v309
  %343 = vst.msk [vmem:[%s3 + $0x3c] sm:$0xf] %vm327, %v310
  // Predicated region
  $region14: #{convnet_forward.6} parent=0 // pred_check
    _
  $region15: #{convnet_forward.6} parent=0 // pred_check_branch
    %345 = sbr.rel (0) target = $region17
  $region16: #{convnet_forward.6} parent=0 // pred_region
    _
  $region17: #{convnet_forward.6} parent=0 // pred_fallthru
    _
  // Predicated region
  $region18: #{convnet_forward.6} parent=0 // pred_check
    _
  $region19: #{convnet_forward.6} parent=0 // pred_check_branch
    %347 = sbr.rel (0) target = $region21
  $region20: #{convnet_forward.6} parent=0 // pred_region
    _
  $region21: #{convnet_forward.6} parent=0 // pred_fallthru
    _

// kernel: convnet_forward.7
$region0: #{convnet_forward.7}
  #allocation0 [shape = 'u32[]', space=smem, size = 0x4, offset = 0x4, fixed_abs, tag = 'smem constant byte address 0x4 - core index']
  #allocation1 [shape = 'u32[144,128]{1,0:T(1,128)}', space=vmem, size = 0x12000, scoped, tag = 'internal scratch']
  %s0 = inlined_call_operand.vmem [shape: bf16[50,512], index: 0, kind: input, shape index: {}]
  %s1 = inlined_call_operand.vmem [shape: bf16[512,64], index: 1, kind: input, shape index: {}]
  %s2 = inlined_call_operand.vmem [shape: f32[1,64], index: 2, kind: input, shape index: {}]
  %s3 = inlined_call_operand.vmem [shape: bf16[50,64], index: 3, kind: output, shape index: {}]
  %s4 = sld [smem:[#allocation0]]
  $region22: #{convnet_forward.7} parent=0
    _
  %s6 = ssub.s32 1, %s4
  %s7 = scalar_select 0, %s6, %s4
  // Predicated region
  $region2: #{convnet_forward.7} parent=0 // pred_check
    _
  $region3: #{convnet_forward.7} parent=0 // pred_check_branch
    %9 = sbr.rel (0) target = $region5
  $region4: #{convnet_forward.7} parent=0 // pred_region
    _
  $region5: #{convnet_forward.7} parent=0 // pred_fallthru
    _
  // Predicated region
  $region6: #{convnet_forward.7} parent=0 // pred_check
    _
  $region7: #{convnet_forward.7} parent=0 // pred_check_branch
    %11 = sbr.rel (0) target = $region9
  $region8: #{convnet_forward.7} parent=0 // pred_region
    _
  $region9: #{convnet_forward.7} parent=0 // pred_fallthru
    _
  // Predicated region
  $region10: #{convnet_forward.7} parent=0 // pred_check
    _
  $region11: #{convnet_forward.7} parent=0 // pred_check_branch
    %13 = sbr.rel (0) target = $region13
  $region12: #{convnet_forward.7} parent=0 // pred_region
    _
  $region13: #{convnet_forward.7} parent=0 // pred_fallthru
    _
  %v15 = vld [vmem:[%s0] sm:$0xff]
  %v16 = vld [vmem:[%s0 + $0x8] sm:$0xff]
  %v17 = vld [vmem:[%s0 + $0x10] sm:$0xff]
  %v18 = vld [vmem:[%s0 + $0x18] sm:$0xff]
  %v19 = vld [vmem:[%s0 + $0x20] sm:$0xff]
  %v20 = vld [vmem:[%s0 + $0x28] sm:$0xff]
  %v21 = vld [vmem:[%s0 + $0x30] sm:$0xff]
  %v22 = vld [vmem:[%s0 + $0x38] sm:$0xff]
  %v23 = vld [vmem:[%s0 + $0x40] sm:$0xff]
  %v24 = vld [vmem:[%s0 + $0x48] sm:$0xff]
  %v25 = vld [vmem:[%s0 + $0x50] sm:$0xff]
  %v26 = vld [vmem:[%s0 + $0x58] sm:$0xff]
  %v27 = vld [vmem:[%s0 + $0x60] sm:$0x11]
  %v28 = vld [vmem:[%s0 + $0x68] sm:$0x11]
  %v29 = vld [vmem:[%s1] sm:$0xf]
  %v30 = vld [vmem:[%s1 + $0x4] sm:$0xf]
  %v31 = vld [vmem:[%s1 + $0x8] sm:$0xf]
  %v32 = vld [vmem:[%s1 + $0xc] sm:$0xf]
  %v33 = vld [vmem:[%s1 + $0x10] sm:$0xf]
  %v34 = vld [vmem:[%s1 + $0x14] sm:$0xf]
  %v35 = vld [vmem:[%s1 + $0x18] sm:$0xf]
  %v36 = vld [vmem:[%s1 + $0x1c] sm:$0xf]
  %v37 = vld [vmem:[%s1 + $0x20] sm:$0xf]
  %v38 = vld [vmem:[%s1 + $0x24] sm:$0xf]
  %v39 = vld [vmem:[%s1 + $0x28] sm:$0xf]
  %v40 = vld [vmem:[%s1 + $0x2c] sm:$0xf]
  %v41 = vld [vmem:[%s1 + $0x30] sm:$0xf]
  %v42 = vld [vmem:[%s1 + $0x34] sm:$0xf]
  %v43 = vld [vmem:[%s1 + $0x38] sm:$0xf]
  %v44 = vld [vmem:[%s1 + $0x3c] sm:$0xf]
  %v45 = vld [vmem:[%s1 + $0x40] sm:$0xf]
  %v46 = vld [vmem:[%s1 + $0x44] sm:$0xf]
  %v47 = vld [vmem:[%s1 + $0x48] sm:$0xf]
  %v48 = vld [vmem:[%s1 + $0x4c] sm:$0xf]
  %v49 = vld [vmem:[%s1 + $0x50] sm:$0xf]
  %v50 = vld [vmem:[%s1 + $0x54] sm:$0xf]
  %v51 = vld [vmem:[%s1 + $0x58] sm:$0xf]
  %v52 = vld [vmem:[%s1 + $0x5c] sm:$0xf]
  %v53 = vld [vmem:[%s1 + $0x60] sm:$0xf]
  %v54 = vld [vmem:[%s1 + $0x64] sm:$0xf]
  %v55 = vld [vmem:[%s1 + $0x68] sm:$0xf]
  %v56 = vld [vmem:[%s1 + $0x6c] sm:$0xf]
  %v57 = vld [vmem:[%s1 + $0x70] sm:$0xf]
  %v58 = vld [vmem:[%s1 + $0x74] sm:$0xf]
  %v59 = vld [vmem:[%s1 + $0x78] sm:$0xf]
  %v60 = vld [vmem:[%s1 + $0x7c] sm:$0xf]
  %v61 = vld [vmem:[%s1 + $0x80] sm:$0xf]
  %v62 = vld [vmem:[%s1 + $0x84] sm:$0xf]
  %v63 = vld [vmem:[%s1 + $0x88] sm:$0xf]
  %v64 = vld [vmem:[%s1 + $0x8c] sm:$0xf]
  %v65 = vld [vmem:[%s1 + $0x90] sm:$0xf]
  %v66 = vld [vmem:[%s1 + $0x94] sm:$0xf]
  %v67 = vld [vmem:[%s1 + $0x98] sm:$0xf]
  %v68 = vld [vmem:[%s1 + $0x9c] sm:$0xf]
  %v69 = vld [vmem:[%s1 + $0xa0] sm:$0xf]
  %v70 = vld [vmem:[%s1 + $0xa4] sm:$0xf]
  %v71 = vld [vmem:[%s1 + $0xa8] sm:$0xf]
  %v72 = vld [vmem:[%s1 + $0xac] sm:$0xf]
  %v73 = vld [vmem:[%s1 + $0xb0] sm:$0xf]
  %v74 = vld [vmem:[%s1 + $0xb4] sm:$0xf]
  %v75 = vld [vmem:[%s1 + $0xb8] sm:$0xf]
  %v76 = vld [vmem:[%s1 + $0xbc] sm:$0xf]
  %v77 = vld [vmem:[%s1 + $0xc0] sm:$0xf]
  %v78 = vld [vmem:[%s1 + $0xc4] sm:$0xf]
  %v79 = vld [vmem:[%s1 + $0xc8] sm:$0xf]
  %v80 = vld [vmem:[%s1 + $0xcc] sm:$0xf]
  %v81 = vld [vmem:[%s1 + $0xd0] sm:$0xf]
  %v82 = vld [vmem:[%s1 + $0xd4] sm:$0xf]
  %v83 = vld [vmem:[%s1 + $0xd8] sm:$0xf]
  %v84 = vld [vmem:[%s1 + $0xdc] sm:$0xf]
  %v85 = vld [vmem:[%s1 + $0xe0] sm:$0xf]
  %v86 = vld [vmem:[%s1 + $0xe4] sm:$0xf]
  %v87 = vld [vmem:[%s1 + $0xe8] sm:$0xf]
  %v88 = vld [vmem:[%s1 + $0xec] sm:$0xf]
  %v89 = vld [vmem:[%s1 + $0xf0] sm:$0xf]
  %v90 = vld [vmem:[%s1 + $0xf4] sm:$0xf]
  %v91 = vld [vmem:[%s1 + $0xf8] sm:$0xf]
  %v92 = vld [vmem:[%s1 + $0xfc] sm:$0xf]
  %v93 = vld [vmem:[%s2] sm:$0x1]
  %v95 = vlaneseq
  %v96 = vshrl.u32 %v95, 7
  %v97 = vsub.s32 0, %v96
  %v98 = vrot.slane %v93, %v97
  %v114 = vunpack.c.l.b16 %v15
  %v115 = vunpack.c.h.b16 %v15
  %v116 = vunpack.c.l.b16 %v16
  %v117 = vunpack.c.h.b16 %v16
  %v118 = vunpack.c.l.b16 %v17
  %v119 = vunpack.c.h.b16 %v17
  %v120 = vunpack.c.l.b16 %v18
  %v121 = vunpack.c.h.b16 %v18
  %v122 = vunpack.c.l.b16 %v19
  %v123 = vunpack.c.h.b16 %v19
  %v124 = vunpack.c.l.b16 %v20
  %v125 = vunpack.c.h.b16 %v20
  %v126 = vunpack.c.l.b16 %v21
  %v127 = vunpack.c.h.b16 %v21
  %v128 = vunpack.c.l.b16 %v22
  %v129 = vunpack.c.h.b16 %v22
  %v130 = vunpack.c.l.b16 %v23
  %v131 = vunpack.c.h.b16 %v23
  %v132 = vunpack.c.l.b16 %v24
  %v133 = vunpack.c.h.b16 %v24
  %v134 = vunpack.c.l.b16 %v25
  %v135 = vunpack.c.h.b16 %v25
  %v136 = vunpack.c.l.b16 %v26
  %v137 = vunpack.c.h.b16 %v26
  %v138 = vunpack.c.l.b16 %v27
  %v139 = vunpack.c.h.b16 %v27
  %v140 = vunpack.c.l.b16 %v28
  %v141 = vunpack.c.h.b16 %v28
  %v142 = vpack.c.b16 %v118, %v114
  %v143 = vpack.c.b16 %v119, %v115
  %v144 = vpack.c.b16 %v120, %v116
  %v145 = vpack.c.b16 %v121, %v117
  %v146 = vpack.c.b16 %v126, %v122
  %v147 = vpack.c.b16 %v127, %v123
  %v148 = vpack.c.b16 %v128, %v124
  %v149 = vpack.c.b16 %v129, %v125
  %v150 = vpack.c.b16 %v134, %v130
  %v151 = vpack.c.b16 %v135, %v131
  %v152 = vpack.c.b16 %v136, %v132
  %v153 = vpack.c.b16 %v137, %v133
  %v154 = vpack.c.b16 %v138, %v138
  %v155 = vpack.c.b16 %v139, %v139
  %v156 = vpack.c.b16 %v140, %v140
  %v157 = vpack.c.b16 %v141, %v141
  %v238 = vunpack.c.l.b16 %v29
  %v239 = vunpack.c.l.b16 %v30
  %v240 = vunpack.c.l.b16 %v31
  %v241 = vunpack.c.l.b16 %v32
  %v242 = vunpack.c.l.b16 %v33
  %v243 = vunpack.c.l.b16 %v34
  %v244 = vunpack.c.l.b16 %v35
  %v245 = vunpack.c.l.b16 %v36
  %v246 = vunpack.c.l.b16 %v37
  %v247 = vunpack.c.l.b16 %v38
  %v248 = vunpack.c.l.b16 %v39
  %v249 = vunpack.c.l.b16 %v40
  %v250 = vunpack.c.l.b16 %v41
  %v251 = vunpack.c.l.b16 %v42
  %v252 = vunpack.c.l.b16 %v43
  %v253 = vunpack.c.l.b16 %v44
  %v254 = vunpack.c.l.b16 %v45
  %v255 = vunpack.c.l.b16 %v46
  %v256 = vunpack.c.l.b16 %v47
  %v257 = vunpack.c.l.b16 %v48
  %v258 = vunpack.c.l.b16 %v49
  %v259 = vunpack.c.l.b16 %v50
  %v260 = vunpack.c.l.b16 %v51
  %v261 = vunpack.c.l.b16 %v52
  %v262 = vunpack.c.l.b16 %v53
  %v263 = vunpack.c.l.b16 %v54
  %v264 = vunpack.c.l.b16 %v55
  %v265 = vunpack.c.l.b16 %v56
  %v266 = vunpack.c.l.b16 %v57
  %v267 = vunpack.c.l.b16 %v58
  %v268 = vunpack.c.l.b16 %v59
  %v269 = vunpack.c.l.b16 %v60
  %v270 = vunpack.c.l.b16 %v61
  %v271 = vunpack.c.l.b16 %v62
  %v272 = vunpack.c.l.b16 %v63
  %v273 = vunpack.c.l.b16 %v64
  %v274 = vunpack.c.l.b16 %v65
  %v275 = vunpack.c.l.b16 %v66
  %v276 = vunpack.c.l.b16 %v67
  %v277 = vunpack.c.l.b16 %v68
  %v278 = vunpack.c.l.b16 %v69
  %v279 = vunpack.c.l.b16 %v70
  %v280 = vunpack.c.l.b16 %v71
  %v281 = vunpack.c.l.b16 %v72
  %v282 = vunpack.c.l.b16 %v73
  %v283 = vunpack.c.l.b16 %v74
  %v284 = vunpack.c.l.b16 %v75
  %v285 = vunpack.c.l.b16 %v76
  %v286 = vunpack.c.l.b16 %v77
  %v287 = vunpack.c.l.b16 %v78
  %v288 = vunpack.c.l.b16 %v79
  %v289 = vunpack.c.l.b16 %v80
  %v290 = vunpack.c.l.b16 %v81
  %v291 = vunpack.c.l.b16 %v82
  %v292 = vunpack.c.l.b16 %v83
  %v293 = vunpack.c.l.b16 %v84
  %v294 = vunpack.c.l.b16 %v85
  %v295 = vunpack.c.l.b16 %v86
  %v296 = vunpack.c.l.b16 %v87
  %v297 = vunpack.c.l.b16 %v88
  %v298 = vunpack.c.l.b16 %v89
  %v299 = vunpack.c.l.b16 %v90
  %v300 = vunpack.c.l.b16 %v91
  %v301 = vunpack.c.l.b16 %v92
  %v302 = vpack.c.b16 %v239, %v238
  %v303 = vpack.c.b16 %v241, %v240
  %v304 = vpack.c.b16 %v243, %v242
  %v305 = vpack.c.b16 %v245, %v244
  %v306 = vpack.c.b16 %v247, %v246
  %v307 = vpack.c.b16 %v249, %v248
  %v308 = vpack.c.b16 %v251, %v250
  %v309 = vpack.c.b16 %v253, %v252
  %v310 = vpack.c.b16 %v255, %v254
  %v311 = vpack.c.b16 %v257, %v256
  %v312 = vpack.c.b16 %v259, %v258
  %v313 = vpack.c.b16 %v261, %v260
  %v314 = vpack.c.b16 %v263, %v262
  %v315 = vpack.c.b16 %v265, %v264
  %v316 = vpack.c.b16 %v267, %v266
  %v317 = vpack.c.b16 %v269, %v268
  %v318 = vpack.c.b16 %v271, %v270
  %v319 = vpack.c.b16 %v273, %v272
  %v320 = vpack.c.b16 %v275, %v274
  %v321 = vpack.c.b16 %v277, %v276
  %v322 = vpack.c.b16 %v279, %v278
  %v323 = vpack.c.b16 %v281, %v280
  %v324 = vpack.c.b16 %v283, %v282
  %v325 = vpack.c.b16 %v285, %v284
  %v326 = vpack.c.b16 %v287, %v286
  %v327 = vpack.c.b16 %v289, %v288
  %v328 = vpack.c.b16 %v291, %v290
  %v329 = vpack.c.b16 %v293, %v292
  %v330 = vpack.c.b16 %v295, %v294
  %v331 = vpack.c.b16 %v297, %v296
  %v332 = vpack.c.b16 %v299, %v298
  %v333 = vpack.c.b16 %v301, %v300
  %366 = vmatprep.subr.bf16.mxu0 0
  %367 = vmatpush1.bf16.msra.mxu0 %v302
  %368 = vmatprep.subr.bf16.mxu0 0
  %369 = vmatpush1.bf16.msra.mxu0 %v303
  %370 = vmatprep.subr.bf16.mxu0 0
  %371 = vmatpush1.bf16.msra.mxu0 %v304
  %372 = vmatprep.subr.bf16.mxu0 0
  %373 = vmatpush1.bf16.msra.mxu0 %v305
  %374 = vmatprep.subr.bf16.mxu0 0
  %375 = vmatpush1.bf16.msra.mxu0 %v306
  %376 = vmatprep.subr.bf16.mxu0 0
  %377 = vmatpush1.bf16.msra.mxu0 %v307
  %378 = vmatprep.subr.bf16.mxu0 0
  %379 = vmatpush1.bf16.msra.mxu0 %v308
  %380 = vmatprep.subr.bf16.mxu0 0
  %381 = vmatpush1.bf16.msra.mxu0 %v309
  %382 = vmatprep.subr.bf16.mxu0 0
  %383 = vmatpush1.bf16.msra.mxu0 %v310
  %384 = vmatprep.subr.bf16.mxu0 0
  %385 = vmatpush1.bf16.msra.mxu0 %v311
  %386 = vmatprep.subr.bf16.mxu0 0
  %387 = vmatpush1.bf16.msra.mxu0 %v312
  %388 = vmatprep.subr.bf16.mxu0 0
  %389 = vmatpush1.bf16.msra.mxu0 %v313
  %390 = vmatprep.subr.bf16.mxu0 0
  %391 = vmatpush1.bf16.msra.mxu0 %v314
  %392 = vmatprep.subr.bf16.mxu0 0
  %393 = vmatpush1.bf16.msra.mxu0 %v315
  %394 = vmatprep.subr.bf16.mxu0 0
  %395 = vmatpush1.bf16.msra.mxu0 %v316
  %396 = vmatprep.subr.bf16.mxu0 0
  %397 = vmatpush1.bf16.msra.mxu0 %v317
  %398 = vmatprep.mubr.bf16.mxu0 %v143
  %399 = vmatmul.mubr.bf16.gmra.mrb[0].mxu0 %v142
  %v400 = vpop.f32.mrb[0].mxu0
  %v401 = vadd.f32 %v98, %v400
  %v402 = vpop.f32.mrb[0].mxu0
  %v403 = vpop.f32.mrb[0].mxu0
  %v404 = vadd.f32 %v98, %v403
  %v405 = vpop.f32.mrb[0].mxu0
  %406 = vmatprep.mubr.bf16.mxu0 %v147
  %407 = vmatmul.mubr.bf16.gmra.mrb[0].mxu0 %v146
  %v408 = vpop.f32.mrb[0].mxu0
  %v409 = vadd.f32 %v98, %v408
  %v410 = vpop.f32.mrb[0].mxu0
  %v411 = vpop.f32.mrb[0].mxu0
  %v412 = vadd.f32 %v98, %v411
  %v413 = vpop.f32.mrb[0].mxu0
  %414 = vmatprep.mubr.bf16.mxu0 %v151
  %415 = vmatmul.mubr.bf16.gmra.mrb[0].mxu0 %v150
  %v416 = vpop.f32.mrb[0].mxu0
  %v417 = vadd.f32 %v98, %v416
  %v418 = vpop.f32.mrb[0].mxu0
  %v419 = vpop.f32.mrb[0].mxu0
  %v420 = vadd.f32 %v98, %v419
  %v421 = vpop.f32.mrb[0].mxu0
  %422 = vmatprep.mubr.bf16.mxu0 %v155
  %423 = vmatmul.mubr.bf16.gmra.mrb[0].mxu0 %v154
  %v424 = vpop.f32.mrb[0].mxu0
  %v425 = vadd.f32 %v98, %v424
  %v426 = vpop.f32.mrb[0].mxu0
  %v427 = vpop.f32.mrb[0].mxu0
  %v428 = vpop.f32.mrb[0].mxu0
  %429 = vdwg.mxu0
  %430 = vmatprep.subr.bf16.mxu0 0
  %431 = vmatpush1.bf16.msra.mxu0 %v318
  %432 = vmatprep.subr.bf16.mxu0 0
  %433 = vmatpush1.bf16.msra.mxu0 %v319
  %434 = vmatprep.subr.bf16.mxu0 0
  %435 = vmatpush1.bf16.msra.mxu0 %v320
  %436 = vmatprep.subr.bf16.mxu0 0
  %437 = vmatpush1.bf16.msra.mxu0 %v321
  %438 = vmatprep.subr.bf16.mxu0 0
  %439 = vmatpush1.bf16.msra.mxu0 %v322
  %440 = vmatprep.subr.bf16.mxu0 0
  %441 = vmatpush1.bf16.msra.mxu0 %v323
  %442 = vmatprep.subr.bf16.mxu0 0
  %443 = vmatpush1.bf16.msra.mxu0 %v324
  %444 = vmatprep.subr.bf16.mxu0 0
  %445 = vmatpush1.bf16.msra.mxu0 %v325
  %446 = vmatprep.subr.bf16.mxu0 0
  %447 = vmatpush1.bf16.msra.mxu0 %v326
  %448 = vmatprep.subr.bf16.mxu0 0
  %449 = vmatpush1.bf16.msra.mxu0 %v327
  %450 = vmatprep.subr.bf16.mxu0 0
  %451 = vmatpush1.bf16.msra.mxu0 %v328
  %452 = vmatprep.subr.bf16.mxu0 0
  %453 = vmatpush1.bf16.msra.mxu0 %v329
  %454 = vmatprep.subr.bf16.mxu0 0
  %455 = vmatpush1.bf16.msra.mxu0 %v330
  %456 = vmatprep.subr.bf16.mxu0 0
  %457 = vmatpush1.bf16.msra.mxu0 %v331
  %458 = vmatprep.subr.bf16.mxu0 0
  %459 = vmatpush1.bf16.msra.mxu0 %v332
  %460 = vmatprep.subr.bf16.mxu0 0
  %461 = vmatpush1.bf16.msra.mxu0 %v333
  %462 = vmatprep.mubr.bf16.mxu0 %v145
  %463 = vmatmul.mubr.bf16.gmra.mrb[0].mxu0 %v144
  %v464 = vpop.f32.mrb[0].mxu0
  %v465 = vadd.f32 %v401, %v464
  %v466 = vpop.f32.mrb[0].mxu0
  %v467 = vpop.f32.mrb[0].mxu0
  %v468 = vadd.f32 %v404, %v467
  %v469 = vpop.f32.mrb[0].mxu0
  %470 = vmatprep.mubr.bf16.mxu0 %v149
  %471 = vmatmul.mubr.bf16.gmra.mrb[0].mxu0 %v148
  %v472 = vpop.f32.mrb[0].mxu0
  %v473 = vadd.f32 %v409, %v472
  %v474 = vpop.f32.mrb[0].mxu0
  %v475 = vpop.f32.mrb[0].mxu0
  %v476 = vadd.f32 %v412, %v475
  %v477 = vpop.f32.mrb[0].mxu0
  %478 = vmatprep.mubr.bf16.mxu0 %v153
  %479 = vmatmul.mubr.bf16.gmra.mrb[0].mxu0 %v152
  %v480 = vpop.f32.mrb[0].mxu0
  %v481 = vadd.f32 %v417, %v480
  %v482 = vpop.f32.mrb[0].mxu0
  %v483 = vpop.f32.mrb[0].mxu0
  %v484 = vadd.f32 %v420, %v483
  %v485 = vpop.f32.mrb[0].mxu0
  %486 = vmatprep.mubr.bf16.mxu0 %v157
  %487 = vmatmul.mubr.bf16.gmra.mrb[0].mxu0 %v156
  %v488 = vpop.f32.mrb[0].mxu0
  %v489 = vadd.f32 %v425, %v488
  %v490 = vpop.f32.mrb[0].mxu0
  %v491 = vpop.f32.mrb[0].mxu0
  %v492 = vpop.f32.mrb[0].mxu0
  %493 = vdwg.mxu0
  %v494 = vmax.f32 %v465, 0.0
  %v495 = vmax.f32 %v468, 0.0
  %v496 = vmax.f32 %v473, 0.0
  %v497 = vmax.f32 %v476, 0.0
  %v498 = vmax.f32 %v481, 0.0
  %v499 = vmax.f32 %v484, 0.0
  %v500 = vmax.f32 %v489, 0.0
  %v501 = vpack.c.bf16 %v495, %v494
  %v502 = vpack.c.bf16 %v497, %v496
  %v503 = vpack.c.bf16 %v499, %v498
  %v504 = vpack.c.bf16 %v500, %v500
  %v509 = vunpack.c.l.b16 %v501
  %v510 = vunpack.c.h.b16 %v501
  %v511 = vunpack.c.l.b16 %v502
  %v512 = vunpack.c.h.b16 %v502
  %v513 = vunpack.c.l.b16 %v503
  %v514 = vunpack.c.h.b16 %v503
  %v515 = vunpack.c.l.b16 %v504
  %v516 = vpack.c.b16 %v509, %v509
  %v517 = vpack.c.b16 %v510, %v510
  %v518 = vpack.c.b16 %v511, %v511
  %v519 = vpack.c.b16 %v512, %v512
  %v520 = vpack.c.b16 %v513, %v513
  %v521 = vpack.c.b16 %v514, %v514
  %v522 = vpack.c.b16 %v515, %v515
  %vm530 = vcmask 519168
  %531 = vst.msk [vmem:[%s3] sm:$0xf] %vm530, %v516
  %532 = vst.msk [vmem:[%s3 + $0x4] sm:$0xf] %vm530, %v517
  %533 = vst.msk [vmem:[%s3 + $0x8] sm:$0xf] %vm530, %v518
  %534 = vst.msk [vmem:[%s3 + $0xc] sm:$0xf] %vm530, %v519
  %535 = vst.msk [vmem:[%s3 + $0x10] sm:$0xf] %vm530, %v520
  %536 = vst.msk [vmem:[%s3 + $0x14] sm:$0xf] %vm530, %v521
  %vm537 = vcmask 516096
  %538 = vst.msk [vmem:[%s3 + $0x18] sm:$0x1] %vm537, %v522
  // Predicated region
  $region14: #{convnet_forward.7} parent=0 // pred_check
    _
  $region15: #{convnet_forward.7} parent=0 // pred_check_branch
    %540 = sbr.rel (0) target = $region17
  $region16: #{convnet_forward.7} parent=0 // pred_region
    _
  $region17: #{convnet_forward.7} parent=0 // pred_fallthru
    _
  // Predicated region
  $region18: #{convnet_forward.7} parent=0 // pred_check
    _
  $region19: #{convnet_forward.7} parent=0 // pred_check_branch
    %542 = sbr.rel (0) target = $region21
  $region20: #{convnet_forward.7} parent=0 // pred_region
    _
  $region21: #{convnet_forward.7} parent=0 // pred_fallthru
    _

// kernel: convnet_forward.8
$region0: #{convnet_forward.8}
  #allocation0 [shape = 'u32[]', space=smem, size = 0x4, offset = 0x4, fixed_abs, tag = 'smem constant byte address 0x4 - core index']
  #allocation1 [shape = 'u32[144,128]{1,0:T(1,128)}', space=vmem, size = 0x12000, scoped, tag = 'internal scratch']
  %s0 = inlined_call_operand.vmem [shape: bf16[18,576], index: 0, kind: input, shape index: {}]
  %s1 = inlined_call_operand.vmem [shape: bf16[576,128], index: 1, kind: input, shape index: {}]
  %s2 = inlined_call_operand.vmem [shape: f32[1,128], index: 2, kind: input, shape index: {}]
  %s3 = inlined_call_operand.vmem [shape: bf16[18,128], index: 3, kind: output, shape index: {}]
  %s4 = sld [smem:[#allocation0]]
  $region22: #{convnet_forward.8} parent=0
    _
  %s6 = ssub.s32 1, %s4
  %s7 = scalar_select 0, %s6, %s4
  // Predicated region
  $region2: #{convnet_forward.8} parent=0 // pred_check
    _
  $region3: #{convnet_forward.8} parent=0 // pred_check_branch
    %9 = sbr.rel (0) target = $region5
  $region4: #{convnet_forward.8} parent=0 // pred_region
    _
  $region5: #{convnet_forward.8} parent=0 // pred_fallthru
    _
  // Predicated region
  $region6: #{convnet_forward.8} parent=0 // pred_check
    _
  $region7: #{convnet_forward.8} parent=0 // pred_check_branch
    %11 = sbr.rel (0) target = $region9
  $region8: #{convnet_forward.8} parent=0 // pred_region
    _
  $region9: #{convnet_forward.8} parent=0 // pred_fallthru
    _
  // Predicated region
  $region10: #{convnet_forward.8} parent=0 // pred_check
    _
  $region11: #{convnet_forward.8} parent=0 // pred_check_branch
    %13 = sbr.rel (0) target = $region13
  $region12: #{convnet_forward.8} parent=0 // pred_region
    _
  $region13: #{convnet_forward.8} parent=0 // pred_fallthru
    _
  %v15 = vld [vmem:[%s0] sm:$0xff]
  %v16 = vld [vmem:[%s0 + $0x8] sm:$0xff]
  %v17 = vld [vmem:[%s0 + $0x10] sm:$0xf]
  %v18 = vld [vmem:[%s0 + $0x14] sm:$0xff]
  %v19 = vld [vmem:[%s0 + $0x1c] sm:$0xff]
  %v20 = vld [vmem:[%s0 + $0x24] sm:$0xf]
  %v21 = vld [vmem:[%s0 + $0x28] sm:$0x11]
  %v22 = vld [vmem:[%s0 + $0x30] sm:$0x11]
  %v23 = vld [vmem:[%s0 + $0x38] sm:$0x1]
  %v24 = vld [vmem:[%s1] sm:$0xf]
  %v25 = vld [vmem:[%s1 + $0x4] sm:$0xf]
  %v26 = vld [vmem:[%s1 + $0x8] sm:$0xf]
  %v27 = vld [vmem:[%s1 + $0xc] sm:$0xf]
  %v28 = vld [vmem:[%s1 + $0x10] sm:$0xf]
  %v29 = vld [vmem:[%s1 + $0x14] sm:$0xf]
  %v30 = vld [vmem:[%s1 + $0x18] sm:$0xf]
  %v31 = vld [vmem:[%s1 + $0x1c] sm:$0xf]
  %v32 = vld [vmem:[%s1 + $0x20] sm:$0xf]
  %v33 = vld [vmem:[%s1 + $0x24] sm:$0xf]
  %v34 = vld [vmem:[%s1 + $0x28] sm:$0xf]
  %v35 = vld [vmem:[%s1 + $0x2c] sm:$0xf]
  %v36 = vld [vmem:[%s1 + $0x30] sm:$0xf]
  %v37 = vld [vmem:[%s1 + $0x34] sm:$0xf]
  %v38 = vld [vmem:[%s1 + $0x38] sm:$0xf]
  %v39 = vld [vmem:[%s1 + $0x3c] sm:$0xf]
  %v40 = vld [vmem:[%s1 + $0x40] sm:$0xf]
  %v41 = vld [vmem:[%s1 + $0x44] sm:$0xf]
  %v42 = vld [vmem:[%s1 + $0x48] sm:$0xf]
  %v43 = vld [vmem:[%s1 + $0x4c] sm:$0xf]
  %v44 = vld [vmem:[%s1 + $0x50] sm:$0xf]
  %v45 = vld [vmem:[%s1 + $0x54] sm:$0xf]
  %v46 = vld [vmem:[%s1 + $0x58] sm:$0xf]
  %v47 = vld [vmem:[%s1 + $0x5c] sm:$0xf]
  %v48 = vld [vmem:[%s1 + $0x60] sm:$0xf]
  %v49 = vld [vmem:[%s1 + $0x64] sm:$0xf]
  %v50 = vld [vmem:[%s1 + $0x68] sm:$0xf]
  %v51 = vld [vmem:[%s1 + $0x6c] sm:$0xf]
  %v52 = vld [vmem:[%s1 + $0x70] sm:$0xf]
  %v53 = vld [vmem:[%s1 + $0x74] sm:$0xf]
  %v54 = vld [vmem:[%s1 + $0x78] sm:$0xf]
  %v55 = vld [vmem:[%s1 + $0x7c] sm:$0xf]
  %v56 = vld [vmem:[%s1 + $0x80] sm:$0xf]
  %v57 = vld [vmem:[%s1 + $0x84] sm:$0xf]
  %v58 = vld [vmem:[%s1 + $0x88] sm:$0xf]
  %v59 = vld [vmem:[%s1 + $0x8c] sm:$0xf]
  %v60 = vld [vmem:[%s1 + $0x90] sm:$0xf]
  %v61 = vld [vmem:[%s1 + $0x94] sm:$0xf]
  %v62 = vld [vmem:[%s1 + $0x98] sm:$0xf]
  %v63 = vld [vmem:[%s1 + $0x9c] sm:$0xf]
  %v64 = vld [vmem:[%s1 + $0xa0] sm:$0xf]
  %v65 = vld [vmem:[%s1 + $0xa4] sm:$0xf]
  %v66 = vld [vmem:[%s1 + $0xa8] sm:$0xf]
  %v67 = vld [vmem:[%s1 + $0xac] sm:$0xf]
  %v68 = vld [vmem:[%s1 + $0xb0] sm:$0xf]
  %v69 = vld [vmem:[%s1 + $0xb4] sm:$0xf]
  %v70 = vld [vmem:[%s1 + $0xb8] sm:$0xf]
  %v71 = vld [vmem:[%s1 + $0xbc] sm:$0xf]
  %v72 = vld [vmem:[%s1 + $0xc0] sm:$0xf]
  %v73 = vld [vmem:[%s1 + $0xc4] sm:$0xf]
  %v74 = vld [vmem:[%s1 + $0xc8] sm:$0xf]
  %v75 = vld [vmem:[%s1 + $0xcc] sm:$0xf]
  %v76 = vld [vmem:[%s1 + $0xd0] sm:$0xf]
  %v77 = vld [vmem:[%s1 + $0xd4] sm:$0xf]
  %v78 = vld [vmem:[%s1 + $0xd8] sm:$0xf]
  %v79 = vld [vmem:[%s1 + $0xdc] sm:$0xf]
  %v80 = vld [vmem:[%s1 + $0xe0] sm:$0xf]
  %v81 = vld [vmem:[%s1 + $0xe4] sm:$0xf]
  %v82 = vld [vmem:[%s1 + $0xe8] sm:$0xf]
  %v83 = vld [vmem:[%s1 + $0xec] sm:$0xf]
  %v84 = vld [vmem:[%s1 + $0xf0] sm:$0xf]
  %v85 = vld [vmem:[%s1 + $0xf4] sm:$0xf]
  %v86 = vld [vmem:[%s1 + $0xf8] sm:$0xf]
  %v87 = vld [vmem:[%s1 + $0xfc] sm:$0xf]
  %v88 = vld [vmem:[%s1 + $0x100] sm:$0xf]
  %v89 = vld [vmem:[%s1 + $0x104] sm:$0xf]
  %v90 = vld [vmem:[%s1 + $0x108] sm:$0xf]
  %v91 = vld [vmem:[%s1 + $0x10c] sm:$0xf]
  %v92 = vld [vmem:[%s1 + $0x110] sm:$0xf]
  %v93 = vld [vmem:[%s1 + $0x114] sm:$0xf]
  %v94 = vld [vmem:[%s1 + $0x118] sm:$0xf]
  %v95 = vld [vmem:[%s1 + $0x11c] sm:$0xf]
  %v96 = vld [vmem:[%s2] sm:$0x1]
  %v98 = vlaneseq
  %v99 = vshrl.u32 %v98, 7
  %v100 = vsub.s32 0, %v99
  %v101 = vrot.slane %v96, %v100
  %v112 = vunpack.c.l.b16 %v15
  %v113 = vunpack.c.h.b16 %v15
  %v114 = vunpack.c.l.b16 %v16
  %v115 = vunpack.c.h.b16 %v16
  %v116 = vunpack.c.l.b16 %v17
  %v117 = vunpack.c.l.b16 %v18
  %v118 = vunpack.c.h.b16 %v18
  %v119 = vunpack.c.l.b16 %v19
  %v120 = vunpack.c.h.b16 %v19
  %v121 = vunpack.c.l.b16 %v20
  %v122 = vunpack.c.l.b16 %v21
  %v123 = vunpack.c.h.b16 %v21
  %v124 = vunpack.c.l.b16 %v22
  %v125 = vunpack.c.h.b16 %v22
  %v126 = vunpack.c.l.b16 %v23
  %v127 = vpack.c.b16 %v117, %v112
  %v128 = vpack.c.b16 %v118, %v113
  %v129 = vpack.c.b16 %v119, %v114
  %v130 = vpack.c.b16 %v120, %v115
  %v131 = vpack.c.b16 %v121, %v116
  %v132 = vpack.c.b16 %v122, %v122
  %v133 = vpack.c.b16 %v123, %v123
  %v134 = vpack.c.b16 %v124, %v124
  %v135 = vpack.c.b16 %v125, %v125
  %v136 = vpack.c.b16 %v126, %v126
  %v217 = vunpack.c.l.b16 %v24
  %v218 = vunpack.c.l.b16 %v25
  %v219 = vunpack.c.l.b16 %v26
  %v220 = vunpack.c.l.b16 %v27
  %v221 = vunpack.c.l.b16 %v28
  %v222 = vunpack.c.l.b16 %v29
  %v223 = vunpack.c.l.b16 %v30
  %v224 = vunpack.c.l.b16 %v31
  %v225 = vunpack.c.l.b16 %v32
  %v226 = vunpack.c.l.b16 %v33
  %v227 = vunpack.c.l.b16 %v34
  %v228 = vunpack.c.l.b16 %v35
  %v229 = vunpack.c.l.b16 %v36
  %v230 = vunpack.c.l.b16 %v37
  %v231 = vunpack.c.l.b16 %v38
  %v232 = vunpack.c.l.b16 %v39
  %v233 = vunpack.c.l.b16 %v40
  %v234 = vunpack.c.l.b16 %v41
  %v235 = vunpack.c.l.b16 %v42
  %v236 = vunpack.c.l.b16 %v43
  %v237 = vunpack.c.l.b16 %v44
  %v238 = vunpack.c.l.b16 %v45
  %v239 = vunpack.c.l.b16 %v46
  %v240 = vunpack.c.l.b16 %v47
  %v241 = vunpack.c.l.b16 %v48
  %v242 = vunpack.c.l.b16 %v49
  %v243 = vunpack.c.l.b16 %v50
  %v244 = vunpack.c.l.b16 %v51
  %v245 = vunpack.c.l.b16 %v52
  %v246 = vunpack.c.l.b16 %v53
  %v247 = vunpack.c.l.b16 %v54
  %v248 = vunpack.c.l.b16 %v55
  %v249 = vunpack.c.l.b16 %v56
  %v250 = vunpack.c.l.b16 %v57
  %v251 = vunpack.c.l.b16 %v58
  %v252 = vunpack.c.l.b16 %v59
  %v253 = vunpack.c.l.b16 %v60
  %v254 = vunpack.c.l.b16 %v61
  %v255 = vunpack.c.l.b16 %v62
  %v256 = vunpack.c.l.b16 %v63
  %v257 = vunpack.c.l.b16 %v64
  %v258 = vunpack.c.l.b16 %v65
  %v259 = vunpack.c.l.b16 %v66
  %v260 = vunpack.c.l.b16 %v67
  %v261 = vunpack.c.l.b16 %v68
  %v262 = vunpack.c.l.b16 %v69
  %v263 = vunpack.c.l.b16 %v70
  %v264 = vunpack.c.l.b16 %v71
  %v265 = vunpack.c.l.b16 %v72
  %v266 = vunpack.c.l.b16 %v73
  %v267 = vunpack.c.l.b16 %v74
  %v268 = vunpack.c.l.b16 %v75
  %v269 = vunpack.c.l.b16 %v76
  %v270 = vunpack.c.l.b16 %v77
  %v271 = vunpack.c.l.b16 %v78
  %v272 = vunpack.c.l.b16 %v79
  %v273 = vunpack.c.l.b16 %v80
  %v274 = vunpack.c.l.b16 %v81
  %v275 = vunpack.c.l.b16 %v82
  %v276 = vunpack.c.l.b16 %v83
  %v277 = vunpack.c.l.b16 %v84
  %v278 = vunpack.c.l.b16 %v85
  %v279 = vunpack.c.l.b16 %v86
  %v280 = vunpack.c.l.b16 %v87
  %v281 = vunpack.c.l.b16 %v88
  %v282 = vunpack.c.l.b16 %v89
  %v283 = vunpack.c.l.b16 %v90
  %v284 = vunpack.c.l.b16 %v91
  %v285 = vunpack.c.l.b16 %v92
  %v286 = vunpack.c.l.b16 %v93
  %v287 = vunpack.c.l.b16 %v94
  %v288 = vunpack.c.l.b16 %v95
  %v289 = vpack.c.b16 %v218, %v217
  %v290 = vpack.c.b16 %v220, %v219
  %v291 = vpack.c.b16 %v222, %v221
  %v292 = vpack.c.b16 %v224, %v223
  %v293 = vpack.c.b16 %v226, %v225
  %v294 = vpack.c.b16 %v228, %v227
  %v295 = vpack.c.b16 %v230, %v229
  %v296 = vpack.c.b16 %v232, %v231
  %v297 = vpack.c.b16 %v234, %v233
  %v298 = vpack.c.b16 %v236, %v235
  %v299 = vpack.c.b16 %v238, %v237
  %v300 = vpack.c.b16 %v240, %v239
  %v301 = vpack.c.b16 %v242, %v241
  %v302 = vpack.c.b16 %v244, %v243
  %v303 = vpack.c.b16 %v246, %v245
  %v304 = vpack.c.b16 %v248, %v247
  %v305 = vpack.c.b16 %v250, %v249
  %v306 = vpack.c.b16 %v252, %v251
  %v307 = vpack.c.b16 %v254, %v253
  %v308 = vpack.c.b16 %v256, %v255
  %v309 = vpack.c.b16 %v258, %v257
  %v310 = vpack.c.b16 %v260, %v259
  %v311 = vpack.c.b16 %v262, %v261
  %v312 = vpack.c.b16 %v264, %v263
  %v313 = vpack.c.b16 %v266, %v265
  %v314 = vpack.c.b16 %v268, %v267
  %v315 = vpack.c.b16 %v270, %v269
  %v316 = vpack.c.b16 %v272, %v271
  %v317 = vpack.c.b16 %v274, %v273
  %v318 = vpack.c.b16 %v276, %v275
  %v319 = vpack.c.b16 %v278, %v277
  %v320 = vpack.c.b16 %v280, %v279
  %v321 = vpack.c.b16 %v282, %v281
  %v322 = vpack.c.b16 %v284, %v283
  %v323 = vpack.c.b16 %v286, %v285
  %v324 = vpack.c.b16 %v288, %v287
  %vm361 = vcmask 523264
  %v363 = vsel %vm361, %v131, 0
  %v366 = vsel %vm361, %v136, 0
  %368 = vmatprep.subr.bf16.mxu0 0
  %369 = vmatpush1.bf16.msra.mxu0 %v289
  %370 = vmatprep.subr.bf16.mxu0 0
  %371 = vmatpush1.bf16.msra.mxu0 %v290
  %372 = vmatprep.subr.bf16.mxu0 0
  %373 = vmatpush1.bf16.msra.mxu0 %v291
  %374 = vmatprep.subr.bf16.mxu0 0
  %375 = vmatpush1.bf16.msra.mxu0 %v292
  %376 = vmatprep.subr.bf16.mxu0 0
  %377 = vmatpush1.bf16.msra.mxu0 %v293
  %378 = vmatprep.subr.bf16.mxu0 0
  %379 = vmatpush1.bf16.msra.mxu0 %v294
  %380 = vmatprep.subr.bf16.mxu0 0
  %381 = vmatpush1.bf16.msra.mxu0 %v295
  %382 = vmatprep.subr.bf16.mxu0 0
  %383 = vmatpush1.bf16.msra.mxu0 %v296
  %384 = vmatprep.subr.bf16.mxu0 0
  %385 = vmatpush1.bf16.msra.mxu0 %v297
  %386 = vmatprep.subr.bf16.mxu0 0
  %387 = vmatpush1.bf16.msra.mxu0 %v298
  %388 = vmatprep.subr.bf16.mxu0 0
  %389 = vmatpush1.bf16.msra.mxu0 %v299
  %390 = vmatprep.subr.bf16.mxu0 0
  %391 = vmatpush1.bf16.msra.mxu0 %v300
  %392 = vmatprep.subr.bf16.mxu0 0
  %393 = vmatpush1.bf16.msra.mxu0 %v301
  %394 = vmatprep.subr.bf16.mxu0 0
  %395 = vmatpush1.bf16.msra.mxu0 %v302
  %396 = vmatprep.subr.bf16.mxu0 0
  %397 = vmatpush1.bf16.msra.mxu0 %v303
  %398 = vmatprep.subr.bf16.mxu0 0
  %399 = vmatpush1.bf16.msra.mxu0 %v304
  %400 = vmatprep.mubr.bf16.mxu0 %v128
  %401 = vmatmul.mubr.bf16.gmra.mrb[0].mxu0 %v127
  %v402 = vpop.f32.mrb[0].mxu0
  %v403 = vadd.f32 %v101, %v402
  %v404 = vpop.f32.mrb[0].mxu0
  %v405 = vpop.f32.mrb[0].mxu0
  %v406 = vadd.f32 %v101, %v405
  %v407 = vpop.f32.mrb[0].mxu0
  %408 = vmatprep.mubr.bf16.mxu0 %v133
  %409 = vmatmul.mubr.bf16.gmra.mrb[0].mxu0 %v132
  %v410 = vpop.f32.mrb[0].mxu0
  %v411 = vadd.f32 %v101, %v410
  %v412 = vpop.f32.mrb[0].mxu0
  %v413 = vpop.f32.mrb[0].mxu0
  %v414 = vpop.f32.mrb[0].mxu0
  %415 = vdwg.mxu0
  %416 = vmatprep.subr.bf16.mxu0 0
  %417 = vmatpush1.bf16.msra.mxu0 %v305
  %418 = vmatprep.subr.bf16.mxu0 0
  %419 = vmatpush1.bf16.msra.mxu0 %v306
  %420 = vmatprep.subr.bf16.mxu0 0
  %421 = vmatpush1.bf16.msra.mxu0 %v307
  %422 = vmatprep.subr.bf16.mxu0 0
  %423 = vmatpush1.bf16.msra.mxu0 %v308
  %424 = vmatprep.subr.bf16.mxu0 0
  %425 = vmatpush1.bf16.msra.mxu0 %v309
  %426 = vmatprep.subr.bf16.mxu0 0
  %427 = vmatpush1.bf16.msra.mxu0 %v310
  %428 = vmatprep.subr.bf16.mxu0 0
  %429 = vmatpush1.bf16.msra.mxu0 %v311
  %430 = vmatprep.subr.bf16.mxu0 0
  %431 = vmatpush1.bf16.msra.mxu0 %v312
  %432 = vmatprep.subr.bf16.mxu0 0
  %433 = vmatpush1.bf16.msra.mxu0 %v313
  %434 = vmatprep.subr.bf16.mxu0 0
  %435 = vmatpush1.bf16.msra.mxu0 %v314
  %436 = vmatprep.subr.bf16.mxu0 0
  %437 = vmatpush1.bf16.msra.mxu0 %v315
  %438 = vmatprep.subr.bf16.mxu0 0
  %439 = vmatpush1.bf16.msra.mxu0 %v316
  %440 = vmatprep.subr.bf16.mxu0 0
  %441 = vmatpush1.bf16.msra.mxu0 %v317
  %442 = vmatprep.subr.bf16.mxu0 0
  %443 = vmatpush1.bf16.msra.mxu0 %v318
  %444 = vmatprep.subr.bf16.mxu0 0
  %445 = vmatpush1.bf16.msra.mxu0 %v319
  %446 = vmatprep.subr.bf16.mxu0 0
  %447 = vmatpush1.bf16.msra.mxu0 %v320
  %448 = vmatprep.mubr.bf16.mxu0 %v130
  %449 = vmatmul.mubr.bf16.gmra.mrb[0].mxu0 %v129
  %v450 = vpop.f32.mrb[0].mxu0
  %v451 = vadd.f32 %v403, %v450
  %v452 = vpop.f32.mrb[0].mxu0
  %v453 = vpop.f32.mrb[0].mxu0
  %v454 = vadd.f32 %v406, %v453
  %v455 = vpop.f32.mrb[0].mxu0
  %456 = vmatprep.mubr.bf16.mxu0 %v135
  %457 = vmatmul.mubr.bf16.gmra.mrb[0].mxu0 %v134
  %v458 = vpop.f32.mrb[0].mxu0
  %v459 = vadd.f32 %v411, %v458
  %v460 = vpop.f32.mrb[0].mxu0
  %v461 = vpop.f32.mrb[0].mxu0
  %v462 = vpop.f32.mrb[0].mxu0
  %463 = vdwg.mxu0
  %464 = vmatprep.subr.bf16.mxu0 0
  %465 = vmatpush1.bf16.msra.mxu0 %v321
  %466 = vmatprep.subr.bf16.mxu0 0
  %467 = vmatpush1.bf16.msra.mxu0 %v322
  %468 = vmatprep.subr.bf16.mxu0 0
  %469 = vmatpush1.bf16.msra.mxu0 %v323
  %470 = vmatprep.subr.bf16.mxu0 0
  %471 = vmatpush1.bf16.msra.mxu0 %v324
  %472 = vmatprep.subr.bf16.mxu0 0
  %473 = vmatpush1.bf16.msra.mxu0 0
  %474 = vmatprep.subr.bf16.mxu0 0
  %475 = vmatpush1.bf16.msra.mxu0 0
  %476 = vmatprep.subr.bf16.mxu0 0
  %477 = vmatpush1.bf16.msra.mxu0 0
  %478 = vmatprep.subr.bf16.mxu0 0
  %479 = vmatpush1.bf16.msra.mxu0 0
  %480 = vmatprep.subr.bf16.mxu0 0
  %481 = vmatpush1.bf16.msra.mxu0 0
  %482 = vmatprep.subr.bf16.mxu0 0
  %483 = vmatpush1.bf16.msra.mxu0 0
  %484 = vmatprep.subr.bf16.mxu0 0
  %485 = vmatpush1.bf16.msra.mxu0 0
  %486 = vmatprep.subr.bf16.mxu0 0
  %487 = vmatpush1.bf16.msra.mxu0 0
  %488 = vmatprep.subr.bf16.mxu0 0
  %489 = vmatpush1.bf16.msra.mxu0 0
  %490 = vmatprep.subr.bf16.mxu0 0
  %491 = vmatpush1.bf16.msra.mxu0 0
  %492 = vmatprep.subr.bf16.mxu0 0
  %493 = vmatpush1.bf16.msra.mxu0 0
  %494 = vmatprep.subr.bf16.mxu0 0
  %495 = vmatpush1.bf16.msra.mxu0 0
  %496 = vmatprep.mubr.bf16.mxu0 0
  %497 = vmatmul.mubr.bf16.gmra.mrb[0].mxu0 %v363
  %v498 = vpop.f32.mrb[0].mxu0
  %v499 = vadd.f32 %v451, %v498
  %v500 = vpop.f32.mrb[0].mxu0
  %v501 = vpop.f32.mrb[0].mxu0
  %v502 = vadd.f32 %v454, %v501
  %v503 = vpop.f32.mrb[0].mxu0
  %504 = vmatprep.mubr.bf16.mxu0 0
  %505 = vmatmul.mubr.bf16.gmra.mrb[0].mxu0 %v366
  %v506 = vpop.f32.mrb[0].mxu0
  %v507 = vadd.f32 %v459, %v506
  %v508 = vpop.f32.mrb[0].mxu0
  %v509 = vpop.f32.mrb[0].mxu0
  %v510 = vpop.f32.mrb[0].mxu0
  %511 = vdwg.mxu0
  %v512 = vmax.f32 %v499, 0.0
  %v513 = vmax.f32 %v502, 0.0
  %v514 = vmax.f32 %v507, 0.0
  %v515 = vpack.c.bf16 %v513, %v512
  %v516 = vpack.c.bf16 %v514, %v514
  %v519 = vunpack.c.l.b16 %v515
  %v520 = vunpack.c.h.b16 %v515
  %v521 = vunpack.c.l.b16 %v516
  %v522 = vpack.c.b16 %v519, %v519
  %v523 = vpack.c.b16 %v520, %v520
  %v524 = vpack.c.b16 %v521, %v521
  %528 = vst [vmem:[%s3] sm:$0xf] %v522
  %529 = vst [vmem:[%s3 + $0x4] sm:$0xf] %v523
  %530 = vst [vmem:[%s3 + $0x8] sm:$0x1] %v524
  // Predicated region
  $region14: #{convnet_forward.8} parent=0 // pred_check
    _
  $region15: #{convnet_forward.8} parent=0 // pred_check_branch
    %532 = sbr.rel (0) target = $region17
  $region16: #{convnet_forward.8} parent=0 // pred_region
    _
  $region17: #{convnet_forward.8} parent=0 // pred_fallthru
    _
  // Predicated region
  $region18: #{convnet_forward.8} parent=0 // pred_check
    _
  $region19: #{convnet_forward.8} parent=0 // pred_check_branch
    %534 = sbr.rel (0) target = $region21
  $region20: #{convnet_forward.8} parent=0 // pred_region
    _
  $region21: #{convnet_forward.8} parent=0 // pred_fallthru
    _

// kernel: convnet_forward.9
$region0: #{convnet_forward.9}
  #allocation0 [shape = 'u32[]', space=smem, size = 0x4, offset = 0x4, fixed_abs, tag = 'smem constant byte address 0x4 - core index']
  #allocation1 [shape = 'u32[144,128]{1,0:T(1,128)}', space=vmem, size = 0x12000, scoped, tag = 'internal scratch']
  #allocation2 [shape = 'f32[1,1]{1,0:T(1,128)S(1)}', space=vmem, size = 0x200, scoped, tag = 'scoped memory for convnet_forward.9']
  %s0 = inlined_call_operand.vmem [shape: bf16[2,1152], index: 0, kind: input, shape index: {}]
  %s1 = inlined_call_operand.vmem [shape: f32[2,1], index: 1, kind: input, shape index: {}]
  %s2 = inlined_call_operand.vmem [shape: bf16[1152,512], index: 2, kind: input, shape index: {}]
  %s3 = inlined_call_operand.vmem [shape: f32[1,512], index: 3, kind: input, shape index: {}]
  %s4 = inlined_call_operand.vmem [shape: bf16[512,512], index: 4, kind: input, shape index: {}]
  %s5 = inlined_call_operand.vmem [shape: f32[1,512], index: 5, kind: input, shape index: {}]
  %s6 = inlined_call_operand.vmem [shape: f32[1,512], index: 6, kind: input, shape index: {}]
  %s7 = inlined_call_operand.vmem [shape: bf16[512,592], index: 7, kind: input, shape index: {}]
  %s8 = inlined_call_operand.vmem [shape: f32[1,592], index: 8, kind: input, shape index: {}]
  %s9 = inlined_call_operand.vmem [shape: f32[1,592], index: 9, kind: input, shape index: {}]
  %s10 = inlined_call_operand.<no memory space> [shape: f32[1,1], index: 10, kind: input, shape index: {}]
  %s11 = inlined_call_operand.vmem [shape: f32[2,1], index: 11, kind: output, shape index: {}]
  %s12 = sld [smem:[#allocation0]]
  $region54: #{convnet_forward.9} parent=0
    _
  %s14 = ssub.s32 1, %s12
  %s15 = scalar_select 0, %s14, %s12
  %v16 = vstv %s10
  %17 = vst [vmem:[#allocation2] sm:$0x1] %v16
  // Predicated region
  $region2: #{convnet_forward.9} parent=0 // pred_check
    _
  $region3: #{convnet_forward.9} parent=0 // pred_check_branch
    %19 = sbr.rel (0) target = $region5
  $region4: #{convnet_forward.9} parent=0 // pred_region
    _
  $region5: #{convnet_forward.9} parent=0 // pred_fallthru
    _
  // Predicated region
  $region6: #{convnet_forward.9} parent=0 // pred_check
    _
  $region7: #{convnet_forward.9} parent=0 // pred_check_branch
    %21 = sbr.rel (0) target = $region9
  $region8: #{convnet_forward.9} parent=0 // pred_region
    _
  $region9: #{convnet_forward.9} parent=0 // pred_fallthru
    _
  // Predicated region
  $region10: #{convnet_forward.9} parent=0 // pred_check
    _
  $region11: #{convnet_forward.9} parent=0 // pred_check_branch
    %23 = sbr.rel (0) target = $region13
  $region12: #{convnet_forward.9} parent=0 // pred_region
    _
  $region13: #{convnet_forward.9} parent=0 // pred_fallthru
    _
  // Predicated region
  $region14: #{convnet_forward.9} parent=0 // pred_check
    _
  $region15: #{convnet_forward.9} parent=0 // pred_check_branch
    %25 = sbr.rel (0) target = $region17
  $region16: #{convnet_forward.9} parent=0 // pred_region
    _
  $region17: #{convnet_forward.9} parent=0 // pred_fallthru
    _
  // Predicated region
  $region18: #{convnet_forward.9} parent=0 // pred_check
    _
  $region19: #{convnet_forward.9} parent=0 // pred_check_branch
    %27 = sbr.rel (0) target = $region21
  $region20: #{convnet_forward.9} parent=0 // pred_region
    _
  $region21: #{convnet_forward.9} parent=0 // pred_fallthru
    _
  // Predicated region
  $region22: #{convnet_forward.9} parent=0 // pred_check
    _
  $region23: #{convnet_forward.9} parent=0 // pred_check_branch
    %29 = sbr.rel (0) target = $region25
  $region24: #{convnet_forward.9} parent=0 // pred_region
    _
  $region25: #{convnet_forward.9} parent=0 // pred_fallthru
    _
  // Predicated region
  $region26: #{convnet_forward.9} parent=0 // pred_check
    _
  $region27: #{convnet_forward.9} parent=0 // pred_check_branch
    %31 = sbr.rel (0) target = $region29
  $region28: #{convnet_forward.9} parent=0 // pred_region
    _
  $region29: #{convnet_forward.9} parent=0 // pred_fallthru
    _
  // Predicated region
  $region30: #{convnet_forward.9} parent=0 // pred_check
    _
  $region31: #{convnet_forward.9} parent=0 // pred_check_branch
    %33 = sbr.rel (0) target = $region33
  $region32: #{convnet_forward.9} parent=0 // pred_region
    _
  $region33: #{convnet_forward.9} parent=0 // pred_fallthru
    _
  // Predicated region
  $region34: #{convnet_forward.9} parent=0 // pred_check
    _
  $region35: #{convnet_forward.9} parent=0 // pred_check_branch
    %35 = sbr.rel (0) target = $region37
  $region36: #{convnet_forward.9} parent=0 // pred_region
    _
  $region37: #{convnet_forward.9} parent=0 // pred_fallthru
    _
  // Predicated region
  $region38: #{convnet_forward.9} parent=0 // pred_check
    _
  $region39: #{convnet_forward.9} parent=0 // pred_check_branch
    %37 = sbr.rel (0) target = $region41
  $region40: #{convnet_forward.9} parent=0 // pred_region
    _
  $region41: #{convnet_forward.9} parent=0 // pred_fallthru
    _
  // Predicated region
  $region42: #{convnet_forward.9} parent=0 // pred_check
    _
  $region43: #{convnet_forward.9} parent=0 // pred_check_branch
    %39 = sbr.rel (0) target = $region45
  $region44: #{convnet_forward.9} parent=0 // pred_region
    _
  $region45: #{convnet_forward.9} parent=0 // pred_fallthru
    _
  %v41 = vld [vmem:[%s0] sm:$0xff]
  %v42 = vld [vmem:[%s0 + $0x8] sm:$0x1]
  %v43 = vld [vmem:[%s2] sm:$0xff]
  %v44 = vld [vmem:[%s2 + $0x8] sm:$0xff]
  %v45 = vld [vmem:[%s2 + $0x10] sm:$0xff]
  %v46 = vld [vmem:[%s2 + $0x18] sm:$0xff]
  %v47 = vld [vmem:[%s2 + $0x20] sm:$0xff]
  %v48 = vld [vmem:[%s2 + $0x28] sm:$0xff]
  %v49 = vld [vmem:[%s2 + $0x30] sm:$0xff]
  %v50 = vld [vmem:[%s2 + $0x38] sm:$0xff]
  %v51 = vld [vmem:[%s2 + $0x40] sm:$0xff]
  %v52 = vld [vmem:[%s2 + $0x48] sm:$0xff]
  %v53 = vld [vmem:[%s2 + $0x50] sm:$0xff]
  %v54 = vld [vmem:[%s2 + $0x58] sm:$0xff]
  %v55 = vld [vmem:[%s2 + $0x60] sm:$0xff]
  %v56 = vld [vmem:[%s2 + $0x68] sm:$0xff]
  %v57 = vld [vmem:[%s2 + $0x70] sm:$0xff]
  %v58 = vld [vmem:[%s2 + $0x78] sm:$0xff]
  %v59 = vld [vmem:[%s2 + $0x80] sm:$0xff]
  %v60 = vld [vmem:[%s2 + $0x88] sm:$0xff]
  %v61 = vld [vmem:[%s2 + $0x90] sm:$0xff]
  %v62 = vld [vmem:[%s2 + $0x98] sm:$0xff]
  %v63 = vld [vmem:[%s2 + $0xa0] sm:$0xff]
  %v64 = vld [vmem:[%s2 + $0xa8] sm:$0xff]
  %v65 = vld [vmem:[%s2 + $0xb0] sm:$0xff]
  %v66 = vld [vmem:[%s2 + $0xb8] sm:$0xff]
  %v67 = vld [vmem:[%s2 + $0xc0] sm:$0xff]
  %v68 = vld [vmem:[%s2 + $0xc8] sm:$0xff]
  %v69 = vld [vmem:[%s2 + $0xd0] sm:$0xff]
  %v70 = vld [vmem:[%s2 + $0xd8] sm:$0xff]
  %v71 = vld [vmem:[%s2 + $0xe0] sm:$0xff]
  %v72 = vld [vmem:[%s2 + $0xe8] sm:$0xff]
  %v73 = vld [vmem:[%s2 + $0xf0] sm:$0xff]
  %v74 = vld [vmem:[%s2 + $0xf8] sm:$0xff]
  %v75 = vld [vmem:[%s2 + $0x100] sm:$0xff]
  %v76 = vld [vmem:[%s2 + $0x108] sm:$0xff]
  %v77 = vld [vmem:[%s2 + $0x110] sm:$0xff]
  %v78 = vld [vmem:[%s2 + $0x118] sm:$0xff]
  %v79 = vld [vmem:[%s2 + $0x120] sm:$0xff]
  %v80 = vld [vmem:[%s2 + $0x128] sm:$0xff]
  %v81 = vld [vmem:[%s2 + $0x130] sm:$0xff]
  %v82 = vld [vmem:[%s2 + $0x138] sm:$0xff]
  %v83 = vld [vmem:[%s2 + $0x140] sm:$0xff]
  %v84 = vld [vmem:[%s2 + $0x148] sm:$0xff]
  %v85 = vld [vmem:[%s2 + $0x150] sm:$0xff]
  %v86 = vld [vmem:[%s2 + $0x158] sm:$0xff]
  %v87 = vld [vmem:[%s2 + $0x160] sm:$0xff]
  %v88 = vld [vmem:[%s2 + $0x168] sm:$0xff]
  %v89 = vld [vmem:[%s2 + $0x170] sm:$0xff]
  %v90 = vld [vmem:[%s2 + $0x178] sm:$0xff]
  %v91 = vld [vmem:[%s2 + $0x180] sm:$0xff]
  %v92 = vld [vmem:[%s2 + $0x188] sm:$0xff]
  %v93 = vld [vmem:[%s2 + $0x190] sm:$0xff]
  %v94 = vld [vmem:[%s2 + $0x198] sm:$0xff]
  %v95 = vld [vmem:[%s2 + $0x1a0] sm:$0xff]
  %v96 = vld [vmem:[%s2 + $0x1a8] sm:$0xff]
  %v97 = vld [vmem:[%s2 + $0x1b0] sm:$0xff]
  %v98 = vld [vmem:[%s2 + $0x1b8] sm:$0xff]
  %v99 = vld [vmem:[%s2 + $0x1c0] sm:$0xff]
  %v100 = vld [vmem:[%s2 + $0x1c8] sm:$0xff]
  %v101 = vld [vmem:[%s2 + $0x1d0] sm:$0xff]
  %v102 = vld [vmem:[%s2 + $0x1d8] sm:$0xff]
  %v103 = vld [vmem:[%s2 + $0x1e0] sm:$0xff]
  %v104 = vld [vmem:[%s2 + $0x1e8] sm:$0xff]
  %v105 = vld [vmem:[%s2 + $0x1f0] sm:$0xff]
  %v106 = vld [vmem:[%s2 + $0x1f8] sm:$0xff]
  %v107 = vld [vmem:[%s2 + $0x200] sm:$0xff]
  %v108 = vld [vmem:[%s2 + $0x208] sm:$0xff]
  %v109 = vld [vmem:[%s2 + $0x210] sm:$0xff]
  %v110 = vld [vmem:[%s2 + $0x218] sm:$0xff]
  %v111 = vld [vmem:[%s2 + $0x220] sm:$0xff]
  %v112 = vld [vmem:[%s2 + $0x228] sm:$0xff]
  %v113 = vld [vmem:[%s2 + $0x230] sm:$0xff]
  %v114 = vld [vmem:[%s2 + $0x238] sm:$0xff]
  %v115 = vld [vmem:[%s2 + $0x240] sm:$0xff]
  %v116 = vld [vmem:[%s2 + $0x248] sm:$0xff]
  %v117 = vld [vmem:[%s2 + $0x250] sm:$0xff]
  %v118 = vld [vmem:[%s2 + $0x258] sm:$0xff]
  %v119 = vld [vmem:[%s2 + $0x260] sm:$0xff]
  %v120 = vld [vmem:[%s2 + $0x268] sm:$0xff]
  %v121 = vld [vmem:[%s2 + $0x270] sm:$0xff]
  %v122 = vld [vmem:[%s2 + $0x278] sm:$0xff]
  %v123 = vld [vmem:[%s2 + $0x280] sm:$0xff]
  %v124 = vld [vmem:[%s2 + $0x288] sm:$0xff]
  %v125 = vld [vmem:[%s2 + $0x290] sm:$0xff]
  %v126 = vld [vmem:[%s2 + $0x298] sm:$0xff]
  %v127 = vld [vmem:[%s2 + $0x2a0] sm:$0xff]
  %v128 = vld [vmem:[%s2 + $0x2a8] sm:$0xff]
  %v129 = vld [vmem:[%s2 + $0x2b0] sm:$0xff]
  %v130 = vld [vmem:[%s2 + $0x2b8] sm:$0xff]
  %v131 = vld [vmem:[%s2 + $0x2c0] sm:$0xff]
  %v132 = vld [vmem:[%s2 + $0x2c8] sm:$0xff]
  %v133 = vld [vmem:[%s2 + $0x2d0] sm:$0xff]
  %v134 = vld [vmem:[%s2 + $0x2d8] sm:$0xff]
  %v135 = vld [vmem:[%s2 + $0x2e0] sm:$0xff]
  %v136 = vld [vmem:[%s2 + $0x2e8] sm:$0xff]
  %v137 = vld [vmem:[%s2 + $0x2f0] sm:$0xff]
  %v138 = vld [vmem:[%s2 + $0x2f8] sm:$0xff]
  %v139 = vld [vmem:[%s2 + $0x300] sm:$0xff]
  %v140 = vld [vmem:[%s2 + $0x308] sm:$0xff]
  %v141 = vld [vmem:[%s2 + $0x310] sm:$0xff]
  %v142 = vld [vmem:[%s2 + $0x318] sm:$0xff]
  %v143 = vld [vmem:[%s2 + $0x320] sm:$0xff]
  %v144 = vld [vmem:[%s2 + $0x328] sm:$0xff]
  %v145 = vld [vmem:[%s2 + $0x330] sm:$0xff]
  %v146 = vld [vmem:[%s2 + $0x338] sm:$0xff]
  %v147 = vld [vmem:[%s2 + $0x340] sm:$0xff]
  %v148 = vld [vmem:[%s2 + $0x348] sm:$0xff]
  %v149 = vld [vmem:[%s2 + $0x350] sm:$0xff]
  %v150 = vld [vmem:[%s2 + $0x358] sm:$0xff]
  %v151 = vld [vmem:[%s2 + $0x360] sm:$0xff]
  %v152 = vld [vmem:[%s2 + $0x368] sm:$0xff]
  %v153 = vld [vmem:[%s2 + $0x370] sm:$0xff]
  %v154 = vld [vmem:[%s2 + $0x378] sm:$0xff]
  %v155 = vld [vmem:[%s2 + $0x380] sm:$0xff]
  %v156 = vld [vmem:[%s2 + $0x388] sm:$0xff]
  %v157 = vld [vmem:[%s2 + $0x390] sm:$0xff]
  %v158 = vld [vmem:[%s2 + $0x398] sm:$0xff]
  %v159 = vld [vmem:[%s2 + $0x3a0] sm:$0xff]
  %v160 = vld [vmem:[%s2 + $0x3a8] sm:$0xff]
  %v161 = vld [vmem:[%s2 + $0x3b0] sm:$0xff]
  %v162 = vld [vmem:[%s2 + $0x3b8] sm:$0xff]
  %v163 = vld [vmem:[%s2 + $0x3c0] sm:$0xff]
  %v164 = vld [vmem:[%s2 + $0x3c8] sm:$0xff]
  %v165 = vld [vmem:[%s2 + $0x3d0] sm:$0xff]
  %v166 = vld [vmem:[%s2 + $0x3d8] sm:$0xff]
  %v167 = vld [vmem:[%s2 + $0x3e0] sm:$0xff]
  %v168 = vld [vmem:[%s2 + $0x3e8] sm:$0xff]
  %v169 = vld [vmem:[%s2 + $0x3f0] sm:$0xff]
  %v170 = vld [vmem:[%s2 + $0x3f8] sm:$0xff]
  %v171 = vld [vmem:[%s2 + $0x400] sm:$0xff]
  %v172 = vld [vmem:[%s2 + $0x408] sm:$0xff]
  %v173 = vld [vmem:[%s2 + $0x410] sm:$0xff]
  %v174 = vld [vmem:[%s2 + $0x418] sm:$0xff]
  %v175 = vld [vmem:[%s2 + $0x420] sm:$0xff]
  %v176 = vld [vmem:[%s2 + $0x428] sm:$0xff]
  %v177 = vld [vmem:[%s2 + $0x430] sm:$0xff]
  %v178 = vld [vmem:[%s2 + $0x438] sm:$0xff]
  %v179 = vld [vmem:[%s2 + $0x440] sm:$0xff]
  %v180 = vld [vmem:[%s2 + $0x448] sm:$0xff]
  %v181 = vld [vmem:[%s2 + $0x450] sm:$0xff]
  %v182 = vld [vmem:[%s2 + $0x458] sm:$0xff]
  %v183 = vld [vmem:[%s2 + $0x460] sm:$0xff]
  %v184 = vld [vmem:[%s2 + $0x468] sm:$0xff]
  %v185 = vld [vmem:[%s2 + $0x470] sm:$0xff]
  %v186 = vld [vmem:[%s2 + $0x478] sm:$0xff]
  %v187 = vld [vmem:[%s2 + $0x480] sm:$0xff]
  %v188 = vld [vmem:[%s2 + $0x488] sm:$0xff]
  %v189 = vld [vmem:[%s2 + $0x490] sm:$0xff]
  %v190 = vld [vmem:[%s2 + $0x498] sm:$0xff]
  %v191 = vld [vmem:[%s2 + $0x4a0] sm:$0xff]
  %v192 = vld [vmem:[%s2 + $0x4a8] sm:$0xff]
  %v193 = vld [vmem:[%s2 + $0x4b0] sm:$0xff]
  %v194 = vld [vmem:[%s2 + $0x4b8] sm:$0xff]
  %v195 = vld [vmem:[%s2 + $0x4c0] sm:$0xff]
  %v196 = vld [vmem:[%s2 + $0x4c8] sm:$0xff]
  %v197 = vld [vmem:[%s2 + $0x4d0] sm:$0xff]
  %v198 = vld [vmem:[%s2 + $0x4d8] sm:$0xff]
  %v199 = vld [vmem:[%s2 + $0x4e0] sm:$0xff]
  %v200 = vld [vmem:[%s2 + $0x4e8] sm:$0xff]
  %v201 = vld [vmem:[%s2 + $0x4f0] sm:$0xff]
  %v202 = vld [vmem:[%s2 + $0x4f8] sm:$0xff]
  %v203 = vld [vmem:[%s2 + $0x500] sm:$0xff]
  %v204 = vld [vmem:[%s2 + $0x508] sm:$0xff]
  %v205 = vld [vmem:[%s2 + $0x510] sm:$0xff]
  %v206 = vld [vmem:[%s2 + $0x518] sm:$0xff]
  %v207 = vld [vmem:[%s2 + $0x520] sm:$0xff]
  %v208 = vld [vmem:[%s2 + $0x528] sm:$0xff]
  %v209 = vld [vmem:[%s2 + $0x530] sm:$0xff]
  %v210 = vld [vmem:[%s2 + $0x538] sm:$0xff]
  %v211 = vld [vmem:[%s2 + $0x540] sm:$0xff]
  %v212 = vld [vmem:[%s2 + $0x548] sm:$0xff]
  %v213 = vld [vmem:[%s2 + $0x550] sm:$0xff]
  %v214 = vld [vmem:[%s2 + $0x558] sm:$0xff]
  %v215 = vld [vmem:[%s2 + $0x560] sm:$0xff]
  %v216 = vld [vmem:[%s2 + $0x568] sm:$0xff]
  %v217 = vld [vmem:[%s2 + $0x570] sm:$0xff]
  %v218 = vld [vmem:[%s2 + $0x578] sm:$0xff]
  %v219 = vld [vmem:[%s2 + $0x580] sm:$0xff]
  %v220 = vld [vmem:[%s2 + $0x588] sm:$0xff]
  %v221 = vld [vmem:[%s2 + $0x590] sm:$0xff]
  %v222 = vld [vmem:[%s2 + $0x598] sm:$0xff]
  %v223 = vld [vmem:[%s2 + $0x5a0] sm:$0xff]
  %v224 = vld [vmem:[%s2 + $0x5a8] sm:$0xff]
  %v225 = vld [vmem:[%s2 + $0x5b0] sm:$0xff]
  %v226 = vld [vmem:[%s2 + $0x5b8] sm:$0xff]
  %v227 = vld [vmem:[%s2 + $0x5c0] sm:$0xff]
  %v228 = vld [vmem:[%s2 + $0x5c8] sm:$0xff]
  %v229 = vld [vmem:[%s2 + $0x5d0] sm:$0xff]
  %v230 = vld [vmem:[%s2 + $0x5d8] sm:$0xff]
  %v231 = vld [vmem:[%s2 + $0x5e0] sm:$0xff]
  %v232 = vld [vmem:[%s2 + $0x5e8] sm:$0xff]
  %v233 = vld [vmem:[%s2 + $0x5f0] sm:$0xff]
  %v234 = vld [vmem:[%s2 + $0x5f8] sm:$0xff]
  %v235 = vld [vmem:[%s2 + $0x600] sm:$0xff]
  %v236 = vld [vmem:[%s2 + $0x608] sm:$0xff]
  %v237 = vld [vmem:[%s2 + $0x610] sm:$0xff]
  %v238 = vld [vmem:[%s2 + $0x618] sm:$0xff]
  %v239 = vld [vmem:[%s2 + $0x620] sm:$0xff]
  %v240 = vld [vmem:[%s2 + $0x628] sm:$0xff]
  %v241 = vld [vmem:[%s2 + $0x630] sm:$0xff]
  %v242 = vld [vmem:[%s2 + $0x638] sm:$0xff]
  %v243 = vld [vmem:[%s2 + $0x640] sm:$0xff]
  %v244 = vld [vmem:[%s2 + $0x648] sm:$0xff]
  %v245 = vld [vmem:[%s2 + $0x650] sm:$0xff]
  %v246 = vld [vmem:[%s2 + $0x658] sm:$0xff]
  %v247 = vld [vmem:[%s2 + $0x660] sm:$0xff]
  %v248 = vld [vmem:[%s2 + $0x668] sm:$0xff]
  %v249 = vld [vmem:[%s2 + $0x670] sm:$0xff]
  %v250 = vld [vmem:[%s2 + $0x678] sm:$0xff]
  %v251 = vld [vmem:[%s2 + $0x680] sm:$0xff]
  %v252 = vld [vmem:[%s2 + $0x688] sm:$0xff]
  %v253 = vld [vmem:[%s2 + $0x690] sm:$0xff]
  %v254 = vld [vmem:[%s2 + $0x698] sm:$0xff]
  %v255 = vld [vmem:[%s2 + $0x6a0] sm:$0xff]
  %v256 = vld [vmem:[%s2 + $0x6a8] sm:$0xff]
  %v257 = vld [vmem:[%s2 + $0x6b0] sm:$0xff]
  %v258 = vld [vmem:[%s2 + $0x6b8] sm:$0xff]
  %v259 = vld [vmem:[%s2 + $0x6c0] sm:$0xff]
  %v260 = vld [vmem:[%s2 + $0x6c8] sm:$0xff]
  %v261 = vld [vmem:[%s2 + $0x6d0] sm:$0xff]
  %v262 = vld [vmem:[%s2 + $0x6d8] sm:$0xff]
  %v263 = vld [vmem:[%s2 + $0x6e0] sm:$0xff]
  %v264 = vld [vmem:[%s2 + $0x6e8] sm:$0xff]
  %v265 = vld [vmem:[%s2 + $0x6f0] sm:$0xff]
  %v266 = vld [vmem:[%s2 + $0x6f8] sm:$0xff]
  %v267 = vld [vmem:[%s2 + $0x700] sm:$0xff]
  %v268 = vld [vmem:[%s2 + $0x708] sm:$0xff]
  %v269 = vld [vmem:[%s2 + $0x710] sm:$0xff]
  %v270 = vld [vmem:[%s2 + $0x718] sm:$0xff]
  %v271 = vld [vmem:[%s2 + $0x720] sm:$0xff]
  %v272 = vld [vmem:[%s2 + $0x728] sm:$0xff]
  %v273 = vld [vmem:[%s2 + $0x730] sm:$0xff]
  %v274 = vld [vmem:[%s2 + $0x738] sm:$0xff]
  %v275 = vld [vmem:[%s2 + $0x740] sm:$0xff]
  %v276 = vld [vmem:[%s2 + $0x748] sm:$0xff]
  %v277 = vld [vmem:[%s2 + $0x750] sm:$0xff]
  %v278 = vld [vmem:[%s2 + $0x758] sm:$0xff]
  %v279 = vld [vmem:[%s2 + $0x760] sm:$0xff]
  %v280 = vld [vmem:[%s2 + $0x768] sm:$0xff]
  %v281 = vld [vmem:[%s2 + $0x770] sm:$0xff]
  %v282 = vld [vmem:[%s2 + $0x778] sm:$0xff]
  %v283 = vld [vmem:[%s2 + $0x780] sm:$0xff]
  %v284 = vld [vmem:[%s2 + $0x788] sm:$0xff]
  %v285 = vld [vmem:[%s2 + $0x790] sm:$0xff]
  %v286 = vld [vmem:[%s2 + $0x798] sm:$0xff]
  %v287 = vld [vmem:[%s2 + $0x7a0] sm:$0xff]
  %v288 = vld [vmem:[%s2 + $0x7a8] sm:$0xff]
  %v289 = vld [vmem:[%s2 + $0x7b0] sm:$0xff]
  %v290 = vld [vmem:[%s2 + $0x7b8] sm:$0xff]
  %v291 = vld [vmem:[%s2 + $0x7c0] sm:$0xff]
  %v292 = vld [vmem:[%s2 + $0x7c8] sm:$0xff]
  %v293 = vld [vmem:[%s2 + $0x7d0] sm:$0xff]
  %v294 = vld [vmem:[%s2 + $0x7d8] sm:$0xff]
  %v295 = vld [vmem:[%s2 + $0x7e0] sm:$0xff]
  %v296 = vld [vmem:[%s2 + $0x7e8] sm:$0xff]
  %v297 = vld [vmem:[%s2 + $0x7f0] sm:$0xff]
  %v298 = vld [vmem:[%s2 + $0x7f8] sm:$0xff]
  %v299 = vld [vmem:[%s2 + $0x800] sm:$0xff]
  %v300 = vld [vmem:[%s2 + $0x808] sm:$0xff]
  %v301 = vld [vmem:[%s2 + $0x810] sm:$0xff]
  %v302 = vld [vmem:[%s2 + $0x818] sm:$0xff]
  %v303 = vld [vmem:[%s2 + $0x820] sm:$0xff]
  %v304 = vld [vmem:[%s2 + $0x828] sm:$0xff]
  %v305 = vld [vmem:[%s2 + $0x830] sm:$0xff]
  %v306 = vld [vmem:[%s2 + $0x838] sm:$0xff]
  %v307 = vld [vmem:[%s2 + $0x840] sm:$0xff]
  %v308 = vld [vmem:[%s2 + $0x848] sm:$0xff]
  %v309 = vld [vmem:[%s2 + $0x850] sm:$0xff]
  %v310 = vld [vmem:[%s2 + $0x858] sm:$0xff]
  %v311 = vld [vmem:[%s2 + $0x860] sm:$0xff]
  %v312 = vld [vmem:[%s2 + $0x868] sm:$0xff]
  %v313 = vld [vmem:[%s2 + $0x870] sm:$0xff]
  %v314 = vld [vmem:[%s2 + $0x878] sm:$0xff]
  %v315 = vld [vmem:[%s2 + $0x880] sm:$0xff]
  %v316 = vld [vmem:[%s2 + $0x888] sm:$0xff]
  %v317 = vld [vmem:[%s2 + $0x890] sm:$0xff]
  %v318 = vld [vmem:[%s2 + $0x898] sm:$0xff]
  %v319 = vld [vmem:[%s2 + $0x8a0] sm:$0xff]
  %v320 = vld [vmem:[%s2 + $0x8a8] sm:$0xff]
  %v321 = vld [vmem:[%s2 + $0x8b0] sm:$0xff]
  %v322 = vld [vmem:[%s2 + $0x8b8] sm:$0xff]
  %v323 = vld [vmem:[%s2 + $0x8c0] sm:$0xff]
  %v324 = vld [vmem:[%s2 + $0x8c8] sm:$0xff]
  %v325 = vld [vmem:[%s2 + $0x8d0] sm:$0xff]
  %v326 = vld [vmem:[%s2 + $0x8d8] sm:$0xff]
  %v327 = vld [vmem:[%s2 + $0x8e0] sm:$0xff]
  %v328 = vld [vmem:[%s2 + $0x8e8] sm:$0xff]
  %v329 = vld [vmem:[%s2 + $0x8f0] sm:$0xff]
  %v330 = vld [vmem:[%s2 + $0x8f8] sm:$0xff]
  %v331 = vld [vmem:[%s3] sm:$0xf]
  %v333 = vlaneseq
  %v334 = vshrl.u32 %v333, 7
  %v335 = vsub.s32 0, %v334
  %v336 = vrot.slane %v331, %v335
  %v337 = vlaneseq
  %v338 = vshrl.u32 %v337, 7
  %v339 = vsub.s32 1, %v338
  %v340 = vrot.slane %v331, %v339
  %v341 = vlaneseq
  %v342 = vshrl.u32 %v341, 7
  %v343 = vsub.s32 2, %v342
  %v344 = vrot.slane %v331, %v343
  %v345 = vlaneseq
  %v346 = vshrl.u32 %v345, 7
  %v347 = vsub.s32 3, %v346
  %v348 = vrot.slane %v331, %v347
  %v355 = vcombine.high %v41, %v41
  %v357 = vunpack.c.l.s4 1966171168
  %v358 = vunpack.c.0.s8 %v357
  %v359 = vlaneseq
  %v360 = vshrl.u32 %v359, 7
  %v361 = vsub.s32 %v358, %v360
  %v362 = vrot.slane %v41, %v361
  %v364 = vunpack.c.l.s4 1966171168
  %v365 = vunpack.c.0.s8 %v364
  %v366 = vlaneseq
  %v367 = vshrl.u32 %v366, 7
  %v368 = vsub.s32 %v365, %v367
  %v369 = vrot.slane %v355, %v368
  %v370 = vcombine.high %v362, %v362
  %v371 = vcombine.high %v369, %v369
  %v373 = vunpack.c.l.s4 1966171168
  %v374 = vunpack.c.0.s8 %v373
  %v375 = vlaneseq
  %v376 = vshrl.u32 %v375, 7
  %v377 = vsub.s32 %v374, %v376
  %v378 = vrot.slane %v362, %v377
  %v380 = vunpack.c.l.s4 1966171168
  %v381 = vunpack.c.0.s8 %v380
  %v382 = vlaneseq
  %v383 = vshrl.u32 %v382, 7
  %v384 = vsub.s32 %v381, %v383
  %v385 = vrot.slane %v369, %v384
  %v387 = vunpack.c.l.s4 1966171168
  %v388 = vunpack.c.0.s8 %v387
  %v389 = vlaneseq
  %v390 = vshrl.u32 %v389, 7
  %v391 = vsub.s32 %v388, %v390
  %v392 = vrot.slane %v370, %v391
  %v394 = vunpack.c.l.s4 1966171168
  %v395 = vunpack.c.0.s8 %v394
  %v396 = vlaneseq
  %v397 = vshrl.u32 %v396, 7
  %v398 = vsub.s32 %v395, %v397
  %v399 = vrot.slane %v371, %v398
  %v400 = vcombine.high %v378, %v378
  %v401 = vcombine.high %v385, %v385
  %v402 = vcombine.high %v392, %v392
  %v403 = vcombine.high %v399, %v399
  %v405 = vunpack.c.l.s4 1966171168
  %v406 = vunpack.c.0.s8 %v405
  %v407 = vlaneseq
  %v408 = vshrl.u32 %v407, 7
  %v409 = vsub.s32 %v406, %v408
  %v410 = vrot.slane %v42, %v409
  %v412 = vunpack.c.l.s4 1966171168
  %v413 = vunpack.c.0.s8 %v412
  %v414 = vlaneseq
  %v415 = vshrl.u32 %v414, 7
  %v416 = vsub.s32 %v413, %v415
  %v417 = vrot.slane %v410, %v416
  %v715 = vunpack.c.l.b16 %v43
  %v716 = vunpack.c.h.b16 %v43
  %v717 = vunpack.c.l.b16 %v44
  %v718 = vunpack.c.h.b16 %v44
  %v719 = vunpack.c.l.b16 %v45
  %v720 = vunpack.c.h.b16 %v45
  %v721 = vunpack.c.l.b16 %v46
  %v722 = vunpack.c.h.b16 %v46
  %v723 = vunpack.c.l.b16 %v47
  %v724 = vunpack.c.h.b16 %v47
  %v725 = vunpack.c.l.b16 %v48
  %v726 = vunpack.c.h.b16 %v48
  %v727 = vunpack.c.l.b16 %v49
  %v728 = vunpack.c.h.b16 %v49
  %v729 = vunpack.c.l.b16 %v50
  %v730 = vunpack.c.h.b16 %v50
  %v731 = vunpack.c.l.b16 %v51
  %v732 = vunpack.c.h.b16 %v51
  %v733 = vunpack.c.l.b16 %v52
  %v734 = vunpack.c.h.b16 %v52
  %v735 = vunpack.c.l.b16 %v53
  %v736 = vunpack.c.h.b16 %v53
  %v737 = vunpack.c.l.b16 %v54
  %v738 = vunpack.c.h.b16 %v54
  %v739 = vunpack.c.l.b16 %v55
  %v740 = vunpack.c.h.b16 %v55
  %v741 = vunpack.c.l.b16 %v56
  %v742 = vunpack.c.h.b16 %v56
  %v743 = vunpack.c.l.b16 %v57
  %v744 = vunpack.c.h.b16 %v57
  %v745 = vunpack.c.l.b16 %v58
  %v746 = vunpack.c.h.b16 %v58
  %v747 = vunpack.c.l.b16 %v59
  %v748 = vunpack.c.h.b16 %v59
  %v749 = vunpack.c.l.b16 %v60
  %v750 = vunpack.c.h.b16 %v60
  %v751 = vunpack.c.l.b16 %v61
  %v752 = vunpack.c.h.b16 %v61
  %v753 = vunpack.c.l.b16 %v62
  %v754 = vunpack.c.h.b16 %v62
  %v755 = vunpack.c.l.b16 %v63
  %v756 = vunpack.c.h.b16 %v63
  %v757 = vunpack.c.l.b16 %v64
  %v758 = vunpack.c.h.b16 %v64
  %v759 = vunpack.c.l.b16 %v65
  %v760 = vunpack.c.h.b16 %v65
  %v761 = vunpack.c.l.b16 %v66
  %v762 = vunpack.c.h.b16 %v66
  %v763 = vunpack.c.l.b16 %v67
  %v764 = vunpack.c.h.b16 %v67
  %v765 = vunpack.c.l.b16 %v68
  %v766 = vunpack.c.h.b16 %v68
  %v767 = vunpack.c.l.b16 %v69
  %v768 = vunpack.c.h.b16 %v69
  %v769 = vunpack.c.l.b16 %v70
  %v770 = vunpack.c.h.b16 %v70
  %v771 = vunpack.c.l.b16 %v71
  %v772 = vunpack.c.h.b16 %v71
  %v773 = vunpack.c.l.b16 %v72
  %v774 = vunpack.c.h.b16 %v72
  %v775 = vunpack.c.l.b16 %v73
  %v776 = vunpack.c.h.b16 %v73
  %v777 = vunpack.c.l.b16 %v74
  %v778 = vunpack.c.h.b16 %v74
  %v779 = vunpack.c.l.b16 %v75
  %v780 = vunpack.c.h.b16 %v75
  %v781 = vunpack.c.l.b16 %v76
  %v782 = vunpack.c.h.b16 %v76
  %v783 = vunpack.c.l.b16 %v77
  %v784 = vunpack.c.h.b16 %v77
  %v785 = vunpack.c.l.b16 %v78
  %v786 = vunpack.c.h.b16 %v78
  %v787 = vunpack.c.l.b16 %v79
  %v788 = vunpack.c.h.b16 %v79
  %v789 = vunpack.c.l.b16 %v80
  %v790 = vunpack.c.h.b16 %v80
  %v791 = vunpack.c.l.b16 %v81
  %v792 = vunpack.c.h.b16 %v81
  %v793 = vunpack.c.l.b16 %v82
  %v794 = vunpack.c.h.b16 %v82
  %v795 = vunpack.c.l.b16 %v83
  %v796 = vunpack.c.h.b16 %v83
  %v797 = vunpack.c.l.b16 %v84
  %v798 = vunpack.c.h.b16 %v84
  %v799 = vunpack.c.l.b16 %v85
  %v800 = vunpack.c.h.b16 %v85
  %v801 = vunpack.c.l.b16 %v86
  %v802 = vunpack.c.h.b16 %v86
  %v803 = vunpack.c.l.b16 %v87
  %v804 = vunpack.c.h.b16 %v87
  %v805 = vunpack.c.l.b16 %v88
  %v806 = vunpack.c.h.b16 %v88
  %v807 = vunpack.c.l.b16 %v89
  %v808 = vunpack.c.h.b16 %v89
  %v809 = vunpack.c.l.b16 %v90
  %v810 = vunpack.c.h.b16 %v90
  %v811 = vunpack.c.l.b16 %v91
  %v812 = vunpack.c.h.b16 %v91
  %v813 = vunpack.c.l.b16 %v92
  %v814 = vunpack.c.h.b16 %v92
  %v815 = vunpack.c.l.b16 %v93
  %v816 = vunpack.c.h.b16 %v93
  %v817 = vunpack.c.l.b16 %v94
  %v818 = vunpack.c.h.b16 %v94
  %v819 = vunpack.c.l.b16 %v95
  %v820 = vunpack.c.h.b16 %v95
  %v821 = vunpack.c.l.b16 %v96
  %v822 = vunpack.c.h.b16 %v96
  %v823 = vunpack.c.l.b16 %v97
  %v824 = vunpack.c.h.b16 %v97
  %v825 = vunpack.c.l.b16 %v98
  %v826 = vunpack.c.h.b16 %v98
  %v827 = vunpack.c.l.b16 %v99
  %v828 = vunpack.c.h.b16 %v99
  %v829 = vunpack.c.l.b16 %v100
  %v830 = vunpack.c.h.b16 %v100
  %v831 = vunpack.c.l.b16 %v101
  %v832 = vunpack.c.h.b16 %v101
  %v833 = vunpack.c.l.b16 %v102
  %v834 = vunpack.c.h.b16 %v102
  %v835 = vunpack.c.l.b16 %v103
  %v836 = vunpack.c.h.b16 %v103
  %v837 = vunpack.c.l.b16 %v104
  %v838 = vunpack.c.h.b16 %v104
  %v839 = vunpack.c.l.b16 %v105
  %v840 = vunpack.c.h.b16 %v105
  %v841 = vunpack.c.l.b16 %v106
  %v842 = vunpack.c.h.b16 %v106
  %v843 = vunpack.c.l.b16 %v107
  %v844 = vunpack.c.h.b16 %v107
  %v845 = vunpack.c.l.b16 %v108
  %v846 = vunpack.c.h.b16 %v108
  %v847 = vunpack.c.l.b16 %v109
  %v848 = vunpack.c.h.b16 %v109
  %v849 = vunpack.c.l.b16 %v110
  %v850 = vunpack.c.h.b16 %v110
  %v851 = vunpack.c.l.b16 %v111
  %v852 = vunpack.c.h.b16 %v111
  %v853 = vunpack.c.l.b16 %v112
  %v854 = vunpack.c.h.b16 %v112
  %v855 = vunpack.c.l.b16 %v113
  %v856 = vunpack.c.h.b16 %v113
  %v857 = vunpack.c.l.b16 %v114
  %v858 = vunpack.c.h.b16 %v114
  %v859 = vunpack.c.l.b16 %v115
  %v860 = vunpack.c.h.b16 %v115
  %v861 = vunpack.c.l.b16 %v116
  %v862 = vunpack.c.h.b16 %v116
  %v863 = vunpack.c.l.b16 %v117
  %v864 = vunpack.c.h.b16 %v117
  %v865 = vunpack.c.l.b16 %v118
  %v866 = vunpack.c.h.b16 %v118
  %v867 = vunpack.c.l.b16 %v119
  %v868 = vunpack.c.h.b16 %v119
  %v869 = vunpack.c.l.b16 %v120
  %v870 = vunpack.c.h.b16 %v120
  %v871 = vunpack.c.l.b16 %v121
  %v872 = vunpack.c.h.b16 %v121
  %v873 = vunpack.c.l.b16 %v122
  %v874 = vunpack.c.h.b16 %v122
  %v875 = vunpack.c.l.b16 %v123
  %v876 = vunpack.c.h.b16 %v123
  %v877 = vunpack.c.l.b16 %v124
  %v878 = vunpack.c.h.b16 %v124
  %v879 = vunpack.c.l.b16 %v125
  %v880 = vunpack.c.h.b16 %v125
  %v881 = vunpack.c.l.b16 %v126
  %v882 = vunpack.c.h.b16 %v126
  %v883 = vunpack.c.l.b16 %v127
  %v884 = vunpack.c.h.b16 %v127
  %v885 = vunpack.c.l.b16 %v128
  %v886 = vunpack.c.h.b16 %v128
  %v887 = vunpack.c.l.b16 %v129
  %v888 = vunpack.c.h.b16 %v129
  %v889 = vunpack.c.l.b16 %v130
  %v890 = vunpack.c.h.b16 %v130
  %v891 = vunpack.c.l.b16 %v131
  %v892 = vunpack.c.h.b16 %v131
  %v893 = vunpack.c.l.b16 %v132
  %v894 = vunpack.c.h.b16 %v132
  %v895 = vunpack.c.l.b16 %v133
  %v896 = vunpack.c.h.b16 %v133
  %v897 = vunpack.c.l.b16 %v134
  %v898 = vunpack.c.h.b16 %v134
  %v899 = vunpack.c.l.b16 %v135
  %v900 = vunpack.c.h.b16 %v135
  %v901 = vunpack.c.l.b16 %v136
  %v902 = vunpack.c.h.b16 %v136
  %v903 = vunpack.c.l.b16 %v137
  %v904 = vunpack.c.h.b16 %v137
  %v905 = vunpack.c.l.b16 %v138
  %v906 = vunpack.c.h.b16 %v138
  %v907 = vunpack.c.l.b16 %v139
  %v908 = vunpack.c.h.b16 %v139
  %v909 = vunpack.c.l.b16 %v140
  %v910 = vunpack.c.h.b16 %v140
  %v911 = vunpack.c.l.b16 %v141
  %v912 = vunpack.c.h.b16 %v141
  %v913 = vunpack.c.l.b16 %v142
  %v914 = vunpack.c.h.b16 %v142
  %v915 = vunpack.c.l.b16 %v143
  %v916 = vunpack.c.h.b16 %v143
  %v917 = vunpack.c.l.b16 %v144
  %v918 = vunpack.c.h.b16 %v144
  %v919 = vunpack.c.l.b16 %v145
  %v920 = vunpack.c.h.b16 %v145
  %v921 = vunpack.c.l.b16 %v146
  %v922 = vunpack.c.h.b16 %v146
  %v923 = vunpack.c.l.b16 %v147
  %v924 = vunpack.c.h.b16 %v147
  %v925 = vunpack.c.l.b16 %v148
  %v926 = vunpack.c.h.b16 %v148
  %v927 = vunpack.c.l.b16 %v149
  %v928 = vunpack.c.h.b16 %v149
  %v929 = vunpack.c.l.b16 %v150
  %v930 = vunpack.c.h.b16 %v150
  %v931 = vunpack.c.l.b16 %v151
  %v932 = vunpack.c.h.b16 %v151
  %v933 = vunpack.c.l.b16 %v152
  %v934 = vunpack.c.h.b16 %v152
  %v935 = vunpack.c.l.b16 %v153
  %v936 = vunpack.c.h.b16 %v153
  %v937 = vunpack.c.l.b16 %v154
  %v938 = vunpack.c.h.b16 %v154
  %v939 = vunpack.c.l.b16 %v155
  %v940 = vunpack.c.h.b16 %v155
  %v941 = vunpack.c.l.b16 %v156
  %v942 = vunpack.c.h.b16 %v156
  %v943 = vunpack.c.l.b16 %v157
  %v944 = vunpack.c.h.b16 %v157
  %v945 = vunpack.c.l.b16 %v158
  %v946 = vunpack.c.h.b16 %v158
  %v947 = vunpack.c.l.b16 %v159
  %v948 = vunpack.c.h.b16 %v159
  %v949 = vunpack.c.l.b16 %v160
  %v950 = vunpack.c.h.b16 %v160
  %v951 = vunpack.c.l.b16 %v161
  %v952 = vunpack.c.h.b16 %v161
  %v953 = vunpack.c.l.b16 %v162
  %v954 = vunpack.c.h.b16 %v162
  %v955 = vunpack.c.l.b16 %v163
  %v956 = vunpack.c.h.b16 %v163
  %v957 = vunpack.c.l.b16 %v164
  %v958 = vunpack.c.h.b16 %v164
  %v959 = vunpack.c.l.b16 %v165
  %v960 = vunpack.c.h.b16 %v165
  %v961 = vunpack.c.l.b16 %v166
  %v962 = vunpack.c.h.b16 %v166
  %v963 = vunpack.c.l.b16 %v167
  %v964 = vunpack.c.h.b16 %v167
  %v965 = vunpack.c.l.b16 %v168
  %v966 = vunpack.c.h.b16 %v168
  %v967 = vunpack.c.l.b16 %v169
  %v968 = vunpack.c.h.b16 %v169
  %v969 = vunpack.c.l.b16 %v170
  %v970 = vunpack.c.h.b16 %v170
  %v971 = vunpack.c.l.b16 %v171
  %v972 = vunpack.c.h.b16 %v171
  %v973 = vunpack.c.l.b16 %v172
  %v974 = vunpack.c.h.b16 %v172
  %v975 = vunpack.c.l.b16 %v173
  %v976 = vunpack.c.h.b16 %v173
  %v977 = vunpack.c.l.b16 %v174
  %v978 = vunpack.c.h.b16 %v174
  %v979 = vunpack.c.l.b16 %v175
  %v980 = vunpack.c.h.b16 %v175
  %v981 = vunpack.c.l.b16 %v176
  %v982 = vunpack.c.h.b16 %v176
  %v983 = vunpack.c.l.b16 %v177
  %v984 = vunpack.c.h.b16 %v177
  %v985 = vunpack.c.l.b16 %v178
  %v986 = vunpack.c.h.b16 %v178
  %v987 = vunpack.c.l.b16 %v179
  %v988 = vunpack.c.h.b16 %v179
  %v989 = vunpack.c.l.b16 %v180
  %v990 = vunpack.c.h.b16 %v180
  %v991 = vunpack.c.l.b16 %v181
  %v992 = vunpack.c.h.b16 %v181
  %v993 = vunpack.c.l.b16 %v182
  %v994 = vunpack.c.h.b16 %v182
  %v995 = vunpack.c.l.b16 %v183
  %v996 = vunpack.c.h.b16 %v183
  %v997 = vunpack.c.l.b16 %v184
  %v998 = vunpack.c.h.b16 %v184
  %v999 = vunpack.c.l.b16 %v185
  %v1000 = vunpack.c.h.b16 %v185
  %v1001 = vunpack.c.l.b16 %v186
  %v1002 = vunpack.c.h.b16 %v186
  %v1003 = vunpack.c.l.b16 %v187
  %v1004 = vunpack.c.h.b16 %v187
  %v1005 = vunpack.c.l.b16 %v188
  %v1006 = vunpack.c.h.b16 %v188
  %v1007 = vunpack.c.l.b16 %v189
  %v1008 = vunpack.c.h.b16 %v189
  %v1009 = vunpack.c.l.b16 %v190
  %v1010 = vunpack.c.h.b16 %v190
  %v1011 = vunpack.c.l.b16 %v191
  %v1012 = vunpack.c.h.b16 %v191
  %v1013 = vunpack.c.l.b16 %v192
  %v1014 = vunpack.c.h.b16 %v192
  %v1015 = vunpack.c.l.b16 %v193
  %v1016 = vunpack.c.h.b16 %v193
  %v1017 = vunpack.c.l.b16 %v194
  %v1018 = vunpack.c.h.b16 %v194
  %v1019 = vunpack.c.l.b16 %v195
  %v1020 = vunpack.c.h.b16 %v195
  %v1021 = vunpack.c.l.b16 %v196
  %v1022 = vunpack.c.h.b16 %v196
  %v1023 = vunpack.c.l.b16 %v197
  %v1024 = vunpack.c.h.b16 %v197
  %v1025 = vunpack.c.l.b16 %v198
  %v1026 = vunpack.c.h.b16 %v198
  %v1027 = vunpack.c.l.b16 %v199
  %v1028 = vunpack.c.h.b16 %v199
  %v1029 = vunpack.c.l.b16 %v200
  %v1030 = vunpack.c.h.b16 %v200
  %v1031 = vunpack.c.l.b16 %v201
  %v1032 = vunpack.c.h.b16 %v201
  %v1033 = vunpack.c.l.b16 %v202
  %v1034 = vunpack.c.h.b16 %v202
  %v1035 = vunpack.c.l.b16 %v203
  %v1036 = vunpack.c.h.b16 %v203
  %v1037 = vunpack.c.l.b16 %v204
  %v1038 = vunpack.c.h.b16 %v204
  %v1039 = vunpack.c.l.b16 %v205
  %v1040 = vunpack.c.h.b16 %v205
  %v1041 = vunpack.c.l.b16 %v206
  %v1042 = vunpack.c.h.b16 %v206
  %v1043 = vunpack.c.l.b16 %v207
  %v1044 = vunpack.c.h.b16 %v207
  %v1045 = vunpack.c.l.b16 %v208
  %v1046 = vunpack.c.h.b16 %v208
  %v1047 = vunpack.c.l.b16 %v209
  %v1048 = vunpack.c.h.b16 %v209
  %v1049 = vunpack.c.l.b16 %v210
  %v1050 = vunpack.c.h.b16 %v210
  %v1051 = vunpack.c.l.b16 %v211
  %v1052 = vunpack.c.h.b16 %v211
  %v1053 = vunpack.c.l.b16 %v212
  %v1054 = vunpack.c.h.b16 %v212
  %v1055 = vunpack.c.l.b16 %v213
  %v1056 = vunpack.c.h.b16 %v213
  %v1057 = vunpack.c.l.b16 %v214
  %v1058 = vunpack.c.h.b16 %v214
  %v1059 = vunpack.c.l.b16 %v215
  %v1060 = vunpack.c.h.b16 %v215
  %v1061 = vunpack.c.l.b16 %v216
  %v1062 = vunpack.c.h.b16 %v216
  %v1063 = vunpack.c.l.b16 %v217
  %v1064 = vunpack.c.h.b16 %v217
  %v1065 = vunpack.c.l.b16 %v218
  %v1066 = vunpack.c.h.b16 %v218
  %v1067 = vunpack.c.l.b16 %v219
  %v1068 = vunpack.c.h.b16 %v219
  %v1069 = vunpack.c.l.b16 %v220
  %v1070 = vunpack.c.h.b16 %v220
  %v1071 = vunpack.c.l.b16 %v221
  %v1072 = vunpack.c.h.b16 %v221
  %v1073 = vunpack.c.l.b16 %v222
  %v1074 = vunpack.c.h.b16 %v222
  %v1075 = vunpack.c.l.b16 %v223
  %v1076 = vunpack.c.h.b16 %v223
  %v1077 = vunpack.c.l.b16 %v224
  %v1078 = vunpack.c.h.b16 %v224
  %v1079 = vunpack.c.l.b16 %v225
  %v1080 = vunpack.c.h.b16 %v225
  %v1081 = vunpack.c.l.b16 %v226
  %v1082 = vunpack.c.h.b16 %v226
  %v1083 = vunpack.c.l.b16 %v227
  %v1084 = vunpack.c.h.b16 %v227
  %v1085 = vunpack.c.l.b16 %v228
  %v1086 = vunpack.c.h.b16 %v228
  %v1087 = vunpack.c.l.b16 %v229
  %v1088 = vunpack.c.h.b16 %v229
  %v1089 = vunpack.c.l.b16 %v230
  %v1090 = vunpack.c.h.b16 %v230
  %v1091 = vunpack.c.l.b16 %v231
  %v1092 = vunpack.c.h.b16 %v231
  %v1093 = vunpack.c.l.b16 %v232
  %v1094 = vunpack.c.h.b16 %v232
  %v1095 = vunpack.c.l.b16 %v233
  %v1096 = vunpack.c.h.b16 %v233
  %v1097 = vunpack.c.l.b16 %v234
  %v1098 = vunpack.c.h.b16 %v234
  %v1099 = vunpack.c.l.b16 %v235
  %v1100 = vunpack.c.h.b16 %v235
  %v1101 = vunpack.c.l.b16 %v236
  %v1102 = vunpack.c.h.b16 %v236
  %v1103 = vunpack.c.l.b16 %v237
  %v1104 = vunpack.c.h.b16 %v237
  %v1105 = vunpack.c.l.b16 %v238
  %v1106 = vunpack.c.h.b16 %v238
  %v1107 = vunpack.c.l.b16 %v239
  %v1108 = vunpack.c.h.b16 %v239
  %v1109 = vunpack.c.l.b16 %v240
  %v1110 = vunpack.c.h.b16 %v240
  %v1111 = vunpack.c.l.b16 %v241
  %v1112 = vunpack.c.h.b16 %v241
  %v1113 = vunpack.c.l.b16 %v242
  %v1114 = vunpack.c.h.b16 %v242
  %v1115 = vunpack.c.l.b16 %v243
  %v1116 = vunpack.c.h.b16 %v243
  %v1117 = vunpack.c.l.b16 %v244
  %v1118 = vunpack.c.h.b16 %v244
  %v1119 = vunpack.c.l.b16 %v245
  %v1120 = vunpack.c.h.b16 %v245
  %v1121 = vunpack.c.l.b16 %v246
  %v1122 = vunpack.c.h.b16 %v246
  %v1123 = vunpack.c.l.b16 %v247
  %v1124 = vunpack.c.h.b16 %v247
  %v1125 = vunpack.c.l.b16 %v248
  %v1126 = vunpack.c.h.b16 %v248
  %v1127 = vunpack.c.l.b16 %v249
  %v1128 = vunpack.c.h.b16 %v249
  %v1129 = vunpack.c.l.b16 %v250
  %v1130 = vunpack.c.h.b16 %v250
  %v1131 = vunpack.c.l.b16 %v251
  %v1132 = vunpack.c.h.b16 %v251
  %v1133 = vunpack.c.l.b16 %v252
  %v1134 = vunpack.c.h.b16 %v252
  %v1135 = vunpack.c.l.b16 %v253
  %v1136 = vunpack.c.h.b16 %v253
  %v1137 = vunpack.c.l.b16 %v254
  %v1138 = vunpack.c.h.b16 %v254
  %v1139 = vunpack.c.l.b16 %v255
  %v1140 = vunpack.c.h.b16 %v255
  %v1141 = vunpack.c.l.b16 %v256
  %v1142 = vunpack.c.h.b16 %v256
  %v1143 = vunpack.c.l.b16 %v257
  %v1144 = vunpack.c.h.b16 %v257
  %v1145 = vunpack.c.l.b16 %v258
  %v1146 = vunpack.c.h.b16 %v258
  %v1147 = vunpack.c.l.b16 %v259
  %v1148 = vunpack.c.h.b16 %v259
  %v1149 = vunpack.c.l.b16 %v260
  %v1150 = vunpack.c.h.b16 %v260
  %v1151 = vunpack.c.l.b16 %v261
  %v1152 = vunpack.c.h.b16 %v261
  %v1153 = vunpack.c.l.b16 %v262
  %v1154 = vunpack.c.h.b16 %v262
  %v1155 = vunpack.c.l.b16 %v263
  %v1156 = vunpack.c.h.b16 %v263
  %v1157 = vunpack.c.l.b16 %v264
  %v1158 = vunpack.c.h.b16 %v264
  %v1159 = vunpack.c.l.b16 %v265
  %v1160 = vunpack.c.h.b16 %v265
  %v1161 = vunpack.c.l.b16 %v266
  %v1162 = vunpack.c.h.b16 %v266
  %v1163 = vunpack.c.l.b16 %v267
  %v1164 = vunpack.c.h.b16 %v267
  %v1165 = vunpack.c.l.b16 %v268
  %v1166 = vunpack.c.h.b16 %v268
  %v1167 = vunpack.c.l.b16 %v269
  %v1168 = vunpack.c.h.b16 %v269
  %v1169 = vunpack.c.l.b16 %v270
  %v1170 = vunpack.c.h.b16 %v270
  %v1171 = vunpack.c.l.b16 %v271
  %v1172 = vunpack.c.h.b16 %v271
  %v1173 = vunpack.c.l.b16 %v272
  %v1174 = vunpack.c.h.b16 %v272
  %v1175 = vunpack.c.l.b16 %v273
  %v1176 = vunpack.c.h.b16 %v273
  %v1177 = vunpack.c.l.b16 %v274
  %v1178 = vunpack.c.h.b16 %v274
  %v1179 = vunpack.c.l.b16 %v275
  %v1180 = vunpack.c.h.b16 %v275
  %v1181 = vunpack.c.l.b16 %v276
  %v1182 = vunpack.c.h.b16 %v276
  %v1183 = vunpack.c.l.b16 %v277
  %v1184 = vunpack.c.h.b16 %v277
  %v1185 = vunpack.c.l.b16 %v278
  %v1186 = vunpack.c.h.b16 %v278
  %v1187 = vunpack.c.l.b16 %v279
  %v1188 = vunpack.c.h.b16 %v279
  %v1189 = vunpack.c.l.b16 %v280
  %v1190 = vunpack.c.h.b16 %v280
  %v1191 = vunpack.c.l.b16 %v281
  %v1192 = vunpack.c.h.b16 %v281
  %v1193 = vunpack.c.l.b16 %v282
  %v1194 = vunpack.c.h.b16 %v282
  %v1195 = vunpack.c.l.b16 %v283
  %v1196 = vunpack.c.h.b16 %v283
  %v1197 = vunpack.c.l.b16 %v284
  %v1198 = vunpack.c.h.b16 %v284
  %v1199 = vunpack.c.l.b16 %v285
  %v1200 = vunpack.c.h.b16 %v285
  %v1201 = vunpack.c.l.b16 %v286
  %v1202 = vunpack.c.h.b16 %v286
  %v1203 = vunpack.c.l.b16 %v287
  %v1204 = vunpack.c.h.b16 %v287
  %v1205 = vunpack.c.l.b16 %v288
  %v1206 = vunpack.c.h.b16 %v288
  %v1207 = vunpack.c.l.b16 %v289
  %v1208 = vunpack.c.h.b16 %v289
  %v1209 = vunpack.c.l.b16 %v290
  %v1210 = vunpack.c.h.b16 %v290
  %v1211 = vunpack.c.l.b16 %v291
  %v1212 = vunpack.c.h.b16 %v291
  %v1213 = vunpack.c.l.b16 %v292
  %v1214 = vunpack.c.h.b16 %v292
  %v1215 = vunpack.c.l.b16 %v293
  %v1216 = vunpack.c.h.b16 %v293
  %v1217 = vunpack.c.l.b16 %v294
  %v1218 = vunpack.c.h.b16 %v294
  %v1219 = vunpack.c.l.b16 %v295
  %v1220 = vunpack.c.h.b16 %v295
  %v1221 = vunpack.c.l.b16 %v296
  %v1222 = vunpack.c.h.b16 %v296
  %v1223 = vunpack.c.l.b16 %v297
  %v1224 = vunpack.c.h.b16 %v297
  %v1225 = vunpack.c.l.b16 %v298
  %v1226 = vunpack.c.h.b16 %v298
  %v1227 = vunpack.c.l.b16 %v299
  %v1228 = vunpack.c.h.b16 %v299
  %v1229 = vunpack.c.l.b16 %v300
  %v1230 = vunpack.c.h.b16 %v300
  %v1231 = vunpack.c.l.b16 %v301
  %v1232 = vunpack.c.h.b16 %v301
  %v1233 = vunpack.c.l.b16 %v302
  %v1234 = vunpack.c.h.b16 %v302
  %v1235 = vunpack.c.l.b16 %v303
  %v1236 = vunpack.c.h.b16 %v303
  %v1237 = vunpack.c.l.b16 %v304
  %v1238 = vunpack.c.h.b16 %v304
  %v1239 = vunpack.c.l.b16 %v305
  %v1240 = vunpack.c.h.b16 %v305
  %v1241 = vunpack.c.l.b16 %v306
  %v1242 = vunpack.c.h.b16 %v306
  %v1243 = vunpack.c.l.b16 %v307
  %v1244 = vunpack.c.h.b16 %v307
  %v1245 = vunpack.c.l.b16 %v308
  %v1246 = vunpack.c.h.b16 %v308
  %v1247 = vunpack.c.l.b16 %v309
  %v1248 = vunpack.c.h.b16 %v309
  %v1249 = vunpack.c.l.b16 %v310
  %v1250 = vunpack.c.h.b16 %v310
  %v1251 = vunpack.c.l.b16 %v311
  %v1252 = vunpack.c.h.b16 %v311
  %v1253 = vunpack.c.l.b16 %v312
  %v1254 = vunpack.c.h.b16 %v312
  %v1255 = vunpack.c.l.b16 %v313
  %v1256 = vunpack.c.h.b16 %v313
  %v1257 = vunpack.c.l.b16 %v314
  %v1258 = vunpack.c.h.b16 %v314
  %v1259 = vunpack.c.l.b16 %v315
  %v1260 = vunpack.c.h.b16 %v315
  %v1261 = vunpack.c.l.b16 %v316
  %v1262 = vunpack.c.h.b16 %v316
  %v1263 = vunpack.c.l.b16 %v317
  %v1264 = vunpack.c.h.b16 %v317
  %v1265 = vunpack.c.l.b16 %v318
  %v1266 = vunpack.c.h.b16 %v318
  %v1267 = vunpack.c.l.b16 %v319
  %v1268 = vunpack.c.h.b16 %v319
  %v1269 = vunpack.c.l.b16 %v320
  %v1270 = vunpack.c.h.b16 %v320
  %v1271 = vunpack.c.l.b16 %v321
  %v1272 = vunpack.c.h.b16 %v321
  %v1273 = vunpack.c.l.b16 %v322
  %v1274 = vunpack.c.h.b16 %v322
  %v1275 = vunpack.c.l.b16 %v323
  %v1276 = vunpack.c.h.b16 %v323
  %v1277 = vunpack.c.l.b16 %v324
  %v1278 = vunpack.c.h.b16 %v324
  %v1279 = vunpack.c.l.b16 %v325
  %v1280 = vunpack.c.h.b16 %v325
  %v1281 = vunpack.c.l.b16 %v326
  %v1282 = vunpack.c.h.b16 %v326
  %v1283 = vunpack.c.l.b16 %v327
  %v1284 = vunpack.c.h.b16 %v327
  %v1285 = vunpack.c.l.b16 %v328
  %v1286 = vunpack.c.h.b16 %v328
  %v1287 = vunpack.c.l.b16 %v329
  %v1288 = vunpack.c.h.b16 %v329
  %v1289 = vunpack.c.l.b16 %v330
  %v1290 = vunpack.c.h.b16 %v330
  %v1291 = vpack.c.b16 %v719, %v715
  %v1292 = vpack.c.b16 %v720, %v716
  %v1293 = vpack.c.b16 %v721, %v717
  %v1294 = vpack.c.b16 %v722, %v718
  %v1295 = vpack.c.b16 %v727, %v723
  %v1296 = vpack.c.b16 %v728, %v724
  %v1297 = vpack.c.b16 %v729, %v725
  %v1298 = vpack.c.b16 %v730, %v726
  %v1299 = vpack.c.b16 %v735, %v731
  %v1300 = vpack.c.b16 %v736, %v732
  %v1301 = vpack.c.b16 %v737, %v733
  %v1302 = vpack.c.b16 %v738, %v734
  %v1303 = vpack.c.b16 %v743, %v739
  %v1304 = vpack.c.b16 %v744, %v740
  %v1305 = vpack.c.b16 %v745, %v741
  %v1306 = vpack.c.b16 %v746, %v742
  %v1307 = vpack.c.b16 %v751, %v747
  %v1308 = vpack.c.b16 %v752, %v748
  %v1309 = vpack.c.b16 %v753, %v749
  %v1310 = vpack.c.b16 %v754, %v750
  %v1311 = vpack.c.b16 %v759, %v755
  %v1312 = vpack.c.b16 %v760, %v756
  %v1313 = vpack.c.b16 %v761, %v757
  %v1314 = vpack.c.b16 %v762, %v758
  %v1315 = vpack.c.b16 %v767, %v763
  %v1316 = vpack.c.b16 %v768, %v764
  %v1317 = vpack.c.b16 %v769, %v765
  %v1318 = vpack.c.b16 %v770, %v766
  %v1319 = vpack.c.b16 %v775, %v771
  %v1320 = vpack.c.b16 %v776, %v772
  %v1321 = vpack.c.b16 %v777, %v773
  %v1322 = vpack.c.b16 %v778, %v774
  %v1323 = vpack.c.b16 %v783, %v779
  %v1324 = vpack.c.b16 %v784, %v780
  %v1325 = vpack.c.b16 %v785, %v781
  %v1326 = vpack.c.b16 %v786, %v782
  %v1327 = vpack.c.b16 %v791, %v787
  %v1328 = vpack.c.b16 %v792, %v788
  %v1329 = vpack.c.b16 %v793, %v789
  %v1330 = vpack.c.b16 %v794, %v790
  %v1331 = vpack.c.b16 %v799, %v795
  %v1332 = vpack.c.b16 %v800, %v796
  %v1333 = vpack.c.b16 %v801, %v797
  %v1334 = vpack.c.b16 %v802, %v798
  %v1335 = vpack.c.b16 %v807, %v803
  %v1336 = vpack.c.b16 %v808, %v804
  %v1337 = vpack.c.b16 %v809, %v805
  %v1338 = vpack.c.b16 %v810, %v806
  %v1339 = vpack.c.b16 %v815, %v811
  %v1340 = vpack.c.b16 %v816, %v812
  %v1341 = vpack.c.b16 %v817, %v813
  %v1342 = vpack.c.b16 %v818, %v814
  %v1343 = vpack.c.b16 %v823, %v819
  %v1344 = vpack.c.b16 %v824, %v820
  %v1345 = vpack.c.b16 %v825, %v821
  %v1346 = vpack.c.b16 %v826, %v822
  %v1347 = vpack.c.b16 %v831, %v827
  %v1348 = vpack.c.b16 %v832, %v828
  %v1349 = vpack.c.b16 %v833, %v829
  %v1350 = vpack.c.b16 %v834, %v830
  %v1351 = vpack.c.b16 %v839, %v835
  %v1352 = vpack.c.b16 %v840, %v836
  %v1353 = vpack.c.b16 %v841, %v837
  %v1354 = vpack.c.b16 %v842, %v838
  %v1355 = vpack.c.b16 %v847, %v843
  %v1356 = vpack.c.b16 %v848, %v844
  %v1357 = vpack.c.b16 %v849, %v845
  %v1358 = vpack.c.b16 %v850, %v846
  %v1359 = vpack.c.b16 %v855, %v851
  %v1360 = vpack.c.b16 %v856, %v852
  %v1361 = vpack.c.b16 %v857, %v853
  %v1362 = vpack.c.b16 %v858, %v854
  %v1363 = vpack.c.b16 %v863, %v859
  %v1364 = vpack.c.b16 %v864, %v860
  %v1365 = vpack.c.b16 %v865, %v861
  %v1366 = vpack.c.b16 %v866, %v862
  %v1367 = vpack.c.b16 %v871, %v867
  %v1368 = vpack.c.b16 %v872, %v868
  %v1369 = vpack.c.b16 %v873, %v869
  %v1370 = vpack.c.b16 %v874, %v870
  %v1371 = vpack.c.b16 %v879, %v875
  %v1372 = vpack.c.b16 %v880, %v876
  %v1373 = vpack.c.b16 %v881, %v877
  %v1374 = vpack.c.b16 %v882, %v878
  %v1375 = vpack.c.b16 %v887, %v883
  %v1376 = vpack.c.b16 %v888, %v884
  %v1377 = vpack.c.b16 %v889, %v885
  %v1378 = vpack.c.b16 %v890, %v886
  %v1379 = vpack.c.b16 %v895, %v891
  %v1380 = vpack.c.b16 %v896, %v892
  %v1381 = vpack.c.b16 %v897, %v893
  %v1382 = vpack.c.b16 %v898, %v894
  %v1383 = vpack.c.b16 %v903, %v899
  %v1384 = vpack.c.b16 %v904, %v900
  %v1385 = vpack.c.b16 %v905, %v901
  %v1386 = vpack.c.b16 %v906, %v902
  %v1387 = vpack.c.b16 %v911, %v907
  %v1388 = vpack.c.b16 %v912, %v908
  %v1389 = vpack.c.b16 %v913, %v909
  %v1390 = vpack.c.b16 %v914, %v910
  %v1391 = vpack.c.b16 %v919, %v915
  %v1392 = vpack.c.b16 %v920, %v916
  %v1393 = vpack.c.b16 %v921, %v917
  %v1394 = vpack.c.b16 %v922, %v918
  %v1395 = vpack.c.b16 %v927, %v923
  %v1396 = vpack.c.b16 %v928, %v924
  %v1397 = vpack.c.b16 %v929, %v925
  %v1398 = vpack.c.b16 %v930, %v926
  %v1399 = vpack.c.b16 %v935, %v931
  %v1400 = vpack.c.b16 %v936, %v932
  %v1401 = vpack.c.b16 %v937, %v933
  %v1402 = vpack.c.b16 %v938, %v934
  %v1403 = vpack.c.b16 %v943, %v939
  %v1404 = vpack.c.b16 %v944, %v940
  %v1405 = vpack.c.b16 %v945, %v941
  %v1406 = vpack.c.b16 %v946, %v942
  %v1407 = vpack.c.b16 %v951, %v947
  %v1408 = vpack.c.b16 %v952, %v948
  %v1409 = vpack.c.b16 %v953, %v949
  %v1410 = vpack.c.b16 %v954, %v950
  %v1411 = vpack.c.b16 %v959, %v955
  %v1412 = vpack.c.b16 %v960, %v956
  %v1413 = vpack.c.b16 %v961, %v957
  %v1414 = vpack.c.b16 %v962, %v958
  %v1415 = vpack.c.b16 %v967, %v963
  %v1416 = vpack.c.b16 %v968, %v964
  %v1417 = vpack.c.b16 %v969, %v965
  %v1418 = vpack.c.b16 %v970, %v966
  %v1419 = vpack.c.b16 %v975, %v971
  %v1420 = vpack.c.b16 %v976, %v972
  %v1421 = vpack.c.b16 %v977, %v973
  %v1422 = vpack.c.b16 %v978, %v974
  %v1423 = vpack.c.b16 %v983, %v979
  %v1424 = vpack.c.b16 %v984, %v980
  %v1425 = vpack.c.b16 %v985, %v981
  %v1426 = vpack.c.b16 %v986, %v982
  %v1427 = vpack.c.b16 %v991, %v987
  %v1428 = vpack.c.b16 %v992, %v988
  %v1429 = vpack.c.b16 %v993, %v989
  %v1430 = vpack.c.b16 %v994, %v990
  %v1431 = vpack.c.b16 %v999, %v995
  %v1432 = vpack.c.b16 %v1000, %v996
  %v1433 = vpack.c.b16 %v1001, %v997
  %v1434 = vpack.c.b16 %v1002, %v998
  %v1435 = vpack.c.b16 %v1007, %v1003
  %v1436 = vpack.c.b16 %v1008, %v1004
  %v1437 = vpack.c.b16 %v1009, %v1005
  %v1438 = vpack.c.b16 %v1010, %v1006
  %v1439 = vpack.c.b16 %v1015, %v1011
  %v1440 = vpack.c.b16 %v1016, %v1012
  %v1441 = vpack.c.b16 %v1017, %v1013
  %v1442 = vpack.c.b16 %v1018, %v1014
  %v1443 = vpack.c.b16 %v1023, %v1019
  %v1444 = vpack.c.b16 %v1024, %v1020
  %v1445 = vpack.c.b16 %v1025, %v1021
  %v1446 = vpack.c.b16 %v1026, %v1022
  %v1447 = vpack.c.b16 %v1031, %v1027
  %v1448 = vpack.c.b16 %v1032, %v1028
  %v1449 = vpack.c.b16 %v1033, %v1029
  %v1450 = vpack.c.b16 %v1034, %v1030
  %v1451 = vpack.c.b16 %v1039, %v1035
  %v1452 = vpack.c.b16 %v1040, %v1036
  %v1453 = vpack.c.b16 %v1041, %v1037
  %v1454 = vpack.c.b16 %v1042, %v1038
  %v1455 = vpack.c.b16 %v1047, %v1043
  %v1456 = vpack.c.b16 %v1048, %v1044
  %v1457 = vpack.c.b16 %v1049, %v1045
  %v1458 = vpack.c.b16 %v1050, %v1046
  %v1459 = vpack.c.b16 %v1055, %v1051
  %v1460 = vpack.c.b16 %v1056, %v1052
  %v1461 = vpack.c.b16 %v1057, %v1053
  %v1462 = vpack.c.b16 %v1058, %v1054
  %v1463 = vpack.c.b16 %v1063, %v1059
  %v1464 = vpack.c.b16 %v1064, %v1060
  %v1465 = vpack.c.b16 %v1065, %v1061
  %v1466 = vpack.c.b16 %v1066, %v1062
  %v1467 = vpack.c.b16 %v1071, %v1067
  %v1468 = vpack.c.b16 %v1072, %v1068
  %v1469 = vpack.c.b16 %v1073, %v1069
  %v1470 = vpack.c.b16 %v1074, %v1070
  %v1471 = vpack.c.b16 %v1079, %v1075
  %v1472 = vpack.c.b16 %v1080, %v1076
  %v1473 = vpack.c.b16 %v1081, %v1077
  %v1474 = vpack.c.b16 %v1082, %v1078
  %v1475 = vpack.c.b16 %v1087, %v1083
  %v1476 = vpack.c.b16 %v1088, %v1084
  %v1477 = vpack.c.b16 %v1089, %v1085
  %v1478 = vpack.c.b16 %v1090, %v1086
  %v1479 = vpack.c.b16 %v1095, %v1091
  %v1480 = vpack.c.b16 %v1096, %v1092
  %v1481 = vpack.c.b16 %v1097, %v1093
  %v1482 = vpack.c.b16 %v1098, %v1094
  %v1483 = vpack.c.b16 %v1103, %v1099
  %v1484 = vpack.c.b16 %v1104, %v1100
  %v1485 = vpack.c.b16 %v1105, %v1101
  %v1486 = vpack.c.b16 %v1106, %v1102
  %v1487 = vpack.c.b16 %v1111, %v1107
  %v1488 = vpack.c.b16 %v1112, %v1108
  %v1489 = vpack.c.b16 %v1113, %v1109
  %v1490 = vpack.c.b16 %v1114, %v1110
  %v1491 = vpack.c.b16 %v1119, %v1115
  %v1492 = vpack.c.b16 %v1120, %v1116
  %v1493 = vpack.c.b16 %v1121, %v1117
  %v1494 = vpack.c.b16 %v1122, %v1118
  %v1495 = vpack.c.b16 %v1127, %v1123
  %v1496 = vpack.c.b16 %v1128, %v1124
  %v1497 = vpack.c.b16 %v1129, %v1125
  %v1498 = vpack.c.b16 %v1130, %v1126
  %v1499 = vpack.c.b16 %v1135, %v1131
  %v1500 = vpack.c.b16 %v1136, %v1132
  %v1501 = vpack.c.b16 %v1137, %v1133
  %v1502 = vpack.c.b16 %v1138, %v1134
  %v1503 = vpack.c.b16 %v1143, %v1139
  %v1504 = vpack.c.b16 %v1144, %v1140
  %v1505 = vpack.c.b16 %v1145, %v1141
  %v1506 = vpack.c.b16 %v1146, %v1142
  %v1507 = vpack.c.b16 %v1151, %v1147
  %v1508 = vpack.c.b16 %v1152, %v1148
  %v1509 = vpack.c.b16 %v1153, %v1149
  %v1510 = vpack.c.b16 %v1154, %v1150
  %v1511 = vpack.c.b16 %v1159, %v1155
  %v1512 = vpack.c.b16 %v1160, %v1156
  %v1513 = vpack.c.b16 %v1161, %v1157
  %v1514 = vpack.c.b16 %v1162, %v1158
  %v1515 = vpack.c.b16 %v1167, %v1163
  %v1516 = vpack.c.b16 %v1168, %v1164
  %v1517 = vpack.c.b16 %v1169, %v1165
  %v1518 = vpack.c.b16 %v1170, %v1166
  %v1519 = vpack.c.b16 %v1175, %v1171
  %v1520 = vpack.c.b16 %v1176, %v1172
  %v1521 = vpack.c.b16 %v1177, %v1173
  %v1522 = vpack.c.b16 %v1178, %v1174
  %v1523 = vpack.c.b16 %v1183, %v1179
  %v1524 = vpack.c.b16 %v1184, %v1180
  %v1525 = vpack.c.b16 %v1185, %v1181
  %v1526 = vpack.c.b16 %v1186, %v1182
  %v1527 = vpack.c.b16 %v1191, %v1187
  %v1528 = vpack.c.b16 %v1192, %v1188
  %v1529 = vpack.c.b16 %v1193, %v1189
  %v1530 = vpack.c.b16 %v1194, %v1190
  %v1531 = vpack.c.b16 %v1199, %v1195
  %v1532 = vpack.c.b16 %v1200, %v1196
  %v1533 = vpack.c.b16 %v1201, %v1197
  %v1534 = vpack.c.b16 %v1202, %v1198
  %v1535 = vpack.c.b16 %v1207, %v1203
  %v1536 = vpack.c.b16 %v1208, %v1204
  %v1537 = vpack.c.b16 %v1209, %v1205
  %v1538 = vpack.c.b16 %v1210, %v1206
  %v1539 = vpack.c.b16 %v1215, %v1211
  %v1540 = vpack.c.b16 %v1216, %v1212
  %v1541 = vpack.c.b16 %v1217, %v1213
  %v1542 = vpack.c.b16 %v1218, %v1214
  %v1543 = vpack.c.b16 %v1223, %v1219
  %v1544 = vpack.c.b16 %v1224, %v1220
  %v1545 = vpack.c.b16 %v1225, %v1221
  %v1546 = vpack.c.b16 %v1226, %v1222
  %v1547 = vpack.c.b16 %v1231, %v1227
  %v1548 = vpack.c.b16 %v1232, %v1228
  %v1549 = vpack.c.b16 %v1233, %v1229
  %v1550 = vpack.c.b16 %v1234, %v1230
  %v1551 = vpack.c.b16 %v1239, %v1235
  %v1552 = vpack.c.b16 %v1240, %v1236
  %v1553 = vpack.c.b16 %v1241, %v1237
  %v1554 = vpack.c.b16 %v1242, %v1238
  %v1555 = vpack.c.b16 %v1247, %v1243
  %v1556 = vpack.c.b16 %v1248, %v1244
  %v1557 = vpack.c.b16 %v1249, %v1245
  %v1558 = vpack.c.b16 %v1250, %v1246
  %v1559 = vpack.c.b16 %v1255, %v1251
  %v1560 = vpack.c.b16 %v1256, %v1252
  %v1561 = vpack.c.b16 %v1257, %v1253
  %v1562 = vpack.c.b16 %v1258, %v1254
  %v1563 = vpack.c.b16 %v1263, %v1259
  %v1564 = vpack.c.b16 %v1264, %v1260
  %v1565 = vpack.c.b16 %v1265, %v1261
  %v1566 = vpack.c.b16 %v1266, %v1262
  %v1567 = vpack.c.b16 %v1271, %v1267
  %v1568 = vpack.c.b16 %v1272, %v1268
  %v1569 = vpack.c.b16 %v1273, %v1269
  %v1570 = vpack.c.b16 %v1274, %v1270
  %v1571 = vpack.c.b16 %v1279, %v1275
  %v1572 = vpack.c.b16 %v1280, %v1276
  %v1573 = vpack.c.b16 %v1281, %v1277
  %v1574 = vpack.c.b16 %v1282, %v1278
  %v1575 = vpack.c.b16 %v1287, %v1283
  %v1576 = vpack.c.b16 %v1288, %v1284
  %v1577 = vpack.c.b16 %v1289, %v1285
  %v1578 = vpack.c.b16 %v1290, %v1286
  %1867 = vmatprep.subr.bf16.mxu0 %v1292
  %1868 = vmatpush1.bf16.msra.mxu0 %v1291
  %1869 = vmatprep.subr.bf16.mxu0 %v1296
  %1870 = vmatpush1.bf16.msra.mxu0 %v1295
  %1871 = vmatprep.subr.bf16.mxu0 %v1300
  %1872 = vmatpush1.bf16.msra.mxu0 %v1299
  %1873 = vmatprep.subr.bf16.mxu0 %v1304
  %1874 = vmatpush1.bf16.msra.mxu0 %v1303
  %1875 = vmatprep.subr.bf16.mxu0 %v1308
  %1876 = vmatpush1.bf16.msra.mxu0 %v1307
  %1877 = vmatprep.subr.bf16.mxu0 %v1312
  %1878 = vmatpush1.bf16.msra.mxu0 %v1311
  %1879 = vmatprep.subr.bf16.mxu0 %v1316
  %1880 = vmatpush1.bf16.msra.mxu0 %v1315
  %1881 = vmatprep.subr.bf16.mxu0 %v1320
  %1882 = vmatpush1.bf16.msra.mxu0 %v1319
  %1883 = vmatprep.subr.bf16.mxu0 %v1324
  %1884 = vmatpush1.bf16.msra.mxu0 %v1323
  %1885 = vmatprep.subr.bf16.mxu0 %v1328
  %1886 = vmatpush1.bf16.msra.mxu0 %v1327
  %1887 = vmatprep.subr.bf16.mxu0 %v1332
  %1888 = vmatpush1.bf16.msra.mxu0 %v1331
  %1889 = vmatprep.subr.bf16.mxu0 %v1336
  %1890 = vmatpush1.bf16.msra.mxu0 %v1335
  %1891 = vmatprep.subr.bf16.mxu0 %v1340
  %1892 = vmatpush1.bf16.msra.mxu0 %v1339
  %1893 = vmatprep.subr.bf16.mxu0 %v1344
  %1894 = vmatpush1.bf16.msra.mxu0 %v1343
  %1895 = vmatprep.subr.bf16.mxu0 %v1348
  %1896 = vmatpush1.bf16.msra.mxu0 %v1347
  %1897 = vmatprep.subr.bf16.mxu0 %v1352
  %1898 = vmatpush1.bf16.msra.mxu0 %v1351
  %1899 = vmatprep.mubr.bf16.mxu0 %v392
  %1900 = vmatmul.mubr.bf16.gmra.mrb[0].mxu0 %v378
  %v1901 = vpop.f32.mrb[0].mxu0
  %v1902 = vadd.f32 %v336, %v1901
  %v1903 = vpop.f32.mrb[0].mxu0
  %v1904 = vadd.f32 %v340, %v1903
  %v1905 = vpop.f32.mrb[0].mxu0
  %v1906 = vpop.f32.mrb[0].mxu0
  %1907 = vdwg.mxu0
  %1908 = vmatprep.subr.bf16.mxu0 %v1356
  %1909 = vmatpush1.bf16.msra.mxu0 %v1355
  %1910 = vmatprep.subr.bf16.mxu0 %v1360
  %1911 = vmatpush1.bf16.msra.mxu0 %v1359
  %1912 = vmatprep.subr.bf16.mxu0 %v1364
  %1913 = vmatpush1.bf16.msra.mxu0 %v1363
  %1914 = vmatprep.subr.bf16.mxu0 %v1368
  %1915 = vmatpush1.bf16.msra.mxu0 %v1367
  %1916 = vmatprep.subr.bf16.mxu0 %v1372
  %1917 = vmatpush1.bf16.msra.mxu0 %v1371
  %1918 = vmatprep.subr.bf16.mxu0 %v1376
  %1919 = vmatpush1.bf16.msra.mxu0 %v1375
  %1920 = vmatprep.subr.bf16.mxu0 %v1380
  %1921 = vmatpush1.bf16.msra.mxu0 %v1379
  %1922 = vmatprep.subr.bf16.mxu0 %v1384
  %1923 = vmatpush1.bf16.msra.mxu0 %v1383
  %1924 = vmatprep.subr.bf16.mxu0 %v1388
  %1925 = vmatpush1.bf16.msra.mxu0 %v1387
  %1926 = vmatprep.subr.bf16.mxu0 %v1392
  %1927 = vmatpush1.bf16.msra.mxu0 %v1391
  %1928 = vmatprep.subr.bf16.mxu0 %v1396
  %1929 = vmatpush1.bf16.msra.mxu0 %v1395
  %1930 = vmatprep.subr.bf16.mxu0 %v1400
  %1931 = vmatpush1.bf16.msra.mxu0 %v1399
  %1932 = vmatprep.subr.bf16.mxu0 %v1404
  %1933 = vmatpush1.bf16.msra.mxu0 %v1403
  %1934 = vmatprep.subr.bf16.mxu0 %v1408
  %1935 = vmatpush1.bf16.msra.mxu0 %v1407
  %1936 = vmatprep.subr.bf16.mxu0 %v1412
  %1937 = vmatpush1.bf16.msra.mxu0 %v1411
  %1938 = vmatprep.subr.bf16.mxu0 %v1416
  %1939 = vmatpush1.bf16.msra.mxu0 %v1415
  %1940 = vmatprep.mubr.bf16.mxu0 %v402
  %1941 = vmatmul.mubr.bf16.gmra.mrb[0].mxu0 %v400
  %v1942 = vpop.f32.mrb[0].mxu0
  %v1943 = vadd.f32 %v1902, %v1942
  %v1944 = vpop.f32.mrb[0].mxu0
  %v1945 = vadd.f32 %v1904, %v1944
  %v1946 = vpop.f32.mrb[0].mxu0
  %v1947 = vpop.f32.mrb[0].mxu0
  %1948 = vdwg.mxu0
  %1949 = vmatprep.subr.bf16.mxu0 %v1420
  %1950 = vmatpush1.bf16.msra.mxu0 %v1419
  %1951 = vmatprep.subr.bf16.mxu0 %v1424
  %1952 = vmatpush1.bf16.msra.mxu0 %v1423
  %1953 = vmatprep.subr.bf16.mxu0 %v1428
  %1954 = vmatpush1.bf16.msra.mxu0 %v1427
  %1955 = vmatprep.subr.bf16.mxu0 %v1432
  %1956 = vmatpush1.bf16.msra.mxu0 %v1431
  %1957 = vmatprep.subr.bf16.mxu0 %v1436
  %1958 = vmatpush1.bf16.msra.mxu0 %v1435
  %1959 = vmatprep.subr.bf16.mxu0 %v1440
  %1960 = vmatpush1.bf16.msra.mxu0 %v1439
  %1961 = vmatprep.subr.bf16.mxu0 %v1444
  %1962 = vmatpush1.bf16.msra.mxu0 %v1443
  %1963 = vmatprep.subr.bf16.mxu0 %v1448
  %1964 = vmatpush1.bf16.msra.mxu0 %v1447
  %1965 = vmatprep.subr.bf16.mxu0 %v1452
  %1966 = vmatpush1.bf16.msra.mxu0 %v1451
  %1967 = vmatprep.subr.bf16.mxu0 %v1456
  %1968 = vmatpush1.bf16.msra.mxu0 %v1455
  %1969 = vmatprep.subr.bf16.mxu0 %v1460
  %1970 = vmatpush1.bf16.msra.mxu0 %v1459
  %1971 = vmatprep.subr.bf16.mxu0 %v1464
  %1972 = vmatpush1.bf16.msra.mxu0 %v1463
  %1973 = vmatprep.subr.bf16.mxu0 %v1468
  %1974 = vmatpush1.bf16.msra.mxu0 %v1467
  %1975 = vmatprep.subr.bf16.mxu0 %v1472
  %1976 = vmatpush1.bf16.msra.mxu0 %v1471
  %1977 = vmatprep.subr.bf16.mxu0 %v1476
  %1978 = vmatpush1.bf16.msra.mxu0 %v1475
  %1979 = vmatprep.subr.bf16.mxu0 %v1480
  %1980 = vmatpush1.bf16.msra.mxu0 %v1479
  %1981 = vmatprep.mubr.bf16.mxu0 %v399
  %1982 = vmatmul.mubr.bf16.gmra.mrb[0].mxu0 %v385
  %v1983 = vpop.f32.mrb[0].mxu0
  %v1984 = vadd.f32 %v1943, %v1983
  %v1985 = vpop.f32.mrb[0].mxu0
  %v1986 = vadd.f32 %v1945, %v1985
  %v1987 = vpop.f32.mrb[0].mxu0
  %v1988 = vpop.f32.mrb[0].mxu0
  %1989 = vdwg.mxu0
  %1990 = vmatprep.subr.bf16.mxu0 %v1484
  %1991 = vmatpush1.bf16.msra.mxu0 %v1483
  %1992 = vmatprep.subr.bf16.mxu0 %v1488
  %1993 = vmatpush1.bf16.msra.mxu0 %v1487
  %1994 = vmatprep.subr.bf16.mxu0 %v1492
  %1995 = vmatpush1.bf16.msra.mxu0 %v1491
  %1996 = vmatprep.subr.bf16.mxu0 %v1496
  %1997 = vmatpush1.bf16.msra.mxu0 %v1495
  %1998 = vmatprep.subr.bf16.mxu0 %v1500
  %1999 = vmatpush1.bf16.msra.mxu0 %v1499
  %2000 = vmatprep.subr.bf16.mxu0 %v1504
  %2001 = vmatpush1.bf16.msra.mxu0 %v1503
  %2002 = vmatprep.subr.bf16.mxu0 %v1508
  %2003 = vmatpush1.bf16.msra.mxu0 %v1507
  %2004 = vmatprep.subr.bf16.mxu0 %v1512
  %2005 = vmatpush1.bf16.msra.mxu0 %v1511
  %2006 = vmatprep.subr.bf16.mxu0 %v1516
  %2007 = vmatpush1.bf16.msra.mxu0 %v1515
  %2008 = vmatprep.subr.bf16.mxu0 %v1520
  %2009 = vmatpush1.bf16.msra.mxu0 %v1519
  %2010 = vmatprep.subr.bf16.mxu0 %v1524
  %2011 = vmatpush1.bf16.msra.mxu0 %v1523
  %2012 = vmatprep.subr.bf16.mxu0 %v1528
  %2013 = vmatpush1.bf16.msra.mxu0 %v1527
  %2014 = vmatprep.subr.bf16.mxu0 %v1532
  %2015 = vmatpush1.bf16.msra.mxu0 %v1531
  %2016 = vmatprep.subr.bf16.mxu0 %v1536
  %2017 = vmatpush1.bf16.msra.mxu0 %v1535
  %2018 = vmatprep.subr.bf16.mxu0 %v1540
  %2019 = vmatpush1.bf16.msra.mxu0 %v1539
  %2020 = vmatprep.subr.bf16.mxu0 %v1544
  %2021 = vmatpush1.bf16.msra.mxu0 %v1543
  %2022 = vmatprep.mubr.bf16.mxu0 %v403
  %2023 = vmatmul.mubr.bf16.gmra.mrb[0].mxu0 %v401
  %v2024 = vpop.f32.mrb[0].mxu0
  %v2025 = vadd.f32 %v1984, %v2024
  %v2026 = vpop.f32.mrb[0].mxu0
  %v2027 = vadd.f32 %v1986, %v2026
  %v2028 = vpop.f32.mrb[0].mxu0
  %v2029 = vpop.f32.mrb[0].mxu0
  %2030 = vdwg.mxu0
  %2031 = vmatprep.subr.bf16.mxu0 %v1548
  %2032 = vmatpush1.bf16.msra.mxu0 %v1547
  %2033 = vmatprep.subr.bf16.mxu0 %v1552
  %2034 = vmatpush1.bf16.msra.mxu0 %v1551
  %2035 = vmatprep.subr.bf16.mxu0 %v1556
  %2036 = vmatpush1.bf16.msra.mxu0 %v1555
  %2037 = vmatprep.subr.bf16.mxu0 %v1560
  %2038 = vmatpush1.bf16.msra.mxu0 %v1559
  %2039 = vmatprep.subr.bf16.mxu0 %v1564
  %2040 = vmatpush1.bf16.msra.mxu0 %v1563
  %2041 = vmatprep.subr.bf16.mxu0 %v1568
  %2042 = vmatpush1.bf16.msra.mxu0 %v1567
  %2043 = vmatprep.subr.bf16.mxu0 %v1572
  %2044 = vmatpush1.bf16.msra.mxu0 %v1571
  %2045 = vmatprep.subr.bf16.mxu0 %v1576
  %2046 = vmatpush1.bf16.msra.mxu0 %v1575
  %2047 = vmatprep.subr.bf16.mxu0 0
  %2048 = vmatpush1.bf16.msra.mxu0 0
  %2049 = vmatprep.subr.bf16.mxu0 0
  %2050 = vmatpush1.bf16.msra.mxu0 0
  %2051 = vmatprep.subr.bf16.mxu0 0
  %2052 = vmatpush1.bf16.msra.mxu0 0
  %2053 = vmatprep.subr.bf16.mxu0 0
  %2054 = vmatpush1.bf16.msra.mxu0 0
  %2055 = vmatprep.subr.bf16.mxu0 0
  %2056 = vmatpush1.bf16.msra.mxu0 0
  %2057 = vmatprep.subr.bf16.mxu0 0
  %2058 = vmatpush1.bf16.msra.mxu0 0
  %2059 = vmatprep.subr.bf16.mxu0 0
  %2060 = vmatpush1.bf16.msra.mxu0 0
  %2061 = vmatprep.subr.bf16.mxu0 0
  %2062 = vmatpush1.bf16.msra.mxu0 0
  %2063 = vmatprep.mubr.bf16.mxu0 0
  %2064 = vmatmul.mubr.bf16.gmra.mrb[0].mxu0 %v417
  %v2065 = vpop.f32.mrb[0].mxu0
  %v2066 = vadd.f32 %v2025, %v2065
  %v2067 = vpop.f32.mrb[0].mxu0
  %v2068 = vadd.f32 %v2027, %v2067
  %v2069 = vpop.f32.mrb[0].mxu0
  %v2070 = vpop.f32.mrb[0].mxu0
  %2071 = vdwg.mxu0
  %2072 = vmatprep.subr.bf16.mxu0 %v1294
  %2073 = vmatpush1.bf16.msra.mxu0 %v1293
  %2074 = vmatprep.subr.bf16.mxu0 %v1298
  %2075 = vmatpush1.bf16.msra.mxu0 %v1297
  %2076 = vmatprep.subr.bf16.mxu0 %v1302
  %2077 = vmatpush1.bf16.msra.mxu0 %v1301
  %2078 = vmatprep.subr.bf16.mxu0 %v1306
  %2079 = vmatpush1.bf16.msra.mxu0 %v1305
  %2080 = vmatprep.subr.bf16.mxu0 %v1310
  %2081 = vmatpush1.bf16.msra.mxu0 %v1309
  %2082 = vmatprep.subr.bf16.mxu0 %v1314
  %2083 = vmatpush1.bf16.msra.mxu0 %v1313
  %2084 = vmatprep.subr.bf16.mxu0 %v1318
  %2085 = vmatpush1.bf16.msra.mxu0 %v1317
  %2086 = vmatprep.subr.bf16.mxu0 %v1322
  %2087 = vmatpush1.bf16.msra.mxu0 %v1321
  %2088 = vmatprep.subr.bf16.mxu0 %v1326
  %2089 = vmatpush1.bf16.msra.mxu0 %v1325
  %2090 = vmatprep.subr.bf16.mxu0 %v1330
  %2091 = vmatpush1.bf16.msra.mxu0 %v1329
  %2092 = vmatprep.subr.bf16.mxu0 %v1334
  %2093 = vmatpush1.bf16.msra.mxu0 %v1333
  %2094 = vmatprep.subr.bf16.mxu0 %v1338
  %2095 = vmatpush1.bf16.msra.mxu0 %v1337
  %2096 = vmatprep.subr.bf16.mxu0 %v1342
  %2097 = vmatpush1.bf16.msra.mxu0 %v1341
  %2098 = vmatprep.subr.bf16.mxu0 %v1346
  %2099 = vmatpush1.bf16.msra.mxu0 %v1345
  %2100 = vmatprep.subr.bf16.mxu0 %v1350
  %2101 = vmatpush1.bf16.msra.mxu0 %v1349
  %2102 = vmatprep.subr.bf16.mxu0 %v1354
  %2103 = vmatpush1.bf16.msra.mxu0 %v1353
  %2104 = vmatprep.mubr.bf16.mxu0 %v392
  %2105 = vmatmul.mubr.bf16.gmra.mrb[0].mxu0 %v378
  %v2106 = vpop.f32.mrb[0].mxu0
  %v2107 = vadd.f32 %v344, %v2106
  %v2108 = vpop.f32.mrb[0].mxu0
  %v2109 = vadd.f32 %v348, %v2108
  %v2110 = vpop.f32.mrb[0].mxu0
  %v2111 = vpop.f32.mrb[0].mxu0
  %2112 = vdwg.mxu0
  %2113 = vmatprep.subr.bf16.mxu0 %v1358
  %2114 = vmatpush1.bf16.msra.mxu0 %v1357
  %2115 = vmatprep.subr.bf16.mxu0 %v1362
  %2116 = vmatpush1.bf16.msra.mxu0 %v1361
  %2117 = vmatprep.subr.bf16.mxu0 %v1366
  %2118 = vmatpush1.bf16.msra.mxu0 %v1365
  %2119 = vmatprep.subr.bf16.mxu0 %v1370
  %2120 = vmatpush1.bf16.msra.mxu0 %v1369
  %2121 = vmatprep.subr.bf16.mxu0 %v1374
  %2122 = vmatpush1.bf16.msra.mxu0 %v1373
  %2123 = vmatprep.subr.bf16.mxu0 %v1378
  %2124 = vmatpush1.bf16.msra.mxu0 %v1377
  %2125 = vmatprep.subr.bf16.mxu0 %v1382
  %2126 = vmatpush1.bf16.msra.mxu0 %v1381
  %2127 = vmatprep.subr.bf16.mxu0 %v1386
  %2128 = vmatpush1.bf16.msra.mxu0 %v1385
  %2129 = vmatprep.subr.bf16.mxu0 %v1390
  %2130 = vmatpush1.bf16.msra.mxu0 %v1389
  %2131 = vmatprep.subr.bf16.mxu0 %v1394
  %2132 = vmatpush1.bf16.msra.mxu0 %v1393
  %2133 = vmatprep.subr.bf16.mxu0 %v1398
  %2134 = vmatpush1.bf16.msra.mxu0 %v1397
  %2135 = vmatprep.subr.bf16.mxu0 %v1402
  %2136 = vmatpush1.bf16.msra.mxu0 %v1401
  %2137 = vmatprep.subr.bf16.mxu0 %v1406
  %2138 = vmatpush1.bf16.msra.mxu0 %v1405
  %2139 = vmatprep.subr.bf16.mxu0 %v1410
  %2140 = vmatpush1.bf16.msra.mxu0 %v1409
  %2141 = vmatprep.subr.bf16.mxu0 %v1414
  %2142 = vmatpush1.bf16.msra.mxu0 %v1413
  %2143 = vmatprep.subr.bf16.mxu0 %v1418
  %2144 = vmatpush1.bf16.msra.mxu0 %v1417
  %2145 = vmatprep.mubr.bf16.mxu0 %v402
  %2146 = vmatmul.mubr.bf16.gmra.mrb[0].mxu0 %v400
  %v2147 = vpop.f32.mrb[0].mxu0
  %v2148 = vadd.f32 %v2107, %v2147
  %v2149 = vpop.f32.mrb[0].mxu0
  %v2150 = vadd.f32 %v2109, %v2149
  %v2151 = vpop.f32.mrb[0].mxu0
  %v2152 = vpop.f32.mrb[0].mxu0
  %2153 = vdwg.mxu0
  %2154 = vmatprep.subr.bf16.mxu0 %v1422
  %2155 = vmatpush1.bf16.msra.mxu0 %v1421
  %2156 = vmatprep.subr.bf16.mxu0 %v1426
  %2157 = vmatpush1.bf16.msra.mxu0 %v1425
  %2158 = vmatprep.subr.bf16.mxu0 %v1430
  %2159 = vmatpush1.bf16.msra.mxu0 %v1429
  %2160 = vmatprep.subr.bf16.mxu0 %v1434
  %2161 = vmatpush1.bf16.msra.mxu0 %v1433
  %2162 = vmatprep.subr.bf16.mxu0 %v1438
  %2163 = vmatpush1.bf16.msra.mxu0 %v1437
  %2164 = vmatprep.subr.bf16.mxu0 %v1442
  %2165 = vmatpush1.bf16.msra.mxu0 %v1441
  %2166 = vmatprep.subr.bf16.mxu0 %v1446
  %2167 = vmatpush1.bf16.msra.mxu0 %v1445
  %2168 = vmatprep.subr.bf16.mxu0 %v1450
  %2169 = vmatpush1.bf16.msra.mxu0 %v1449
  %2170 = vmatprep.subr.bf16.mxu0 %v1454
  %2171 = vmatpush1.bf16.msra.mxu0 %v1453
  %2172 = vmatprep.subr.bf16.mxu0 %v1458
  %2173 = vmatpush1.bf16.msra.mxu0 %v1457
  %2174 = vmatprep.subr.bf16.mxu0 %v1462
  %2175 = vmatpush1.bf16.msra.mxu0 %v1461
  %2176 = vmatprep.subr.bf16.mxu0 %v1466
  %2177 = vmatpush1.bf16.msra.mxu0 %v1465
  %2178 = vmatprep.subr.bf16.mxu0 %v1470
  %2179 = vmatpush1.bf16.msra.mxu0 %v1469
  %2180 = vmatprep.subr.bf16.mxu0 %v1474
  %2181 = vmatpush1.bf16.msra.mxu0 %v1473
  %2182 = vmatprep.subr.bf16.mxu0 %v1478
  %2183 = vmatpush1.bf16.msra.mxu0 %v1477
  %2184 = vmatprep.subr.bf16.mxu0 %v1482
  %2185 = vmatpush1.bf16.msra.mxu0 %v1481
  %2186 = vmatprep.mubr.bf16.mxu0 %v399
  %2187 = vmatmul.mubr.bf16.gmra.mrb[0].mxu0 %v385
  %v2188 = vpop.f32.mrb[0].mxu0
  %v2189 = vadd.f32 %v2148, %v2188
  %v2190 = vpop.f32.mrb[0].mxu0
  %v2191 = vadd.f32 %v2150, %v2190
  %v2192 = vpop.f32.mrb[0].mxu0
  %v2193 = vpop.f32.mrb[0].mxu0
  %2194 = vdwg.mxu0
  %2195 = vmatprep.subr.bf16.mxu0 %v1486
  %2196 = vmatpush1.bf16.msra.mxu0 %v1485
  %2197 = vmatprep.subr.bf16.mxu0 %v1490
  %2198 = vmatpush1.bf16.msra.mxu0 %v1489
  %2199 = vmatprep.subr.bf16.mxu0 %v1494
  %2200 = vmatpush1.bf16.msra.mxu0 %v1493
  %2201 = vmatprep.subr.bf16.mxu0 %v1498
  %2202 = vmatpush1.bf16.msra.mxu0 %v1497
  %2203 = vmatprep.subr.bf16.mxu0 %v1502
  %2204 = vmatpush1.bf16.msra.mxu0 %v1501
  %2205 = vmatprep.subr.bf16.mxu0 %v1506
  %2206 = vmatpush1.bf16.msra.mxu0 %v1505
  %2207 = vmatprep.subr.bf16.mxu0 %v1510
  %2208 = vmatpush1.bf16.msra.mxu0 %v1509
  %2209 = vmatprep.subr.bf16.mxu0 %v1514
  %2210 = vmatpush1.bf16.msra.mxu0 %v1513
  %2211 = vmatprep.subr.bf16.mxu0 %v1518
  %2212 = vmatpush1.bf16.msra.mxu0 %v1517
  %2213 = vmatprep.subr.bf16.mxu0 %v1522
  %2214 = vmatpush1.bf16.msra.mxu0 %v1521
  %2215 = vmatprep.subr.bf16.mxu0 %v1526
  %2216 = vmatpush1.bf16.msra.mxu0 %v1525
  %2217 = vmatprep.subr.bf16.mxu0 %v1530
  %2218 = vmatpush1.bf16.msra.mxu0 %v1529
  %2219 = vmatprep.subr.bf16.mxu0 %v1534
  %2220 = vmatpush1.bf16.msra.mxu0 %v1533
  %2221 = vmatprep.subr.bf16.mxu0 %v1538
  %2222 = vmatpush1.bf16.msra.mxu0 %v1537
  %2223 = vmatprep.subr.bf16.mxu0 %v1542
  %2224 = vmatpush1.bf16.msra.mxu0 %v1541
  %2225 = vmatprep.subr.bf16.mxu0 %v1546
  %2226 = vmatpush1.bf16.msra.mxu0 %v1545
  %2227 = vmatprep.mubr.bf16.mxu0 %v403
  %2228 = vmatmul.mubr.bf16.gmra.mrb[0].mxu0 %v401
  %v2229 = vpop.f32.mrb[0].mxu0
  %v2230 = vadd.f32 %v2189, %v2229
  %v2231 = vpop.f32.mrb[0].mxu0
  %v2232 = vadd.f32 %v2191, %v2231
  %v2233 = vpop.f32.mrb[0].mxu0
  %v2234 = vpop.f32.mrb[0].mxu0
  %2235 = vdwg.mxu0
  %2236 = vmatprep.subr.bf16.mxu0 %v1550
  %2237 = vmatpush1.bf16.msra.mxu0 %v1549
  %2238 = vmatprep.subr.bf16.mxu0 %v1554
  %2239 = vmatpush1.bf16.msra.mxu0 %v1553
  %2240 = vmatprep.subr.bf16.mxu0 %v1558
  %2241 = vmatpush1.bf16.msra.mxu0 %v1557
  %2242 = vmatprep.subr.bf16.mxu0 %v1562
  %2243 = vmatpush1.bf16.msra.mxu0 %v1561
  %2244 = vmatprep.subr.bf16.mxu0 %v1566
  %2245 = vmatpush1.bf16.msra.mxu0 %v1565
  %2246 = vmatprep.subr.bf16.mxu0 %v1570
  %2247 = vmatpush1.bf16.msra.mxu0 %v1569
  %2248 = vmatprep.subr.bf16.mxu0 %v1574
  %2249 = vmatpush1.bf16.msra.mxu0 %v1573
  %2250 = vmatprep.subr.bf16.mxu0 %v1578
  %2251 = vmatpush1.bf16.msra.mxu0 %v1577
  %2252 = vmatprep.subr.bf16.mxu0 0
  %2253 = vmatpush1.bf16.msra.mxu0 0
  %2254 = vmatprep.subr.bf16.mxu0 0
  %2255 = vmatpush1.bf16.msra.mxu0 0
  %2256 = vmatprep.subr.bf16.mxu0 0
  %2257 = vmatpush1.bf16.msra.mxu0 0
  %2258 = vmatprep.subr.bf16.mxu0 0
  %2259 = vmatpush1.bf16.msra.mxu0 0
  %2260 = vmatprep.subr.bf16.mxu0 0
  %2261 = vmatpush1.bf16.msra.mxu0 0
  %2262 = vmatprep.subr.bf16.mxu0 0
  %2263 = vmatpush1.bf16.msra.mxu0 0
  %2264 = vmatprep.subr.bf16.mxu0 0
  %2265 = vmatpush1.bf16.msra.mxu0 0
  %2266 = vmatprep.subr.bf16.mxu0 0
  %2267 = vmatpush1.bf16.msra.mxu0 0
  %2268 = vmatprep.mubr.bf16.mxu0 0
  %2269 = vmatmul.mubr.bf16.gmra.mrb[0].mxu0 %v417
  %v2270 = vpop.f32.mrb[0].mxu0
  %v2271 = vadd.f32 %v2230, %v2270
  %v2272 = vpop.f32.mrb[0].mxu0
  %v2273 = vadd.f32 %v2232, %v2272
  %v2274 = vpop.f32.mrb[0].mxu0
  %v2275 = vpop.f32.mrb[0].mxu0
  %2276 = vdwg.mxu0
  %v2277 = vmax.f32 %v2066, 0.0
  %v2278 = vmax.f32 %v2068, 0.0
  %v2279 = vmax.f32 %v2271, 0.0
  %v2280 = vmax.f32 %v2273, 0.0
  %v2281 = vpack.c.bf16 %v2277, %v2277
  %v2282 = vpack.c.bf16 %v2278, %v2278
  %v2283 = vpack.c.bf16 %v2279, %v2279
  %v2284 = vpack.c.bf16 %v2280, %v2280
  %v2285 = vld [vmem:[%s4] sm:$0xff]
  %v2286 = vld [vmem:[%s4 + $0x8] sm:$0xff]
  %v2287 = vld [vmem:[%s4 + $0x10] sm:$0xff]
  %v2288 = vld [vmem:[%s4 + $0x18] sm:$0xff]
  %v2289 = vld [vmem:[%s4 + $0x20] sm:$0xff]
  %v2290 = vld [vmem:[%s4 + $0x28] sm:$0xff]
  %v2291 = vld [vmem:[%s4 + $0x30] sm:$0xff]
  %v2292 = vld [vmem:[%s4 + $0x38] sm:$0xff]
  %v2293 = vld [vmem:[%s4 + $0x40] sm:$0xff]
  %v2294 = vld [vmem:[%s4 + $0x48] sm:$0xff]
  %v2295 = vld [vmem:[%s4 + $0x50] sm:$0xff]
  %v2296 = vld [vmem:[%s4 + $0x58] sm:$0xff]
  %v2297 = vld [vmem:[%s4 + $0x60] sm:$0xff]
  %v2298 = vld [vmem:[%s4 + $0x68] sm:$0xff]
  %v2299 = vld [vmem:[%s4 + $0x70] sm:$0xff]
  %v2300 = vld [vmem:[%s4 + $0x78] sm:$0xff]
  %v2301 = vld [vmem:[%s4 + $0x80] sm:$0xff]
  %v2302 = vld [vmem:[%s4 + $0x88] sm:$0xff]
  %v2303 = vld [vmem:[%s4 + $0x90] sm:$0xff]
  %v2304 = vld [vmem:[%s4 + $0x98] sm:$0xff]
  %v2305 = vld [vmem:[%s4 + $0xa0] sm:$0xff]
  %v2306 = vld [vmem:[%s4 + $0xa8] sm:$0xff]
  %v2307 = vld [vmem:[%s4 + $0xb0] sm:$0xff]
  %v2308 = vld [vmem:[%s4 + $0xb8] sm:$0xff]
  %v2309 = vld [vmem:[%s4 + $0xc0] sm:$0xff]
  %v2310 = vld [vmem:[%s4 + $0xc8] sm:$0xff]
  %v2311 = vld [vmem:[%s4 + $0xd0] sm:$0xff]
  %v2312 = vld [vmem:[%s4 + $0xd8] sm:$0xff]
  %v2313 = vld [vmem:[%s4 + $0xe0] sm:$0xff]
  %v2314 = vld [vmem:[%s4 + $0xe8] sm:$0xff]
  %v2315 = vld [vmem:[%s4 + $0xf0] sm:$0xff]
  %v2316 = vld [vmem:[%s4 + $0xf8] sm:$0xff]
  %v2317 = vld [vmem:[%s4 + $0x100] sm:$0xff]
  %v2318 = vld [vmem:[%s4 + $0x108] sm:$0xff]
  %v2319 = vld [vmem:[%s4 + $0x110] sm:$0xff]
  %v2320 = vld [vmem:[%s4 + $0x118] sm:$0xff]
  %v2321 = vld [vmem:[%s4 + $0x120] sm:$0xff]
  %v2322 = vld [vmem:[%s4 + $0x128] sm:$0xff]
  %v2323 = vld [vmem:[%s4 + $0x130] sm:$0xff]
  %v2324 = vld [vmem:[%s4 + $0x138] sm:$0xff]
  %v2325 = vld [vmem:[%s4 + $0x140] sm:$0xff]
  %v2326 = vld [vmem:[%s4 + $0x148] sm:$0xff]
  %v2327 = vld [vmem:[%s4 + $0x150] sm:$0xff]
  %v2328 = vld [vmem:[%s4 + $0x158] sm:$0xff]
  %v2329 = vld [vmem:[%s4 + $0x160] sm:$0xff]
  %v2330 = vld [vmem:[%s4 + $0x168] sm:$0xff]
  %v2331 = vld [vmem:[%s4 + $0x170] sm:$0xff]
  %v2332 = vld [vmem:[%s4 + $0x178] sm:$0xff]
  %v2333 = vld [vmem:[%s4 + $0x180] sm:$0xff]
  %v2334 = vld [vmem:[%s4 + $0x188] sm:$0xff]
  %v2335 = vld [vmem:[%s4 + $0x190] sm:$0xff]
  %v2336 = vld [vmem:[%s4 + $0x198] sm:$0xff]
  %v2337 = vld [vmem:[%s4 + $0x1a0] sm:$0xff]
  %v2338 = vld [vmem:[%s4 + $0x1a8] sm:$0xff]
  %v2339 = vld [vmem:[%s4 + $0x1b0] sm:$0xff]
  %v2340 = vld [vmem:[%s4 + $0x1b8] sm:$0xff]
  %v2341 = vld [vmem:[%s4 + $0x1c0] sm:$0xff]
  %v2342 = vld [vmem:[%s4 + $0x1c8] sm:$0xff]
  %v2343 = vld [vmem:[%s4 + $0x1d0] sm:$0xff]
  %v2344 = vld [vmem:[%s4 + $0x1d8] sm:$0xff]
  %v2345 = vld [vmem:[%s4 + $0x1e0] sm:$0xff]
  %v2346 = vld [vmem:[%s4 + $0x1e8] sm:$0xff]
  %v2347 = vld [vmem:[%s4 + $0x1f0] sm:$0xff]
  %v2348 = vld [vmem:[%s4 + $0x1f8] sm:$0xff]
  %v2349 = vld [vmem:[%s4 + $0x200] sm:$0xff]
  %v2350 = vld [vmem:[%s4 + $0x208] sm:$0xff]
  %v2351 = vld [vmem:[%s4 + $0x210] sm:$0xff]
  %v2352 = vld [vmem:[%s4 + $0x218] sm:$0xff]
  %v2353 = vld [vmem:[%s4 + $0x220] sm:$0xff]
  %v2354 = vld [vmem:[%s4 + $0x228] sm:$0xff]
  %v2355 = vld [vmem:[%s4 + $0x230] sm:$0xff]
  %v2356 = vld [vmem:[%s4 + $0x238] sm:$0xff]
  %v2357 = vld [vmem:[%s4 + $0x240] sm:$0xff]
  %v2358 = vld [vmem:[%s4 + $0x248] sm:$0xff]
  %v2359 = vld [vmem:[%s4 + $0x250] sm:$0xff]
  %v2360 = vld [vmem:[%s4 + $0x258] sm:$0xff]
  %v2361 = vld [vmem:[%s4 + $0x260] sm:$0xff]
  %v2362 = vld [vmem:[%s4 + $0x268] sm:$0xff]
  %v2363 = vld [vmem:[%s4 + $0x270] sm:$0xff]
  %v2364 = vld [vmem:[%s4 + $0x278] sm:$0xff]
  %v2365 = vld [vmem:[%s4 + $0x280] sm:$0xff]
  %v2366 = vld [vmem:[%s4 + $0x288] sm:$0xff]
  %v2367 = vld [vmem:[%s4 + $0x290] sm:$0xff]
  %v2368 = vld [vmem:[%s4 + $0x298] sm:$0xff]
  %v2369 = vld [vmem:[%s4 + $0x2a0] sm:$0xff]
  %v2370 = vld [vmem:[%s4 + $0x2a8] sm:$0xff]
  %v2371 = vld [vmem:[%s4 + $0x2b0] sm:$0xff]
  %v2372 = vld [vmem:[%s4 + $0x2b8] sm:$0xff]
  %v2373 = vld [vmem:[%s4 + $0x2c0] sm:$0xff]
  %v2374 = vld [vmem:[%s4 + $0x2c8] sm:$0xff]
  %v2375 = vld [vmem:[%s4 + $0x2d0] sm:$0xff]
  %v2376 = vld [vmem:[%s4 + $0x2d8] sm:$0xff]
  %v2377 = vld [vmem:[%s4 + $0x2e0] sm:$0xff]
  %v2378 = vld [vmem:[%s4 + $0x2e8] sm:$0xff]
  %v2379 = vld [vmem:[%s4 + $0x2f0] sm:$0xff]
  %v2380 = vld [vmem:[%s4 + $0x2f8] sm:$0xff]
  %v2381 = vld [vmem:[%s4 + $0x300] sm:$0xff]
  %v2382 = vld [vmem:[%s4 + $0x308] sm:$0xff]
  %v2383 = vld [vmem:[%s4 + $0x310] sm:$0xff]
  %v2384 = vld [vmem:[%s4 + $0x318] sm:$0xff]
  %v2385 = vld [vmem:[%s4 + $0x320] sm:$0xff]
  %v2386 = vld [vmem:[%s4 + $0x328] sm:$0xff]
  %v2387 = vld [vmem:[%s4 + $0x330] sm:$0xff]
  %v2388 = vld [vmem:[%s4 + $0x338] sm:$0xff]
  %v2389 = vld [vmem:[%s4 + $0x340] sm:$0xff]
  %v2390 = vld [vmem:[%s4 + $0x348] sm:$0xff]
  %v2391 = vld [vmem:[%s4 + $0x350] sm:$0xff]
  %v2392 = vld [vmem:[%s4 + $0x358] sm:$0xff]
  %v2393 = vld [vmem:[%s4 + $0x360] sm:$0xff]
  %v2394 = vld [vmem:[%s4 + $0x368] sm:$0xff]
  %v2395 = vld [vmem:[%s4 + $0x370] sm:$0xff]
  %v2396 = vld [vmem:[%s4 + $0x378] sm:$0xff]
  %v2397 = vld [vmem:[%s4 + $0x380] sm:$0xff]
  %v2398 = vld [vmem:[%s4 + $0x388] sm:$0xff]
  %v2399 = vld [vmem:[%s4 + $0x390] sm:$0xff]
  %v2400 = vld [vmem:[%s4 + $0x398] sm:$0xff]
  %v2401 = vld [vmem:[%s4 + $0x3a0] sm:$0xff]
  %v2402 = vld [vmem:[%s4 + $0x3a8] sm:$0xff]
  %v2403 = vld [vmem:[%s4 + $0x3b0] sm:$0xff]
  %v2404 = vld [vmem:[%s4 + $0x3b8] sm:$0xff]
  %v2405 = vld [vmem:[%s4 + $0x3c0] sm:$0xff]
  %v2406 = vld [vmem:[%s4 + $0x3c8] sm:$0xff]
  %v2407 = vld [vmem:[%s4 + $0x3d0] sm:$0xff]
  %v2408 = vld [vmem:[%s4 + $0x3d8] sm:$0xff]
  %v2409 = vld [vmem:[%s4 + $0x3e0] sm:$0xff]
  %v2410 = vld [vmem:[%s4 + $0x3e8] sm:$0xff]
  %v2411 = vld [vmem:[%s4 + $0x3f0] sm:$0xff]
  %v2412 = vld [vmem:[%s4 + $0x3f8] sm:$0xff]
  %v2413 = vld [vmem:[%s1] sm:$0x3]
  %v2414 = vld [vmem:[%s5] sm:$0xf]
  %2416 = vset.pattern.permute.xlu0 0
  %2417 = vperm.xlu0 %2416, %v2413
  %v2418 = vpop.permute.xlu0 %2417
  %v2421 = vlaneseq
  %v2422 = vshrl.u32 %v2421, 7
  %v2423 = vsub.s32 0, %v2422
  %v2424 = vrot.slane %v2414, %v2423
  %v2425 = vlaneseq
  %v2426 = vshrl.u32 %v2425, 7
  %v2427 = vsub.s32 1, %v2426
  %v2428 = vrot.slane %v2414, %v2427
  %v2429 = vlaneseq
  %v2430 = vshrl.u32 %v2429, 7
  %v2431 = vsub.s32 2, %v2430
  %v2432 = vrot.slane %v2414, %v2431
  %v2433 = vlaneseq
  %v2434 = vshrl.u32 %v2433, 7
  %v2435 = vsub.s32 3, %v2434
  %v2436 = vrot.slane %v2414, %v2435
  %v2441 = vmul.f32 %v2418, %v2424
  %v2442 = vmul.f32 %v2418, %v2428
  %v2443 = vmul.f32 %v2418, %v2432
  %v2444 = vmul.f32 %v2418, %v2436
  %v2573 = vunpack.c.l.b16 %v2285
  %v2574 = vunpack.c.h.b16 %v2285
  %v2575 = vunpack.c.l.b16 %v2286
  %v2576 = vunpack.c.h.b16 %v2286
  %v2577 = vunpack.c.l.b16 %v2287
  %v2578 = vunpack.c.h.b16 %v2287
  %v2579 = vunpack.c.l.b16 %v2288
  %v2580 = vunpack.c.h.b16 %v2288
  %v2581 = vunpack.c.l.b16 %v2289
  %v2582 = vunpack.c.h.b16 %v2289
  %v2583 = vunpack.c.l.b16 %v2290
  %v2584 = vunpack.c.h.b16 %v2290
  %v2585 = vunpack.c.l.b16 %v2291
  %v2586 = vunpack.c.h.b16 %v2291
  %v2587 = vunpack.c.l.b16 %v2292
  %v2588 = vunpack.c.h.b16 %v2292
  %v2589 = vunpack.c.l.b16 %v2293
  %v2590 = vunpack.c.h.b16 %v2293
  %v2591 = vunpack.c.l.b16 %v2294
  %v2592 = vunpack.c.h.b16 %v2294
  %v2593 = vunpack.c.l.b16 %v2295
  %v2594 = vunpack.c.h.b16 %v2295
  %v2595 = vunpack.c.l.b16 %v2296
  %v2596 = vunpack.c.h.b16 %v2296
  %v2597 = vunpack.c.l.b16 %v2297
  %v2598 = vunpack.c.h.b16 %v2297
  %v2599 = vunpack.c.l.b16 %v2298
  %v2600 = vunpack.c.h.b16 %v2298
  %v2601 = vunpack.c.l.b16 %v2299
  %v2602 = vunpack.c.h.b16 %v2299
  %v2603 = vunpack.c.l.b16 %v2300
  %v2604 = vunpack.c.h.b16 %v2300
  %v2605 = vunpack.c.l.b16 %v2301
  %v2606 = vunpack.c.h.b16 %v2301
  %v2607 = vunpack.c.l.b16 %v2302
  %v2608 = vunpack.c.h.b16 %v2302
  %v2609 = vunpack.c.l.b16 %v2303
  %v2610 = vunpack.c.h.b16 %v2303
  %v2611 = vunpack.c.l.b16 %v2304
  %v2612 = vunpack.c.h.b16 %v2304
  %v2613 = vunpack.c.l.b16 %v2305
  %v2614 = vunpack.c.h.b16 %v2305
  %v2615 = vunpack.c.l.b16 %v2306
  %v2616 = vunpack.c.h.b16 %v2306
  %v2617 = vunpack.c.l.b16 %v2307
  %v2618 = vunpack.c.h.b16 %v2307
  %v2619 = vunpack.c.l.b16 %v2308
  %v2620 = vunpack.c.h.b16 %v2308
  %v2621 = vunpack.c.l.b16 %v2309
  %v2622 = vunpack.c.h.b16 %v2309
  %v2623 = vunpack.c.l.b16 %v2310
  %v2624 = vunpack.c.h.b16 %v2310
  %v2625 = vunpack.c.l.b16 %v2311
  %v2626 = vunpack.c.h.b16 %v2311
  %v2627 = vunpack.c.l.b16 %v2312
  %v2628 = vunpack.c.h.b16 %v2312
  %v2629 = vunpack.c.l.b16 %v2313
  %v2630 = vunpack.c.h.b16 %v2313
  %v2631 = vunpack.c.l.b16 %v2314
  %v2632 = vunpack.c.h.b16 %v2314
  %v2633 = vunpack.c.l.b16 %v2315
  %v2634 = vunpack.c.h.b16 %v2315
  %v2635 = vunpack.c.l.b16 %v2316
  %v2636 = vunpack.c.h.b16 %v2316
  %v2637 = vunpack.c.l.b16 %v2317
  %v2638 = vunpack.c.h.b16 %v2317
  %v2639 = vunpack.c.l.b16 %v2318
  %v2640 = vunpack.c.h.b16 %v2318
  %v2641 = vunpack.c.l.b16 %v2319
  %v2642 = vunpack.c.h.b16 %v2319
  %v2643 = vunpack.c.l.b16 %v2320
  %v2644 = vunpack.c.h.b16 %v2320
  %v2645 = vunpack.c.l.b16 %v2321
  %v2646 = vunpack.c.h.b16 %v2321
  %v2647 = vunpack.c.l.b16 %v2322
  %v2648 = vunpack.c.h.b16 %v2322
  %v2649 = vunpack.c.l.b16 %v2323
  %v2650 = vunpack.c.h.b16 %v2323
  %v2651 = vunpack.c.l.b16 %v2324
  %v2652 = vunpack.c.h.b16 %v2324
  %v2653 = vunpack.c.l.b16 %v2325
  %v2654 = vunpack.c.h.b16 %v2325
  %v2655 = vunpack.c.l.b16 %v2326
  %v2656 = vunpack.c.h.b16 %v2326
  %v2657 = vunpack.c.l.b16 %v2327
  %v2658 = vunpack.c.h.b16 %v2327
  %v2659 = vunpack.c.l.b16 %v2328
  %v2660 = vunpack.c.h.b16 %v2328
  %v2661 = vunpack.c.l.b16 %v2329
  %v2662 = vunpack.c.h.b16 %v2329
  %v2663 = vunpack.c.l.b16 %v2330
  %v2664 = vunpack.c.h.b16 %v2330
  %v2665 = vunpack.c.l.b16 %v2331
  %v2666 = vunpack.c.h.b16 %v2331
  %v2667 = vunpack.c.l.b16 %v2332
  %v2668 = vunpack.c.h.b16 %v2332
  %v2669 = vunpack.c.l.b16 %v2333
  %v2670 = vunpack.c.h.b16 %v2333
  %v2671 = vunpack.c.l.b16 %v2334
  %v2672 = vunpack.c.h.b16 %v2334
  %v2673 = vunpack.c.l.b16 %v2335
  %v2674 = vunpack.c.h.b16 %v2335
  %v2675 = vunpack.c.l.b16 %v2336
  %v2676 = vunpack.c.h.b16 %v2336
  %v2677 = vunpack.c.l.b16 %v2337
  %v2678 = vunpack.c.h.b16 %v2337
  %v2679 = vunpack.c.l.b16 %v2338
  %v2680 = vunpack.c.h.b16 %v2338
  %v2681 = vunpack.c.l.b16 %v2339
  %v2682 = vunpack.c.h.b16 %v2339
  %v2683 = vunpack.c.l.b16 %v2340
  %v2684 = vunpack.c.h.b16 %v2340
  %v2685 = vunpack.c.l.b16 %v2341
  %v2686 = vunpack.c.h.b16 %v2341
  %v2687 = vunpack.c.l.b16 %v2342
  %v2688 = vunpack.c.h.b16 %v2342
  %v2689 = vunpack.c.l.b16 %v2343
  %v2690 = vunpack.c.h.b16 %v2343
  %v2691 = vunpack.c.l.b16 %v2344
  %v2692 = vunpack.c.h.b16 %v2344
  %v2693 = vunpack.c.l.b16 %v2345
  %v2694 = vunpack.c.h.b16 %v2345
  %v2695 = vunpack.c.l.b16 %v2346
  %v2696 = vunpack.c.h.b16 %v2346
  %v2697 = vunpack.c.l.b16 %v2347
  %v2698 = vunpack.c.h.b16 %v2347
  %v2699 = vunpack.c.l.b16 %v2348
  %v2700 = vunpack.c.h.b16 %v2348
  %v2701 = vunpack.c.l.b16 %v2349
  %v2702 = vunpack.c.h.b16 %v2349
  %v2703 = vunpack.c.l.b16 %v2350
  %v2704 = vunpack.c.h.b16 %v2350
  %v2705 = vunpack.c.l.b16 %v2351
  %v2706 = vunpack.c.h.b16 %v2351
  %v2707 = vunpack.c.l.b16 %v2352
  %v2708 = vunpack.c.h.b16 %v2352
  %v2709 = vunpack.c.l.b16 %v2353
  %v2710 = vunpack.c.h.b16 %v2353
  %v2711 = vunpack.c.l.b16 %v2354
  %v2712 = vunpack.c.h.b16 %v2354
  %v2713 = vunpack.c.l.b16 %v2355
  %v2714 = vunpack.c.h.b16 %v2355
  %v2715 = vunpack.c.l.b16 %v2356
  %v2716 = vunpack.c.h.b16 %v2356
  %v2717 = vunpack.c.l.b16 %v2357
  %v2718 = vunpack.c.h.b16 %v2357
  %v2719 = vunpack.c.l.b16 %v2358
  %v2720 = vunpack.c.h.b16 %v2358
  %v2721 = vunpack.c.l.b16 %v2359
  %v2722 = vunpack.c.h.b16 %v2359
  %v2723 = vunpack.c.l.b16 %v2360
  %v2724 = vunpack.c.h.b16 %v2360
  %v2725 = vunpack.c.l.b16 %v2361
  %v2726 = vunpack.c.h.b16 %v2361
  %v2727 = vunpack.c.l.b16 %v2362
  %v2728 = vunpack.c.h.b16 %v2362
  %v2729 = vunpack.c.l.b16 %v2363
  %v2730 = vunpack.c.h.b16 %v2363
  %v2731 = vunpack.c.l.b16 %v2364
  %v2732 = vunpack.c.h.b16 %v2364
  %v2733 = vunpack.c.l.b16 %v2365
  %v2734 = vunpack.c.h.b16 %v2365
  %v2735 = vunpack.c.l.b16 %v2366
  %v2736 = vunpack.c.h.b16 %v2366
  %v2737 = vunpack.c.l.b16 %v2367
  %v2738 = vunpack.c.h.b16 %v2367
  %v2739 = vunpack.c.l.b16 %v2368
  %v2740 = vunpack.c.h.b16 %v2368
  %v2741 = vunpack.c.l.b16 %v2369
  %v2742 = vunpack.c.h.b16 %v2369
  %v2743 = vunpack.c.l.b16 %v2370
  %v2744 = vunpack.c.h.b16 %v2370
  %v2745 = vunpack.c.l.b16 %v2371
  %v2746 = vunpack.c.h.b16 %v2371
  %v2747 = vunpack.c.l.b16 %v2372
  %v2748 = vunpack.c.h.b16 %v2372
  %v2749 = vunpack.c.l.b16 %v2373
  %v2750 = vunpack.c.h.b16 %v2373
  %v2751 = vunpack.c.l.b16 %v2374
  %v2752 = vunpack.c.h.b16 %v2374
  %v2753 = vunpack.c.l.b16 %v2375
  %v2754 = vunpack.c.h.b16 %v2375
  %v2755 = vunpack.c.l.b16 %v2376
  %v2756 = vunpack.c.h.b16 %v2376
  %v2757 = vunpack.c.l.b16 %v2377
  %v2758 = vunpack.c.h.b16 %v2377
  %v2759 = vunpack.c.l.b16 %v2378
  %v2760 = vunpack.c.h.b16 %v2378
  %v2761 = vunpack.c.l.b16 %v2379
  %v2762 = vunpack.c.h.b16 %v2379
  %v2763 = vunpack.c.l.b16 %v2380
  %v2764 = vunpack.c.h.b16 %v2380
  %v2765 = vunpack.c.l.b16 %v2381
  %v2766 = vunpack.c.h.b16 %v2381
  %v2767 = vunpack.c.l.b16 %v2382
  %v2768 = vunpack.c.h.b16 %v2382
  %v2769 = vunpack.c.l.b16 %v2383
  %v2770 = vunpack.c.h.b16 %v2383
  %v2771 = vunpack.c.l.b16 %v2384
  %v2772 = vunpack.c.h.b16 %v2384
  %v2773 = vunpack.c.l.b16 %v2385
  %v2774 = vunpack.c.h.b16 %v2385
  %v2775 = vunpack.c.l.b16 %v2386
  %v2776 = vunpack.c.h.b16 %v2386
  %v2777 = vunpack.c.l.b16 %v2387
  %v2778 = vunpack.c.h.b16 %v2387
  %v2779 = vunpack.c.l.b16 %v2388
  %v2780 = vunpack.c.h.b16 %v2388
  %v2781 = vunpack.c.l.b16 %v2389
  %v2782 = vunpack.c.h.b16 %v2389
  %v2783 = vunpack.c.l.b16 %v2390
  %v2784 = vunpack.c.h.b16 %v2390
  %v2785 = vunpack.c.l.b16 %v2391
  %v2786 = vunpack.c.h.b16 %v2391
  %v2787 = vunpack.c.l.b16 %v2392
  %v2788 = vunpack.c.h.b16 %v2392
  %v2789 = vunpack.c.l.b16 %v2393
  %v2790 = vunpack.c.h.b16 %v2393
  %v2791 = vunpack.c.l.b16 %v2394
  %v2792 = vunpack.c.h.b16 %v2394
  %v2793 = vunpack.c.l.b16 %v2395
  %v2794 = vunpack.c.h.b16 %v2395
  %v2795 = vunpack.c.l.b16 %v2396
  %v2796 = vunpack.c.h.b16 %v2396
  %v2797 = vunpack.c.l.b16 %v2397
  %v2798 = vunpack.c.h.b16 %v2397
  %v2799 = vunpack.c.l.b16 %v2398
  %v2800 = vunpack.c.h.b16 %v2398
  %v2801 = vunpack.c.l.b16 %v2399
  %v2802 = vunpack.c.h.b16 %v2399
  %v2803 = vunpack.c.l.b16 %v2400
  %v2804 = vunpack.c.h.b16 %v2400
  %v2805 = vunpack.c.l.b16 %v2401
  %v2806 = vunpack.c.h.b16 %v2401
  %v2807 = vunpack.c.l.b16 %v2402
  %v2808 = vunpack.c.h.b16 %v2402
  %v2809 = vunpack.c.l.b16 %v2403
  %v2810 = vunpack.c.h.b16 %v2403
  %v2811 = vunpack.c.l.b16 %v2404
  %v2812 = vunpack.c.h.b16 %v2404
  %v2813 = vunpack.c.l.b16 %v2405
  %v2814 = vunpack.c.h.b16 %v2405
  %v2815 = vunpack.c.l.b16 %v2406
  %v2816 = vunpack.c.h.b16 %v2406
  %v2817 = vunpack.c.l.b16 %v2407
  %v2818 = vunpack.c.h.b16 %v2407
  %v2819 = vunpack.c.l.b16 %v2408
  %v2820 = vunpack.c.h.b16 %v2408
  %v2821 = vunpack.c.l.b16 %v2409
  %v2822 = vunpack.c.h.b16 %v2409
  %v2823 = vunpack.c.l.b16 %v2410
  %v2824 = vunpack.c.h.b16 %v2410
  %v2825 = vunpack.c.l.b16 %v2411
  %v2826 = vunpack.c.h.b16 %v2411
  %v2827 = vunpack.c.l.b16 %v2412
  %v2828 = vunpack.c.h.b16 %v2412
  %v2829 = vpack.c.b16 %v2577, %v2573
  %v2830 = vpack.c.b16 %v2578, %v2574
  %v2831 = vpack.c.b16 %v2579, %v2575
  %v2832 = vpack.c.b16 %v2580, %v2576
  %v2833 = vpack.c.b16 %v2585, %v2581
  %v2834 = vpack.c.b16 %v2586, %v2582
  %v2835 = vpack.c.b16 %v2587, %v2583
  %v2836 = vpack.c.b16 %v2588, %v2584
  %v2837 = vpack.c.b16 %v2593, %v2589
  %v2838 = vpack.c.b16 %v2594, %v2590
  %v2839 = vpack.c.b16 %v2595, %v2591
  %v2840 = vpack.c.b16 %v2596, %v2592
  %v2841 = vpack.c.b16 %v2601, %v2597
  %v2842 = vpack.c.b16 %v2602, %v2598
  %v2843 = vpack.c.b16 %v2603, %v2599
  %v2844 = vpack.c.b16 %v2604, %v2600
  %v2845 = vpack.c.b16 %v2609, %v2605
  %v2846 = vpack.c.b16 %v2610, %v2606
  %v2847 = vpack.c.b16 %v2611, %v2607
  %v2848 = vpack.c.b16 %v2612, %v2608
  %v2849 = vpack.c.b16 %v2617, %v2613
  %v2850 = vpack.c.b16 %v2618, %v2614
  %v2851 = vpack.c.b16 %v2619, %v2615
  %v2852 = vpack.c.b16 %v2620, %v2616
  %v2853 = vpack.c.b16 %v2625, %v2621
  %v2854 = vpack.c.b16 %v2626, %v2622
  %v2855 = vpack.c.b16 %v2627, %v2623
  %v2856 = vpack.c.b16 %v2628, %v2624
  %v2857 = vpack.c.b16 %v2633, %v2629
  %v2858 = vpack.c.b16 %v2634, %v2630
  %v2859 = vpack.c.b16 %v2635, %v2631
  %v2860 = vpack.c.b16 %v2636, %v2632
  %v2861 = vpack.c.b16 %v2641, %v2637
  %v2862 = vpack.c.b16 %v2642, %v2638
  %v2863 = vpack.c.b16 %v2643, %v2639
  %v2864 = vpack.c.b16 %v2644, %v2640
  %v2865 = vpack.c.b16 %v2649, %v2645
  %v2866 = vpack.c.b16 %v2650, %v2646
  %v2867 = vpack.c.b16 %v2651, %v2647
  %v2868 = vpack.c.b16 %v2652, %v2648
  %v2869 = vpack.c.b16 %v2657, %v2653
  %v2870 = vpack.c.b16 %v2658, %v2654
  %v2871 = vpack.c.b16 %v2659, %v2655
  %v2872 = vpack.c.b16 %v2660, %v2656
  %v2873 = vpack.c.b16 %v2665, %v2661
  %v2874 = vpack.c.b16 %v2666, %v2662
  %v2875 = vpack.c.b16 %v2667, %v2663
  %v2876 = vpack.c.b16 %v2668, %v2664
  %v2877 = vpack.c.b16 %v2673, %v2669
  %v2878 = vpack.c.b16 %v2674, %v2670
  %v2879 = vpack.c.b16 %v2675, %v2671
  %v2880 = vpack.c.b16 %v2676, %v2672
  %v2881 = vpack.c.b16 %v2681, %v2677
  %v2882 = vpack.c.b16 %v2682, %v2678
  %v2883 = vpack.c.b16 %v2683, %v2679
  %v2884 = vpack.c.b16 %v2684, %v2680
  %v2885 = vpack.c.b16 %v2689, %v2685
  %v2886 = vpack.c.b16 %v2690, %v2686
  %v2887 = vpack.c.b16 %v2691, %v2687
  %v2888 = vpack.c.b16 %v2692, %v2688
  %v2889 = vpack.c.b16 %v2697, %v2693
  %v2890 = vpack.c.b16 %v2698, %v2694
  %v2891 = vpack.c.b16 %v2699, %v2695
  %v2892 = vpack.c.b16 %v2700, %v2696
  %v2893 = vpack.c.b16 %v2705, %v2701
  %v2894 = vpack.c.b16 %v2706, %v2702
  %v2895 = vpack.c.b16 %v2707, %v2703
  %v2896 = vpack.c.b16 %v2708, %v2704
  %v2897 = vpack.c.b16 %v2713, %v2709
  %v2898 = vpack.c.b16 %v2714, %v2710
  %v2899 = vpack.c.b16 %v2715, %v2711
  %v2900 = vpack.c.b16 %v2716, %v2712
  %v2901 = vpack.c.b16 %v2721, %v2717
  %v2902 = vpack.c.b16 %v2722, %v2718
  %v2903 = vpack.c.b16 %v2723, %v2719
  %v2904 = vpack.c.b16 %v2724, %v2720
  %v2905 = vpack.c.b16 %v2729, %v2725
  %v2906 = vpack.c.b16 %v2730, %v2726
  %v2907 = vpack.c.b16 %v2731, %v2727
  %v2908 = vpack.c.b16 %v2732, %v2728
  %v2909 = vpack.c.b16 %v2737, %v2733
  %v2910 = vpack.c.b16 %v2738, %v2734
  %v2911 = vpack.c.b16 %v2739, %v2735
  %v2912 = vpack.c.b16 %v2740, %v2736
  %v2913 = vpack.c.b16 %v2745, %v2741
  %v2914 = vpack.c.b16 %v2746, %v2742
  %v2915 = vpack.c.b16 %v2747, %v2743
  %v2916 = vpack.c.b16 %v2748, %v2744
  %v2917 = vpack.c.b16 %v2753, %v2749
  %v2918 = vpack.c.b16 %v2754, %v2750
  %v2919 = vpack.c.b16 %v2755, %v2751
  %v2920 = vpack.c.b16 %v2756, %v2752
  %v2921 = vpack.c.b16 %v2761, %v2757
  %v2922 = vpack.c.b16 %v2762, %v2758
  %v2923 = vpack.c.b16 %v2763, %v2759
  %v2924 = vpack.c.b16 %v2764, %v2760
  %v2925 = vpack.c.b16 %v2769, %v2765
  %v2926 = vpack.c.b16 %v2770, %v2766
  %v2927 = vpack.c.b16 %v2771, %v2767
  %v2928 = vpack.c.b16 %v2772, %v2768
  %v2929 = vpack.c.b16 %v2777, %v2773
  %v2930 = vpack.c.b16 %v2778, %v2774
  %v2931 = vpack.c.b16 %v2779, %v2775
  %v2932 = vpack.c.b16 %v2780, %v2776
  %v2933 = vpack.c.b16 %v2785, %v2781
  %v2934 = vpack.c.b16 %v2786, %v2782
  %v2935 = vpack.c.b16 %v2787, %v2783
  %v2936 = vpack.c.b16 %v2788, %v2784
  %v2937 = vpack.c.b16 %v2793, %v2789
  %v2938 = vpack.c.b16 %v2794, %v2790
  %v2939 = vpack.c.b16 %v2795, %v2791
  %v2940 = vpack.c.b16 %v2796, %v2792
  %v2941 = vpack.c.b16 %v2801, %v2797
  %v2942 = vpack.c.b16 %v2802, %v2798
  %v2943 = vpack.c.b16 %v2803, %v2799
  %v2944 = vpack.c.b16 %v2804, %v2800
  %v2945 = vpack.c.b16 %v2809, %v2805
  %v2946 = vpack.c.b16 %v2810, %v2806
  %v2947 = vpack.c.b16 %v2811, %v2807
  %v2948 = vpack.c.b16 %v2812, %v2808
  %v2949 = vpack.c.b16 %v2817, %v2813
  %v2950 = vpack.c.b16 %v2818, %v2814
  %v2951 = vpack.c.b16 %v2819, %v2815
  %v2952 = vpack.c.b16 %v2820, %v2816
  %v2953 = vpack.c.b16 %v2825, %v2821
  %v2954 = vpack.c.b16 %v2826, %v2822
  %v2955 = vpack.c.b16 %v2827, %v2823
  %v2956 = vpack.c.b16 %v2828, %v2824
  %3085 = vmatprep.subr.bf16.mxu0 %v2830
  %3086 = vmatpush1.bf16.msra.mxu0 %v2829
  %3087 = vmatprep.subr.bf16.mxu0 %v2834
  %3088 = vmatpush1.bf16.msra.mxu0 %v2833
  %3089 = vmatprep.subr.bf16.mxu0 %v2838
  %3090 = vmatpush1.bf16.msra.mxu0 %v2837
  %3091 = vmatprep.subr.bf16.mxu0 %v2842
  %3092 = vmatpush1.bf16.msra.mxu0 %v2841
  %3093 = vmatprep.subr.bf16.mxu0 %v2846
  %3094 = vmatpush1.bf16.msra.mxu0 %v2845
  %3095 = vmatprep.subr.bf16.mxu0 %v2850
  %3096 = vmatpush1.bf16.msra.mxu0 %v2849
  %3097 = vmatprep.subr.bf16.mxu0 %v2854
  %3098 = vmatpush1.bf16.msra.mxu0 %v2853
  %3099 = vmatprep.subr.bf16.mxu0 %v2858
  %3100 = vmatpush1.bf16.msra.mxu0 %v2857
  %3101 = vmatprep.subr.bf16.mxu0 %v2862
  %3102 = vmatpush1.bf16.msra.mxu0 %v2861
  %3103 = vmatprep.subr.bf16.mxu0 %v2866
  %3104 = vmatpush1.bf16.msra.mxu0 %v2865
  %3105 = vmatprep.subr.bf16.mxu0 %v2870
  %3106 = vmatpush1.bf16.msra.mxu0 %v2869
  %3107 = vmatprep.subr.bf16.mxu0 %v2874
  %3108 = vmatpush1.bf16.msra.mxu0 %v2873
  %3109 = vmatprep.subr.bf16.mxu0 %v2878
  %3110 = vmatpush1.bf16.msra.mxu0 %v2877
  %3111 = vmatprep.subr.bf16.mxu0 %v2882
  %3112 = vmatpush1.bf16.msra.mxu0 %v2881
  %3113 = vmatprep.subr.bf16.mxu0 %v2886
  %3114 = vmatpush1.bf16.msra.mxu0 %v2885
  %3115 = vmatprep.subr.bf16.mxu0 %v2890
  %3116 = vmatpush1.bf16.msra.mxu0 %v2889
  %3117 = vmatprep.mubr.bf16.mxu0 %v2282
  %3118 = vmatmul.mubr.bf16.gmra.mrb[0].mxu0 %v2281
  %v3119 = vpop.f32.mrb[0].mxu0
  %v3120 = vadd.f32 %v2441, %v3119
  %v3121 = vpop.f32.mrb[0].mxu0
  %v3122 = vadd.f32 %v2442, %v3121
  %v3123 = vpop.f32.mrb[0].mxu0
  %v3124 = vpop.f32.mrb[0].mxu0
  %3125 = vdwg.mxu0
  %3126 = vmatprep.subr.bf16.mxu0 %v2894
  %3127 = vmatpush1.bf16.msra.mxu0 %v2893
  %3128 = vmatprep.subr.bf16.mxu0 %v2898
  %3129 = vmatpush1.bf16.msra.mxu0 %v2897
  %3130 = vmatprep.subr.bf16.mxu0 %v2902
  %3131 = vmatpush1.bf16.msra.mxu0 %v2901
  %3132 = vmatprep.subr.bf16.mxu0 %v2906
  %3133 = vmatpush1.bf16.msra.mxu0 %v2905
  %3134 = vmatprep.subr.bf16.mxu0 %v2910
  %3135 = vmatpush1.bf16.msra.mxu0 %v2909
  %3136 = vmatprep.subr.bf16.mxu0 %v2914
  %3137 = vmatpush1.bf16.msra.mxu0 %v2913
  %3138 = vmatprep.subr.bf16.mxu0 %v2918
  %3139 = vmatpush1.bf16.msra.mxu0 %v2917
  %3140 = vmatprep.subr.bf16.mxu0 %v2922
  %3141 = vmatpush1.bf16.msra.mxu0 %v2921
  %3142 = vmatprep.subr.bf16.mxu0 %v2926
  %3143 = vmatpush1.bf16.msra.mxu0 %v2925
  %3144 = vmatprep.subr.bf16.mxu0 %v2930
  %3145 = vmatpush1.bf16.msra.mxu0 %v2929
  %3146 = vmatprep.subr.bf16.mxu0 %v2934
  %3147 = vmatpush1.bf16.msra.mxu0 %v2933
  %3148 = vmatprep.subr.bf16.mxu0 %v2938
  %3149 = vmatpush1.bf16.msra.mxu0 %v2937
  %3150 = vmatprep.subr.bf16.mxu0 %v2942
  %3151 = vmatpush1.bf16.msra.mxu0 %v2941
  %3152 = vmatprep.subr.bf16.mxu0 %v2946
  %3153 = vmatpush1.bf16.msra.mxu0 %v2945
  %3154 = vmatprep.subr.bf16.mxu0 %v2950
  %3155 = vmatpush1.bf16.msra.mxu0 %v2949
  %3156 = vmatprep.subr.bf16.mxu0 %v2954
  %3157 = vmatpush1.bf16.msra.mxu0 %v2953
  %3158 = vmatprep.mubr.bf16.mxu0 %v2284
  %3159 = vmatmul.mubr.bf16.gmra.mrb[0].mxu0 %v2283
  %v3160 = vpop.f32.mrb[0].mxu0
  %v3161 = vadd.f32 %v3120, %v3160
  %v3162 = vpop.f32.mrb[0].mxu0
  %v3163 = vadd.f32 %v3122, %v3162
  %v3164 = vpop.f32.mrb[0].mxu0
  %v3165 = vpop.f32.mrb[0].mxu0
  %3166 = vdwg.mxu0
  %3167 = vmatprep.subr.bf16.mxu0 %v2832
  %3168 = vmatpush1.bf16.msra.mxu0 %v2831
  %3169 = vmatprep.subr.bf16.mxu0 %v2836
  %3170 = vmatpush1.bf16.msra.mxu0 %v2835
  %3171 = vmatprep.subr.bf16.mxu0 %v2840
  %3172 = vmatpush1.bf16.msra.mxu0 %v2839
  %3173 = vmatprep.subr.bf16.mxu0 %v2844
  %3174 = vmatpush1.bf16.msra.mxu0 %v2843
  %3175 = vmatprep.subr.bf16.mxu0 %v2848
  %3176 = vmatpush1.bf16.msra.mxu0 %v2847
  %3177 = vmatprep.subr.bf16.mxu0 %v2852
  %3178 = vmatpush1.bf16.msra.mxu0 %v2851
  %3179 = vmatprep.subr.bf16.mxu0 %v2856
  %3180 = vmatpush1.bf16.msra.mxu0 %v2855
  %3181 = vmatprep.subr.bf16.mxu0 %v2860
  %3182 = vmatpush1.bf16.msra.mxu0 %v2859
  %3183 = vmatprep.subr.bf16.mxu0 %v2864
  %3184 = vmatpush1.bf16.msra.mxu0 %v2863
  %3185 = vmatprep.subr.bf16.mxu0 %v2868
  %3186 = vmatpush1.bf16.msra.mxu0 %v2867
  %3187 = vmatprep.subr.bf16.mxu0 %v2872
  %3188 = vmatpush1.bf16.msra.mxu0 %v2871
  %3189 = vmatprep.subr.bf16.mxu0 %v2876
  %3190 = vmatpush1.bf16.msra.mxu0 %v2875
  %3191 = vmatprep.subr.bf16.mxu0 %v2880
  %3192 = vmatpush1.bf16.msra.mxu0 %v2879
  %3193 = vmatprep.subr.bf16.mxu0 %v2884
  %3194 = vmatpush1.bf16.msra.mxu0 %v2883
  %3195 = vmatprep.subr.bf16.mxu0 %v2888
  %3196 = vmatpush1.bf16.msra.mxu0 %v2887
  %3197 = vmatprep.subr.bf16.mxu0 %v2892
  %3198 = vmatpush1.bf16.msra.mxu0 %v2891
  %3199 = vmatprep.mubr.bf16.mxu0 %v2282
  %3200 = vmatmul.mubr.bf16.gmra.mrb[0].mxu0 %v2281
  %v3201 = vpop.f32.mrb[0].mxu0
  %v3202 = vadd.f32 %v2443, %v3201
  %v3203 = vpop.f32.mrb[0].mxu0
  %v3204 = vadd.f32 %v2444, %v3203
  %v3205 = vpop.f32.mrb[0].mxu0
  %v3206 = vpop.f32.mrb[0].mxu0
  %3207 = vdwg.mxu0
  %3208 = vmatprep.subr.bf16.mxu0 %v2896
  %3209 = vmatpush1.bf16.msra.mxu0 %v2895
  %3210 = vmatprep.subr.bf16.mxu0 %v2900
  %3211 = vmatpush1.bf16.msra.mxu0 %v2899
  %3212 = vmatprep.subr.bf16.mxu0 %v2904
  %3213 = vmatpush1.bf16.msra.mxu0 %v2903
  %3214 = vmatprep.subr.bf16.mxu0 %v2908
  %3215 = vmatpush1.bf16.msra.mxu0 %v2907
  %3216 = vmatprep.subr.bf16.mxu0 %v2912
  %3217 = vmatpush1.bf16.msra.mxu0 %v2911
  %3218 = vmatprep.subr.bf16.mxu0 %v2916
  %3219 = vmatpush1.bf16.msra.mxu0 %v2915
  %3220 = vmatprep.subr.bf16.mxu0 %v2920
  %3221 = vmatpush1.bf16.msra.mxu0 %v2919
  %3222 = vmatprep.subr.bf16.mxu0 %v2924
  %3223 = vmatpush1.bf16.msra.mxu0 %v2923
  %3224 = vmatprep.subr.bf16.mxu0 %v2928
  %3225 = vmatpush1.bf16.msra.mxu0 %v2927
  %3226 = vmatprep.subr.bf16.mxu0 %v2932
  %3227 = vmatpush1.bf16.msra.mxu0 %v2931
  %3228 = vmatprep.subr.bf16.mxu0 %v2936
  %3229 = vmatpush1.bf16.msra.mxu0 %v2935
  %3230 = vmatprep.subr.bf16.mxu0 %v2940
  %3231 = vmatpush1.bf16.msra.mxu0 %v2939
  %3232 = vmatprep.subr.bf16.mxu0 %v2944
  %3233 = vmatpush1.bf16.msra.mxu0 %v2943
  %3234 = vmatprep.subr.bf16.mxu0 %v2948
  %3235 = vmatpush1.bf16.msra.mxu0 %v2947
  %3236 = vmatprep.subr.bf16.mxu0 %v2952
  %3237 = vmatpush1.bf16.msra.mxu0 %v2951
  %3238 = vmatprep.subr.bf16.mxu0 %v2956
  %3239 = vmatpush1.bf16.msra.mxu0 %v2955
  %3240 = vmatprep.mubr.bf16.mxu0 %v2284
  %3241 = vmatmul.mubr.bf16.gmra.mrb[0].mxu0 %v2283
  %v3242 = vpop.f32.mrb[0].mxu0
  %v3243 = vadd.f32 %v3202, %v3242
  %v3244 = vpop.f32.mrb[0].mxu0
  %v3245 = vadd.f32 %v3204, %v3244
  %v3246 = vpop.f32.mrb[0].mxu0
  %v3247 = vpop.f32.mrb[0].mxu0
  %3248 = vdwg.mxu0
  %v3249 = vld [vmem:[%s6] sm:$0xf]
  %v3251 = vlaneseq
  %v3252 = vshrl.u32 %v3251, 7
  %v3253 = vsub.s32 0, %v3252
  %v3254 = vrot.slane %v3249, %v3253
  %v3255 = vlaneseq
  %v3256 = vshrl.u32 %v3255, 7
  %v3257 = vsub.s32 1, %v3256
  %v3258 = vrot.slane %v3249, %v3257
  %v3259 = vlaneseq
  %v3260 = vshrl.u32 %v3259, 7
  %v3261 = vsub.s32 2, %v3260
  %v3262 = vrot.slane %v3249, %v3261
  %v3263 = vlaneseq
  %v3264 = vshrl.u32 %v3263, 7
  %v3265 = vsub.s32 3, %v3264
  %v3266 = vrot.slane %v3249, %v3265
  %v3271 = vadd.f32 %v3161, %v3254
  %v3272 = vadd.f32 %v3163, %v3258
  %v3273 = vadd.f32 %v3243, %v3262
  %v3274 = vadd.f32 %v3245, %v3266
  %v3275 = vmax.f32 %v3271, 0.0
  %v3276 = vmax.f32 %v3272, 0.0
  %v3277 = vmax.f32 %v3273, 0.0
  %v3278 = vmax.f32 %v3274, 0.0
  %v3279 = vpack.c.bf16 %v3275, %v3275
  %v3280 = vpack.c.bf16 %v3276, %v3276
  %v3281 = vpack.c.bf16 %v3277, %v3277
  %v3282 = vpack.c.bf16 %v3278, %v3278
  %v3283 = vld [vmem:[%s7] sm:$0xff]
  %v3284 = vld [vmem:[%s7 + $0x8] sm:$0xff]
  %v3285 = vld [vmem:[%s7 + $0x10] sm:$0xf]
  %v3286 = vld [vmem:[%s7 + $0x14] sm:$0xff]
  %v3287 = vld [vmem:[%s7 + $0x1c] sm:$0xff]
  %v3288 = vld [vmem:[%s7 + $0x24] sm:$0xf]
  %v3289 = vld [vmem:[%s7 + $0x28] sm:$0xff]
  %v3290 = vld [vmem:[%s7 + $0x30] sm:$0xff]
  %v3291 = vld [vmem:[%s7 + $0x38] sm:$0xf]
  %v3292 = vld [vmem:[%s7 + $0x3c] sm:$0xff]
  %v3293 = vld [vmem:[%s7 + $0x44] sm:$0xff]
  %v3294 = vld [vmem:[%s7 + $0x4c] sm:$0xf]
  %v3295 = vld [vmem:[%s7 + $0x50] sm:$0xff]
  %v3296 = vld [vmem:[%s7 + $0x58] sm:$0xff]
  %v3297 = vld [vmem:[%s7 + $0x60] sm:$0xf]
  %v3298 = vld [vmem:[%s7 + $0x64] sm:$0xff]
  %v3299 = vld [vmem:[%s7 + $0x6c] sm:$0xff]
  %v3300 = vld [vmem:[%s7 + $0x74] sm:$0xf]
  %v3301 = vld [vmem:[%s7 + $0x78] sm:$0xff]
  %v3302 = vld [vmem:[%s7 + $0x80] sm:$0xff]
  %v3303 = vld [vmem:[%s7 + $0x88] sm:$0xf]
  %v3304 = vld [vmem:[%s7 + $0x8c] sm:$0xff]
  %v3305 = vld [vmem:[%s7 + $0x94] sm:$0xff]
  %v3306 = vld [vmem:[%s7 + $0x9c] sm:$0xf]
  %v3307 = vld [vmem:[%s7 + $0xa0] sm:$0xff]
  %v3308 = vld [vmem:[%s7 + $0xa8] sm:$0xff]
  %v3309 = vld [vmem:[%s7 + $0xb0] sm:$0xf]
  %v3310 = vld [vmem:[%s7 + $0xb4] sm:$0xff]
  %v3311 = vld [vmem:[%s7 + $0xbc] sm:$0xff]
  %v3312 = vld [vmem:[%s7 + $0xc4] sm:$0xf]
  %v3313 = vld [vmem:[%s7 + $0xc8] sm:$0xff]
  %v3314 = vld [vmem:[%s7 + $0xd0] sm:$0xff]
  %v3315 = vld [vmem:[%s7 + $0xd8] sm:$0xf]
  %v3316 = vld [vmem:[%s7 + $0xdc] sm:$0xff]
  %v3317 = vld [vmem:[%s7 + $0xe4] sm:$0xff]
  %v3318 = vld [vmem:[%s7 + $0xec] sm:$0xf]
  %v3319 = vld [vmem:[%s7 + $0xf0] sm:$0xff]
  %v3320 = vld [vmem:[%s7 + $0xf8] sm:$0xff]
  %v3321 = vld [vmem:[%s7 + $0x100] sm:$0xf]
  %v3322 = vld [vmem:[%s7 + $0x104] sm:$0xff]
  %v3323 = vld [vmem:[%s7 + $0x10c] sm:$0xff]
  %v3324 = vld [vmem:[%s7 + $0x114] sm:$0xf]
  %v3325 = vld [vmem:[%s7 + $0x118] sm:$0xff]
  %v3326 = vld [vmem:[%s7 + $0x120] sm:$0xff]
  %v3327 = vld [vmem:[%s7 + $0x128] sm:$0xf]
  %v3328 = vld [vmem:[%s7 + $0x12c] sm:$0xff]
  %v3329 = vld [vmem:[%s7 + $0x134] sm:$0xff]
  %v3330 = vld [vmem:[%s7 + $0x13c] sm:$0xf]
  %v3331 = vld [vmem:[%s7 + $0x140] sm:$0xff]
  %v3332 = vld [vmem:[%s7 + $0x148] sm:$0xff]
  %v3333 = vld [vmem:[%s7 + $0x150] sm:$0xf]
  %v3334 = vld [vmem:[%s7 + $0x154] sm:$0xff]
  %v3335 = vld [vmem:[%s7 + $0x15c] sm:$0xff]
  %v3336 = vld [vmem:[%s7 + $0x164] sm:$0xf]
  %v3337 = vld [vmem:[%s7 + $0x168] sm:$0xff]
  %v3338 = vld [vmem:[%s7 + $0x170] sm:$0xff]
  %v3339 = vld [vmem:[%s7 + $0x178] sm:$0xf]
  %v3340 = vld [vmem:[%s7 + $0x17c] sm:$0xff]
  %v3341 = vld [vmem:[%s7 + $0x184] sm:$0xff]
  %v3342 = vld [vmem:[%s7 + $0x18c] sm:$0xf]
  %v3343 = vld [vmem:[%s7 + $0x190] sm:$0xff]
  %v3344 = vld [vmem:[%s7 + $0x198] sm:$0xff]
  %v3345 = vld [vmem:[%s7 + $0x1a0] sm:$0xf]
  %v3346 = vld [vmem:[%s7 + $0x1a4] sm:$0xff]
  %v3347 = vld [vmem:[%s7 + $0x1ac] sm:$0xff]
  %v3348 = vld [vmem:[%s7 + $0x1b4] sm:$0xf]
  %v3349 = vld [vmem:[%s7 + $0x1b8] sm:$0xff]
  %v3350 = vld [vmem:[%s7 + $0x1c0] sm:$0xff]
  %v3351 = vld [vmem:[%s7 + $0x1c8] sm:$0xf]
  %v3352 = vld [vmem:[%s7 + $0x1cc] sm:$0xff]
  %v3353 = vld [vmem:[%s7 + $0x1d4] sm:$0xff]
  %v3354 = vld [vmem:[%s7 + $0x1dc] sm:$0xf]
  %v3355 = vld [vmem:[%s7 + $0x1e0] sm:$0xff]
  %v3356 = vld [vmem:[%s7 + $0x1e8] sm:$0xff]
  %v3357 = vld [vmem:[%s7 + $0x1f0] sm:$0xf]
  %v3358 = vld [vmem:[%s7 + $0x1f4] sm:$0xff]
  %v3359 = vld [vmem:[%s7 + $0x1fc] sm:$0xff]
  %v3360 = vld [vmem:[%s7 + $0x204] sm:$0xf]
  %v3361 = vld [vmem:[%s7 + $0x208] sm:$0xff]
  %v3362 = vld [vmem:[%s7 + $0x210] sm:$0xff]
  %v3363 = vld [vmem:[%s7 + $0x218] sm:$0xf]
  %v3364 = vld [vmem:[%s7 + $0x21c] sm:$0xff]
  %v3365 = vld [vmem:[%s7 + $0x224] sm:$0xff]
  %v3366 = vld [vmem:[%s7 + $0x22c] sm:$0xf]
  %v3367 = vld [vmem:[%s7 + $0x230] sm:$0xff]
  %v3368 = vld [vmem:[%s7 + $0x238] sm:$0xff]
  %v3369 = vld [vmem:[%s7 + $0x240] sm:$0xf]
  %v3370 = vld [vmem:[%s7 + $0x244] sm:$0xff]
  %v3371 = vld [vmem:[%s7 + $0x24c] sm:$0xff]
  %v3372 = vld [vmem:[%s7 + $0x254] sm:$0xf]
  %v3373 = vld [vmem:[%s7 + $0x258] sm:$0xff]
  %v3374 = vld [vmem:[%s7 + $0x260] sm:$0xff]
  %v3375 = vld [vmem:[%s7 + $0x268] sm:$0xf]
  %v3376 = vld [vmem:[%s7 + $0x26c] sm:$0xff]
  %v3377 = vld [vmem:[%s7 + $0x274] sm:$0xff]
  %v3378 = vld [vmem:[%s7 + $0x27c] sm:$0xf]
  %v3379 = vld [vmem:[%s7 + $0x280] sm:$0xff]
  %v3380 = vld [vmem:[%s7 + $0x288] sm:$0xff]
  %v3381 = vld [vmem:[%s7 + $0x290] sm:$0xf]
  %v3382 = vld [vmem:[%s7 + $0x294] sm:$0xff]
  %v3383 = vld [vmem:[%s7 + $0x29c] sm:$0xff]
  %v3384 = vld [vmem:[%s7 + $0x2a4] sm:$0xf]
  %v3385 = vld [vmem:[%s7 + $0x2a8] sm:$0xff]
  %v3386 = vld [vmem:[%s7 + $0x2b0] sm:$0xff]
  %v3387 = vld [vmem:[%s7 + $0x2b8] sm:$0xf]
  %v3388 = vld [vmem:[%s7 + $0x2bc] sm:$0xff]
  %v3389 = vld [vmem:[%s7 + $0x2c4] sm:$0xff]
  %v3390 = vld [vmem:[%s7 + $0x2cc] sm:$0xf]
  %v3391 = vld [vmem:[%s7 + $0x2d0] sm:$0xff]
  %v3392 = vld [vmem:[%s7 + $0x2d8] sm:$0xff]
  %v3393 = vld [vmem:[%s7 + $0x2e0] sm:$0xf]
  %v3394 = vld [vmem:[%s7 + $0x2e4] sm:$0xff]
  %v3395 = vld [vmem:[%s7 + $0x2ec] sm:$0xff]
  %v3396 = vld [vmem:[%s7 + $0x2f4] sm:$0xf]
  %v3397 = vld [vmem:[%s7 + $0x2f8] sm:$0xff]
  %v3398 = vld [vmem:[%s7 + $0x300] sm:$0xff]
  %v3399 = vld [vmem:[%s7 + $0x308] sm:$0xf]
  %v3400 = vld [vmem:[%s7 + $0x30c] sm:$0xff]
  %v3401 = vld [vmem:[%s7 + $0x314] sm:$0xff]
  %v3402 = vld [vmem:[%s7 + $0x31c] sm:$0xf]
  %v3403 = vld [vmem:[%s7 + $0x320] sm:$0xff]
  %v3404 = vld [vmem:[%s7 + $0x328] sm:$0xff]
  %v3405 = vld [vmem:[%s7 + $0x330] sm:$0xf]
  %v3406 = vld [vmem:[%s7 + $0x334] sm:$0xff]
  %v3407 = vld [vmem:[%s7 + $0x33c] sm:$0xff]
  %v3408 = vld [vmem:[%s7 + $0x344] sm:$0xf]
  %v3409 = vld [vmem:[%s7 + $0x348] sm:$0xff]
  %v3410 = vld [vmem:[%s7 + $0x350] sm:$0xff]
  %v3411 = vld [vmem:[%s7 + $0x358] sm:$0xf]
  %v3412 = vld [vmem:[%s7 + $0x35c] sm:$0xff]
  %v3413 = vld [vmem:[%s7 + $0x364] sm:$0xff]
  %v3414 = vld [vmem:[%s7 + $0x36c] sm:$0xf]
  %v3415 = vld [vmem:[%s7 + $0x370] sm:$0xff]
  %v3416 = vld [vmem:[%s7 + $0x378] sm:$0xff]
  %v3417 = vld [vmem:[%s7 + $0x380] sm:$0xf]
  %v3418 = vld [vmem:[%s7 + $0x384] sm:$0xff]
  %v3419 = vld [vmem:[%s7 + $0x38c] sm:$0xff]
  %v3420 = vld [vmem:[%s7 + $0x394] sm:$0xf]
  %v3421 = vld [vmem:[%s7 + $0x398] sm:$0xff]
  %v3422 = vld [vmem:[%s7 + $0x3a0] sm:$0xff]
  %v3423 = vld [vmem:[%s7 + $0x3a8] sm:$0xf]
  %v3424 = vld [vmem:[%s7 + $0x3ac] sm:$0xff]
  %v3425 = vld [vmem:[%s7 + $0x3b4] sm:$0xff]
  %v3426 = vld [vmem:[%s7 + $0x3bc] sm:$0xf]
  %v3427 = vld [vmem:[%s7 + $0x3c0] sm:$0xff]
  %v3428 = vld [vmem:[%s7 + $0x3c8] sm:$0xff]
  %v3429 = vld [vmem:[%s7 + $0x3d0] sm:$0xf]
  %v3430 = vld [vmem:[%s7 + $0x3d4] sm:$0xff]
  %v3431 = vld [vmem:[%s7 + $0x3dc] sm:$0xff]
  %v3432 = vld [vmem:[%s7 + $0x3e4] sm:$0xf]
  %v3433 = vld [vmem:[%s7 + $0x3e8] sm:$0xff]
  %v3434 = vld [vmem:[%s7 + $0x3f0] sm:$0xff]
  %v3435 = vld [vmem:[%s7 + $0x3f8] sm:$0xf]
  %v3436 = vld [vmem:[%s7 + $0x3fc] sm:$0xff]
  %v3437 = vld [vmem:[%s7 + $0x404] sm:$0xff]
  %v3438 = vld [vmem:[%s7 + $0x40c] sm:$0xf]
  %v3439 = vld [vmem:[%s7 + $0x410] sm:$0xff]
  %v3440 = vld [vmem:[%s7 + $0x418] sm:$0xff]
  %v3441 = vld [vmem:[%s7 + $0x420] sm:$0xf]
  %v3442 = vld [vmem:[%s7 + $0x424] sm:$0xff]
  %v3443 = vld [vmem:[%s7 + $0x42c] sm:$0xff]
  %v3444 = vld [vmem:[%s7 + $0x434] sm:$0xf]
  %v3445 = vld [vmem:[%s7 + $0x438] sm:$0xff]
  %v3446 = vld [vmem:[%s7 + $0x440] sm:$0xff]
  %v3447 = vld [vmem:[%s7 + $0x448] sm:$0xf]
  %v3448 = vld [vmem:[%s7 + $0x44c] sm:$0xff]
  %v3449 = vld [vmem:[%s7 + $0x454] sm:$0xff]
  %v3450 = vld [vmem:[%s7 + $0x45c] sm:$0xf]
  %v3451 = vld [vmem:[%s7 + $0x460] sm:$0xff]
  %v3452 = vld [vmem:[%s7 + $0x468] sm:$0xff]
  %v3453 = vld [vmem:[%s7 + $0x470] sm:$0xf]
  %v3454 = vld [vmem:[%s7 + $0x474] sm:$0xff]
  %v3455 = vld [vmem:[%s7 + $0x47c] sm:$0xff]
  %v3456 = vld [vmem:[%s7 + $0x484] sm:$0xf]
  %v3457 = vld [vmem:[%s7 + $0x488] sm:$0xff]
  %v3458 = vld [vmem:[%s7 + $0x490] sm:$0xff]
  %v3459 = vld [vmem:[%s7 + $0x498] sm:$0xf]
  %v3460 = vld [vmem:[%s7 + $0x49c] sm:$0xff]
  %v3461 = vld [vmem:[%s7 + $0x4a4] sm:$0xff]
  %v3462 = vld [vmem:[%s7 + $0x4ac] sm:$0xf]
  %v3463 = vld [vmem:[%s7 + $0x4b0] sm:$0xff]
  %v3464 = vld [vmem:[%s7 + $0x4b8] sm:$0xff]
  %v3465 = vld [vmem:[%s7 + $0x4c0] sm:$0xf]
  %v3466 = vld [vmem:[%s7 + $0x4c4] sm:$0xff]
  %v3467 = vld [vmem:[%s7 + $0x4cc] sm:$0xff]
  %v3468 = vld [vmem:[%s7 + $0x4d4] sm:$0xf]
  %v3469 = vld [vmem:[%s7 + $0x4d8] sm:$0xff]
  %v3470 = vld [vmem:[%s7 + $0x4e0] sm:$0xff]
  %v3471 = vld [vmem:[%s7 + $0x4e8] sm:$0xf]
  %v3472 = vld [vmem:[%s7 + $0x4ec] sm:$0xff]
  %v3473 = vld [vmem:[%s7 + $0x4f4] sm:$0xff]
  %v3474 = vld [vmem:[%s7 + $0x4fc] sm:$0xf]
  %v3475 = vld [vmem:[%s8] sm:$0x1f]
  %v3477 = vlaneseq
  %v3478 = vshrl.u32 %v3477, 7
  %v3479 = vsub.s32 0, %v3478
  %v3480 = vrot.slane %v3475, %v3479
  %v3481 = vlaneseq
  %v3482 = vshrl.u32 %v3481, 7
  %v3483 = vsub.s32 1, %v3482
  %v3484 = vrot.slane %v3475, %v3483
  %v3485 = vlaneseq
  %v3486 = vshrl.u32 %v3485, 7
  %v3487 = vsub.s32 2, %v3486
  %v3488 = vrot.slane %v3475, %v3487
  %v3489 = vlaneseq
  %v3490 = vshrl.u32 %v3489, 7
  %v3491 = vsub.s32 3, %v3490
  %v3492 = vrot.slane %v3475, %v3491
  %v3493 = vlaneseq
  %v3494 = vshrl.u32 %v3493, 7
  %v3495 = vsub.s32 4, %v3494
  %v3496 = vrot.slane %v3475, %v3495
  %v3694 = vunpack.c.l.b16 %v3283
  %v3695 = vunpack.c.h.b16 %v3283
  %v3696 = vunpack.c.l.b16 %v3284
  %v3697 = vunpack.c.h.b16 %v3284
  %v3698 = vunpack.c.l.b16 %v3285
  %v3699 = vunpack.c.l.b16 %v3286
  %v3700 = vunpack.c.h.b16 %v3286
  %v3701 = vunpack.c.l.b16 %v3287
  %v3702 = vunpack.c.h.b16 %v3287
  %v3703 = vunpack.c.l.b16 %v3288
  %v3704 = vunpack.c.l.b16 %v3289
  %v3705 = vunpack.c.h.b16 %v3289
  %v3706 = vunpack.c.l.b16 %v3290
  %v3707 = vunpack.c.h.b16 %v3290
  %v3708 = vunpack.c.l.b16 %v3291
  %v3709 = vunpack.c.l.b16 %v3292
  %v3710 = vunpack.c.h.b16 %v3292
  %v3711 = vunpack.c.l.b16 %v3293
  %v3712 = vunpack.c.h.b16 %v3293
  %v3713 = vunpack.c.l.b16 %v3294
  %v3714 = vunpack.c.l.b16 %v3295
  %v3715 = vunpack.c.h.b16 %v3295
  %v3716 = vunpack.c.l.b16 %v3296
  %v3717 = vunpack.c.h.b16 %v3296
  %v3718 = vunpack.c.l.b16 %v3297
  %v3719 = vunpack.c.l.b16 %v3298
  %v3720 = vunpack.c.h.b16 %v3298
  %v3721 = vunpack.c.l.b16 %v3299
  %v3722 = vunpack.c.h.b16 %v3299
  %v3723 = vunpack.c.l.b16 %v3300
  %v3724 = vunpack.c.l.b16 %v3301
  %v3725 = vunpack.c.h.b16 %v3301
  %v3726 = vunpack.c.l.b16 %v3302
  %v3727 = vunpack.c.h.b16 %v3302
  %v3728 = vunpack.c.l.b16 %v3303
  %v3729 = vunpack.c.l.b16 %v3304
  %v3730 = vunpack.c.h.b16 %v3304
  %v3731 = vunpack.c.l.b16 %v3305
  %v3732 = vunpack.c.h.b16 %v3305
  %v3733 = vunpack.c.l.b16 %v3306
  %v3734 = vunpack.c.l.b16 %v3307
  %v3735 = vunpack.c.h.b16 %v3307
  %v3736 = vunpack.c.l.b16 %v3308
  %v3737 = vunpack.c.h.b16 %v3308
  %v3738 = vunpack.c.l.b16 %v3309
  %v3739 = vunpack.c.l.b16 %v3310
  %v3740 = vunpack.c.h.b16 %v3310
  %v3741 = vunpack.c.l.b16 %v3311
  %v3742 = vunpack.c.h.b16 %v3311
  %v3743 = vunpack.c.l.b16 %v3312
  %v3744 = vunpack.c.l.b16 %v3313
  %v3745 = vunpack.c.h.b16 %v3313
  %v3746 = vunpack.c.l.b16 %v3314
  %v3747 = vunpack.c.h.b16 %v3314
  %v3748 = vunpack.c.l.b16 %v3315
  %v3749 = vunpack.c.l.b16 %v3316
  %v3750 = vunpack.c.h.b16 %v3316
  %v3751 = vunpack.c.l.b16 %v3317
  %v3752 = vunpack.c.h.b16 %v3317
  %v3753 = vunpack.c.l.b16 %v3318
  %v3754 = vunpack.c.l.b16 %v3319
  %v3755 = vunpack.c.h.b16 %v3319
  %v3756 = vunpack.c.l.b16 %v3320
  %v3757 = vunpack.c.h.b16 %v3320
  %v3758 = vunpack.c.l.b16 %v3321
  %v3759 = vunpack.c.l.b16 %v3322
  %v3760 = vunpack.c.h.b16 %v3322
  %v3761 = vunpack.c.l.b16 %v3323
  %v3762 = vunpack.c.h.b16 %v3323
  %v3763 = vunpack.c.l.b16 %v3324
  %v3764 = vunpack.c.l.b16 %v3325
  %v3765 = vunpack.c.h.b16 %v3325
  %v3766 = vunpack.c.l.b16 %v3326
  %v3767 = vunpack.c.h.b16 %v3326
  %v3768 = vunpack.c.l.b16 %v3327
  %v3769 = vunpack.c.l.b16 %v3328
  %v3770 = vunpack.c.h.b16 %v3328
  %v3771 = vunpack.c.l.b16 %v3329
  %v3772 = vunpack.c.h.b16 %v3329
  %v3773 = vunpack.c.l.b16 %v3330
  %v3774 = vunpack.c.l.b16 %v3331
  %v3775 = vunpack.c.h.b16 %v3331
  %v3776 = vunpack.c.l.b16 %v3332
  %v3777 = vunpack.c.h.b16 %v3332
  %v3778 = vunpack.c.l.b16 %v3333
  %v3779 = vunpack.c.l.b16 %v3334
  %v3780 = vunpack.c.h.b16 %v3334
  %v3781 = vunpack.c.l.b16 %v3335
  %v3782 = vunpack.c.h.b16 %v3335
  %v3783 = vunpack.c.l.b16 %v3336
  %v3784 = vunpack.c.l.b16 %v3337
  %v3785 = vunpack.c.h.b16 %v3337
  %v3786 = vunpack.c.l.b16 %v3338
  %v3787 = vunpack.c.h.b16 %v3338
  %v3788 = vunpack.c.l.b16 %v3339
  %v3789 = vunpack.c.l.b16 %v3340
  %v3790 = vunpack.c.h.b16 %v3340
  %v3791 = vunpack.c.l.b16 %v3341
  %v3792 = vunpack.c.h.b16 %v3341
  %v3793 = vunpack.c.l.b16 %v3342
  %v3794 = vunpack.c.l.b16 %v3343
  %v3795 = vunpack.c.h.b16 %v3343
  %v3796 = vunpack.c.l.b16 %v3344
  %v3797 = vunpack.c.h.b16 %v3344
  %v3798 = vunpack.c.l.b16 %v3345
  %v3799 = vunpack.c.l.b16 %v3346
  %v3800 = vunpack.c.h.b16 %v3346
  %v3801 = vunpack.c.l.b16 %v3347
  %v3802 = vunpack.c.h.b16 %v3347
  %v3803 = vunpack.c.l.b16 %v3348
  %v3804 = vunpack.c.l.b16 %v3349
  %v3805 = vunpack.c.h.b16 %v3349
  %v3806 = vunpack.c.l.b16 %v3350
  %v3807 = vunpack.c.h.b16 %v3350
  %v3808 = vunpack.c.l.b16 %v3351
  %v3809 = vunpack.c.l.b16 %v3352
  %v3810 = vunpack.c.h.b16 %v3352
  %v3811 = vunpack.c.l.b16 %v3353
  %v3812 = vunpack.c.h.b16 %v3353
  %v3813 = vunpack.c.l.b16 %v3354
  %v3814 = vunpack.c.l.b16 %v3355
  %v3815 = vunpack.c.h.b16 %v3355
  %v3816 = vunpack.c.l.b16 %v3356
  %v3817 = vunpack.c.h.b16 %v3356
  %v3818 = vunpack.c.l.b16 %v3357
  %v3819 = vunpack.c.l.b16 %v3358
  %v3820 = vunpack.c.h.b16 %v3358
  %v3821 = vunpack.c.l.b16 %v3359
  %v3822 = vunpack.c.h.b16 %v3359
  %v3823 = vunpack.c.l.b16 %v3360
  %v3824 = vunpack.c.l.b16 %v3361
  %v3825 = vunpack.c.h.b16 %v3361
  %v3826 = vunpack.c.l.b16 %v3362
  %v3827 = vunpack.c.h.b16 %v3362
  %v3828 = vunpack.c.l.b16 %v3363
  %v3829 = vunpack.c.l.b16 %v3364
  %v3830 = vunpack.c.h.b16 %v3364
  %v3831 = vunpack.c.l.b16 %v3365
  %v3832 = vunpack.c.h.b16 %v3365
  %v3833 = vunpack.c.l.b16 %v3366
  %v3834 = vunpack.c.l.b16 %v3367
  %v3835 = vunpack.c.h.b16 %v3367
  %v3836 = vunpack.c.l.b16 %v3368
  %v3837 = vunpack.c.h.b16 %v3368
  %v3838 = vunpack.c.l.b16 %v3369
  %v3839 = vunpack.c.l.b16 %v3370
  %v3840 = vunpack.c.h.b16 %v3370
  %v3841 = vunpack.c.l.b16 %v3371
  %v3842 = vunpack.c.h.b16 %v3371
  %v3843 = vunpack.c.l.b16 %v3372
  %v3844 = vunpack.c.l.b16 %v3373
  %v3845 = vunpack.c.h.b16 %v3373
  %v3846 = vunpack.c.l.b16 %v3374
  %v3847 = vunpack.c.h.b16 %v3374
  %v3848 = vunpack.c.l.b16 %v3375
  %v3849 = vunpack.c.l.b16 %v3376
  %v3850 = vunpack.c.h.b16 %v3376
  %v3851 = vunpack.c.l.b16 %v3377
  %v3852 = vunpack.c.h.b16 %v3377
  %v3853 = vunpack.c.l.b16 %v3378
  %v3854 = vunpack.c.l.b16 %v3379
  %v3855 = vunpack.c.h.b16 %v3379
  %v3856 = vunpack.c.l.b16 %v3380
  %v3857 = vunpack.c.h.b16 %v3380
  %v3858 = vunpack.c.l.b16 %v3381
  %v3859 = vunpack.c.l.b16 %v3382
  %v3860 = vunpack.c.h.b16 %v3382
  %v3861 = vunpack.c.l.b16 %v3383
  %v3862 = vunpack.c.h.b16 %v3383
  %v3863 = vunpack.c.l.b16 %v3384
  %v3864 = vunpack.c.l.b16 %v3385
  %v3865 = vunpack.c.h.b16 %v3385
  %v3866 = vunpack.c.l.b16 %v3386
  %v3867 = vunpack.c.h.b16 %v3386
  %v3868 = vunpack.c.l.b16 %v3387
  %v3869 = vunpack.c.l.b16 %v3388
  %v3870 = vunpack.c.h.b16 %v3388
  %v3871 = vunpack.c.l.b16 %v3389
  %v3872 = vunpack.c.h.b16 %v3389
  %v3873 = vunpack.c.l.b16 %v3390
  %v3874 = vunpack.c.l.b16 %v3391
  %v3875 = vunpack.c.h.b16 %v3391
  %v3876 = vunpack.c.l.b16 %v3392
  %v3877 = vunpack.c.h.b16 %v3392
  %v3878 = vunpack.c.l.b16 %v3393
  %v3879 = vunpack.c.l.b16 %v3394
  %v3880 = vunpack.c.h.b16 %v3394
  %v3881 = vunpack.c.l.b16 %v3395
  %v3882 = vunpack.c.h.b16 %v3395
  %v3883 = vunpack.c.l.b16 %v3396
  %v3884 = vunpack.c.l.b16 %v3397
  %v3885 = vunpack.c.h.b16 %v3397
  %v3886 = vunpack.c.l.b16 %v3398
  %v3887 = vunpack.c.h.b16 %v3398
  %v3888 = vunpack.c.l.b16 %v3399
  %v3889 = vunpack.c.l.b16 %v3400
  %v3890 = vunpack.c.h.b16 %v3400
  %v3891 = vunpack.c.l.b16 %v3401
  %v3892 = vunpack.c.h.b16 %v3401
  %v3893 = vunpack.c.l.b16 %v3402
  %v3894 = vunpack.c.l.b16 %v3403
  %v3895 = vunpack.c.h.b16 %v3403
  %v3896 = vunpack.c.l.b16 %v3404
  %v3897 = vunpack.c.h.b16 %v3404
  %v3898 = vunpack.c.l.b16 %v3405
  %v3899 = vunpack.c.l.b16 %v3406
  %v3900 = vunpack.c.h.b16 %v3406
  %v3901 = vunpack.c.l.b16 %v3407
  %v3902 = vunpack.c.h.b16 %v3407
  %v3903 = vunpack.c.l.b16 %v3408
  %v3904 = vunpack.c.l.b16 %v3409
  %v3905 = vunpack.c.h.b16 %v3409
  %v3906 = vunpack.c.l.b16 %v3410
  %v3907 = vunpack.c.h.b16 %v3410
  %v3908 = vunpack.c.l.b16 %v3411
  %v3909 = vunpack.c.l.b16 %v3412
  %v3910 = vunpack.c.h.b16 %v3412
  %v3911 = vunpack.c.l.b16 %v3413
  %v3912 = vunpack.c.h.b16 %v3413
  %v3913 = vunpack.c.l.b16 %v3414
  %v3914 = vunpack.c.l.b16 %v3415
  %v3915 = vunpack.c.h.b16 %v3415
  %v3916 = vunpack.c.l.b16 %v3416
  %v3917 = vunpack.c.h.b16 %v3416
  %v3918 = vunpack.c.l.b16 %v3417
  %v3919 = vunpack.c.l.b16 %v3418
  %v3920 = vunpack.c.h.b16 %v3418
  %v3921 = vunpack.c.l.b16 %v3419
  %v3922 = vunpack.c.h.b16 %v3419
  %v3923 = vunpack.c.l.b16 %v3420
  %v3924 = vunpack.c.l.b16 %v3421
  %v3925 = vunpack.c.h.b16 %v3421
  %v3926 = vunpack.c.l.b16 %v3422
  %v3927 = vunpack.c.h.b16 %v3422
  %v3928 = vunpack.c.l.b16 %v3423
  %v3929 = vunpack.c.l.b16 %v3424
  %v3930 = vunpack.c.h.b16 %v3424
  %v3931 = vunpack.c.l.b16 %v3425
  %v3932 = vunpack.c.h.b16 %v3425
  %v3933 = vunpack.c.l.b16 %v3426
  %v3934 = vunpack.c.l.b16 %v3427
  %v3935 = vunpack.c.h.b16 %v3427
  %v3936 = vunpack.c.l.b16 %v3428
  %v3937 = vunpack.c.h.b16 %v3428
  %v3938 = vunpack.c.l.b16 %v3429
  %v3939 = vunpack.c.l.b16 %v3430
  %v3940 = vunpack.c.h.b16 %v3430
  %v3941 = vunpack.c.l.b16 %v3431
  %v3942 = vunpack.c.h.b16 %v3431
  %v3943 = vunpack.c.l.b16 %v3432
  %v3944 = vunpack.c.l.b16 %v3433
  %v3945 = vunpack.c.h.b16 %v3433
  %v3946 = vunpack.c.l.b16 %v3434
  %v3947 = vunpack.c.h.b16 %v3434
  %v3948 = vunpack.c.l.b16 %v3435
  %v3949 = vunpack.c.l.b16 %v3436
  %v3950 = vunpack.c.h.b16 %v3436
  %v3951 = vunpack.c.l.b16 %v3437
  %v3952 = vunpack.c.h.b16 %v3437
  %v3953 = vunpack.c.l.b16 %v3438
  %v3954 = vunpack.c.l.b16 %v3439
  %v3955 = vunpack.c.h.b16 %v3439
  %v3956 = vunpack.c.l.b16 %v3440
  %v3957 = vunpack.c.h.b16 %v3440
  %v3958 = vunpack.c.l.b16 %v3441
  %v3959 = vunpack.c.l.b16 %v3442
  %v3960 = vunpack.c.h.b16 %v3442
  %v3961 = vunpack.c.l.b16 %v3443
  %v3962 = vunpack.c.h.b16 %v3443
  %v3963 = vunpack.c.l.b16 %v3444
  %v3964 = vunpack.c.l.b16 %v3445
  %v3965 = vunpack.c.h.b16 %v3445
  %v3966 = vunpack.c.l.b16 %v3446
  %v3967 = vunpack.c.h.b16 %v3446
  %v3968 = vunpack.c.l.b16 %v3447
  %v3969 = vunpack.c.l.b16 %v3448
  %v3970 = vunpack.c.h.b16 %v3448
  %v3971 = vunpack.c.l.b16 %v3449
  %v3972 = vunpack.c.h.b16 %v3449
  %v3973 = vunpack.c.l.b16 %v3450
  %v3974 = vunpack.c.l.b16 %v3451
  %v3975 = vunpack.c.h.b16 %v3451
  %v3976 = vunpack.c.l.b16 %v3452
  %v3977 = vunpack.c.h.b16 %v3452
  %v3978 = vunpack.c.l.b16 %v3453
  %v3979 = vunpack.c.l.b16 %v3454
  %v3980 = vunpack.c.h.b16 %v3454
  %v3981 = vunpack.c.l.b16 %v3455
  %v3982 = vunpack.c.h.b16 %v3455
  %v3983 = vunpack.c.l.b16 %v3456
  %v3984 = vunpack.c.l.b16 %v3457
  %v3985 = vunpack.c.h.b16 %v3457
  %v3986 = vunpack.c.l.b16 %v3458
  %v3987 = vunpack.c.h.b16 %v3458
  %v3988 = vunpack.c.l.b16 %v3459
  %v3989 = vunpack.c.l.b16 %v3460
  %v3990 = vunpack.c.h.b16 %v3460
  %v3991 = vunpack.c.l.b16 %v3461
  %v3992 = vunpack.c.h.b16 %v3461
  %v3993 = vunpack.c.l.b16 %v3462
  %v3994 = vunpack.c.l.b16 %v3463
  %v3995 = vunpack.c.h.b16 %v3463
  %v3996 = vunpack.c.l.b16 %v3464
  %v3997 = vunpack.c.h.b16 %v3464
  %v3998 = vunpack.c.l.b16 %v3465
  %v3999 = vunpack.c.l.b16 %v3466
  %v4000 = vunpack.c.h.b16 %v3466
  %v4001 = vunpack.c.l.b16 %v3467
  %v4002 = vunpack.c.h.b16 %v3467
  %v4003 = vunpack.c.l.b16 %v3468
  %v4004 = vunpack.c.l.b16 %v3469
  %v4005 = vunpack.c.h.b16 %v3469
  %v4006 = vunpack.c.l.b16 %v3470
  %v4007 = vunpack.c.h.b16 %v3470
  %v4008 = vunpack.c.l.b16 %v3471
  %v4009 = vunpack.c.l.b16 %v3472
  %v4010 = vunpack.c.h.b16 %v3472
  %v4011 = vunpack.c.l.b16 %v3473
  %v4012 = vunpack.c.h.b16 %v3473
  %v4013 = vunpack.c.l.b16 %v3474
  %v4014 = vpack.c.b16 %v3699, %v3694
  %v4015 = vpack.c.b16 %v3700, %v3695
  %v4016 = vpack.c.b16 %v3701, %v3696
  %v4017 = vpack.c.b16 %v3702, %v3697
  %v4018 = vpack.c.b16 %v3703, %v3698
  %v4019 = vpack.c.b16 %v3709, %v3704
  %v4020 = vpack.c.b16 %v3710, %v3705
  %v4021 = vpack.c.b16 %v3711, %v3706
  %v4022 = vpack.c.b16 %v3712, %v3707
  %v4023 = vpack.c.b16 %v3713, %v3708
  %v4024 = vpack.c.b16 %v3719, %v3714
  %v4025 = vpack.c.b16 %v3720, %v3715
  %v4026 = vpack.c.b16 %v3721, %v3716
  %v4027 = vpack.c.b16 %v3722, %v3717
  %v4028 = vpack.c.b16 %v3723, %v3718
  %v4029 = vpack.c.b16 %v3729, %v3724
  %v4030 = vpack.c.b16 %v3730, %v3725
  %v4031 = vpack.c.b16 %v3731, %v3726
  %v4032 = vpack.c.b16 %v3732, %v3727
  %v4033 = vpack.c.b16 %v3733, %v3728
  %v4034 = vpack.c.b16 %v3739, %v3734
  %v4035 = vpack.c.b16 %v3740, %v3735
  %v4036 = vpack.c.b16 %v3741, %v3736
  %v4037 = vpack.c.b16 %v3742, %v3737
  %v4038 = vpack.c.b16 %v3743, %v3738
  %v4039 = vpack.c.b16 %v3749, %v3744
  %v4040 = vpack.c.b16 %v3750, %v3745
  %v4041 = vpack.c.b16 %v3751, %v3746
  %v4042 = vpack.c.b16 %v3752, %v3747
  %v4043 = vpack.c.b16 %v3753, %v3748
  %v4044 = vpack.c.b16 %v3759, %v3754
  %v4045 = vpack.c.b16 %v3760, %v3755
  %v4046 = vpack.c.b16 %v3761, %v3756
  %v4047 = vpack.c.b16 %v3762, %v3757
  %v4048 = vpack.c.b16 %v3763, %v3758
  %v4049 = vpack.c.b16 %v3769, %v3764
  %v4050 = vpack.c.b16 %v3770, %v3765
  %v4051 = vpack.c.b16 %v3771, %v3766
  %v4052 = vpack.c.b16 %v3772, %v3767
  %v4053 = vpack.c.b16 %v3773, %v3768
  %v4054 = vpack.c.b16 %v3779, %v3774
  %v4055 = vpack.c.b16 %v3780, %v3775
  %v4056 = vpack.c.b16 %v3781, %v3776
  %v4057 = vpack.c.b16 %v3782, %v3777
  %v4058 = vpack.c.b16 %v3783, %v3778
  %v4059 = vpack.c.b16 %v3789, %v3784
  %v4060 = vpack.c.b16 %v3790, %v3785
  %v4061 = vpack.c.b16 %v3791, %v3786
  %v4062 = vpack.c.b16 %v3792, %v3787
  %v4063 = vpack.c.b16 %v3793, %v3788
  %v4064 = vpack.c.b16 %v3799, %v3794
  %v4065 = vpack.c.b16 %v3800, %v3795
  %v4066 = vpack.c.b16 %v3801, %v3796
  %v4067 = vpack.c.b16 %v3802, %v3797
  %v4068 = vpack.c.b16 %v3803, %v3798
  %v4069 = vpack.c.b16 %v3809, %v3804
  %v4070 = vpack.c.b16 %v3810, %v3805
  %v4071 = vpack.c.b16 %v3811, %v3806
  %v4072 = vpack.c.b16 %v3812, %v3807
  %v4073 = vpack.c.b16 %v3813, %v3808
  %v4074 = vpack.c.b16 %v3819, %v3814
  %v4075 = vpack.c.b16 %v3820, %v3815
  %v4076 = vpack.c.b16 %v3821, %v3816
  %v4077 = vpack.c.b16 %v3822, %v3817
  %v4078 = vpack.c.b16 %v3823, %v3818
  %v4079 = vpack.c.b16 %v3829, %v3824
  %v4080 = vpack.c.b16 %v3830, %v3825
  %v4081 = vpack.c.b16 %v3831, %v3826
  %v4082 = vpack.c.b16 %v3832, %v3827
  %v4083 = vpack.c.b16 %v3833, %v3828
  %v4084 = vpack.c.b16 %v3839, %v3834
  %v4085 = vpack.c.b16 %v3840, %v3835
  %v4086 = vpack.c.b16 %v3841, %v3836
  %v4087 = vpack.c.b16 %v3842, %v3837
  %v4088 = vpack.c.b16 %v3843, %v3838
  %v4089 = vpack.c.b16 %v3849, %v3844
  %v4090 = vpack.c.b16 %v3850, %v3845
  %v4091 = vpack.c.b16 %v3851, %v3846
  %v4092 = vpack.c.b16 %v3852, %v3847
  %v4093 = vpack.c.b16 %v3853, %v3848
  %v4094 = vpack.c.b16 %v3859, %v3854
  %v4095 = vpack.c.b16 %v3860, %v3855
  %v4096 = vpack.c.b16 %v3861, %v3856
  %v4097 = vpack.c.b16 %v3862, %v3857
  %v4098 = vpack.c.b16 %v3863, %v3858
  %v4099 = vpack.c.b16 %v3869, %v3864
  %v4100 = vpack.c.b16 %v3870, %v3865
  %v4101 = vpack.c.b16 %v3871, %v3866
  %v4102 = vpack.c.b16 %v3872, %v3867
  %v4103 = vpack.c.b16 %v3873, %v3868
  %v4104 = vpack.c.b16 %v3879, %v3874
  %v4105 = vpack.c.b16 %v3880, %v3875
  %v4106 = vpack.c.b16 %v3881, %v3876
  %v4107 = vpack.c.b16 %v3882, %v3877
  %v4108 = vpack.c.b16 %v3883, %v3878
  %v4109 = vpack.c.b16 %v3889, %v3884
  %v4110 = vpack.c.b16 %v3890, %v3885
  %v4111 = vpack.c.b16 %v3891, %v3886
  %v4112 = vpack.c.b16 %v3892, %v3887
  %v4113 = vpack.c.b16 %v3893, %v3888
  %v4114 = vpack.c.b16 %v3899, %v3894
  %v4115 = vpack.c.b16 %v3900, %v3895
  %v4116 = vpack.c.b16 %v3901, %v3896
  %v4117 = vpack.c.b16 %v3902, %v3897
  %v4118 = vpack.c.b16 %v3903, %v3898
  %v4119 = vpack.c.b16 %v3909, %v3904
  %v4120 = vpack.c.b16 %v3910, %v3905
  %v4121 = vpack.c.b16 %v3911, %v3906
  %v4122 = vpack.c.b16 %v3912, %v3907
  %v4123 = vpack.c.b16 %v3913, %v3908
  %v4124 = vpack.c.b16 %v3919, %v3914
  %v4125 = vpack.c.b16 %v3920, %v3915
  %v4126 = vpack.c.b16 %v3921, %v3916
  %v4127 = vpack.c.b16 %v3922, %v3917
  %v4128 = vpack.c.b16 %v3923, %v3918
  %v4129 = vpack.c.b16 %v3929, %v3924
  %v4130 = vpack.c.b16 %v3930, %v3925
  %v4131 = vpack.c.b16 %v3931, %v3926
  %v4132 = vpack.c.b16 %v3932, %v3927
  %v4133 = vpack.c.b16 %v3933, %v3928
  %v4134 = vpack.c.b16 %v3939, %v3934
  %v4135 = vpack.c.b16 %v3940, %v3935
  %v4136 = vpack.c.b16 %v3941, %v3936
  %v4137 = vpack.c.b16 %v3942, %v3937
  %v4138 = vpack.c.b16 %v3943, %v3938
  %v4139 = vpack.c.b16 %v3949, %v3944
  %v4140 = vpack.c.b16 %v3950, %v3945
  %v4141 = vpack.c.b16 %v3951, %v3946
  %v4142 = vpack.c.b16 %v3952, %v3947
  %v4143 = vpack.c.b16 %v3953, %v3948
  %v4144 = vpack.c.b16 %v3959, %v3954
  %v4145 = vpack.c.b16 %v3960, %v3955
  %v4146 = vpack.c.b16 %v3961, %v3956
  %v4147 = vpack.c.b16 %v3962, %v3957
  %v4148 = vpack.c.b16 %v3963, %v3958
  %v4149 = vpack.c.b16 %v3969, %v3964
  %v4150 = vpack.c.b16 %v3970, %v3965
  %v4151 = vpack.c.b16 %v3971, %v3966
  %v4152 = vpack.c.b16 %v3972, %v3967
  %v4153 = vpack.c.b16 %v3973, %v3968
  %v4154 = vpack.c.b16 %v3979, %v3974
  %v4155 = vpack.c.b16 %v3980, %v3975
  %v4156 = vpack.c.b16 %v3981, %v3976
  %v4157 = vpack.c.b16 %v3982, %v3977
  %v4158 = vpack.c.b16 %v3983, %v3978
  %v4159 = vpack.c.b16 %v3989, %v3984
  %v4160 = vpack.c.b16 %v3990, %v3985
  %v4161 = vpack.c.b16 %v3991, %v3986
  %v4162 = vpack.c.b16 %v3992, %v3987
  %v4163 = vpack.c.b16 %v3993, %v3988
  %v4164 = vpack.c.b16 %v3999, %v3994
  %v4165 = vpack.c.b16 %v4000, %v3995
  %v4166 = vpack.c.b16 %v4001, %v3996
  %v4167 = vpack.c.b16 %v4002, %v3997
  %v4168 = vpack.c.b16 %v4003, %v3998
  %v4169 = vpack.c.b16 %v4009, %v4004
  %v4170 = vpack.c.b16 %v4010, %v4005
  %v4171 = vpack.c.b16 %v4011, %v4006
  %v4172 = vpack.c.b16 %v4012, %v4007
  %v4173 = vpack.c.b16 %v4013, %v4008
  %4334 = vmatprep.subr.bf16.mxu0 %v4015
  %4335 = vmatpush1.bf16.msra.mxu0 %v4014
  %4336 = vmatprep.subr.bf16.mxu0 %v4020
  %4337 = vmatpush1.bf16.msra.mxu0 %v4019
  %4338 = vmatprep.subr.bf16.mxu0 %v4025
  %4339 = vmatpush1.bf16.msra.mxu0 %v4024
  %4340 = vmatprep.subr.bf16.mxu0 %v4030
  %4341 = vmatpush1.bf16.msra.mxu0 %v4029
  %4342 = vmatprep.subr.bf16.mxu0 %v4035
  %4343 = vmatpush1.bf16.msra.mxu0 %v4034
  %4344 = vmatprep.subr.bf16.mxu0 %v4040
  %4345 = vmatpush1.bf16.msra.mxu0 %v4039
  %4346 = vmatprep.subr.bf16.mxu0 %v4045
  %4347 = vmatpush1.bf16.msra.mxu0 %v4044
  %4348 = vmatprep.subr.bf16.mxu0 %v4050
  %4349 = vmatpush1.bf16.msra.mxu0 %v4049
  %4350 = vmatprep.subr.bf16.mxu0 %v4055
  %4351 = vmatpush1.bf16.msra.mxu0 %v4054
  %4352 = vmatprep.subr.bf16.mxu0 %v4060
  %4353 = vmatpush1.bf16.msra.mxu0 %v4059
  %4354 = vmatprep.subr.bf16.mxu0 %v4065
  %4355 = vmatpush1.bf16.msra.mxu0 %v4064
  %4356 = vmatprep.subr.bf16.mxu0 %v4070
  %4357 = vmatpush1.bf16.msra.mxu0 %v4069
  %4358 = vmatprep.subr.bf16.mxu0 %v4075
  %4359 = vmatpush1.bf16.msra.mxu0 %v4074
  %4360 = vmatprep.subr.bf16.mxu0 %v4080
  %4361 = vmatpush1.bf16.msra.mxu0 %v4079
  %4362 = vmatprep.subr.bf16.mxu0 %v4085
  %4363 = vmatpush1.bf16.msra.mxu0 %v4084
  %4364 = vmatprep.subr.bf16.mxu0 %v4090
  %4365 = vmatpush1.bf16.msra.mxu0 %v4089
  %4366 = vmatprep.mubr.bf16.mxu0 %v3280
  %4367 = vmatmul.mubr.bf16.gmra.mrb[0].mxu0 %v3279
  %v4368 = vpop.f32.mrb[0].mxu0
  %v4369 = vadd.f32 %v3480, %v4368
  %v4370 = vpop.f32.mrb[0].mxu0
  %v4371 = vadd.f32 %v3484, %v4370
  %v4372 = vpop.f32.mrb[0].mxu0
  %v4373 = vpop.f32.mrb[0].mxu0
  %4374 = vdwg.mxu0
  %4375 = vmatprep.subr.bf16.mxu0 %v4095
  %4376 = vmatpush1.bf16.msra.mxu0 %v4094
  %4377 = vmatprep.subr.bf16.mxu0 %v4100
  %4378 = vmatpush1.bf16.msra.mxu0 %v4099
  %4379 = vmatprep.subr.bf16.mxu0 %v4105
  %4380 = vmatpush1.bf16.msra.mxu0 %v4104
  %4381 = vmatprep.subr.bf16.mxu0 %v4110
  %4382 = vmatpush1.bf16.msra.mxu0 %v4109
  %4383 = vmatprep.subr.bf16.mxu0 %v4115
  %4384 = vmatpush1.bf16.msra.mxu0 %v4114
  %4385 = vmatprep.subr.bf16.mxu0 %v4120
  %4386 = vmatpush1.bf16.msra.mxu0 %v4119
  %4387 = vmatprep.subr.bf16.mxu0 %v4125
  %4388 = vmatpush1.bf16.msra.mxu0 %v4124
  %4389 = vmatprep.subr.bf16.mxu0 %v4130
  %4390 = vmatpush1.bf16.msra.mxu0 %v4129
  %4391 = vmatprep.subr.bf16.mxu0 %v4135
  %4392 = vmatpush1.bf16.msra.mxu0 %v4134
  %4393 = vmatprep.subr.bf16.mxu0 %v4140
  %4394 = vmatpush1.bf16.msra.mxu0 %v4139
  %4395 = vmatprep.subr.bf16.mxu0 %v4145
  %4396 = vmatpush1.bf16.msra.mxu0 %v4144
  %4397 = vmatprep.subr.bf16.mxu0 %v4150
  %4398 = vmatpush1.bf16.msra.mxu0 %v4149
  %4399 = vmatprep.subr.bf16.mxu0 %v4155
  %4400 = vmatpush1.bf16.msra.mxu0 %v4154
  %4401 = vmatprep.subr.bf16.mxu0 %v4160
  %4402 = vmatpush1.bf16.msra.mxu0 %v4159
  %4403 = vmatprep.subr.bf16.mxu0 %v4165
  %4404 = vmatpush1.bf16.msra.mxu0 %v4164
  %4405 = vmatprep.subr.bf16.mxu0 %v4170
  %4406 = vmatpush1.bf16.msra.mxu0 %v4169
  %4407 = vmatprep.mubr.bf16.mxu0 %v3282
  %4408 = vmatmul.mubr.bf16.gmra.mrb[0].mxu0 %v3281
  %v4409 = vpop.f32.mrb[0].mxu0
  %v4410 = vadd.f32 %v4369, %v4409
  %v4411 = vpop.f32.mrb[0].mxu0
  %v4412 = vadd.f32 %v4371, %v4411
  %v4413 = vpop.f32.mrb[0].mxu0
  %v4414 = vpop.f32.mrb[0].mxu0
  %4415 = vdwg.mxu0
  %4416 = vmatprep.subr.bf16.mxu0 %v4017
  %4417 = vmatpush1.bf16.msra.mxu0 %v4016
  %4418 = vmatprep.subr.bf16.mxu0 %v4022
  %4419 = vmatpush1.bf16.msra.mxu0 %v4021
  %4420 = vmatprep.subr.bf16.mxu0 %v4027
  %4421 = vmatpush1.bf16.msra.mxu0 %v4026
  %4422 = vmatprep.subr.bf16.mxu0 %v4032
  %4423 = vmatpush1.bf16.msra.mxu0 %v4031
  %4424 = vmatprep.subr.bf16.mxu0 %v4037
  %4425 = vmatpush1.bf16.msra.mxu0 %v4036
  %4426 = vmatprep.subr.bf16.mxu0 %v4042
  %4427 = vmatpush1.bf16.msra.mxu0 %v4041
  %4428 = vmatprep.subr.bf16.mxu0 %v4047
  %4429 = vmatpush1.bf16.msra.mxu0 %v4046
  %4430 = vmatprep.subr.bf16.mxu0 %v4052
  %4431 = vmatpush1.bf16.msra.mxu0 %v4051
  %4432 = vmatprep.subr.bf16.mxu0 %v4057
  %4433 = vmatpush1.bf16.msra.mxu0 %v4056
  %4434 = vmatprep.subr.bf16.mxu0 %v4062
  %4435 = vmatpush1.bf16.msra.mxu0 %v4061
  %4436 = vmatprep.subr.bf16.mxu0 %v4067
  %4437 = vmatpush1.bf16.msra.mxu0 %v4066
  %4438 = vmatprep.subr.bf16.mxu0 %v4072
  %4439 = vmatpush1.bf16.msra.mxu0 %v4071
  %4440 = vmatprep.subr.bf16.mxu0 %v4077
  %4441 = vmatpush1.bf16.msra.mxu0 %v4076
  %4442 = vmatprep.subr.bf16.mxu0 %v4082
  %4443 = vmatpush1.bf16.msra.mxu0 %v4081
  %4444 = vmatprep.subr.bf16.mxu0 %v4087
  %4445 = vmatpush1.bf16.msra.mxu0 %v4086
  %4446 = vmatprep.subr.bf16.mxu0 %v4092
  %4447 = vmatpush1.bf16.msra.mxu0 %v4091
  %4448 = vmatprep.mubr.bf16.mxu0 %v3280
  %4449 = vmatmul.mubr.bf16.gmra.mrb[0].mxu0 %v3279
  %v4450 = vpop.f32.mrb[0].mxu0
  %v4451 = vadd.f32 %v3488, %v4450
  %v4452 = vpop.f32.mrb[0].mxu0
  %v4453 = vadd.f32 %v3492, %v4452
  %v4454 = vpop.f32.mrb[0].mxu0
  %v4455 = vpop.f32.mrb[0].mxu0
  %4456 = vdwg.mxu0
  %4457 = vmatprep.subr.bf16.mxu0 %v4097
  %4458 = vmatpush1.bf16.msra.mxu0 %v4096
  %4459 = vmatprep.subr.bf16.mxu0 %v4102
  %4460 = vmatpush1.bf16.msra.mxu0 %v4101
  %4461 = vmatprep.subr.bf16.mxu0 %v4107
  %4462 = vmatpush1.bf16.msra.mxu0 %v4106
  %4463 = vmatprep.subr.bf16.mxu0 %v4112
  %4464 = vmatpush1.bf16.msra.mxu0 %v4111
  %4465 = vmatprep.subr.bf16.mxu0 %v4117
  %4466 = vmatpush1.bf16.msra.mxu0 %v4116
  %4467 = vmatprep.subr.bf16.mxu0 %v4122
  %4468 = vmatpush1.bf16.msra.mxu0 %v4121
  %4469 = vmatprep.subr.bf16.mxu0 %v4127
  %4470 = vmatpush1.bf16.msra.mxu0 %v4126
  %4471 = vmatprep.subr.bf16.mxu0 %v4132
  %4472 = vmatpush1.bf16.msra.mxu0 %v4131
  %4473 = vmatprep.subr.bf16.mxu0 %v4137
  %4474 = vmatpush1.bf16.msra.mxu0 %v4136
  %4475 = vmatprep.subr.bf16.mxu0 %v4142
  %4476 = vmatpush1.bf16.msra.mxu0 %v4141
  %4477 = vmatprep.subr.bf16.mxu0 %v4147
  %4478 = vmatpush1.bf16.msra.mxu0 %v4146
  %4479 = vmatprep.subr.bf16.mxu0 %v4152
  %4480 = vmatpush1.bf16.msra.mxu0 %v4151
  %4481 = vmatprep.subr.bf16.mxu0 %v4157
  %4482 = vmatpush1.bf16.msra.mxu0 %v4156
  %4483 = vmatprep.subr.bf16.mxu0 %v4162
  %4484 = vmatpush1.bf16.msra.mxu0 %v4161
  %4485 = vmatprep.subr.bf16.mxu0 %v4167
  %4486 = vmatpush1.bf16.msra.mxu0 %v4166
  %4487 = vmatprep.subr.bf16.mxu0 %v4172
  %4488 = vmatpush1.bf16.msra.mxu0 %v4171
  %4489 = vmatprep.mubr.bf16.mxu0 %v3282
  %4490 = vmatmul.mubr.bf16.gmra.mrb[0].mxu0 %v3281
  %v4491 = vpop.f32.mrb[0].mxu0
  %v4492 = vadd.f32 %v4451, %v4491
  %v4493 = vpop.f32.mrb[0].mxu0
  %v4494 = vadd.f32 %v4453, %v4493
  %v4495 = vpop.f32.mrb[0].mxu0
  %v4496 = vpop.f32.mrb[0].mxu0
  %4497 = vdwg.mxu0
  %4498 = vmatprep.subr.bf16.mxu0 0
  %4499 = vmatpush1.bf16.msra.mxu0 %v4018
  %4500 = vmatprep.subr.bf16.mxu0 0
  %4501 = vmatpush1.bf16.msra.mxu0 %v4023
  %4502 = vmatprep.subr.bf16.mxu0 0
  %4503 = vmatpush1.bf16.msra.mxu0 %v4028
  %4504 = vmatprep.subr.bf16.mxu0 0
  %4505 = vmatpush1.bf16.msra.mxu0 %v4033
  %4506 = vmatprep.subr.bf16.mxu0 0
  %4507 = vmatpush1.bf16.msra.mxu0 %v4038
  %4508 = vmatprep.subr.bf16.mxu0 0
  %4509 = vmatpush1.bf16.msra.mxu0 %v4043
  %4510 = vmatprep.subr.bf16.mxu0 0
  %4511 = vmatpush1.bf16.msra.mxu0 %v4048
  %4512 = vmatprep.subr.bf16.mxu0 0
  %4513 = vmatpush1.bf16.msra.mxu0 %v4053
  %4514 = vmatprep.subr.bf16.mxu0 0
  %4515 = vmatpush1.bf16.msra.mxu0 %v4058
  %4516 = vmatprep.subr.bf16.mxu0 0
  %4517 = vmatpush1.bf16.msra.mxu0 %v4063
  %4518 = vmatprep.subr.bf16.mxu0 0
  %4519 = vmatpush1.bf16.msra.mxu0 %v4068
  %4520 = vmatprep.subr.bf16.mxu0 0
  %4521 = vmatpush1.bf16.msra.mxu0 %v4073
  %4522 = vmatprep.subr.bf16.mxu0 0
  %4523 = vmatpush1.bf16.msra.mxu0 %v4078
  %4524 = vmatprep.subr.bf16.mxu0 0
  %4525 = vmatpush1.bf16.msra.mxu0 %v4083
  %4526 = vmatprep.subr.bf16.mxu0 0
  %4527 = vmatpush1.bf16.msra.mxu0 %v4088
  %4528 = vmatprep.subr.bf16.mxu0 0
  %4529 = vmatpush1.bf16.msra.mxu0 %v4093
  %4530 = vmatprep.mubr.bf16.mxu0 %v3280
  %4531 = vmatmul.mubr.bf16.gmra.mrb[0].mxu0 %v3279
  %v4532 = vpop.f32.mrb[0].mxu0
  %v4533 = vadd.f32 %v3496, %v4532
  %v4534 = vpop.f32.mrb[0].mxu0
  %v4535 = vpop.f32.mrb[0].mxu0
  %v4536 = vpop.f32.mrb[0].mxu0
  %4537 = vdwg.mxu0
  %4538 = vmatprep.subr.bf16.mxu0 0
  %4539 = vmatpush1.bf16.msra.mxu0 %v4098
  %4540 = vmatprep.subr.bf16.mxu0 0
  %4541 = vmatpush1.bf16.msra.mxu0 %v4103
  %4542 = vmatprep.subr.bf16.mxu0 0
  %4543 = vmatpush1.bf16.msra.mxu0 %v4108
  %4544 = vmatprep.subr.bf16.mxu0 0
  %4545 = vmatpush1.bf16.msra.mxu0 %v4113
  %4546 = vmatprep.subr.bf16.mxu0 0
  %4547 = vmatpush1.bf16.msra.mxu0 %v4118
  %4548 = vmatprep.subr.bf16.mxu0 0
  %4549 = vmatpush1.bf16.msra.mxu0 %v4123
  %4550 = vmatprep.subr.bf16.mxu0 0
  %4551 = vmatpush1.bf16.msra.mxu0 %v4128
  %4552 = vmatprep.subr.bf16.mxu0 0
  %4553 = vmatpush1.bf16.msra.mxu0 %v4133
  %4554 = vmatprep.subr.bf16.mxu0 0
  %4555 = vmatpush1.bf16.msra.mxu0 %v4138
  %4556 = vmatprep.subr.bf16.mxu0 0
  %4557 = vmatpush1.bf16.msra.mxu0 %v4143
  %4558 = vmatprep.subr.bf16.mxu0 0
  %4559 = vmatpush1.bf16.msra.mxu0 %v4148
  %4560 = vmatprep.subr.bf16.mxu0 0
  %4561 = vmatpush1.bf16.msra.mxu0 %v4153
  %4562 = vmatprep.subr.bf16.mxu0 0
  %4563 = vmatpush1.bf16.msra.mxu0 %v4158
  %4564 = vmatprep.subr.bf16.mxu0 0
  %4565 = vmatpush1.bf16.msra.mxu0 %v4163
  %4566 = vmatprep.subr.bf16.mxu0 0
  %4567 = vmatpush1.bf16.msra.mxu0 %v4168
  %4568 = vmatprep.subr.bf16.mxu0 0
  %4569 = vmatpush1.bf16.msra.mxu0 %v4173
  %4570 = vmatprep.mubr.bf16.mxu0 %v3282
  %4571 = vmatmul.mubr.bf16.gmra.mrb[0].mxu0 %v3281
  %v4572 = vpop.f32.mrb[0].mxu0
  %v4573 = vadd.f32 %v4533, %v4572
  %v4574 = vpop.f32.mrb[0].mxu0
  %v4575 = vpop.f32.mrb[0].mxu0
  %v4576 = vpop.f32.mrb[0].mxu0
  %4577 = vdwg.mxu0
  %v4578 = vmax.f32 %v4410, 0.0
  %v4579 = vmax.f32 %v4412, 0.0
  %v4580 = vmax.f32 %v4492, 0.0
  %v4581 = vmax.f32 %v4494, 0.0
  %v4582 = vmax.f32 %v4573, 0.0
  %v4583 = vld [vmem:[%s9] sm:$0x1f]
  %v4585 = vlaneseq
  %v4586 = vshrl.u32 %v4585, 7
  %v4587 = vsub.s32 0, %v4586
  %v4588 = vrot.slane %v4583, %v4587
  %v4589 = vlaneseq
  %v4590 = vshrl.u32 %v4589, 7
  %v4591 = vsub.s32 1, %v4590
  %v4592 = vrot.slane %v4583, %v4591
  %v4593 = vlaneseq
  %v4594 = vshrl.u32 %v4593, 7
  %v4595 = vsub.s32 2, %v4594
  %v4596 = vrot.slane %v4583, %v4595
  %v4597 = vlaneseq
  %v4598 = vshrl.u32 %v4597, 7
  %v4599 = vsub.s32 3, %v4598
  %v4600 = vrot.slane %v4583, %v4599
  %v4601 = vlaneseq
  %v4602 = vshrl.u32 %v4601, 7
  %v4603 = vsub.s32 4, %v4602
  %v4604 = vrot.slane %v4583, %v4603
  %v4610 = vmul.f32 %v4578, %v4588
  %v4611 = vmul.f32 %v4579, %v4592
  %v4612 = vmul.f32 %v4580, %v4596
  %v4613 = vmul.f32 %v4581, %v4600
  %v4614 = vmul.f32 %v4582, %v4604
  %vm4615 = vcmask 1041408
  %v4616 = vsel %vm4615, %v4610, 0.0
  %v4617 = vsel %vm4615, %v4611, 0.0
  %v4618 = vadd.f32 %v4616, %v4617
  %v4619 = vsel %vm4615, %v4612, 0.0
  %v4620 = vadd.f32 %v4618, %v4619
  %v4621 = vsel %vm4615, %v4613, 0.0
  %v4622 = vadd.f32 %v4620, %v4621
  %vm4623 = vcmask 648192
  %v4624 = vsel %vm4623, %v4614, 0.0
  %v4625 = vadd.f32 %v4622, %v4624
  %4626 = vadd.xlane.f32.xlu0 %v4625
  %v4627 = vpop.xlane.xlu0 %4626
  %v4628 = vld [vmem:[#allocation2] sm:$0x1]
  %v4630 = vlaneseq
  %v4631 = vshrl.u32 %v4630, 7
  %v4632 = vsub.s32 0, %v4631
  %v4633 = vrot.slane %v4628, %v4632
  %v4635 = vadd.f32 %v4627, %v4633
  %vm4636 = vcmask 1024
  %4637 = vst.msk [vmem:[%s11] sm:$0x3] %vm4636, %v4635
  // Predicated region
  $region46: #{convnet_forward.9} parent=0 // pred_check
    _
  $region47: #{convnet_forward.9} parent=0 // pred_check_branch
    %4639 = sbr.rel (0) target = $region49
  $region48: #{convnet_forward.9} parent=0 // pred_region
    _
  $region49: #{convnet_forward.9} parent=0 // pred_fallthru
    _
  // Predicated region
  $region50: #{convnet_forward.9} parent=0 // pred_check
    _
  $region51: #{convnet_forward.9} parent=0 // pred_check_branch
    %4641 = sbr.rel (0) target = $region53
  $region52: #{convnet_forward.9} parent=0 // pred_region
    _
  $region53: #{convnet_forward.9} parent=0 // pred_fallthru
    _

</llo_original>
